<compile_context>
chip_gen: v7x
topology: tpu7x:2x2x1
jax: 0.10.0
libtpu: 0.0.40
codegen_flags: <defaults>
</compile_context>

<pallas_src>
import numpy as np
import jax
import jax.numpy as jnp
from jax import lax
from jax.experimental import pallas as pl
from jax.experimental.pallas import tpu as pltpu

BN_EPS = 1e-5


# ----------------------------- helpers -----------------------------

def _round_up(x, m):
    return ((x + m - 1) // m) * m


def _fold_bn(p):
    scale = p["gamma"] / jnp.sqrt(p["var"] + BN_EPS)
    bias = p["beta"] - p["mean"] * scale
    return scale, bias


# ------------------- 1x1 ConvBlock: matmul + bias + ReLU -------------------
# (BN scale is pre-folded into the weight matrix on the host.)

def _mm_bias_relu_kernel(x_ref, w_ref, b_ref, o_ref):
    acc = jnp.dot(x_ref[...], w_ref[...], preferred_element_type=jnp.float32)
    o_ref[...] = jnp.maximum(acc + b_ref[...], 0.0)


def _mm_bias_relu(x2d, w, bias, tm_cap=512):
    M, K = x2d.shape
    Nout = w.shape[1]
    tm = min(tm_cap, _round_up(M, 8))
    Mp = _round_up(M, tm)
    xin = x2d if Mp == M else jnp.pad(x2d, ((0, Mp - M), (0, 0)))
    out = pl.pallas_call(
        _mm_bias_relu_kernel,
        out_shape=jax.ShapeDtypeStruct((Mp, Nout), jnp.float32),
        grid=(Mp // tm,),
        in_specs=[
            pl.BlockSpec((tm, K), lambda i: (i, 0)),
            pl.BlockSpec((K, Nout), lambda i: (0, 0)),   # constant -> stays resident
            pl.BlockSpec((1, Nout), lambda i: (0, 0)),
        ],
        out_specs=pl.BlockSpec((tm, Nout), lambda i: (i, 0)),
        compiler_params=pltpu.CompilerParams(dimension_semantics=("parallel",)),
    )(xin, w, bias.reshape(1, -1))
    return out if Mp == M else out[:M]


def _conv1x1_wb(p):
    scale, bias = _fold_bn(p)
    w2 = p["w"][:, :, 0, 0].T * scale                    # (Cin, Cout), BN folded
    return w2, bias


def conv1x1_bn_relu(x, p):
    N, H, W, C = x.shape
    w2, bias = _conv1x1_wb(p)
    y = _mm_bias_relu(x.reshape(-1, C), w2, bias)
    return y.reshape(N, H, W, -1)


# ------------------- 3x3 ConvBlock: in-kernel 9-tap reduction -------------------
# For stride 1 the input is padded to (H+3, W+2) and flattened so tap (di,dj) is
# the contiguous row window starting at di*(W+2)+dj (extended output has 2 junk
# columns per row, discarded in the wrapper).  For stride 2 the padded input is
# space-to-depth'd into 4 parity slabs first, reducing it to the same pattern.

def _make_conv3x3_kernel(offsets, m_ext, cin):
    def kernel(x_ref, w_ref, b_ref, o_ref):
        s0 = offsets[0]
        acc = jnp.dot(x_ref[s0:s0 + m_ext, :], w_ref[0:cin, :],
                      preferred_element_type=jnp.float32)
        for t in range(1, 9):
            s = offsets[t]
            acc = acc + jnp.dot(x_ref[s:s + m_ext, :],
                                w_ref[t * cin:(t + 1) * cin, :],
                                preferred_element_type=jnp.float32)
        o_ref[...] = jnp.maximum(acc + b_ref[...], 0.0)
    return kernel


def conv3x3_bn_relu(x, p, stride):
    # TODO(synk): for very large feature maps, additionally tile the per-batch
    # slab over rows (here the whole slab comfortably fits in VMEM).
    N, H, W, C = x.shape
    Cout = p["w"].shape[0]
    scale, bias = _fold_bn(p)
    w9 = (jnp.transpose(p["w"], (2, 3, 1, 0)) * scale).reshape(9 * C, Cout)

    if stride == 1:
        Ho, Wo, Wp = H, W, W + 2
        xp = jnp.pad(x, ((0, 0), (1, 2), (1, 1), (0, 0)))        # (N, H+3, W+2, C)
        xf = xp.reshape(N, (H + 3) * Wp, C)
        offsets = tuple(di * Wp + dj for di in range(3) for dj in range(3))
    else:
        assert stride == 2 and H % 2 == 0 and W % 2 == 0
        Ho, Wo = H // 2, W // 2
        Hs, Ws = Ho + 2, Wo + 2
        Wp = Ws
        xp = jnp.pad(x, ((0, 0), (1, 3), (1, 3), (0, 0)))        # (N, H+4, W+4, C)
        slabs = jnp.stack([xp[:, pr::2, pc::2, :]
                           for pr in range(2) for pc in range(2)], axis=1)
        xf = slabs.reshape(N, 4 * Hs * Ws, C)
        offsets = tuple(((di % 2) * 2 + (dj % 2)) * Hs * Ws
                        + (di // 2) * Ws + (dj // 2)
                        for di in range(3) for dj in range(3))

    m_ext = Ho * Wp
    L = xf.shape[1]
    kernel = _make_conv3x3_kernel(offsets, m_ext, C)
    out_ext = pl.pallas_call(
        kernel,
        out_shape=jax.ShapeDtypeStruct((N, m_ext, Cout), jnp.float32),
        grid=(N,),
        in_specs=[
            pl.BlockSpec((None, L, C), lambda n: (n, 0, 0)),
            pl.BlockSpec((9 * C, Cout), lambda n: (0, 0)),        # resident weights
            pl.BlockSpec((1, Cout), lambda n: (0, 0)),
        ],
        out_specs=pl.BlockSpec((None, m_ext, Cout), lambda n: (n, 0, 0)),
        compiler_params=pltpu.CompilerParams(dimension_semantics=("parallel",)),
    )(xf, w9, bias.reshape(1, -1))
    return out_ext.reshape(N, Ho, Wp, Cout)[:, :, :Wo, :]


# ------------------- fused weight path: compress convs + softmax + mix -------------------

def _make_fuse_kernel(C, cc):
    def kernel(l0_ref, l1_ref, l2_ref, w_ref, b_ref, a_ref, bl_ref, o_ref):
        l0, l1, l2 = l0_ref[...], l1_ref[...], l2_ref[...]
        b_all = b_ref[...]                                   # (1, 3*cc)

        def compress(l, idx):
            v = jnp.dot(l, w_ref[idx * C:(idx + 1) * C, :],
                        preferred_element_type=jnp.float32)
            return jnp.maximum(v + b_all[:, idx * cc:(idx + 1) * cc], 0.0)

        v0, v1, v2 = compress(l0, 0), compress(l1, 1), compress(l2, 2)
        logits = (jnp.dot(v0, a_ref[0 * cc:1 * cc, :], preferred_element_type=jnp.float32)
                  + jnp.dot(v1, a_ref[1 * cc:2 * cc, :], preferred_element_type=jnp.float32)
                  + jnp.dot(v2, a_ref[2 * cc:3 * cc, :], preferred_element_type=jnp.float32)
                  + bl_ref[...])                             # (tm, 3)
        z0, z1, z2 = logits[:, 0:1], logits[:, 1:2], logits[:, 2:3]
        m = jnp.maximum(jnp.maximum(z0, z1), z2)
        e0, e1, e2 = jnp.exp(z0 - m), jnp.exp(z1 - m), jnp.exp(z2 - m)
        inv = pl.reciprocal(e0 + e1 + e2, approx=True)       # EUP, off the VALU path
        o_ref[...] = (e0 * l0 + e1 * l1 + e2 * l2) * inv
    return kernel


def _fuse(l0, l1, l2, w012, b012, a012, bl, tm_cap=512):
    M, C = l0.shape
    cc = a012.shape[0] // 3
    tm = min(tm_cap, _round_up(M, 8))
    Mp = _round_up(M, tm)
    if Mp != M:
        pad = lambda a: jnp.pad(a, ((0, Mp - M), (0, 0)))
        l0, l1, l2 = pad(l0), pad(l1), pad(l2)
    out = pl.pallas_call(
        _make_fuse_kernel(C, cc),
        out_shape=jax.ShapeDtypeStruct((Mp, C), jnp.float32),
        grid=(Mp // tm,),
        in_specs=[
            pl.BlockSpec((tm, C), lambda i: (i, 0)),
            pl.BlockSpec((tm, C), lambda i: (i, 0)),
            pl.BlockSpec((tm, C), lambda i: (i, 0)),
            pl.BlockSpec((3 * C, cc), lambda i: (0, 0)),
            pl.BlockSpec((1, 3 * cc), lambda i: (0, 0)),
            pl.BlockSpec((3 * cc, 3), lambda i: (0, 0)),
            pl.BlockSpec((1, 3), lambda i: (0, 0)),
        ],
        out_specs=pl.BlockSpec((tm, C), lambda i: (i, 0)),
        compiler_params=pltpu.CompilerParams(dimension_semantics=("parallel",)),
    )(l0, l1, l2, w012, b012, a012, bl)
    return out if Mp == M else out[:M]


# ------------------- bilinear x2 upsample (small JAX glue) -------------------

def _interp_matrix(n_in):
    """Exact PyTorch bilinear x2, align_corners=False, as a (2n, n) matrix."""
    n_out = 2 * n_in
    m = np.zeros((n_out, n_in), dtype=np.float32)
    for i in range(n_out):
        src = (i + 0.5) / 2.0 - 0.5
        i0 = int(np.floor(src))
        frac = src - i0
        lo = min(max(i0, 0), n_in - 1)
        hi = min(max(i0 + 1, 0), n_in - 1)
        m[i, lo] += 1.0 - frac
        m[i, hi] += frac
    return m


def bilinear_up2(x):
    # TODO(synk): could be folded into the preceding 1x1-conv kernel; left as
    # two tiny exact separable einsums (minor HBM traffic at these sizes).
    N, H, W, C = x.shape
    R = jnp.asarray(_interp_matrix(H))
    Cm = jnp.asarray(_interp_matrix(W))
    y = jnp.einsum("ph,nhwc->npwc", R, x, precision="highest")
    y = jnp.einsum("qw,npwc->npqc", Cm, y, precision="highest")
    return y


# ----------------------------- ASFF forward -----------------------------

def asff_forward(params, x0, x1, x2):
    l0r = bilinear_up2(conv1x1_bn_relu(x0, params["level_0"]))
    l1r = conv1x1_bn_relu(x1, params["level_1"])
    l2r = conv3x3_bn_relu(x2, params["level_2"], stride=2)

    # Fused weight path parameters (BN scale folded into the compress weights).
    w0m, b0 = _conv1x1_wb(params["weight_level_0"])
    w1m, b1 = _conv1x1_wb(params["weight_level_1"])
    w2m, b2 = _conv1x1_wb(params["weight_level_2"])
    w012 = jnp.concatenate([w0m, w1m, w2m], axis=0)            # (3*C, cc)
    b012 = jnp.concatenate([b0, b1, b2]).reshape(1, -1)        # (1, 3*cc)
    a012 = params["weight_levels_w"][:, :, 0, 0].T             # (3*cc, 3)
    bl = params["weight_levels_b"].reshape(1, -1)              # (1, 3)

    N, H, W, C = l0r.shape
    fused = _fuse(l0r.reshape(-1, C), l1r.reshape(-1, C), l2r.reshape(-1, C),
                  w012, b012, a012, bl)
    fused = fused.reshape(N, H, W, C)
    return conv3x3_bn_relu(fused, params["expand"], stride=1)


# ----------------------------- params (deterministic, synthetic) -----------------------------

def _make_convblock(key, cin, cout, k):
    ks = jax.random.split(key, 5)
    return {
        "w": jax.random.normal(ks[0], (cout, cin, k, k), jnp.float32)
             * (1.0 / np.sqrt(cin * k * k)),
        "gamma": 1.0 + 0.1 * jax.random.normal(ks[1], (cout,), jnp.float32),
        "beta": 0.1 * jax.random.normal(ks[2], (cout,), jnp.float32),
        "mean": 0.1 * jax.random.normal(ks[3], (cout,), jnp.float32),
        "var": 1.0 + 0.2 * jax.random.uniform(ks[4], (cout,), jnp.float32),
    }


def make_asff_params(key, inter_dim=128, out_dim=256):
    ks = jax.random.split(key, 9)
    compress_c = 16
    return {
        "level_0": _make_convblock(ks[0], 256, inter_dim, 1),
        "level_1": _make_convblock(ks[1], 256, inter_dim, 1),
        "level_2": _make_convblock(ks[2], 128 + 64, inter_dim, 3),
        "expand": _make_convblock(ks[3], inter_dim, out_dim, 3),
        "weight_level_0": _make_convblock(ks[4], inter_dim, compress_c, 1),
        "weight_level_1": _make_convblock(ks[5], inter_dim, compress_c, 1),
        "weight_level_2": _make_convblock(ks[6], inter_dim, compress_c, 1),
        "weight_levels_w": jax.random.normal(ks[7], (3, compress_c * 3, 1, 1),
                                             jnp.float32)
                           * (1.0 / np.sqrt(compress_c * 3)),
        "weight_levels_b": 0.1 * jax.random.normal(ks[8], (3,), jnp.float32),
    }


# ----------------------------- pure-JAX reference -----------------------------

def _ref_convblock(x, p, k, stride):
    w = jnp.transpose(p["w"], (2, 3, 1, 0))           # HWIO
    pad = (k - 1) // 2
    y = lax.conv_general_dilated(
        x, w, (stride, stride), ((pad, pad), (pad, pad)),
        dimension_numbers=("NHWC", "HWIO", "NHWC"),
        precision=lax.Precision.HIGHEST)
    scale, bias = _fold_bn(p)
    return jnp.maximum(y * scale + bias, 0.0)


def asff_reference(params, x0, x1, x2):
    l0r = bilinear_up2(_ref_convblock(x0, params["level_0"], 1, 1))
    l1r = _ref_convblock(x1, params["level_1"], 1, 1)
    l2r = _ref_convblock(x2, params["level_2"], 3, 2)
    w0 = _ref_convblock(l0r, params["weight_level_0"], 1, 1)
    w1 = _ref_convblock(l1r, params["weight_level_1"], 1, 1)
    w2 = _ref_convblock(l2r, params["weight_level_2"], 1, 1)
    wcat = jnp.concatenate([w0, w1, w2], axis=-1)
    logits = jnp.einsum("nhwc,co->nhwo", wcat,
                        params["weight_levels_w"][:, :, 0, 0].T,
                        precision="highest") + params["weight_levels_b"]
    p = jax.nn.softmax(logits, axis=-1)
    fused = (p[..., 0:1] * l0r + p[..., 1:2] * l1r + p[..., 2:3] * l2r)
    return _ref_convblock(fused, params["expand"], 3, 1)


# ----------------------------- main -----------------------------

if __name__ == "__main__":
    key = jax.random.PRNGKey(0)
    kp, k0, k1, k2 = jax.random.split(key, 4)
    params = make_asff_params(kp)

    N = 2
    # NHWC inputs (PyTorch NCHW equivalents: (2,256,4,4), (2,256,8,8), (2,192,16,16))
    x0 = jax.random.normal(k0, (N, 4, 4, 256), jnp.float32)
    x1 = jax.random.normal(k1, (N, 8, 8, 256), jnp.float32)
    x2 = jax.random.normal(k2, (N, 16, 16, 128 + 64), jnp.float32)

    fwd = jax.jit(asff_forward)
    out = jax.block_until_ready(fwd(params, x0, x1, x2))
    assert out.shape == (N, 8, 8, 256), out.shape

    ref = jax.block_until_ready(asff_reference(params, x0, x1, x2))
    # Tolerance covers pl.reciprocal(approx=True) in the fused softmax.
    np.testing.assert_allclose(np.asarray(out), np.asarray(ref),
                               rtol=1e-2, atol=1e-2)
    print("KERNEL_OK")
</pallas_src>

<mosaic_0001>
module attributes {stable_mosaic.version = 11 : i64} {
  func.func @kernel(%arg0: i32, %arg1: memref<1x400x192xf32, #tpu.memory_space<vmem>>, %arg2: memref<1728x128xf32, #tpu.memory_space<vmem>>, %arg3: memref<1x128xf32, #tpu.memory_space<vmem>>, %arg4: memref<1x80x128xf32, #tpu.memory_space<vmem>>) attributes {dimension_semantics = [#tpu.dimension_semantics<parallel>], iteration_bounds = array<i64: 2>, scalar_prefetch = 0 : i64, scratch_operands = 0 : i64, tpu.core_type = #tpu.core_type<tc>, window_params = [{transform_indices = @transform_0, window_bounds = array<i64: 1, 400, 192>}, {pipeline_mode = #tpu.pipeline_mode<synchronous>, transform_indices = @transform_1, window_bounds = array<i64: 1728, 128>}, {pipeline_mode = #tpu.pipeline_mode<synchronous>, transform_indices = @transform_2, window_bounds = array<i64: 1, 128>}, {transform_indices = @transform_3, window_bounds = array<i64: 1, 80, 128>}]} {
    %c0 = arith.constant 0 : index
    %c0_0 = arith.constant 0 : index
    %c0_1 = arith.constant 0 : index
    %0 = vector.load %arg1[%c0, %c0_0, %c0_1] : memref<1x400x192xf32, #tpu.memory_space<vmem>>, vector<1x80x192xf32>
    %1 = vector.shape_cast %0 : vector<1x80x192xf32> to vector<80x192xf32>
    %c0_2 = arith.constant 0 : index
    %c0_3 = arith.constant 0 : index
    %2 = vector.load %arg2[%c0_2, %c0_3] : memref<1728x128xf32, #tpu.memory_space<vmem>>, vector<192x128xf32>
    %cst = arith.constant dense<0.000000e+00> : vector<80x128xf32>
    %3 = tpu.matmul %1, %2, %cst {dimension_numbers = #tpu.dot_dimension_numbers<[1], [0], [0], [1], [0, 0, 1, 1], [], []>} : vector<80x192xf32>, vector<192x128xf32>, vector<80x128xf32> -> vector<80x128xf32>
    %c0_4 = arith.constant 0 : index
    %c100 = arith.constant 100 : index
    %c0_5 = arith.constant 0 : index
    %4 = vector.load %arg1[%c0_4, %c100, %c0_5] : memref<1x400x192xf32, #tpu.memory_space<vmem>>, vector<1x80x192xf32>
    %5 = vector.shape_cast %4 : vector<1x80x192xf32> to vector<80x192xf32>
    %c192 = arith.constant 192 : index
    %c0_6 = arith.constant 0 : index
    %6 = vector.load %arg2[%c192, %c0_6] : memref<1728x128xf32, #tpu.memory_space<vmem>>, vector<192x128xf32>
    %cst_7 = arith.constant dense<0.000000e+00> : vector<80x128xf32>
    %7 = tpu.matmul %5, %6, %cst_7 {dimension_numbers = #tpu.dot_dimension_numbers<[1], [0], [0], [1], [0, 0, 1, 1], [], []>} : vector<80x192xf32>, vector<192x128xf32>, vector<80x128xf32> -> vector<80x128xf32>
    %8 = arith.addf %3, %7 : vector<80x128xf32>
    %c0_8 = arith.constant 0 : index
    %c1 = arith.constant 1 : index
    %c0_9 = arith.constant 0 : index
    %9 = vector.load %arg1[%c0_8, %c1, %c0_9] : memref<1x400x192xf32, #tpu.memory_space<vmem>>, vector<1x80x192xf32>
    %10 = vector.shape_cast %9 : vector<1x80x192xf32> to vector<80x192xf32>
    %c384 = arith.constant 384 : index
    %c0_10 = arith.constant 0 : index
    %11 = vector.load %arg2[%c384, %c0_10] : memref<1728x128xf32, #tpu.memory_space<vmem>>, vector<192x128xf32>
    %cst_11 = arith.constant dense<0.000000e+00> : vector<80x128xf32>
    %12 = tpu.matmul %10, %11, %cst_11 {dimension_numbers = #tpu.dot_dimension_numbers<[1], [0], [0], [1], [0, 0, 1, 1], [], []>} : vector<80x192xf32>, vector<192x128xf32>, vector<80x128xf32> -> vector<80x128xf32>
    %13 = arith.addf %8, %12 : vector<80x128xf32>
    %c0_12 = arith.constant 0 : index
    %c200 = arith.constant 200 : index
    %c0_13 = arith.constant 0 : index
    %14 = vector.load %arg1[%c0_12, %c200, %c0_13] : memref<1x400x192xf32, #tpu.memory_space<vmem>>, vector<1x80x192xf32>
    %15 = vector.shape_cast %14 : vector<1x80x192xf32> to vector<80x192xf32>
    %c576 = arith.constant 576 : index
    %c0_14 = arith.constant 0 : index
    %16 = vector.load %arg2[%c576, %c0_14] : memref<1728x128xf32, #tpu.memory_space<vmem>>, vector<192x128xf32>
    %cst_15 = arith.constant dense<0.000000e+00> : vector<80x128xf32>
    %17 = tpu.matmul %15, %16, %cst_15 {dimension_numbers = #tpu.dot_dimension_numbers<[1], [0], [0], [1], [0, 0, 1, 1], [], []>} : vector<80x192xf32>, vector<192x128xf32>, vector<80x128xf32> -> vector<80x128xf32>
    %18 = arith.addf %13, %17 : vector<80x128xf32>
    %c0_16 = arith.constant 0 : index
    %c300 = arith.constant 300 : index
    %c0_17 = arith.constant 0 : index
    %19 = vector.load %arg1[%c0_16, %c300, %c0_17] : memref<1x400x192xf32, #tpu.memory_space<vmem>>, vector<1x80x192xf32>
    %20 = vector.shape_cast %19 : vector<1x80x192xf32> to vector<80x192xf32>
    %c768 = arith.constant 768 : index
    %c0_18 = arith.constant 0 : index
    %21 = vector.load %arg2[%c768, %c0_18] : memref<1728x128xf32, #tpu.memory_space<vmem>>, vector<192x128xf32>
    %cst_19 = arith.constant dense<0.000000e+00> : vector<80x128xf32>
    %22 = tpu.matmul %20, %21, %cst_19 {dimension_numbers = #tpu.dot_dimension_numbers<[1], [0], [0], [1], [0, 0, 1, 1], [], []>} : vector<80x192xf32>, vector<192x128xf32>, vector<80x128xf32> -> vector<80x128xf32>
    %23 = arith.addf %18, %22 : vector<80x128xf32>
    %c0_20 = arith.constant 0 : index
    %c201 = arith.constant 201 : index
    %c0_21 = arith.constant 0 : index
    %24 = vector.load %arg1[%c0_20, %c201, %c0_21] : memref<1x400x192xf32, #tpu.memory_space<vmem>>, vector<1x80x192xf32>
    %25 = vector.shape_cast %24 : vector<1x80x192xf32> to vector<80x192xf32>
    %c960 = arith.constant 960 : index
    %c0_22 = arith.constant 0 : index
    %26 = vector.load %arg2[%c960, %c0_22] : memref<1728x128xf32, #tpu.memory_space<vmem>>, vector<192x128xf32>
    %cst_23 = arith.constant dense<0.000000e+00> : vector<80x128xf32>
    %27 = tpu.matmul %25, %26, %cst_23 {dimension_numbers = #tpu.dot_dimension_numbers<[1], [0], [0], [1], [0, 0, 1, 1], [], []>} : vector<80x192xf32>, vector<192x128xf32>, vector<80x128xf32> -> vector<80x128xf32>
    %28 = arith.addf %23, %27 : vector<80x128xf32>
    %c0_24 = arith.constant 0 : index
    %c10 = arith.constant 10 : index
    %c0_25 = arith.constant 0 : index
    %29 = vector.load %arg1[%c0_24, %c10, %c0_25] : memref<1x400x192xf32, #tpu.memory_space<vmem>>, vector<1x80x192xf32>
    %30 = vector.shape_cast %29 : vector<1x80x192xf32> to vector<80x192xf32>
    %c1152 = arith.constant 1152 : index
    %c0_26 = arith.constant 0 : index
    %31 = vector.load %arg2[%c1152, %c0_26] : memref<1728x128xf32, #tpu.memory_space<vmem>>, vector<192x128xf32>
    %cst_27 = arith.constant dense<0.000000e+00> : vector<80x128xf32>
    %32 = tpu.matmul %30, %31, %cst_27 {dimension_numbers = #tpu.dot_dimension_numbers<[1], [0], [0], [1], [0, 0, 1, 1], [], []>} : vector<80x192xf32>, vector<192x128xf32>, vector<80x128xf32> -> vector<80x128xf32>
    %33 = arith.addf %28, %32 : vector<80x128xf32>
    %c0_28 = arith.constant 0 : index
    %c110 = arith.constant 110 : index
    %c0_29 = arith.constant 0 : index
    %34 = vector.load %arg1[%c0_28, %c110, %c0_29] : memref<1x400x192xf32, #tpu.memory_space<vmem>>, vector<1x80x192xf32>
    %35 = vector.shape_cast %34 : vector<1x80x192xf32> to vector<80x192xf32>
    %c1344 = arith.constant 1344 : index
    %c0_30 = arith.constant 0 : index
    %36 = vector.load %arg2[%c1344, %c0_30] : memref<1728x128xf32, #tpu.memory_space<vmem>>, vector<192x128xf32>
    %cst_31 = arith.constant dense<0.000000e+00> : vector<80x128xf32>
    %37 = tpu.matmul %35, %36, %cst_31 {dimension_numbers = #tpu.dot_dimension_numbers<[1], [0], [0], [1], [0, 0, 1, 1], [], []>} : vector<80x192xf32>, vector<192x128xf32>, vector<80x128xf32> -> vector<80x128xf32>
    %38 = arith.addf %33, %37 : vector<80x128xf32>
    %c0_32 = arith.constant 0 : index
    %c11 = arith.constant 11 : index
    %c0_33 = arith.constant 0 : index
    %39 = vector.load %arg1[%c0_32, %c11, %c0_33] : memref<1x400x192xf32, #tpu.memory_space<vmem>>, vector<1x80x192xf32>
    %40 = vector.shape_cast %39 : vector<1x80x192xf32> to vector<80x192xf32>
    %c1536 = arith.constant 1536 : index
    %c0_34 = arith.constant 0 : index
    %41 = vector.load %arg2[%c1536, %c0_34] : memref<1728x128xf32, #tpu.memory_space<vmem>>, vector<192x128xf32>
    %cst_35 = arith.constant dense<0.000000e+00> : vector<80x128xf32>
    %42 = tpu.matmul %40, %41, %cst_35 {dimension_numbers = #tpu.dot_dimension_numbers<[1], [0], [0], [1], [0, 0, 1, 1], [], []>} : vector<80x192xf32>, vector<192x128xf32>, vector<80x128xf32> -> vector<80x128xf32>
    %43 = arith.addf %38, %42 : vector<80x128xf32>
    %c0_36 = arith.constant 0 : index
    %c0_37 = arith.constant 0 : index
    %44 = vector.load %arg3[%c0_36, %c0_37] : memref<1x128xf32, #tpu.memory_space<vmem>>, vector<1x128xf32>
    %45 = vector.broadcast %44 : vector<1x128xf32> to vector<80x128xf32>
    %46 = arith.addf %43, %45 : vector<80x128xf32>
    %cst_38 = arith.constant 0.000000e+00 : f32
    %47 = vector.broadcast %cst_38 : f32 to vector<80x128xf32>
    %48 = arith.maximumf %46, %47 : vector<80x128xf32>
    %c0_39 = arith.constant 0 : index
    %c0_40 = arith.constant 0 : index
    %c0_41 = arith.constant 0 : index
    %49 = vector.load %arg4[%c0_39, %c0_40, %c0_41] : memref<1x80x128xf32, #tpu.memory_space<vmem>>, vector<1x80x128xf32>
    %50 = vector.shape_cast %49 : vector<1x80x128xf32> to vector<80x128xf32>
    %51 = vector.shape_cast %48 : vector<80x128xf32> to vector<1x80x128xf32>
    tpu.vector_store %arg4[%c0_39, %c0_40, %c0_41], %51 {strides = array<i32>} : memref<1x80x128xf32, #tpu.memory_space<vmem>>, vector<1x80x128xf32>,
    return
  }
  func.func @transform_0(%arg0: i32) -> (i32, i32, i32) {
    %c0_i32 = arith.constant 0 : i32
    %c0_i32_0 = arith.constant 0 : i32
    %c0_i32_1 = arith.constant 0 : i32
    return %arg0, %c0_i32, %c0_i32_0 : i32, i32, i32
  }
  func.func @transform_1(%arg0: i32) -> (i32, i32) {
    %c0_i32 = arith.constant 0 : i32
    %c0_i32_0 = arith.constant 0 : i32
    %c0_i32_1 = arith.constant 0 : i32
    return %c0_i32, %c0_i32_0 : i32, i32
  }
  func.func @transform_2(%arg0: i32) -> (i32, i32) {
    %c0_i32 = arith.constant 0 : i32
    %c0_i32_0 = arith.constant 0 : i32
    %c0_i32_1 = arith.constant 0 : i32
    return %c0_i32, %c0_i32_0 : i32, i32
  }
  func.func @transform_3(%arg0: i32) -> (i32, i32, i32) {
    %c0_i32 = arith.constant 0 : i32
    %c0_i32_0 = arith.constant 0 : i32
    %c0_i32_1 = arith.constant 0 : i32
    return %arg0, %c0_i32, %c0_i32_0 : i32, i32, i32
  }
}

module attributes {stable_mosaic.version = 11 : i64} {
  func.func @_mm_bias_relu_kernel(%arg0: i32, %arg1: memref<32x256xf32, #tpu.memory_space<vmem>>, %arg2: memref<256x128xf32, #tpu.memory_space<vmem>>, %arg3: memref<1x128xf32, #tpu.memory_space<vmem>>, %arg4: memref<32x128xf32, #tpu.memory_space<vmem>>) attributes {dimension_semantics = [#tpu.dimension_semantics<parallel>], iteration_bounds = array<i64: 1>, scalar_prefetch = 0 : i64, scratch_operands = 0 : i64, tpu.core_type = #tpu.core_type<tc>, window_params = [{transform_indices = @transform_0, window_bounds = array<i64: 32, 256>}, {pipeline_mode = #tpu.pipeline_mode<synchronous>, transform_indices = @transform_1, window_bounds = array<i64: 256, 128>}, {pipeline_mode = #tpu.pipeline_mode<synchronous>, transform_indices = @transform_2, window_bounds = array<i64: 1, 128>}, {transform_indices = @transform_3, window_bounds = array<i64: 32, 128>}]} {
    %c0 = arith.constant 0 : index
    %c0_0 = arith.constant 0 : index
    %0 = vector.load %arg1[%c0, %c0_0] : memref<32x256xf32, #tpu.memory_space<vmem>>, vector<32x256xf32>
    %c0_1 = arith.constant 0 : index
    %c0_2 = arith.constant 0 : index
    %1 = vector.load %arg2[%c0_1, %c0_2] : memref<256x128xf32, #tpu.memory_space<vmem>>, vector<256x128xf32>
    %cst = arith.constant dense<0.000000e+00> : vector<32x128xf32>
    %2 = tpu.matmul %0, %1, %cst {dimension_numbers = #tpu.dot_dimension_numbers<[1], [0], [0], [1], [0, 0, 1, 1], [], []>} : vector<32x256xf32>, vector<256x128xf32>, vector<32x128xf32> -> vector<32x128xf32>
    %c0_3 = arith.constant 0 : index
    %c0_4 = arith.constant 0 : index
    %3 = vector.load %arg3[%c0_3, %c0_4] : memref<1x128xf32, #tpu.memory_space<vmem>>, vector<1x128xf32>
    %4 = vector.broadcast %3 : vector<1x128xf32> to vector<32x128xf32>
    %5 = arith.addf %2, %4 : vector<32x128xf32>
    %cst_5 = arith.constant 0.000000e+00 : f32
    %6 = vector.broadcast %cst_5 : f32 to vector<32x128xf32>
    %7 = arith.maximumf %5, %6 : vector<32x128xf32>
    %c0_6 = arith.constant 0 : index
    %c0_7 = arith.constant 0 : index
    %8 = vector.load %arg4[%c0_6, %c0_7] : memref<32x128xf32, #tpu.memory_space<vmem>>, vector<32x128xf32>
    tpu.vector_store %arg4[%c0_6, %c0_7], %7 {strides = array<i32>} : memref<32x128xf32, #tpu.memory_space<vmem>>, vector<32x128xf32>,
    return
  }
  func.func @transform_0(%arg0: i32) -> (i32, i32) {
    %c0_i32 = arith.constant 0 : i32
    %c0_i32_0 = arith.constant 0 : i32
    return %arg0, %c0_i32 : i32, i32
  }
  func.func @transform_1(%arg0: i32) -> (i32, i32) {
    %c0_i32 = arith.constant 0 : i32
    %c0_i32_0 = arith.constant 0 : i32
    %c0_i32_1 = arith.constant 0 : i32
    return %c0_i32, %c0_i32_0 : i32, i32
  }
  func.func @transform_2(%arg0: i32) -> (i32, i32) {
    %c0_i32 = arith.constant 0 : i32
    %c0_i32_0 = arith.constant 0 : i32
    %c0_i32_1 = arith.constant 0 : i32
    return %c0_i32, %c0_i32_0 : i32, i32
  }
  func.func @transform_3(%arg0: i32) -> (i32, i32) {
    %c0_i32 = arith.constant 0 : i32
    %c0_i32_0 = arith.constant 0 : i32
    return %arg0, %c0_i32 : i32, i32
  }
}

module attributes {stable_mosaic.version = 11 : i64} {
  func.func @_mm_bias_relu_kernel(%arg0: i32, %arg1: memref<128x256xf32, #tpu.memory_space<vmem>>, %arg2: memref<256x128xf32, #tpu.memory_space<vmem>>, %arg3: memref<1x128xf32, #tpu.memory_space<vmem>>, %arg4: memref<128x128xf32, #tpu.memory_space<vmem>>) attributes {dimension_semantics = [#tpu.dimension_semantics<parallel>], iteration_bounds = array<i64: 1>, scalar_prefetch = 0 : i64, scratch_operands = 0 : i64, tpu.core_type = #tpu.core_type<tc>, window_params = [{transform_indices = @transform_0, window_bounds = array<i64: 128, 256>}, {pipeline_mode = #tpu.pipeline_mode<synchronous>, transform_indices = @transform_1, window_bounds = array<i64: 256, 128>}, {pipeline_mode = #tpu.pipeline_mode<synchronous>, transform_indices = @transform_2, window_bounds = array<i64: 1, 128>}, {transform_indices = @transform_3, window_bounds = array<i64: 128, 128>}]} {
    %c0 = arith.constant 0 : index
    %c0_0 = arith.constant 0 : index
    %0 = vector.load %arg1[%c0, %c0_0] : memref<128x256xf32, #tpu.memory_space<vmem>>, vector<128x256xf32>
    %c0_1 = arith.constant 0 : index
    %c0_2 = arith.constant 0 : index
    %1 = vector.load %arg2[%c0_1, %c0_2] : memref<256x128xf32, #tpu.memory_space<vmem>>, vector<256x128xf32>
    %cst = arith.constant dense<0.000000e+00> : vector<128x128xf32>
    %2 = tpu.matmul %0, %1, %cst {dimension_numbers = #tpu.dot_dimension_numbers<[1], [0], [0], [1], [0, 0, 1, 1], [], []>} : vector<128x256xf32>, vector<256x128xf32>, vector<128x128xf32> -> vector<128x128xf32>
    %c0_3 = arith.constant 0 : index
    %c0_4 = arith.constant 0 : index
    %3 = vector.load %arg3[%c0_3, %c0_4] : memref<1x128xf32, #tpu.memory_space<vmem>>, vector<1x128xf32>
    %4 = vector.broadcast %3 : vector<1x128xf32> to vector<128x128xf32>
    %5 = arith.addf %2, %4 : vector<128x128xf32>
    %cst_5 = arith.constant 0.000000e+00 : f32
    %6 = vector.broadcast %cst_5 : f32 to vector<128x128xf32>
    %7 = arith.maximumf %5, %6 : vector<128x128xf32>
    %c0_6 = arith.constant 0 : index
    %c0_7 = arith.constant 0 : index
    %8 = vector.load %arg4[%c0_6, %c0_7] : memref<128x128xf32, #tpu.memory_space<vmem>>, vector<128x128xf32>
    tpu.vector_store %arg4[%c0_6, %c0_7], %7 {strides = array<i32>} : memref<128x128xf32, #tpu.memory_space<vmem>>, vector<128x128xf32>,
    return
  }
  func.func @transform_0(%arg0: i32) -> (i32, i32) {
    %c0_i32 = arith.constant 0 : i32
    %c0_i32_0 = arith.constant 0 : i32
    return %arg0, %c0_i32 : i32, i32
  }
  func.func @transform_1(%arg0: i32) -> (i32, i32) {
    %c0_i32 = arith.constant 0 : i32
    %c0_i32_0 = arith.constant 0 : i32
    %c0_i32_1 = arith.constant 0 : i32
    return %c0_i32, %c0_i32_0 : i32, i32
  }
  func.func @transform_2(%arg0: i32) -> (i32, i32) {
    %c0_i32 = arith.constant 0 : i32
    %c0_i32_0 = arith.constant 0 : i32
    %c0_i32_1 = arith.constant 0 : i32
    return %c0_i32, %c0_i32_0 : i32, i32
  }
  func.func @transform_3(%arg0: i32) -> (i32, i32) {
    %c0_i32 = arith.constant 0 : i32
    %c0_i32_0 = arith.constant 0 : i32
    return %arg0, %c0_i32 : i32, i32
  }
}

module attributes {stable_mosaic.version = 11 : i64} {
  func.func @kernel(%arg0: i32, %arg1: memref<128x128xf32, #tpu.memory_space<vmem>>, %arg2: memref<128x128xf32, #tpu.memory_space<vmem>>, %arg3: memref<128x128xf32, #tpu.memory_space<vmem>>, %arg4: memref<384x16xf32, #tpu.memory_space<vmem>>, %arg5: memref<1x48xf32, #tpu.memory_space<vmem>>, %arg6: memref<48x3xf32, #tpu.memory_space<vmem>>, %arg7: memref<1x3xf32, #tpu.memory_space<vmem>>, %arg8: memref<128x128xf32, #tpu.memory_space<vmem>>) attributes {dimension_semantics = [#tpu.dimension_semantics<parallel>], iteration_bounds = array<i64: 1>, scalar_prefetch = 0 : i64, scratch_operands = 0 : i64, tpu.core_type = #tpu.core_type<tc>, window_params = [{transform_indices = @transform_0, window_bounds = array<i64: 128, 128>}, {transform_indices = @transform_1, window_bounds = array<i64: 128, 128>}, {transform_indices = @transform_2, window_bounds = array<i64: 128, 128>}, {pipeline_mode = #tpu.pipeline_mode<synchronous>, transform_indices = @transform_3, window_bounds = array<i64: 384, 16>}, {pipeline_mode = #tpu.pipeline_mode<synchronous>, transform_indices = @transform_4, window_bounds = array<i64: 1, 48>}, {pipeline_mode = #tpu.pipeline_mode<synchronous>, transform_indices = @transform_5, window_bounds = array<i64: 48, 3>}, {pipeline_mode = #tpu.pipeline_mode<synchronous>, transform_indices = @transform_6, window_bounds = array<i64: 1, 3>}, {transform_indices = @transform_7, window_bounds = array<i64: 128, 128>}]} {
    %c0 = arith.constant 0 : index
    %c0_0 = arith.constant 0 : index
    %0 = vector.load %arg1[%c0, %c0_0] : memref<128x128xf32, #tpu.memory_space<vmem>>, vector<128x128xf32>
    %c0_1 = arith.constant 0 : index
    %c0_2 = arith.constant 0 : index
    %1 = vector.load %arg2[%c0_1, %c0_2] : memref<128x128xf32, #tpu.memory_space<vmem>>, vector<128x128xf32>
    %c0_3 = arith.constant 0 : index
    %c0_4 = arith.constant 0 : index
    %2 = vector.load %arg3[%c0_3, %c0_4] : memref<128x128xf32, #tpu.memory_space<vmem>>, vector<128x128xf32>
    %c0_5 = arith.constant 0 : index
    %c0_6 = arith.constant 0 : index
    %3 = vector.load %arg5[%c0_5, %c0_6] : memref<1x48xf32, #tpu.memory_space<vmem>>, vector<1x48xf32>
    %c0_7 = arith.constant 0 : index
    %c0_8 = arith.constant 0 : index
    %4 = vector.load %arg4[%c0_7, %c0_8] : memref<384x16xf32, #tpu.memory_space<vmem>>, vector<128x16xf32>
    %cst = arith.constant dense<0.000000e+00> : vector<128x16xf32>
    %5 = tpu.matmul %0, %4, %cst {dimension_numbers = #tpu.dot_dimension_numbers<[1], [0], [0], [1], [0, 0, 1, 1], [], []>} : vector<128x128xf32>, vector<128x16xf32>, vector<128x16xf32> -> vector<128x16xf32>
    %6 = vector.extract_strided_slice %3 {offsets = [0, 0], sizes = [1, 16], strides = [1, 1]} : vector<1x48xf32> to vector<1x16xf32>
    %7 = vector.broadcast %6 : vector<1x16xf32> to vector<128x16xf32>
    %8 = arith.addf %5, %7 : vector<128x16xf32>
    %cst_9 = arith.constant 0.000000e+00 : f32
    %9 = vector.broadcast %cst_9 : f32 to vector<128x16xf32>
    %10 = arith.maximumf %8, %9 : vector<128x16xf32>
    %c128 = arith.constant 128 : index
    %c0_10 = arith.constant 0 : index
    %11 = vector.load %arg4[%c128, %c0_10] : memref<384x16xf32, #tpu.memory_space<vmem>>, vector<128x16xf32>
    %cst_11 = arith.constant dense<0.000000e+00> : vector<128x16xf32>
    %12 = tpu.matmul %1, %11, %cst_11 {dimension_numbers = #tpu.dot_dimension_numbers<[1], [0], [0], [1], [0, 0, 1, 1], [], []>} : vector<128x128xf32>, vector<128x16xf32>, vector<128x16xf32> -> vector<128x16xf32>
    %13 = vector.extract_strided_slice %3 {offsets = [0, 16], sizes = [1, 16], strides = [1, 1]} : vector<1x48xf32> to vector<1x16xf32>
    %14 = vector.broadcast %13 : vector<1x16xf32> to vector<128x16xf32>
    %15 = arith.addf %12, %14 : vector<128x16xf32>
    %cst_12 = arith.constant 0.000000e+00 : f32
    %16 = vector.broadcast %cst_12 : f32 to vector<128x16xf32>
    %17 = arith.maximumf %15, %16 : vector<128x16xf32>
    %c256 = arith.constant 256 : index
    %c0_13 = arith.constant 0 : index
    %18 = vector.load %arg4[%c256, %c0_13] : memref<384x16xf32, #tpu.memory_space<vmem>>, vector<128x16xf32>
    %cst_14 = arith.constant dense<0.000000e+00> : vector<128x16xf32>
    %19 = tpu.matmul %2, %18, %cst_14 {dimension_numbers = #tpu.dot_dimension_numbers<[1], [0], [0], [1], [0, 0, 1, 1], [], []>} : vector<128x128xf32>, vector<128x16xf32>, vector<128x16xf32> -> vector<128x16xf32>
    %20 = vector.extract_strided_slice %3 {offsets = [0, 32], sizes = [1, 16], strides = [1, 1]} : vector<1x48xf32> to vector<1x16xf32>
    %21 = vector.broadcast %20 : vector<1x16xf32> to vector<128x16xf32>
    %22 = arith.addf %19, %21 : vector<128x16xf32>
    %cst_15 = arith.constant 0.000000e+00 : f32
    %23 = vector.broadcast %cst_15 : f32 to vector<128x16xf32>
    %24 = arith.maximumf %22, %23 : vector<128x16xf32>
    %c0_16 = arith.constant 0 : index
    %c0_17 = arith.constant 0 : index
    %25 = vector.load %arg6[%c0_16, %c0_17] : memref<48x3xf32, #tpu.memory_space<vmem>>, vector<16x3xf32>
    %cst_18 = arith.constant dense<0.000000e+00> : vector<128x3xf32>
    %26 = tpu.matmul %10, %25, %cst_18 {dimension_numbers = #tpu.dot_dimension_numbers<[1], [0], [0], [1], [0, 0, 1, 1], [], []>} : vector<128x16xf32>, vector<16x3xf32>, vector<128x3xf32> -> vector<128x3xf32>
    %c16 = arith.constant 16 : index
    %c0_19 = arith.constant 0 : index
    %27 = vector.load %arg6[%c16, %c0_19] : memref<48x3xf32, #tpu.memory_space<vmem>>, vector<16x3xf32>
    %cst_20 = arith.constant dense<0.000000e+00> : vector<128x3xf32>
    %28 = tpu.matmul %17, %27, %cst_20 {dimension_numbers = #tpu.dot_dimension_numbers<[1], [0], [0], [1], [0, 0, 1, 1], [], []>} : vector<128x16xf32>, vector<16x3xf32>, vector<128x3xf32> -> vector<128x3xf32>
    %29 = arith.addf %26, %28 : vector<128x3xf32>
    %c32 = arith.constant 32 : index
    %c0_21 = arith.constant 0 : index
    %30 = vector.load %arg6[%c32, %c0_21] : memref<48x3xf32, #tpu.memory_space<vmem>>, vector<16x3xf32>
    %cst_22 = arith.constant dense<0.000000e+00> : vector<128x3xf32>
    %31 = tpu.matmul %24, %30, %cst_22 {dimension_numbers = #tpu.dot_dimension_numbers<[1], [0], [0], [1], [0, 0, 1, 1], [], []>} : vector<128x16xf32>, vector<16x3xf32>, vector<128x3xf32> -> vector<128x3xf32>
    %32 = arith.addf %29, %31 : vector<128x3xf32>
    %c0_23 = arith.constant 0 : index
    %c0_24 = arith.constant 0 : index
    %33 = vector.load %arg7[%c0_23, %c0_24] : memref<1x3xf32, #tpu.memory_space<vmem>>, vector<1x3xf32>
    %34 = vector.broadcast %33 : vector<1x3xf32> to vector<128x3xf32>
    %35 = arith.addf %32, %34 : vector<128x3xf32>
    %36 = vector.extract_strided_slice %35 {offsets = [0, 0], sizes = [128, 1], strides = [1, 1]} : vector<128x3xf32> to vector<128x1xf32>
    %37 = vector.extract_strided_slice %35 {offsets = [0, 1], sizes = [128, 1], strides = [1, 1]} : vector<128x3xf32> to vector<128x1xf32>
    %38 = vector.extract_strided_slice %35 {offsets = [0, 2], sizes = [128, 1], strides = [1, 1]} : vector<128x3xf32> to vector<128x1xf32>
    %39 = arith.maximumf %36, %37 : vector<128x1xf32>
    %40 = arith.maximumf %39, %38 : vector<128x1xf32>
    %41 = arith.subf %36, %40 : vector<128x1xf32>
    %42 = math.exp %41 : vector<128x1xf32>
    %43 = arith.subf %37, %40 : vector<128x1xf32>
    %44 = math.exp %43 : vector<128x1xf32>
    %45 = arith.subf %38, %40 : vector<128x1xf32>
    %46 = math.exp %45 : vector<128x1xf32>
    %47 = arith.addf %42, %44 : vector<128x1xf32>
    %48 = arith.addf %47, %46 : vector<128x1xf32>
    %49 = tpu.reciprocal %48 {approx = true} : vector<128x1xf32> -> vector<128x1xf32>
    %50 = vector.broadcast %42 : vector<128x1xf32> to vector<128x128xf32>
    %51 = arith.mulf %50, %0 : vector<128x128xf32>
    %52 = vector.broadcast %44 : vector<128x1xf32> to vector<128x128xf32>
    %53 = arith.mulf %52, %1 : vector<128x128xf32>
    %54 = arith.addf %51, %53 : vector<128x128xf32>
    %55 = vector.broadcast %46 : vector<128x1xf32> to vector<128x128xf32>
    %56 = arith.mulf %55, %2 : vector<128x128xf32>
    %57 = arith.addf %54, %56 : vector<128x128xf32>
    %58 = vector.broadcast %49 : vector<128x1xf32> to vector<128x128xf32>
    %59 = arith.mulf %57, %58 : vector<128x128xf32>
    %c0_25 = arith.constant 0 : index
    %c0_26 = arith.constant 0 : index
    %60 = vector.load %arg8[%c0_25, %c0_26] : memref<128x128xf32, #tpu.memory_space<vmem>>, vector<128x128xf32>
    tpu.vector_store %arg8[%c0_25, %c0_26], %59 {strides = array<i32>} : memref<128x128xf32, #tpu.memory_space<vmem>>, vector<128x128xf32>,
    return
  }
  func.func @transform_0(%arg0: i32) -> (i32, i32) {
    %c0_i32 = arith.constant 0 : i32
    %c0_i32_0 = arith.constant 0 : i32
    return %arg0, %c0_i32 : i32, i32
  }
  func.func @transform_1(%arg0: i32) -> (i32, i32) {
    %c0_i32 = arith.constant 0 : i32
    %c0_i32_0 = arith.constant 0 : i32
    return %arg0, %c0_i32 : i32, i32
  }
  func.func @transform_2(%arg0: i32) -> (i32, i32) {
    %c0_i32 = arith.constant 0 : i32
    %c0_i32_0 = arith.constant 0 : i32
    return %arg0, %c0_i32 : i32, i32
  }
  func.func @transform_3(%arg0: i32) -> (i32, i32) {
    %c0_i32 = arith.constant 0 : i32
    %c0_i32_0 = arith.constant 0 : i32
    %c0_i32_1 = arith.constant 0 : i32
    return %c0_i32, %c0_i32_0 : i32, i32
  }
  func.func @transform_4(%arg0: i32) -> (i32, i32) {
    %c0_i32 = arith.constant 0 : i32
    %c0_i32_0 = arith.constant 0 : i32
    %c0_i32_1 = arith.constant 0 : i32
    return %c0_i32, %c0_i32_0 : i32, i32
  }
  func.func @transform_5(%arg0: i32) -> (i32, i32) {
    %c0_i32 = arith.constant 0 : i32
    %c0_i32_0 = arith.constant 0 : i32
    %c0_i32_1 = arith.constant 0 : i32
    return %c0_i32, %c0_i32_0 : i32, i32
  }
  func.func @transform_6(%arg0: i32) -> (i32, i32) {
    %c0_i32 = arith.constant 0 : i32
    %c0_i32_0 = arith.constant 0 : i32
    %c0_i32_1 = arith.constant 0 : i32
    return %c0_i32, %c0_i32_0 : i32, i32
  }
  func.func @transform_7(%arg0: i32) -> (i32, i32) {
    %c0_i32 = arith.constant 0 : i32
    %c0_i32_0 = arith.constant 0 : i32
    return %arg0, %c0_i32 : i32, i32
  }
}

module attributes {stable_mosaic.version = 11 : i64} {
  func.func @kernel(%arg0: i32, %arg1: memref<1x110x128xf32, #tpu.memory_space<vmem>>, %arg2: memref<1152x256xf32, #tpu.memory_space<vmem>>, %arg3: memref<1x256xf32, #tpu.memory_space<vmem>>, %arg4: memref<1x80x256xf32, #tpu.memory_space<vmem>>) attributes {dimension_semantics = [#tpu.dimension_semantics<parallel>], iteration_bounds = array<i64: 2>, scalar_prefetch = 0 : i64, scratch_operands = 0 : i64, tpu.core_type = #tpu.core_type<tc>, window_params = [{transform_indices = @transform_0, window_bounds = array<i64: 1, 110, 128>}, {pipeline_mode = #tpu.pipeline_mode<synchronous>, transform_indices = @transform_1, window_bounds = array<i64: 1152, 256>}, {pipeline_mode = #tpu.pipeline_mode<synchronous>, transform_indices = @transform_2, window_bounds = array<i64: 1, 256>}, {transform_indices = @transform_3, window_bounds = array<i64: 1, 80, 256>}]} {
    %c0 = arith.constant 0 : index
    %c0_0 = arith.constant 0 : index
    %c0_1 = arith.constant 0 : index
    %0 = vector.load %arg1[%c0, %c0_0, %c0_1] : memref<1x110x128xf32, #tpu.memory_space<vmem>>, vector<1x80x128xf32>
    %1 = vector.shape_cast %0 : vector<1x80x128xf32> to vector<80x128xf32>
    %c0_2 = arith.constant 0 : index
    %c0_3 = arith.constant 0 : index
    %2 = vector.load %arg2[%c0_2, %c0_3] : memref<1152x256xf32, #tpu.memory_space<vmem>>, vector<128x256xf32>
    %cst = arith.constant dense<0.000000e+00> : vector<80x256xf32>
    %3 = tpu.matmul %1, %2, %cst {dimension_numbers = #tpu.dot_dimension_numbers<[1], [0], [0], [1], [0, 0, 1, 1], [], []>} : vector<80x128xf32>, vector<128x256xf32>, vector<80x256xf32> -> vector<80x256xf32>
    %c0_4 = arith.constant 0 : index
    %c1 = arith.constant 1 : index
    %c0_5 = arith.constant 0 : index
    %4 = vector.load %arg1[%c0_4, %c1, %c0_5] : memref<1x110x128xf32, #tpu.memory_space<vmem>>, vector<1x80x128xf32>
    %5 = vector.shape_cast %4 : vector<1x80x128xf32> to vector<80x128xf32>
    %c128 = arith.constant 128 : index
    %c0_6 = arith.constant 0 : index
    %6 = vector.load %arg2[%c128, %c0_6] : memref<1152x256xf32, #tpu.memory_space<vmem>>, vector<128x256xf32>
    %cst_7 = arith.constant dense<0.000000e+00> : vector<80x256xf32>
    %7 = tpu.matmul %5, %6, %cst_7 {dimension_numbers = #tpu.dot_dimension_numbers<[1], [0], [0], [1], [0, 0, 1, 1], [], []>} : vector<80x128xf32>, vector<128x256xf32>, vector<80x256xf32> -> vector<80x256xf32>
    %8 = arith.addf %3, %7 : vector<80x256xf32>
    %c0_8 = arith.constant 0 : index
    %c2 = arith.constant 2 : index
    %c0_9 = arith.constant 0 : index
    %9 = vector.load %arg1[%c0_8, %c2, %c0_9] : memref<1x110x128xf32, #tpu.memory_space<vmem>>, vector<1x80x128xf32>
    %10 = vector.shape_cast %9 : vector<1x80x128xf32> to vector<80x128xf32>
    %c256 = arith.constant 256 : index
    %c0_10 = arith.constant 0 : index
    %11 = vector.load %arg2[%c256, %c0_10] : memref<1152x256xf32, #tpu.memory_space<vmem>>, vector<128x256xf32>
    %cst_11 = arith.constant dense<0.000000e+00> : vector<80x256xf32>
    %12 = tpu.matmul %10, %11, %cst_11 {dimension_numbers = #tpu.dot_dimension_numbers<[1], [0], [0], [1], [0, 0, 1, 1], [], []>} : vector<80x128xf32>, vector<128x256xf32>, vector<80x256xf32> -> vector<80x256xf32>
    %13 = arith.addf %8, %12 : vector<80x256xf32>
    %c0_12 = arith.constant 0 : index
    %c10 = arith.constant 10 : index
    %c0_13 = arith.constant 0 : index
    %14 = vector.load %arg1[%c0_12, %c10, %c0_13] : memref<1x110x128xf32, #tpu.memory_space<vmem>>, vector<1x80x128xf32>
    %15 = vector.shape_cast %14 : vector<1x80x128xf32> to vector<80x128xf32>
    %c384 = arith.constant 384 : index
    %c0_14 = arith.constant 0 : index
    %16 = vector.load %arg2[%c384, %c0_14] : memref<1152x256xf32, #tpu.memory_space<vmem>>, vector<128x256xf32>
    %cst_15 = arith.constant dense<0.000000e+00> : vector<80x256xf32>
    %17 = tpu.matmul %15, %16, %cst_15 {dimension_numbers = #tpu.dot_dimension_numbers<[1], [0], [0], [1], [0, 0, 1, 1], [], []>} : vector<80x128xf32>, vector<128x256xf32>, vector<80x256xf32> -> vector<80x256xf32>
    %18 = arith.addf %13, %17 : vector<80x256xf32>
    %c0_16 = arith.constant 0 : index
    %c11 = arith.constant 11 : index
    %c0_17 = arith.constant 0 : index
    %19 = vector.load %arg1[%c0_16, %c11, %c0_17] : memref<1x110x128xf32, #tpu.memory_space<vmem>>, vector<1x80x128xf32>
    %20 = vector.shape_cast %19 : vector<1x80x128xf32> to vector<80x128xf32>
    %c512 = arith.constant 512 : index
    %c0_18 = arith.constant 0 : index
    %21 = vector.load %arg2[%c512, %c0_18] : memref<1152x256xf32, #tpu.memory_space<vmem>>, vector<128x256xf32>
    %cst_19 = arith.constant dense<0.000000e+00> : vector<80x256xf32>
    %22 = tpu.matmul %20, %21, %cst_19 {dimension_numbers = #tpu.dot_dimension_numbers<[1], [0], [0], [1], [0, 0, 1, 1], [], []>} : vector<80x128xf32>, vector<128x256xf32>, vector<80x256xf32> -> vector<80x256xf32>
    %23 = arith.addf %18, %22 : vector<80x256xf32>
    %c0_20 = arith.constant 0 : index
    %c12 = arith.constant 12 : index
    %c0_21 = arith.constant 0 : index
    %24 = vector.load %arg1[%c0_20, %c12, %c0_21] : memref<1x110x128xf32, #tpu.memory_space<vmem>>, vector<1x80x128xf32>
    %25 = vector.shape_cast %24 : vector<1x80x128xf32> to vector<80x128xf32>
    %c640 = arith.constant 640 : index
    %c0_22 = arith.constant 0 : index
    %26 = vector.load %arg2[%c640, %c0_22] : memref<1152x256xf32, #tpu.memory_space<vmem>>, vector<128x256xf32>
    %cst_23 = arith.constant dense<0.000000e+00> : vector<80x256xf32>
    %27 = tpu.matmul %25, %26, %cst_23 {dimension_numbers = #tpu.dot_dimension_numbers<[1], [0], [0], [1], [0, 0, 1, 1], [], []>} : vector<80x128xf32>, vector<128x256xf32>, vector<80x256xf32> -> vector<80x256xf32>
    %28 = arith.addf %23, %27 : vector<80x256xf32>
    %c0_24 = arith.constant 0 : index
    %c20 = arith.constant 20 : index
    %c0_25 = arith.constant 0 : index
    %29 = vector.load %arg1[%c0_24, %c20, %c0_25] : memref<1x110x128xf32, #tpu.memory_space<vmem>>, vector<1x80x128xf32>
    %30 = vector.shape_cast %29 : vector<1x80x128xf32> to vector<80x128xf32>
    %c768 = arith.constant 768 : index
    %c0_26 = arith.constant 0 : index
    %31 = vector.load %arg2[%c768, %c0_26] : memref<1152x256xf32, #tpu.memory_space<vmem>>, vector<128x256xf32>
    %cst_27 = arith.constant dense<0.000000e+00> : vector<80x256xf32>
    %32 = tpu.matmul %30, %31, %cst_27 {dimension_numbers = #tpu.dot_dimension_numbers<[1], [0], [0], [1], [0, 0, 1, 1], [], []>} : vector<80x128xf32>, vector<128x256xf32>, vector<80x256xf32> -> vector<80x256xf32>
    %33 = arith.addf %28, %32 : vector<80x256xf32>
    %c0_28 = arith.constant 0 : index
    %c21 = arith.constant 21 : index
    %c0_29 = arith.constant 0 : index
    %34 = vector.load %arg1[%c0_28, %c21, %c0_29] : memref<1x110x128xf32, #tpu.memory_space<vmem>>, vector<1x80x128xf32>
    %35 = vector.shape_cast %34 : vector<1x80x128xf32> to vector<80x128xf32>
    %c896 = arith.constant 896 : index
    %c0_30 = arith.constant 0 : index
    %36 = vector.load %arg2[%c896, %c0_30] : memref<1152x256xf32, #tpu.memory_space<vmem>>, vector<128x256xf32>
    %cst_31 = arith.constant dense<0.000000e+00> : vector<80x256xf32>
    %37 = tpu.matmul %35, %36, %cst_31 {dimension_numbers = #tpu.dot_dimension_numbers<[1], [0], [0], [1], [0, 0, 1, 1], [], []>} : vector<80x128xf32>, vector<128x256xf32>, vector<80x256xf32> -> vector<80x256xf32>
    %38 = arith.addf %33, %37 : vector<80x256xf32>
    %c0_32 = arith.constant 0 : index
    %c22 = arith.constant 22 : index
    %c0_33 = arith.constant 0 : index
    %39 = vector.load %arg1[%c0_32, %c22, %c0_33] : memref<1x110x128xf32, #tpu.memory_space<vmem>>, vector<1x80x128xf32>
    %40 = vector.shape_cast %39 : vector<1x80x128xf32> to vector<80x128xf32>
    %c1024 = arith.constant 1024 : index
    %c0_34 = arith.constant 0 : index
    %41 = vector.load %arg2[%c1024, %c0_34] : memref<1152x256xf32, #tpu.memory_space<vmem>>, vector<128x256xf32>
    %cst_35 = arith.constant dense<0.000000e+00> : vector<80x256xf32>
    %42 = tpu.matmul %40, %41, %cst_35 {dimension_numbers = #tpu.dot_dimension_numbers<[1], [0], [0], [1], [0, 0, 1, 1], [], []>} : vector<80x128xf32>, vector<128x256xf32>, vector<80x256xf32> -> vector<80x256xf32>
    %43 = arith.addf %38, %42 : vector<80x256xf32>
    %c0_36 = arith.constant 0 : index
    %c0_37 = arith.constant 0 : index
    %44 = vector.load %arg3[%c0_36, %c0_37] : memref<1x256xf32, #tpu.memory_space<vmem>>, vector<1x256xf32>
    %45 = vector.broadcast %44 : vector<1x256xf32> to vector<80x256xf32>
    %46 = arith.addf %43, %45 : vector<80x256xf32>
    %cst_38 = arith.constant 0.000000e+00 : f32
    %47 = vector.broadcast %cst_38 : f32 to vector<80x256xf32>
    %48 = arith.maximumf %46, %47 : vector<80x256xf32>
    %c0_39 = arith.constant 0 : index
    %c0_40 = arith.constant 0 : index
    %c0_41 = arith.constant 0 : index
    %49 = vector.load %arg4[%c0_39, %c0_40, %c0_41] : memref<1x80x256xf32, #tpu.memory_space<vmem>>, vector<1x80x256xf32>
    %50 = vector.shape_cast %49 : vector<1x80x256xf32> to vector<80x256xf32>
    %51 = vector.shape_cast %48 : vector<80x256xf32> to vector<1x80x256xf32>
    tpu.vector_store %arg4[%c0_39, %c0_40, %c0_41], %51 {strides = array<i32>} : memref<1x80x256xf32, #tpu.memory_space<vmem>>, vector<1x80x256xf32>,
    return
  }
  func.func @transform_0(%arg0: i32) -> (i32, i32, i32) {
    %c0_i32 = arith.constant 0 : i32
    %c0_i32_0 = arith.constant 0 : i32
    %c0_i32_1 = arith.constant 0 : i32
    return %arg0, %c0_i32, %c0_i32_0 : i32, i32, i32
  }
  func.func @transform_1(%arg0: i32) -> (i32, i32) {
    %c0_i32 = arith.constant 0 : i32
    %c0_i32_0 = arith.constant 0 : i32
    %c0_i32_1 = arith.constant 0 : i32
    return %c0_i32, %c0_i32_0 : i32, i32
  }
  func.func @transform_2(%arg0: i32) -> (i32, i32) {
    %c0_i32 = arith.constant 0 : i32
    %c0_i32_0 = arith.constant 0 : i32
    %c0_i32_1 = arith.constant 0 : i32
    return %c0_i32, %c0_i32_0 : i32, i32
  }
  func.func @transform_3(%arg0: i32) -> (i32, i32, i32) {
    %c0_i32 = arith.constant 0 : i32
    %c0_i32_0 = arith.constant 0 : i32
    %c0_i32_1 = arith.constant 0 : i32
    return %arg0, %c0_i32, %c0_i32_0 : i32, i32, i32
  }
}

</mosaic_0001>

<llo_original>
// kernel: asff_forward.5
$region0: #{asff_forward.5}
  #allocation0 [shape = 'u32[]', space=smem, size = 0x4, offset = 0x4, fixed_abs, tag = 'smem constant byte address 0x4 - core index']
  #allocation1 [shape = 'u32[144,128]{1,0:T(1,128)}', space=vmem, size = 0x12000, scoped, tag = 'internal scratch']
  %s0 = inlined_call_operand.vmem [shape: f32[32,256], index: 0, kind: input, shape index: {}]
  %s1 = inlined_call_operand.vmem [shape: f32[256,128], index: 1, kind: input, shape index: {}]
  %s2 = inlined_call_operand.vmem [shape: f32[1,128], index: 2, kind: input, shape index: {}]
  %s3 = inlined_call_operand.vmem [shape: f32[32,128], index: 3, kind: output, shape index: {}]
  %s4 = sld [smem:[#allocation0]]
  $region22: #{asff_forward.5} parent=0
    _
  %s6 = ssub.s32 1, %s4
  %s7 = scalar_select 0, %s6, %s4
  // Predicated region
  $region2: #{asff_forward.5} parent=0 // pred_check
    _
  $region3: #{asff_forward.5} parent=0 // pred_check_branch
    %9 = sbr.rel (0) target = $region5
  $region4: #{asff_forward.5} parent=0 // pred_region
    _
  $region5: #{asff_forward.5} parent=0 // pred_fallthru
    _
  // Predicated region
  $region6: #{asff_forward.5} parent=0 // pred_check
    _
  $region7: #{asff_forward.5} parent=0 // pred_check_branch
    %11 = sbr.rel (0) target = $region9
  $region8: #{asff_forward.5} parent=0 // pred_region
    _
  $region9: #{asff_forward.5} parent=0 // pred_fallthru
    _
  // Predicated region
  $region10: #{asff_forward.5} parent=0 // pred_check
    _
  $region11: #{asff_forward.5} parent=0 // pred_check_branch
    %13 = sbr.rel (0) target = $region13
  $region12: #{asff_forward.5} parent=0 // pred_region
    _
  $region13: #{asff_forward.5} parent=0 // pred_fallthru
    _
  %v14 = vld [vmem:[%s0] sm:$0xff]
  %v15 = vld [vmem:[%s0 + $0x8] sm:$0xff]
  %v16 = vld [vmem:[%s0 + $0x10] sm:$0xff]
  %v17 = vld [vmem:[%s0 + $0x18] sm:$0xff]
  %v18 = vld [vmem:[%s0 + $0x20] sm:$0xff]
  %v19 = vld [vmem:[%s0 + $0x28] sm:$0xff]
  %v20 = vld [vmem:[%s0 + $0x30] sm:$0xff]
  %v21 = vld [vmem:[%s0 + $0x38] sm:$0xff]
  %v22 = vld [vmem:[%s1] sm:$0xff]
  %v23 = vld [vmem:[%s1 + $0x8] sm:$0xff]
  %v24 = vld [vmem:[%s1 + $0x10] sm:$0xff]
  %v25 = vld [vmem:[%s1 + $0x18] sm:$0xff]
  %v26 = vld [vmem:[%s1 + $0x20] sm:$0xff]
  %v27 = vld [vmem:[%s1 + $0x28] sm:$0xff]
  %v28 = vld [vmem:[%s1 + $0x30] sm:$0xff]
  %v29 = vld [vmem:[%s1 + $0x38] sm:$0xff]
  %v30 = vld [vmem:[%s1 + $0x40] sm:$0xff]
  %v31 = vld [vmem:[%s1 + $0x48] sm:$0xff]
  %v32 = vld [vmem:[%s1 + $0x50] sm:$0xff]
  %v33 = vld [vmem:[%s1 + $0x58] sm:$0xff]
  %v34 = vld [vmem:[%s1 + $0x60] sm:$0xff]
  %v35 = vld [vmem:[%s1 + $0x68] sm:$0xff]
  %v36 = vld [vmem:[%s1 + $0x70] sm:$0xff]
  %v37 = vld [vmem:[%s1 + $0x78] sm:$0xff]
  %v38 = vld [vmem:[%s1 + $0x80] sm:$0xff]
  %v39 = vld [vmem:[%s1 + $0x88] sm:$0xff]
  %v40 = vld [vmem:[%s1 + $0x90] sm:$0xff]
  %v41 = vld [vmem:[%s1 + $0x98] sm:$0xff]
  %v42 = vld [vmem:[%s1 + $0xa0] sm:$0xff]
  %v43 = vld [vmem:[%s1 + $0xa8] sm:$0xff]
  %v44 = vld [vmem:[%s1 + $0xb0] sm:$0xff]
  %v45 = vld [vmem:[%s1 + $0xb8] sm:$0xff]
  %v46 = vld [vmem:[%s1 + $0xc0] sm:$0xff]
  %v47 = vld [vmem:[%s1 + $0xc8] sm:$0xff]
  %v48 = vld [vmem:[%s1 + $0xd0] sm:$0xff]
  %v49 = vld [vmem:[%s1 + $0xd8] sm:$0xff]
  %v50 = vld [vmem:[%s1 + $0xe0] sm:$0xff]
  %v51 = vld [vmem:[%s1 + $0xe8] sm:$0xff]
  %v52 = vld [vmem:[%s1 + $0xf0] sm:$0xff]
  %v53 = vld [vmem:[%s1 + $0xf8] sm:$0xff]
  %v54 = vld [vmem:[%s2] sm:$0x1]
  %v56 = vlaneseq
  %v57 = vshrl.u32 %v56, 7
  %v58 = vsub.s32 0, %v57
  %v59 = vrot.slane %v54, %v58
  %61 = vmatprep.subr.mxu0 0.0
  %62 = vmatpush1.msra.mxu0 %v22
  %63 = vmatprep.subr.mxu0 0.0
  %64 = vmatpush1.msra.mxu0 %v23
  %65 = vmatprep.subr.mxu0 0.0
  %66 = vmatpush1.msra.mxu0 %v24
  %67 = vmatprep.subr.mxu0 0.0
  %68 = vmatpush1.msra.mxu0 %v25
  %69 = vmatprep.subr.mxu0 0.0
  %70 = vmatpush1.msra.mxu0 %v26
  %71 = vmatprep.subr.mxu0 0.0
  %72 = vmatpush1.msra.mxu0 %v27
  %73 = vmatprep.subr.mxu0 0.0
  %74 = vmatpush1.msra.mxu0 %v28
  %75 = vmatprep.subr.mxu0 0.0
  %76 = vmatpush1.msra.mxu0 %v29
  %77 = vmatprep.subr.mxu0 0.0
  %78 = vmatpush1.msra.mxu0 %v30
  %79 = vmatprep.subr.mxu0 0.0
  %80 = vmatpush1.msra.mxu0 %v31
  %81 = vmatprep.subr.mxu0 0.0
  %82 = vmatpush1.msra.mxu0 %v32
  %83 = vmatprep.subr.mxu0 0.0
  %84 = vmatpush1.msra.mxu0 %v33
  %85 = vmatprep.subr.mxu0 0.0
  %86 = vmatpush1.msra.mxu0 %v34
  %87 = vmatprep.subr.mxu0 0.0
  %88 = vmatpush1.msra.mxu0 %v35
  %89 = vmatprep.subr.mxu0 0.0
  %90 = vmatpush1.msra.mxu0 %v36
  %91 = vmatprep.subr.mxu0 0.0
  %92 = vmatpush1.msra.mxu0 %v37
  %93 = vmatprep.subr.mxu0 0.0
  %94 = vmatpush1.msra.mxu0 %v38
  %95 = vmatprep.subr.mxu0 0.0
  %96 = vmatpush1.msra.mxu0 %v39
  %97 = vmatprep.subr.mxu0 0.0
  %98 = vmatpush1.msra.mxu0 %v40
  %99 = vmatprep.subr.mxu0 0.0
  %100 = vmatpush1.msra.mxu0 %v41
  %101 = vmatprep.subr.mxu0 0.0
  %102 = vmatpush1.msra.mxu0 %v42
  %103 = vmatprep.subr.mxu0 0.0
  %104 = vmatpush1.msra.mxu0 %v43
  %105 = vmatprep.subr.mxu0 0.0
  %106 = vmatpush1.msra.mxu0 %v44
  %107 = vmatprep.subr.mxu0 0.0
  %108 = vmatpush1.msra.mxu0 %v45
  %109 = vmatprep.subr.mxu0 0.0
  %110 = vmatpush1.msra.mxu0 %v46
  %111 = vmatprep.subr.mxu0 0.0
  %112 = vmatpush1.msra.mxu0 %v47
  %113 = vmatprep.subr.mxu0 0.0
  %114 = vmatpush1.msra.mxu0 %v48
  %115 = vmatprep.subr.mxu0 0.0
  %116 = vmatpush1.msra.mxu0 %v49
  %117 = vmatprep.subr.mxu0 0.0
  %118 = vmatpush1.msra.mxu0 %v50
  %119 = vmatprep.subr.mxu0 0.0
  %120 = vmatpush1.msra.mxu0 %v51
  %121 = vmatprep.subr.mxu0 0.0
  %122 = vmatpush1.msra.mxu0 %v52
  %123 = vmatprep.subr.mxu0 0.0
  %124 = vmatpush1.msra.mxu0 %v53
  %125 = vmatprep.mubr.f32.mxu0 %v15
  %126 = vmatmul.mubr.f32.gmra.mrb[0].mxu0 %v14
  %v127 = vpop.f32.mrb[0].mxu0
  %v128 = vadd.f32 %v59, %v127
  %v129 = vpop.f32.mrb[0].mxu0
  %130 = vmatprep.mubr.f32.mxu0 %v17
  %131 = vmatmul.mubr.f32.gmra.mrb[0].mxu0 %v16
  %v132 = vpop.f32.mrb[0].mxu0
  %v133 = vadd.f32 %v59, %v132
  %v134 = vpop.f32.mrb[0].mxu0
  %135 = vmatprep.mubr.f32.mxu0 %v19
  %136 = vmatmul.mubr.f32.gmra.mrb[0].mxu0 %v18
  %v137 = vpop.f32.mrb[0].mxu0
  %v138 = vadd.f32 %v59, %v137
  %v139 = vpop.f32.mrb[0].mxu0
  %140 = vmatprep.mubr.f32.mxu0 %v21
  %141 = vmatmul.mubr.f32.gmra.mrb[0].mxu0 %v20
  %v142 = vpop.f32.mrb[0].mxu0
  %v143 = vadd.f32 %v59, %v142
  %v144 = vpop.f32.mrb[0].mxu0
  %145 = vdwg.mxu0
  %v146 = vmax.f32 %v128, 0.0
  %v147 = vmax.f32 %v133, 0.0
  %v148 = vmax.f32 %v138, 0.0
  %v149 = vmax.f32 %v143, 0.0
  %150 = vst [vmem:[%s3] sm:$0xff] %v146
  %151 = vst [vmem:[%s3 + $0x8] sm:$0xff] %v147
  %152 = vst [vmem:[%s3 + $0x10] sm:$0xff] %v148
  %153 = vst [vmem:[%s3 + $0x18] sm:$0xff] %v149
  // Predicated region
  $region14: #{asff_forward.5} parent=0 // pred_check
    _
  $region15: #{asff_forward.5} parent=0 // pred_check_branch
    %155 = sbr.rel (0) target = $region17
  $region16: #{asff_forward.5} parent=0 // pred_region
    _
  $region17: #{asff_forward.5} parent=0 // pred_fallthru
    _
  // Predicated region
  $region18: #{asff_forward.5} parent=0 // pred_check
    _
  $region19: #{asff_forward.5} parent=0 // pred_check_branch
    %157 = sbr.rel (0) target = $region21
  $region20: #{asff_forward.5} parent=0 // pred_region
    _
  $region21: #{asff_forward.5} parent=0 // pred_fallthru
    _

// kernel: asff_forward.7
$region0: #{asff_forward.7}
  #allocation0 [shape = 'u32[]', space=smem, size = 0x4, offset = 0x4, fixed_abs, tag = 'smem constant byte address 0x4 - core index']
  #allocation1 [shape = 'u32[144,128]{1,0:T(1,128)}', space=vmem, size = 0x12000, scoped, tag = 'internal scratch']
  %s0 = inlined_call_operand.vmem [shape: f32[2,400,192], index: 0, kind: input, shape index: {}]
  %s1 = inlined_call_operand.vmem [shape: f32[1728,128], index: 1, kind: input, shape index: {}]
  %s2 = inlined_call_operand.vmem [shape: f32[1,128], index: 2, kind: input, shape index: {}]
  %s3 = inlined_call_operand.vmem [shape: f32[2,80,128], index: 3, kind: output, shape index: {}]
  %s4 = sld [smem:[#allocation0]]
  $region45: #{asff_forward.7} parent=0
    _
  %s6 = ssub.s32 1, %s4
  %s7 = scalar_select 0, %s6, %s4
  loop: start=0, step=1, limit=4
  $region2: #{asff_forward.7} parent=0 // loop_pre_header
    _
  $region3: #{asff_forward.7} parent=0 // loop_header
    %s9 = sphi 0, %s13
    %p10 = scmp.ge.s32.totalorder %s9, 4
    %s19 = sphi 0, %s21
    %s22 = sphi 0, %s19
    %s23 = sphi 0, %s22
    %s39 = sphi 0, %s23
    %s43 = sphi 0, %s43
    %s45 = sphi 0, %s43
    %s46 = sphi 0, %s45
    %s60 = sphi 0, %s46
    %s64 = sphi 0, %s64
    %s66 = sphi 0, %s64
    %s67 = sphi 0, %s66
    %s81 = sphi 0, %s67
    %s87 = sphi 0, %s89
    %s90 = sphi 0, %s87
    %s91 = sphi 0, %s90
    %s107 = sphi 0, %s91
  $region4: #{asff_forward.7} parent=0 // loop_header_branch
    %12 = sbr.rel (%p10) target = $region8
  $region5: #{asff_forward.7} parent=0 // loop_body
    %s14 = ssub.s32 %s9, 1
    %s15 = ssub.s32 %s9, 2
    %s16 = sadd.s32 %s9, 1
    %s17 = ssub.s32 %s9, %s16
    %p18 = scmp.eq.s32.totalorder %s17, 0
    %s20 = sadd.s32 %s19, 1
    %s21 = scalar_select %p18, %s19, %s20
    %p24 = pneg %p18
    %p25 = scmp.eq.s32.totalorder %s9, 1
    %p26 = por %p24, %p25
    %p27 = scmp.ne.s32.totalorder %s19, %s22
    %p28 = scmp.eq.s32.totalorder %s9, 0
    %p29 = por %p27, %p28
    %p30 = scmp.ne.s32.totalorder %s19, %s22
    %p31 = scmp.eq.s32.totalorder %s14, 1
    %p32 = por %p30, %p31
    %p33 = scmp.ne.s32.totalorder %s22, %s23
    %p34 = scmp.eq.s32.totalorder %s14, 0
    %p35 = por %p33, %p34
    %p36 = scmp.ne.s32.totalorder %s22, %s23
    %p37 = scmp.eq.s32.totalorder %s15, 1
    %p38 = por %p36, %p37
    %p40 = scmp.ne.s32.totalorder %s23, %s39
    %p41 = scmp.eq.s32.totalorder %s15, 0
    %p42 = por %p40, %p41
    %s44 = sadd.s32 %s43, 1
    %p47 = scmp.eq.s32.totalorder %s9, 1
    %p48 = scmp.ne.s32.totalorder %s43, %s45
    %p49 = scmp.eq.s32.totalorder %s9, 0
    %p50 = por %p48, %p49
    %p51 = scmp.ne.s32.totalorder %s43, %s45
    %p52 = scmp.eq.s32.totalorder %s14, 1
    %p53 = por %p51, %p52
    %p54 = scmp.ne.s32.totalorder %s45, %s46
    %p55 = scmp.eq.s32.totalorder %s14, 0
    %p56 = por %p54, %p55
    %p57 = scmp.ne.s32.totalorder %s45, %s46
    %p58 = scmp.eq.s32.totalorder %s15, 1
    %p59 = por %p57, %p58
    %p61 = scmp.ne.s32.totalorder %s46, %s60
    %p62 = scmp.eq.s32.totalorder %s15, 0
    %p63 = por %p61, %p62
    %s65 = sadd.s32 %s64, 1
    %p68 = scmp.eq.s32.totalorder %s9, 1
    %p69 = scmp.ne.s32.totalorder %s64, %s66
    %p70 = scmp.eq.s32.totalorder %s9, 0
    %p71 = por %p69, %p70
    %p72 = scmp.ne.s32.totalorder %s64, %s66
    %p73 = scmp.eq.s32.totalorder %s14, 1
    %p74 = por %p72, %p73
    %p75 = scmp.ne.s32.totalorder %s66, %s67
    %p76 = scmp.eq.s32.totalorder %s14, 0
    %p77 = por %p75, %p76
    %p78 = scmp.ne.s32.totalorder %s66, %s67
    %p79 = scmp.eq.s32.totalorder %s15, 1
    %p80 = por %p78, %p79
    %p82 = scmp.ne.s32.totalorder %s67, %s81
    %p83 = scmp.eq.s32.totalorder %s15, 0
    %p84 = por %p82, %p83
    %s85 = ssub.s32 %s9, %s16
    %p86 = scmp.eq.s32.totalorder %s85, 0
    %s88 = sadd.s32 %s87, 1
    %s89 = scalar_select %p86, %s87, %s88
    %p92 = pneg %p86
    %p93 = scmp.eq.s32.totalorder %s9, 1
    %p94 = por %p92, %p93
    %p95 = scmp.ne.s32.totalorder %s87, %s90
    %p96 = scmp.eq.s32.totalorder %s9, 0
    %p97 = por %p95, %p96
    %p98 = scmp.ne.s32.totalorder %s87, %s90
    %p99 = scmp.eq.s32.totalorder %s14, 1
    %p100 = por %p98, %p99
    %p101 = scmp.ne.s32.totalorder %s90, %s91
    %p102 = scmp.eq.s32.totalorder %s14, 0
    %p103 = por %p101, %p102
    %p104 = scmp.ne.s32.totalorder %s90, %s91
    %p105 = scmp.eq.s32.totalorder %s15, 1
    %p106 = por %p104, %p105
    %p108 = scmp.ne.s32.totalorder %s91, %s107
    %p109 = scmp.eq.s32.totalorder %s15, 0
    %p110 = por %p108, %p109
    %p111 = scmp.le.s32.totalorder 1, %s9
    %p112 = scmp.lt.s32.totalorder %s9, 3
    %p113 = pnand %p111, %p112
    %p114 = pneg %p113
    // Predicated region
    $region9: #{asff_forward.7} parent=5 // pred_check
      _
    $region10: #{asff_forward.7} parent=5 // pred_check_branch
      %116 = sbr.rel (%p113) target = $region12
    $region11: #{asff_forward.7} parent=5 // pred_region
      %s117 = ssub.s32 %s9, 1
      // Predicated region
      $region13: #{asff_forward.7} parent=11 // pred_check
        %p118 = pneg %p56
      $region14: #{asff_forward.7} parent=11 // pred_check_branch
        %120 = sbr.rel (%p118) target = $region16
      $region15: #{asff_forward.7} parent=11 // pred_region
        _
      $region16: #{asff_forward.7} parent=11 // pred_fallthru
        _
      // Predicated region
      $region17: #{asff_forward.7} parent=11 // pred_check
        %p121 = pneg %p77
      $region18: #{asff_forward.7} parent=11 // pred_check_branch
        %123 = sbr.rel (%p121) target = $region20
      $region19: #{asff_forward.7} parent=11 // pred_region
        _
      $region20: #{asff_forward.7} parent=11 // pred_fallthru
        _
    $region12: #{asff_forward.7} parent=5 // pred_fallthru
      _
    %p124 = scmp.lt.s32.totalorder %s9, 2
    // Predicated region
    $region21: #{asff_forward.7} parent=5 // pred_check
      %p125 = pneg %p124
    $region22: #{asff_forward.7} parent=5 // pred_check_branch
      %127 = sbr.rel (%p125) target = $region24
    $region23: #{asff_forward.7} parent=5 // pred_region
      // Predicated region
      $region25: #{asff_forward.7} parent=23 // pred_check
        %p128 = pneg %p29
      $region26: #{asff_forward.7} parent=23 // pred_check_branch
        %130 = sbr.rel (%p128) target = $region28
      $region27: #{asff_forward.7} parent=23 // pred_region
        %p131 = scmp.lt.s32.totalorder %s9, 1
        %s132 = scalar_select %p131, %s9, 1
        %s133 = smul.addr %s132, 100
        %s134 = smul.addr %s133, 8
        %s135 = scalar_lea.vmem %s0, %s134
      $region28: #{asff_forward.7} parent=23 // pred_fallthru
        _
    $region24: #{asff_forward.7} parent=5 // pred_fallthru
      _
    %p136 = scmp.le.s32.totalorder 1, %s9
    %p137 = scmp.lt.s32.totalorder %s9, 3
    %p138 = pnand %p136, %p137
    %p139 = pneg %p138
    // Predicated region
    $region29: #{asff_forward.7} parent=5 // pred_check
      _
    $region30: #{asff_forward.7} parent=5 // pred_check_branch
      %141 = sbr.rel (%p138) target = $region32
    $region31: #{asff_forward.7} parent=5 // pred_region
      %s142 = ssub.s32 %s9, 1
      %p143 = scmp.lt.s32.totalorder %s14, 1
      %s144 = scalar_select %p143, %s14, 1
      %s145 = smul.addr %s144, 100
      %s146 = smul.addr %s145, 8
      %s147 = scalar_lea.vmem %s0, %s146
      %p148 = pneg %p35
      %p149 = pneg %p32
      %p150 = pneg %p56
      %p151 = pneg %p53
      %p152 = pneg %p77
      %p153 = pneg %p74
      %p154 = pneg %p103
      %p155 = pneg %p100
      %p156 = scmp.lt.s32.totalorder %s14, 1
      %s157 = scalar_select %p156, %s14, 1
      %s158 = smul.addr %s157, 10
      %s159 = smul.addr %s158, 8
      %s160 = scalar_lea.vmem %s3, %s159
      %p161 = scmp.lt.s32.totalorder %s14, 1
      %s162 = scalar_select %p161, %s14, 1
      %s163 = smul.addr %s162, 100
      %s164 = smul.addr %s163, 8
      %s165 = scalar_lea.vmem %s0, %s164
      %p166 = scmp.lt.s32.totalorder %s14, 1
      %s167 = scalar_select %p166, %s14, 1
      %s168 = smul.addr %s167, 10
      %s169 = smul.addr %s168, 8
      %s170 = scalar_lea.vmem %s3, %s169
      %v171 = vld [vmem:[%s165] sm:$0xff]
      %v172 = vld [vmem:[%s165 + $0x8] sm:$0xff]
      %v173 = vld [vmem:[%s165 + $0x10] sm:$0xff]
      %v174 = vld [vmem:[%s165 + $0x18] sm:$0xff]
      %v175 = vld [vmem:[%s165 + $0x20] sm:$0xff]
      %v176 = vld [vmem:[%s165 + $0x28] sm:$0xff]
      %v177 = vld [vmem:[%s165 + $0x30] sm:$0xff]
      %v178 = vld [vmem:[%s165 + $0x38] sm:$0xff]
      %v179 = vld [vmem:[%s165 + $0x40] sm:$0xff]
      %v180 = vld [vmem:[%s165 + $0x48] sm:$0xff]
      %v181 = vld [vmem:[%s165 + $0x50] sm:$0xff]
      %v182 = vld [vmem:[%s165 + $0x58] sm:$0xff]
      %v183 = vld [vmem:[%s165 + $0x60] sm:$0xff]
      %v184 = vld [vmem:[%s165 + $0x68] sm:$0xff]
      %v185 = vld [vmem:[%s165 + $0x70] sm:$0xff]
      %v186 = vld [vmem:[%s165 + $0x78] sm:$0xff]
      %v187 = vld [vmem:[%s165 + $0x80] sm:$0xff]
      %v188 = vld [vmem:[%s165 + $0x88] sm:$0xff]
      %v189 = vld [vmem:[%s165 + $0x90] sm:$0xff]
      %v190 = vld [vmem:[%s165 + $0x98] sm:$0xff]
      %v191 = vld [vmem:[%s1] sm:$0xff]
      %v192 = vld [vmem:[%s1 + $0x8] sm:$0xff]
      %v193 = vld [vmem:[%s1 + $0x10] sm:$0xff]
      %v194 = vld [vmem:[%s1 + $0x18] sm:$0xff]
      %v195 = vld [vmem:[%s1 + $0x20] sm:$0xff]
      %v196 = vld [vmem:[%s1 + $0x28] sm:$0xff]
      %v197 = vld [vmem:[%s1 + $0x30] sm:$0xff]
      %v198 = vld [vmem:[%s1 + $0x38] sm:$0xff]
      %v199 = vld [vmem:[%s1 + $0x40] sm:$0xff]
      %v200 = vld [vmem:[%s1 + $0x48] sm:$0xff]
      %v201 = vld [vmem:[%s1 + $0x50] sm:$0xff]
      %v202 = vld [vmem:[%s1 + $0x58] sm:$0xff]
      %v203 = vld [vmem:[%s1 + $0x60] sm:$0xff]
      %v204 = vld [vmem:[%s1 + $0x68] sm:$0xff]
      %v205 = vld [vmem:[%s1 + $0x70] sm:$0xff]
      %v206 = vld [vmem:[%s1 + $0x78] sm:$0xff]
      %v207 = vld [vmem:[%s1 + $0x80] sm:$0xff]
      %v208 = vld [vmem:[%s1 + $0x88] sm:$0xff]
      %v209 = vld [vmem:[%s1 + $0x90] sm:$0xff]
      %v210 = vld [vmem:[%s1 + $0x98] sm:$0xff]
      %v211 = vld [vmem:[%s1 + $0xa0] sm:$0xff]
      %v212 = vld [vmem:[%s1 + $0xa8] sm:$0xff]
      %v213 = vld [vmem:[%s1 + $0xb0] sm:$0xff]
      %v214 = vld [vmem:[%s1 + $0xb8] sm:$0xff]
      %v215 = vld [vmem:[%s165 + $0xc0] sm:$0xf0]
      %v216 = vld [vmem:[%s165 + $0xc8] sm:$0xf0]
      %v217 = vld [vmem:[%s165 + $0xd0] sm:$0xff]
      %v218 = vld [vmem:[%s165 + $0xd8] sm:$0xff]
      %v219 = vld [vmem:[%s165 + $0xe0] sm:$0xff]
      %v220 = vld [vmem:[%s165 + $0xe8] sm:$0xff]
      %v221 = vld [vmem:[%s165 + $0xf0] sm:$0xff]
      %v222 = vld [vmem:[%s165 + $0xf8] sm:$0xff]
      %v223 = vld [vmem:[%s165 + $0x100] sm:$0xff]
      %v224 = vld [vmem:[%s165 + $0x108] sm:$0xff]
      %v225 = vld [vmem:[%s165 + $0x110] sm:$0xff]
      %v226 = vld [vmem:[%s165 + $0x118] sm:$0xff]
      %v227 = vld [vmem:[%s165 + $0x120] sm:$0xff]
      %v228 = vld [vmem:[%s165 + $0x128] sm:$0xff]
      %v229 = vld [vmem:[%s165 + $0x130] sm:$0xff]
      %v230 = vld [vmem:[%s165 + $0x138] sm:$0xff]
      %v231 = vld [vmem:[%s165 + $0x140] sm:$0xff]
      %v232 = vld [vmem:[%s165 + $0x148] sm:$0xff]
      %v233 = vld [vmem:[%s165 + $0x150] sm:$0xff]
      %v234 = vld [vmem:[%s165 + $0x158] sm:$0xff]
      %v235 = vld [vmem:[%s165 + $0x160] sm:$0xf]
      %v236 = vld [vmem:[%s165 + $0x168] sm:$0xf]
      %v237 = vld [vmem:[%s1 + $0xc0] sm:$0xff]
      %v238 = vld [vmem:[%s1 + $0xc8] sm:$0xff]
      %v239 = vld [vmem:[%s1 + $0xd0] sm:$0xff]
      %v240 = vld [vmem:[%s1 + $0xd8] sm:$0xff]
      %v241 = vld [vmem:[%s1 + $0xe0] sm:$0xff]
      %v242 = vld [vmem:[%s1 + $0xe8] sm:$0xff]
      %v243 = vld [vmem:[%s1 + $0xf0] sm:$0xff]
      %v244 = vld [vmem:[%s1 + $0xf8] sm:$0xff]
      %v245 = vld [vmem:[%s1 + $0x100] sm:$0xff]
      %v246 = vld [vmem:[%s1 + $0x108] sm:$0xff]
      %v247 = vld [vmem:[%s1 + $0x110] sm:$0xff]
      %v248 = vld [vmem:[%s1 + $0x118] sm:$0xff]
      %v249 = vld [vmem:[%s1 + $0x120] sm:$0xff]
      %v250 = vld [vmem:[%s1 + $0x128] sm:$0xff]
      %v251 = vld [vmem:[%s1 + $0x130] sm:$0xff]
      %v252 = vld [vmem:[%s1 + $0x138] sm:$0xff]
      %v253 = vld [vmem:[%s1 + $0x140] sm:$0xff]
      %v254 = vld [vmem:[%s1 + $0x148] sm:$0xff]
      %v255 = vld [vmem:[%s1 + $0x150] sm:$0xff]
      %v256 = vld [vmem:[%s1 + $0x158] sm:$0xff]
      %v257 = vld [vmem:[%s1 + $0x160] sm:$0xff]
      %v258 = vld [vmem:[%s1 + $0x168] sm:$0xff]
      %v259 = vld [vmem:[%s1 + $0x170] sm:$0xff]
      %v260 = vld [vmem:[%s1 + $0x178] sm:$0xff]
      %vm283 = vcmask 1043456
      %v284 = vrot.slane %v215, 4
      %v285 = vrot.slane %v217, 4
      %v286 = vsel %vm283, %v284, %v285
      %v287 = vrot.slane %v216, 4
      %v288 = vrot.slane %v218, 4
      %v289 = vsel %vm283, %v287, %v288
      %v290 = vrot.slane %v219, 4
      %v291 = vsel %vm283, %v285, %v290
      %v292 = vrot.slane %v220, 4
      %v293 = vsel %vm283, %v288, %v292
      %v294 = vrot.slane %v221, 4
      %v295 = vsel %vm283, %v290, %v294
      %v296 = vrot.slane %v222, 4
      %v297 = vsel %vm283, %v292, %v296
      %v298 = vrot.slane %v223, 4
      %v299 = vsel %vm283, %v294, %v298
      %v300 = vrot.slane %v224, 4
      %v301 = vsel %vm283, %v296, %v300
      %v302 = vrot.slane %v225, 4
      %v303 = vsel %vm283, %v298, %v302
      %v304 = vrot.slane %v226, 4
      %v305 = vsel %vm283, %v300, %v304
      %v306 = vrot.slane %v227, 4
      %v307 = vsel %vm283, %v302, %v306
      %v308 = vrot.slane %v228, 4
      %v309 = vsel %vm283, %v304, %v308
      %v310 = vrot.slane %v229, 4
      %v311 = vsel %vm283, %v306, %v310
      %v312 = vrot.slane %v230, 4
      %v313 = vsel %vm283, %v308, %v312
      %v314 = vrot.slane %v231, 4
      %v315 = vsel %vm283, %v310, %v314
      %v316 = vrot.slane %v232, 4
      %v317 = vsel %vm283, %v312, %v316
      %v318 = vrot.slane %v233, 4
      %v319 = vsel %vm283, %v314, %v318
      %v320 = vrot.slane %v234, 4
      %v321 = vsel %vm283, %v316, %v320
      %v322 = vrot.slane %v235, 4
      %v323 = vsel %vm283, %v318, %v322
      %v324 = vrot.slane %v236, 4
      %v325 = vsel %vm283, %v320, %v324
      %vm336 = vcmask 523264
      %v337 = vsel %vm336, %v289, 0
      %v339 = vsel %vm336, %v293, 0
      %v341 = vsel %vm336, %v297, 0
      %v343 = vsel %vm336, %v301, 0
      %v345 = vsel %vm336, %v305, 0
      %v347 = vsel %vm336, %v309, 0
      %v349 = vsel %vm336, %v313, 0
      %v351 = vsel %vm336, %v317, 0
      %v353 = vsel %vm336, %v321, 0
      %v355 = vsel %vm336, %v325, 0
      %357 = vmatprep.subr.mxu0 0.0
      %358 = vmatpush1.msra.mxu0 %v237
      %359 = vmatprep.subr.mxu0 0.0
      %360 = vmatpush1.msra.mxu0 %v238
      %361 = vmatprep.subr.mxu0 0.0
      %362 = vmatpush1.msra.mxu0 %v239
      %363 = vmatprep.subr.mxu0 0.0
      %364 = vmatpush1.msra.mxu0 %v240
      %365 = vmatprep.subr.mxu0 0.0
      %366 = vmatpush1.msra.mxu0 %v241
      %367 = vmatprep.subr.mxu0 0.0
      %368 = vmatpush1.msra.mxu0 %v242
      %369 = vmatprep.subr.mxu0 0.0
      %370 = vmatpush1.msra.mxu0 %v243
      %371 = vmatprep.subr.mxu0 0.0
      %372 = vmatpush1.msra.mxu0 %v244
      %373 = vmatprep.subr.mxu0 0.0
      %374 = vmatpush1.msra.mxu0 %v245
      %375 = vmatprep.subr.mxu0 0.0
      %376 = vmatpush1.msra.mxu0 %v246
      %377 = vmatprep.subr.mxu0 0.0
      %378 = vmatpush1.msra.mxu0 %v247
      %379 = vmatprep.subr.mxu0 0.0
      %380 = vmatpush1.msra.mxu0 %v248
      %381 = vmatprep.subr.mxu0 0.0
      %382 = vmatpush1.msra.mxu0 %v249
      %383 = vmatprep.subr.mxu0 0.0
      %384 = vmatpush1.msra.mxu0 %v250
      %385 = vmatprep.subr.mxu0 0.0
      %386 = vmatpush1.msra.mxu0 %v251
      %387 = vmatprep.subr.mxu0 0.0
      %388 = vmatpush1.msra.mxu0 %v252
      %389 = vmatprep.subr.mxu0 0.0
      %390 = vmatpush1.msra.mxu0 %v253
      %391 = vmatprep.subr.mxu0 0.0
      %392 = vmatpush1.msra.mxu0 %v254
      %393 = vmatprep.subr.mxu0 0.0
      %394 = vmatpush1.msra.mxu0 %v255
      %395 = vmatprep.subr.mxu0 0.0
      %396 = vmatpush1.msra.mxu0 %v256
      %397 = vmatprep.subr.mxu0 0.0
      %398 = vmatpush1.msra.mxu0 %v257
      %399 = vmatprep.subr.mxu0 0.0
      %400 = vmatpush1.msra.mxu0 %v258
      %401 = vmatprep.subr.mxu0 0.0
      %402 = vmatpush1.msra.mxu0 %v259
      %403 = vmatprep.subr.mxu0 0.0
      %404 = vmatpush1.msra.mxu0 %v260
      %405 = vmatprep.subr.mxu0 0.0
      %406 = vmatpush1.msra.mxu0 0.0
      %407 = vmatprep.subr.mxu0 0.0
      %408 = vmatpush1.msra.mxu0 0.0
      %409 = vmatprep.subr.mxu0 0.0
      %410 = vmatpush1.msra.mxu0 0.0
      %411 = vmatprep.subr.mxu0 0.0
      %412 = vmatpush1.msra.mxu0 0.0
      %413 = vmatprep.subr.mxu0 0.0
      %414 = vmatpush1.msra.mxu0 0.0
      %415 = vmatprep.subr.mxu0 0.0
      %416 = vmatpush1.msra.mxu0 0.0
      %417 = vmatprep.subr.mxu0 0.0
      %418 = vmatpush1.msra.mxu0 0.0
      %419 = vmatprep.subr.mxu0 0.0
      %420 = vmatpush1.msra.mxu0 0.0
      %421 = vmatprep.mubr.f32.mxu0 %v337
      %422 = vmatmul.mubr.f32.gmra.mrb[0].mxu0 %v286
      %v423 = vpop.f32.mrb[0].mxu0
      %v424 = vadd.f32 0.0, %v423
      %v425 = vpop.f32.mrb[0].mxu0
      %426 = vmatprep.mubr.f32.mxu0 %v339
      %427 = vmatmul.mubr.f32.gmra.mrb[0].mxu0 %v291
      %v428 = vpop.f32.mrb[0].mxu0
      %v429 = vadd.f32 0.0, %v428
      %v430 = vpop.f32.mrb[0].mxu0
      %431 = vmatprep.mubr.f32.mxu0 %v341
      %432 = vmatmul.mubr.f32.gmra.mrb[0].mxu0 %v295
      %v433 = vpop.f32.mrb[0].mxu0
      %v434 = vadd.f32 0.0, %v433
      %v435 = vpop.f32.mrb[0].mxu0
      %436 = vmatprep.mubr.f32.mxu0 %v343
      %437 = vmatmul.mubr.f32.gmra.mrb[0].mxu0 %v299
      %v438 = vpop.f32.mrb[0].mxu0
      %v439 = vadd.f32 0.0, %v438
      %v440 = vpop.f32.mrb[0].mxu0
      %441 = vmatprep.mubr.f32.mxu0 %v345
      %442 = vmatmul.mubr.f32.gmra.mrb[0].mxu0 %v303
      %v443 = vpop.f32.mrb[0].mxu0
      %v444 = vadd.f32 0.0, %v443
      %v445 = vpop.f32.mrb[0].mxu0
      %446 = vmatprep.mubr.f32.mxu0 %v347
      %447 = vmatmul.mubr.f32.gmra.mrb[0].mxu0 %v307
      %v448 = vpop.f32.mrb[0].mxu0
      %v449 = vadd.f32 0.0, %v448
      %v450 = vpop.f32.mrb[0].mxu0
      %451 = vmatprep.mubr.f32.mxu0 %v349
      %452 = vmatmul.mubr.f32.gmra.mrb[0].mxu0 %v311
      %v453 = vpop.f32.mrb[0].mxu0
      %v454 = vadd.f32 0.0, %v453
      %v455 = vpop.f32.mrb[0].mxu0
      %456 = vmatprep.mubr.f32.mxu0 %v351
      %457 = vmatmul.mubr.f32.gmra.mrb[0].mxu0 %v315
      %v458 = vpop.f32.mrb[0].mxu0
      %v459 = vadd.f32 0.0, %v458
      %v460 = vpop.f32.mrb[0].mxu0
      %461 = vmatprep.mubr.f32.mxu0 %v353
      %462 = vmatmul.mubr.f32.gmra.mrb[0].mxu0 %v319
      %v463 = vpop.f32.mrb[0].mxu0
      %v464 = vadd.f32 0.0, %v463
      %v465 = vpop.f32.mrb[0].mxu0
      %466 = vmatprep.mubr.f32.mxu0 %v355
      %467 = vmatmul.mubr.f32.gmra.mrb[0].mxu0 %v323
      %v468 = vpop.f32.mrb[0].mxu0
      %v469 = vadd.f32 0.0, %v468
      %v470 = vpop.f32.mrb[0].mxu0
      %471 = vdwg.mxu0
      %v473 = vsel %vm336, %v172, 0
      %v476 = vsel %vm336, %v174, 0
      %v479 = vsel %vm336, %v176, 0
      %v482 = vsel %vm336, %v178, 0
      %v485 = vsel %vm336, %v180, 0
      %v488 = vsel %vm336, %v182, 0
      %v491 = vsel %vm336, %v184, 0
      %v494 = vsel %vm336, %v186, 0
      %v497 = vsel %vm336, %v188, 0
      %v500 = vsel %vm336, %v190, 0
      %502 = vmatprep.subr.mxu0 0.0
      %503 = vmatpush1.msra.mxu0 %v191
      %504 = vmatprep.subr.mxu0 0.0
      %505 = vmatpush1.msra.mxu0 %v192
      %506 = vmatprep.subr.mxu0 0.0
      %507 = vmatpush1.msra.mxu0 %v193
      %508 = vmatprep.subr.mxu0 0.0
      %509 = vmatpush1.msra.mxu0 %v194
      %510 = vmatprep.subr.mxu0 0.0
      %511 = vmatpush1.msra.mxu0 %v195
      %512 = vmatprep.subr.mxu0 0.0
      %513 = vmatpush1.msra.mxu0 %v196
      %514 = vmatprep.subr.mxu0 0.0
      %515 = vmatpush1.msra.mxu0 %v197
      %516 = vmatprep.subr.mxu0 0.0
      %517 = vmatpush1.msra.mxu0 %v198
      %518 = vmatprep.subr.mxu0 0.0
      %519 = vmatpush1.msra.mxu0 %v199
      %520 = vmatprep.subr.mxu0 0.0
      %521 = vmatpush1.msra.mxu0 %v200
      %522 = vmatprep.subr.mxu0 0.0
      %523 = vmatpush1.msra.mxu0 %v201
      %524 = vmatprep.subr.mxu0 0.0
      %525 = vmatpush1.msra.mxu0 %v202
      %526 = vmatprep.subr.mxu0 0.0
      %527 = vmatpush1.msra.mxu0 %v203
      %528 = vmatprep.subr.mxu0 0.0
      %529 = vmatpush1.msra.mxu0 %v204
      %530 = vmatprep.subr.mxu0 0.0
      %531 = vmatpush1.msra.mxu0 %v205
      %532 = vmatprep.subr.mxu0 0.0
      %533 = vmatpush1.msra.mxu0 %v206
      %534 = vmatprep.subr.mxu0 0.0
      %535 = vmatpush1.msra.mxu0 %v207
      %536 = vmatprep.subr.mxu0 0.0
      %537 = vmatpush1.msra.mxu0 %v208
      %538 = vmatprep.subr.mxu0 0.0
      %539 = vmatpush1.msra.mxu0 %v209
      %540 = vmatprep.subr.mxu0 0.0
      %541 = vmatpush1.msra.mxu0 %v210
      %542 = vmatprep.subr.mxu0 0.0
      %543 = vmatpush1.msra.mxu0 %v211
      %544 = vmatprep.subr.mxu0 0.0
      %545 = vmatpush1.msra.mxu0 %v212
      %546 = vmatprep.subr.mxu0 0.0
      %547 = vmatpush1.msra.mxu0 %v213
      %548 = vmatprep.subr.mxu0 0.0
      %549 = vmatpush1.msra.mxu0 %v214
      %550 = vmatprep.subr.mxu0 0.0
      %551 = vmatpush1.msra.mxu0 0.0
      %552 = vmatprep.subr.mxu0 0.0
      %553 = vmatpush1.msra.mxu0 0.0
      %554 = vmatprep.subr.mxu0 0.0
      %555 = vmatpush1.msra.mxu0 0.0
      %556 = vmatprep.subr.mxu0 0.0
      %557 = vmatpush1.msra.mxu0 0.0
      %558 = vmatprep.subr.mxu0 0.0
      %559 = vmatpush1.msra.mxu0 0.0
      %560 = vmatprep.subr.mxu0 0.0
      %561 = vmatpush1.msra.mxu0 0.0
      %562 = vmatprep.subr.mxu0 0.0
      %563 = vmatpush1.msra.mxu0 0.0
      %564 = vmatprep.subr.mxu0 0.0
      %565 = vmatpush1.msra.mxu0 0.0
      %566 = vmatprep.mubr.f32.mxu0 %v473
      %567 = vmatmul.mubr.f32.gmra.mrb[0].mxu0 %v171
      %v568 = vpop.f32.mrb[0].mxu0
      %v569 = vadd.f32 %v424, %v568
      %v570 = vpop.f32.mrb[0].mxu0
      %571 = vmatprep.mubr.f32.mxu0 %v476
      %572 = vmatmul.mubr.f32.gmra.mrb[0].mxu0 %v173
      %v573 = vpop.f32.mrb[0].mxu0
      %v574 = vadd.f32 %v429, %v573
      %v575 = vpop.f32.mrb[0].mxu0
      %576 = vmatprep.mubr.f32.mxu0 %v479
      %577 = vmatmul.mubr.f32.gmra.mrb[0].mxu0 %v175
      %v578 = vpop.f32.mrb[0].mxu0
      %v579 = vadd.f32 %v434, %v578
      %v580 = vpop.f32.mrb[0].mxu0
      %581 = vmatprep.mubr.f32.mxu0 %v482
      %582 = vmatmul.mubr.f32.gmra.mrb[0].mxu0 %v177
      %v583 = vpop.f32.mrb[0].mxu0
      %v584 = vadd.f32 %v439, %v583
      %v585 = vpop.f32.mrb[0].mxu0
      %586 = vmatprep.mubr.f32.mxu0 %v485
      %587 = vmatmul.mubr.f32.gmra.mrb[0].mxu0 %v179
      %v588 = vpop.f32.mrb[0].mxu0
      %v589 = vadd.f32 %v444, %v588
      %v590 = vpop.f32.mrb[0].mxu0
      %591 = vmatprep.mubr.f32.mxu0 %v488
      %592 = vmatmul.mubr.f32.gmra.mrb[0].mxu0 %v181
      %v593 = vpop.f32.mrb[0].mxu0
      %v594 = vadd.f32 %v449, %v593
      %v595 = vpop.f32.mrb[0].mxu0
      %596 = vmatprep.mubr.f32.mxu0 %v491
      %597 = vmatmul.mubr.f32.gmra.mrb[0].mxu0 %v183
      %v598 = vpop.f32.mrb[0].mxu0
      %v599 = vadd.f32 %v454, %v598
      %v600 = vpop.f32.mrb[0].mxu0
      %601 = vmatprep.mubr.f32.mxu0 %v494
      %602 = vmatmul.mubr.f32.gmra.mrb[0].mxu0 %v185
      %v603 = vpop.f32.mrb[0].mxu0
      %v604 = vadd.f32 %v459, %v603
      %v605 = vpop.f32.mrb[0].mxu0
      %606 = vmatprep.mubr.f32.mxu0 %v497
      %607 = vmatmul.mubr.f32.gmra.mrb[0].mxu0 %v187
      %v608 = vpop.f32.mrb[0].mxu0
      %v609 = vadd.f32 %v464, %v608
      %v610 = vpop.f32.mrb[0].mxu0
      %611 = vmatprep.mubr.f32.mxu0 %v500
      %612 = vmatmul.mubr.f32.gmra.mrb[0].mxu0 %v189
      %v613 = vpop.f32.mrb[0].mxu0
      %v614 = vadd.f32 %v469, %v613
      %v615 = vpop.f32.mrb[0].mxu0
      %616 = vdwg.mxu0
      %v617 = vld [vmem:[%s165] sm:$0xfe]
      %v618 = vld [vmem:[%s165 + $0x8] sm:$0xfe]
      %v619 = vld [vmem:[%s165 + $0x10] sm:$0xff]
      %v620 = vld [vmem:[%s165 + $0x18] sm:$0xff]
      %v621 = vld [vmem:[%s165 + $0x20] sm:$0xff]
      %v622 = vld [vmem:[%s165 + $0x28] sm:$0xff]
      %v623 = vld [vmem:[%s165 + $0x30] sm:$0xff]
      %v624 = vld [vmem:[%s165 + $0x38] sm:$0xff]
      %v625 = vld [vmem:[%s165 + $0x40] sm:$0xff]
      %v626 = vld [vmem:[%s165 + $0x48] sm:$0xff]
      %v627 = vld [vmem:[%s165 + $0x50] sm:$0xff]
      %v628 = vld [vmem:[%s165 + $0x58] sm:$0xff]
      %v629 = vld [vmem:[%s165 + $0x60] sm:$0xff]
      %v630 = vld [vmem:[%s165 + $0x68] sm:$0xff]
      %v631 = vld [vmem:[%s165 + $0x70] sm:$0xff]
      %v632 = vld [vmem:[%s165 + $0x78] sm:$0xff]
      %v633 = vld [vmem:[%s165 + $0x80] sm:$0xff]
      %v634 = vld [vmem:[%s165 + $0x88] sm:$0xff]
      %v635 = vld [vmem:[%s165 + $0x90] sm:$0xff]
      %v636 = vld [vmem:[%s165 + $0x98] sm:$0xff]
      %v637 = vld [vmem:[%s165 + $0xa0] sm:$0x1]
      %v638 = vld [vmem:[%s165 + $0xa8] sm:$0x1]
      %v639 = vld [vmem:[%s1 + $0x180] sm:$0xff]
      %v640 = vld [vmem:[%s1 + $0x188] sm:$0xff]
      %v641 = vld [vmem:[%s1 + $0x190] sm:$0xff]
      %v642 = vld [vmem:[%s1 + $0x198] sm:$0xff]
      %v643 = vld [vmem:[%s1 + $0x1a0] sm:$0xff]
      %v644 = vld [vmem:[%s1 + $0x1a8] sm:$0xff]
      %v645 = vld [vmem:[%s1 + $0x1b0] sm:$0xff]
      %v646 = vld [vmem:[%s1 + $0x1b8] sm:$0xff]
      %v647 = vld [vmem:[%s1 + $0x1c0] sm:$0xff]
      %v648 = vld [vmem:[%s1 + $0x1c8] sm:$0xff]
      %v649 = vld [vmem:[%s1 + $0x1d0] sm:$0xff]
      %v650 = vld [vmem:[%s1 + $0x1d8] sm:$0xff]
      %v651 = vld [vmem:[%s1 + $0x1e0] sm:$0xff]
      %v652 = vld [vmem:[%s1 + $0x1e8] sm:$0xff]
      %v653 = vld [vmem:[%s1 + $0x1f0] sm:$0xff]
      %v654 = vld [vmem:[%s1 + $0x1f8] sm:$0xff]
      %v655 = vld [vmem:[%s1 + $0x200] sm:$0xff]
      %v656 = vld [vmem:[%s1 + $0x208] sm:$0xff]
      %v657 = vld [vmem:[%s1 + $0x210] sm:$0xff]
      %v658 = vld [vmem:[%s1 + $0x218] sm:$0xff]
      %v659 = vld [vmem:[%s1 + $0x220] sm:$0xff]
      %v660 = vld [vmem:[%s1 + $0x228] sm:$0xff]
      %v661 = vld [vmem:[%s1 + $0x230] sm:$0xff]
      %v662 = vld [vmem:[%s1 + $0x238] sm:$0xff]
      %vm685 = vcmask 1046528
      %v686 = vrot.slane %v617, 1
      %v687 = vrot.slane %v619, 1
      %v688 = vsel %vm685, %v686, %v687
      %v689 = vrot.slane %v618, 1
      %v690 = vrot.slane %v620, 1
      %v691 = vsel %vm685, %v689, %v690
      %v692 = vrot.slane %v621, 1
      %v693 = vsel %vm685, %v687, %v692
      %v694 = vrot.slane %v622, 1
      %v695 = vsel %vm685, %v690, %v694
      %v696 = vrot.slane %v623, 1
      %v697 = vsel %vm685, %v692, %v696
      %v698 = vrot.slane %v624, 1
      %v699 = vsel %vm685, %v694, %v698
      %v700 = vrot.slane %v625, 1
      %v701 = vsel %vm685, %v696, %v700
      %v702 = vrot.slane %v626, 1
      %v703 = vsel %vm685, %v698, %v702
      %v704 = vrot.slane %v627, 1
      %v705 = vsel %vm685, %v700, %v704
      %v706 = vrot.slane %v628, 1
      %v707 = vsel %vm685, %v702, %v706
      %v708 = vrot.slane %v629, 1
      %v709 = vsel %vm685, %v704, %v708
      %v710 = vrot.slane %v630, 1
      %v711 = vsel %vm685, %v706, %v710
      %v712 = vrot.slane %v631, 1
      %v713 = vsel %vm685, %v708, %v712
      %v714 = vrot.slane %v632, 1
      %v715 = vsel %vm685, %v710, %v714
      %v716 = vrot.slane %v633, 1
      %v717 = vsel %vm685, %v712, %v716
      %v718 = vrot.slane %v634, 1
      %v719 = vsel %vm685, %v714, %v718
      %v720 = vrot.slane %v635, 1
      %v721 = vsel %vm685, %v716, %v720
      %v722 = vrot.slane %v636, 1
      %v723 = vsel %vm685, %v718, %v722
      %v724 = vrot.slane %v637, 1
      %v725 = vsel %vm685, %v720, %v724
      %v726 = vrot.slane %v638, 1
      %v727 = vsel %vm685, %v722, %v726
      %v738 = vsel %vm336, %v691, 0
      %v740 = vsel %vm336, %v695, 0
      %v742 = vsel %vm336, %v699, 0
      %v744 = vsel %vm336, %v703, 0
      %v746 = vsel %vm336, %v707, 0
      %v748 = vsel %vm336, %v711, 0
      %v750 = vsel %vm336, %v715, 0
      %v752 = vsel %vm336, %v719, 0
      %v754 = vsel %vm336, %v723, 0
      %v756 = vsel %vm336, %v727, 0
      %758 = vmatprep.subr.mxu0 0.0
      %759 = vmatpush1.msra.mxu0 %v639
      %760 = vmatprep.subr.mxu0 0.0
      %761 = vmatpush1.msra.mxu0 %v640
      %762 = vmatprep.subr.mxu0 0.0
      %763 = vmatpush1.msra.mxu0 %v641
      %764 = vmatprep.subr.mxu0 0.0
      %765 = vmatpush1.msra.mxu0 %v642
      %766 = vmatprep.subr.mxu0 0.0
      %767 = vmatpush1.msra.mxu0 %v643
      %768 = vmatprep.subr.mxu0 0.0
      %769 = vmatpush1.msra.mxu0 %v644
      %770 = vmatprep.subr.mxu0 0.0
      %771 = vmatpush1.msra.mxu0 %v645
      %772 = vmatprep.subr.mxu0 0.0
      %773 = vmatpush1.msra.mxu0 %v646
      %774 = vmatprep.subr.mxu0 0.0
      %775 = vmatpush1.msra.mxu0 %v647
      %776 = vmatprep.subr.mxu0 0.0
      %777 = vmatpush1.msra.mxu0 %v648
      %778 = vmatprep.subr.mxu0 0.0
      %779 = vmatpush1.msra.mxu0 %v649
      %780 = vmatprep.subr.mxu0 0.0
      %781 = vmatpush1.msra.mxu0 %v650
      %782 = vmatprep.subr.mxu0 0.0
      %783 = vmatpush1.msra.mxu0 %v651
      %784 = vmatprep.subr.mxu0 0.0
      %785 = vmatpush1.msra.mxu0 %v652
      %786 = vmatprep.subr.mxu0 0.0
      %787 = vmatpush1.msra.mxu0 %v653
      %788 = vmatprep.subr.mxu0 0.0
      %789 = vmatpush1.msra.mxu0 %v654
      %790 = vmatprep.subr.mxu0 0.0
      %791 = vmatpush1.msra.mxu0 %v655
      %792 = vmatprep.subr.mxu0 0.0
      %793 = vmatpush1.msra.mxu0 %v656
      %794 = vmatprep.subr.mxu0 0.0
      %795 = vmatpush1.msra.mxu0 %v657
      %796 = vmatprep.subr.mxu0 0.0
      %797 = vmatpush1.msra.mxu0 %v658
      %798 = vmatprep.subr.mxu0 0.0
      %799 = vmatpush1.msra.mxu0 %v659
      %800 = vmatprep.subr.mxu0 0.0
      %801 = vmatpush1.msra.mxu0 %v660
      %802 = vmatprep.subr.mxu0 0.0
      %803 = vmatpush1.msra.mxu0 %v661
      %804 = vmatprep.subr.mxu0 0.0
      %805 = vmatpush1.msra.mxu0 %v662
      %806 = vmatprep.subr.mxu0 0.0
      %807 = vmatpush1.msra.mxu0 0.0
      %808 = vmatprep.subr.mxu0 0.0
      %809 = vmatpush1.msra.mxu0 0.0
      %810 = vmatprep.subr.mxu0 0.0
      %811 = vmatpush1.msra.mxu0 0.0
      %812 = vmatprep.subr.mxu0 0.0
      %813 = vmatpush1.msra.mxu0 0.0
      %814 = vmatprep.subr.mxu0 0.0
      %815 = vmatpush1.msra.mxu0 0.0
      %816 = vmatprep.subr.mxu0 0.0
      %817 = vmatpush1.msra.mxu0 0.0
      %818 = vmatprep.subr.mxu0 0.0
      %819 = vmatpush1.msra.mxu0 0.0
      %820 = vmatprep.subr.mxu0 0.0
      %821 = vmatpush1.msra.mxu0 0.0
      %822 = vmatprep.mubr.f32.mxu0 %v738
      %823 = vmatmul.mubr.f32.gmra.mrb[0].mxu0 %v688
      %v824 = vpop.f32.mrb[0].mxu0
      %v825 = vadd.f32 0.0, %v824
      %v826 = vpop.f32.mrb[0].mxu0
      %827 = vmatprep.mubr.f32.mxu0 %v740
      %828 = vmatmul.mubr.f32.gmra.mrb[0].mxu0 %v693
      %v829 = vpop.f32.mrb[0].mxu0
      %v830 = vadd.f32 0.0, %v829
      %v831 = vpop.f32.mrb[0].mxu0
      %832 = vmatprep.mubr.f32.mxu0 %v742
      %833 = vmatmul.mubr.f32.gmra.mrb[0].mxu0 %v697
      %v834 = vpop.f32.mrb[0].mxu0
      %v835 = vadd.f32 0.0, %v834
      %v836 = vpop.f32.mrb[0].mxu0
      %837 = vmatprep.mubr.f32.mxu0 %v744
      %838 = vmatmul.mubr.f32.gmra.mrb[0].mxu0 %v701
      %v839 = vpop.f32.mrb[0].mxu0
      %v840 = vadd.f32 0.0, %v839
      %v841 = vpop.f32.mrb[0].mxu0
      %842 = vmatprep.mubr.f32.mxu0 %v746
      %843 = vmatmul.mubr.f32.gmra.mrb[0].mxu0 %v705
      %v844 = vpop.f32.mrb[0].mxu0
      %v845 = vadd.f32 0.0, %v844
      %v846 = vpop.f32.mrb[0].mxu0
      %847 = vmatprep.mubr.f32.mxu0 %v748
      %848 = vmatmul.mubr.f32.gmra.mrb[0].mxu0 %v709
      %v849 = vpop.f32.mrb[0].mxu0
      %v850 = vadd.f32 0.0, %v849
      %v851 = vpop.f32.mrb[0].mxu0
      %852 = vmatprep.mubr.f32.mxu0 %v750
      %853 = vmatmul.mubr.f32.gmra.mrb[0].mxu0 %v713
      %v854 = vpop.f32.mrb[0].mxu0
      %v855 = vadd.f32 0.0, %v854
      %v856 = vpop.f32.mrb[0].mxu0
      %857 = vmatprep.mubr.f32.mxu0 %v752
      %858 = vmatmul.mubr.f32.gmra.mrb[0].mxu0 %v717
      %v859 = vpop.f32.mrb[0].mxu0
      %v860 = vadd.f32 0.0, %v859
      %v861 = vpop.f32.mrb[0].mxu0
      %862 = vmatprep.mubr.f32.mxu0 %v754
      %863 = vmatmul.mubr.f32.gmra.mrb[0].mxu0 %v721
      %v864 = vpop.f32.mrb[0].mxu0
      %v865 = vadd.f32 0.0, %v864
      %v866 = vpop.f32.mrb[0].mxu0
      %867 = vmatprep.mubr.f32.mxu0 %v756
      %868 = vmatmul.mubr.f32.gmra.mrb[0].mxu0 %v725
      %v869 = vpop.f32.mrb[0].mxu0
      %v870 = vadd.f32 0.0, %v869
      %v871 = vpop.f32.mrb[0].mxu0
      %872 = vdwg.mxu0
      %v873 = vadd.f32 %v569, %v825
      %v874 = vadd.f32 %v574, %v830
      %v875 = vadd.f32 %v579, %v835
      %v876 = vadd.f32 %v584, %v840
      %v877 = vadd.f32 %v589, %v845
      %v878 = vadd.f32 %v594, %v850
      %v879 = vadd.f32 %v599, %v855
      %v880 = vadd.f32 %v604, %v860
      %v881 = vadd.f32 %v609, %v865
      %v882 = vadd.f32 %v614, %v870
      %v883 = vld [vmem:[%s165 + $0x190] sm:$0xff]
      %v884 = vld [vmem:[%s165 + $0x198] sm:$0xff]
      %v885 = vld [vmem:[%s165 + $0x1a0] sm:$0xff]
      %v886 = vld [vmem:[%s165 + $0x1a8] sm:$0xff]
      %v887 = vld [vmem:[%s165 + $0x1b0] sm:$0xff]
      %v888 = vld [vmem:[%s165 + $0x1b8] sm:$0xff]
      %v889 = vld [vmem:[%s165 + $0x1c0] sm:$0xff]
      %v890 = vld [vmem:[%s165 + $0x1c8] sm:$0xff]
      %v891 = vld [vmem:[%s165 + $0x1d0] sm:$0xff]
      %v892 = vld [vmem:[%s165 + $0x1d8] sm:$0xff]
      %v893 = vld [vmem:[%s165 + $0x1e0] sm:$0xff]
      %v894 = vld [vmem:[%s165 + $0x1e8] sm:$0xff]
      %v895 = vld [vmem:[%s165 + $0x1f0] sm:$0xff]
      %v896 = vld [vmem:[%s165 + $0x1f8] sm:$0xff]
      %v897 = vld [vmem:[%s165 + $0x200] sm:$0xff]
      %v898 = vld [vmem:[%s165 + $0x208] sm:$0xff]
      %v899 = vld [vmem:[%s165 + $0x210] sm:$0xff]
      %v900 = vld [vmem:[%s165 + $0x218] sm:$0xff]
      %v901 = vld [vmem:[%s165 + $0x220] sm:$0xff]
      %v902 = vld [vmem:[%s165 + $0x228] sm:$0xff]
      %v903 = vld [vmem:[%s1 + $0x240] sm:$0xff]
      %v904 = vld [vmem:[%s1 + $0x248] sm:$0xff]
      %v905 = vld [vmem:[%s1 + $0x250] sm:$0xff]
      %v906 = vld [vmem:[%s1 + $0x258] sm:$0xff]
      %v907 = vld [vmem:[%s1 + $0x260] sm:$0xff]
      %v908 = vld [vmem:[%s1 + $0x268] sm:$0xff]
      %v909 = vld [vmem:[%s1 + $0x270] sm:$0xff]
      %v910 = vld [vmem:[%s1 + $0x278] sm:$0xff]
      %v911 = vld [vmem:[%s1 + $0x280] sm:$0xff]
      %v912 = vld [vmem:[%s1 + $0x288] sm:$0xff]
      %v913 = vld [vmem:[%s1 + $0x290] sm:$0xff]
      %v914 = vld [vmem:[%s1 + $0x298] sm:$0xff]
      %v915 = vld [vmem:[%s1 + $0x2a0] sm:$0xff]
      %v916 = vld [vmem:[%s1 + $0x2a8] sm:$0xff]
      %v917 = vld [vmem:[%s1 + $0x2b0] sm:$0xff]
      %v918 = vld [vmem:[%s1 + $0x2b8] sm:$0xff]
      %v919 = vld [vmem:[%s1 + $0x2c0] sm:$0xff]
      %v920 = vld [vmem:[%s1 + $0x2c8] sm:$0xff]
      %v921 = vld [vmem:[%s1 + $0x2d0] sm:$0xff]
      %v922 = vld [vmem:[%s1 + $0x2d8] sm:$0xff]
      %v923 = vld [vmem:[%s1 + $0x2e0] sm:$0xff]
      %v924 = vld [vmem:[%s1 + $0x2e8] sm:$0xff]
      %v925 = vld [vmem:[%s1 + $0x2f0] sm:$0xff]
      %v926 = vld [vmem:[%s1 + $0x2f8] sm:$0xff]
      %v928 = vsel %vm336, %v884, 0
      %v931 = vsel %vm336, %v886, 0
      %v934 = vsel %vm336, %v888, 0
      %v937 = vsel %vm336, %v890, 0
      %v940 = vsel %vm336, %v892, 0
      %v943 = vsel %vm336, %v894, 0
      %v946 = vsel %vm336, %v896, 0
      %v949 = vsel %vm336, %v898, 0
      %v952 = vsel %vm336, %v900, 0
      %v955 = vsel %vm336, %v902, 0
      %957 = vmatprep.subr.mxu0 0.0
      %958 = vmatpush1.msra.mxu0 %v903
      %959 = vmatprep.subr.mxu0 0.0
      %960 = vmatpush1.msra.mxu0 %v904
      %961 = vmatprep.subr.mxu0 0.0
      %962 = vmatpush1.msra.mxu0 %v905
      %963 = vmatprep.subr.mxu0 0.0
      %964 = vmatpush1.msra.mxu0 %v906
      %965 = vmatprep.subr.mxu0 0.0
      %966 = vmatpush1.msra.mxu0 %v907
      %967 = vmatprep.subr.mxu0 0.0
      %968 = vmatpush1.msra.mxu0 %v908
      %969 = vmatprep.subr.mxu0 0.0
      %970 = vmatpush1.msra.mxu0 %v909
      %971 = vmatprep.subr.mxu0 0.0
      %972 = vmatpush1.msra.mxu0 %v910
      %973 = vmatprep.subr.mxu0 0.0
      %974 = vmatpush1.msra.mxu0 %v911
      %975 = vmatprep.subr.mxu0 0.0
      %976 = vmatpush1.msra.mxu0 %v912
      %977 = vmatprep.subr.mxu0 0.0
      %978 = vmatpush1.msra.mxu0 %v913
      %979 = vmatprep.subr.mxu0 0.0
      %980 = vmatpush1.msra.mxu0 %v914
      %981 = vmatprep.subr.mxu0 0.0
      %982 = vmatpush1.msra.mxu0 %v915
      %983 = vmatprep.subr.mxu0 0.0
      %984 = vmatpush1.msra.mxu0 %v916
      %985 = vmatprep.subr.mxu0 0.0
      %986 = vmatpush1.msra.mxu0 %v917
      %987 = vmatprep.subr.mxu0 0.0
      %988 = vmatpush1.msra.mxu0 %v918
      %989 = vmatprep.subr.mxu0 0.0
      %990 = vmatpush1.msra.mxu0 %v919
      %991 = vmatprep.subr.mxu0 0.0
      %992 = vmatpush1.msra.mxu0 %v920
      %993 = vmatprep.subr.mxu0 0.0
      %994 = vmatpush1.msra.mxu0 %v921
      %995 = vmatprep.subr.mxu0 0.0
      %996 = vmatpush1.msra.mxu0 %v922
      %997 = vmatprep.subr.mxu0 0.0
      %998 = vmatpush1.msra.mxu0 %v923
      %999 = vmatprep.subr.mxu0 0.0
      %1000 = vmatpush1.msra.mxu0 %v924
      %1001 = vmatprep.subr.mxu0 0.0
      %1002 = vmatpush1.msra.mxu0 %v925
      %1003 = vmatprep.subr.mxu0 0.0
      %1004 = vmatpush1.msra.mxu0 %v926
      %1005 = vmatprep.subr.mxu0 0.0
      %1006 = vmatpush1.msra.mxu0 0.0
      %1007 = vmatprep.subr.mxu0 0.0
      %1008 = vmatpush1.msra.mxu0 0.0
      %1009 = vmatprep.subr.mxu0 0.0
      %1010 = vmatpush1.msra.mxu0 0.0
      %1011 = vmatprep.subr.mxu0 0.0
      %1012 = vmatpush1.msra.mxu0 0.0
      %1013 = vmatprep.subr.mxu0 0.0
      %1014 = vmatpush1.msra.mxu0 0.0
      %1015 = vmatprep.subr.mxu0 0.0
      %1016 = vmatpush1.msra.mxu0 0.0
      %1017 = vmatprep.subr.mxu0 0.0
      %1018 = vmatpush1.msra.mxu0 0.0
      %1019 = vmatprep.subr.mxu0 0.0
      %1020 = vmatpush1.msra.mxu0 0.0
      %1021 = vmatprep.mubr.f32.mxu0 %v928
      %1022 = vmatmul.mubr.f32.gmra.mrb[0].mxu0 %v883
      %v1023 = vpop.f32.mrb[0].mxu0
      %v1024 = vadd.f32 0.0, %v1023
      %v1025 = vpop.f32.mrb[0].mxu0
      %1026 = vmatprep.mubr.f32.mxu0 %v931
      %1027 = vmatmul.mubr.f32.gmra.mrb[0].mxu0 %v885
      %v1028 = vpop.f32.mrb[0].mxu0
      %v1029 = vadd.f32 0.0, %v1028
      %v1030 = vpop.f32.mrb[0].mxu0
      %1031 = vmatprep.mubr.f32.mxu0 %v934
      %1032 = vmatmul.mubr.f32.gmra.mrb[0].mxu0 %v887
      %v1033 = vpop.f32.mrb[0].mxu0
      %v1034 = vadd.f32 0.0, %v1033
      %v1035 = vpop.f32.mrb[0].mxu0
      %1036 = vmatprep.mubr.f32.mxu0 %v937
      %1037 = vmatmul.mubr.f32.gmra.mrb[0].mxu0 %v889
      %v1038 = vpop.f32.mrb[0].mxu0
      %v1039 = vadd.f32 0.0, %v1038
      %v1040 = vpop.f32.mrb[0].mxu0
      %1041 = vmatprep.mubr.f32.mxu0 %v940
      %1042 = vmatmul.mubr.f32.gmra.mrb[0].mxu0 %v891
      %v1043 = vpop.f32.mrb[0].mxu0
      %v1044 = vadd.f32 0.0, %v1043
      %v1045 = vpop.f32.mrb[0].mxu0
      %1046 = vmatprep.mubr.f32.mxu0 %v943
      %1047 = vmatmul.mubr.f32.gmra.mrb[0].mxu0 %v893
      %v1048 = vpop.f32.mrb[0].mxu0
      %v1049 = vadd.f32 0.0, %v1048
      %v1050 = vpop.f32.mrb[0].mxu0
      %1051 = vmatprep.mubr.f32.mxu0 %v946
      %1052 = vmatmul.mubr.f32.gmra.mrb[0].mxu0 %v895
      %v1053 = vpop.f32.mrb[0].mxu0
      %v1054 = vadd.f32 0.0, %v1053
      %v1055 = vpop.f32.mrb[0].mxu0
      %1056 = vmatprep.mubr.f32.mxu0 %v949
      %1057 = vmatmul.mubr.f32.gmra.mrb[0].mxu0 %v897
      %v1058 = vpop.f32.mrb[0].mxu0
      %v1059 = vadd.f32 0.0, %v1058
      %v1060 = vpop.f32.mrb[0].mxu0
      %1061 = vmatprep.mubr.f32.mxu0 %v952
      %1062 = vmatmul.mubr.f32.gmra.mrb[0].mxu0 %v899
      %v1063 = vpop.f32.mrb[0].mxu0
      %v1064 = vadd.f32 0.0, %v1063
      %v1065 = vpop.f32.mrb[0].mxu0
      %1066 = vmatprep.mubr.f32.mxu0 %v955
      %1067 = vmatmul.mubr.f32.gmra.mrb[0].mxu0 %v901
      %v1068 = vpop.f32.mrb[0].mxu0
      %v1069 = vadd.f32 0.0, %v1068
      %v1070 = vpop.f32.mrb[0].mxu0
      %1071 = vdwg.mxu0
      %v1072 = vadd.f32 %v873, %v1024
      %v1073 = vadd.f32 %v874, %v1029
      %v1074 = vadd.f32 %v875, %v1034
      %v1075 = vadd.f32 %v876, %v1039
      %v1076 = vadd.f32 %v877, %v1044
      %v1077 = vadd.f32 %v878, %v1049
      %v1078 = vadd.f32 %v879, %v1054
      %v1079 = vadd.f32 %v880, %v1059
      %v1080 = vadd.f32 %v881, %v1064
      %v1081 = vadd.f32 %v882, %v1069
      %v1082 = vld [vmem:[%s165 + $0x250] sm:$0xf0]
      %v1083 = vld [vmem:[%s165 + $0x258] sm:$0xf0]
      %v1084 = vld [vmem:[%s165 + $0x260] sm:$0xff]
      %v1085 = vld [vmem:[%s165 + $0x268] sm:$0xff]
      %v1086 = vld [vmem:[%s165 + $0x270] sm:$0xff]
      %v1087 = vld [vmem:[%s165 + $0x278] sm:$0xff]
      %v1088 = vld [vmem:[%s165 + $0x280] sm:$0xff]
      %v1089 = vld [vmem:[%s165 + $0x288] sm:$0xff]
      %v1090 = vld [vmem:[%s165 + $0x290] sm:$0xff]
      %v1091 = vld [vmem:[%s165 + $0x298] sm:$0xff]
      %v1092 = vld [vmem:[%s165 + $0x2a0] sm:$0xff]
      %v1093 = vld [vmem:[%s165 + $0x2a8] sm:$0xff]
      %v1094 = vld [vmem:[%s165 + $0x2b0] sm:$0xff]
      %v1095 = vld [vmem:[%s165 + $0x2b8] sm:$0xff]
      %v1096 = vld [vmem:[%s165 + $0x2c0] sm:$0xff]
      %v1097 = vld [vmem:[%s165 + $0x2c8] sm:$0xff]
      %v1098 = vld [vmem:[%s165 + $0x2d0] sm:$0xff]
      %v1099 = vld [vmem:[%s165 + $0x2d8] sm:$0xff]
      %v1100 = vld [vmem:[%s165 + $0x2e0] sm:$0xff]
      %v1101 = vld [vmem:[%s165 + $0x2e8] sm:$0xff]
      %v1102 = vld [vmem:[%s165 + $0x2f0] sm:$0xf]
      %v1103 = vld [vmem:[%s165 + $0x2f8] sm:$0xf]
      %v1104 = vld [vmem:[%s1 + $0x300] sm:$0xff]
      %v1105 = vld [vmem:[%s1 + $0x308] sm:$0xff]
      %v1106 = vld [vmem:[%s1 + $0x310] sm:$0xff]
      %v1107 = vld [vmem:[%s1 + $0x318] sm:$0xff]
      %v1108 = vld [vmem:[%s1 + $0x320] sm:$0xff]
      %v1109 = vld [vmem:[%s1 + $0x328] sm:$0xff]
      %v1110 = vld [vmem:[%s1 + $0x330] sm:$0xff]
      %v1111 = vld [vmem:[%s1 + $0x338] sm:$0xff]
      %v1112 = vld [vmem:[%s1 + $0x340] sm:$0xff]
      %v1113 = vld [vmem:[%s1 + $0x348] sm:$0xff]
      %v1114 = vld [vmem:[%s1 + $0x350] sm:$0xff]
      %v1115 = vld [vmem:[%s1 + $0x358] sm:$0xff]
      %v1116 = vld [vmem:[%s1 + $0x360] sm:$0xff]
      %v1117 = vld [vmem:[%s1 + $0x368] sm:$0xff]
      %v1118 = vld [vmem:[%s1 + $0x370] sm:$0xff]
      %v1119 = vld [vmem:[%s1 + $0x378] sm:$0xff]
      %v1120 = vld [vmem:[%s1 + $0x380] sm:$0xff]
      %v1121 = vld [vmem:[%s1 + $0x388] sm:$0xff]
      %v1122 = vld [vmem:[%s1 + $0x390] sm:$0xff]
      %v1123 = vld [vmem:[%s1 + $0x398] sm:$0xff]
      %v1124 = vld [vmem:[%s1 + $0x3a0] sm:$0xff]
      %v1125 = vld [vmem:[%s1 + $0x3a8] sm:$0xff]
      %v1126 = vld [vmem:[%s1 + $0x3b0] sm:$0xff]
      %v1127 = vld [vmem:[%s1 + $0x3b8] sm:$0xff]
      %v1150 = vrot.slane %v1082, 4
      %v1151 = vrot.slane %v1084, 4
      %v1152 = vsel %vm283, %v1150, %v1151
      %v1153 = vrot.slane %v1083, 4
      %v1154 = vrot.slane %v1085, 4
      %v1155 = vsel %vm283, %v1153, %v1154
      %v1156 = vrot.slane %v1086, 4
      %v1157 = vsel %vm283, %v1151, %v1156
      %v1158 = vrot.slane %v1087, 4
      %v1159 = vsel %vm283, %v1154, %v1158
      %v1160 = vrot.slane %v1088, 4
      %v1161 = vsel %vm283, %v1156, %v1160
      %v1162 = vrot.slane %v1089, 4
      %v1163 = vsel %vm283, %v1158, %v1162
      %v1164 = vrot.slane %v1090, 4
      %v1165 = vsel %vm283, %v1160, %v1164
      %v1166 = vrot.slane %v1091, 4
      %v1167 = vsel %vm283, %v1162, %v1166
      %v1168 = vrot.slane %v1092, 4
      %v1169 = vsel %vm283, %v1164, %v1168
      %v1170 = vrot.slane %v1093, 4
      %v1171 = vsel %vm283, %v1166, %v1170
      %v1172 = vrot.slane %v1094, 4
      %v1173 = vsel %vm283, %v1168, %v1172
      %v1174 = vrot.slane %v1095, 4
      %v1175 = vsel %vm283, %v1170, %v1174
      %v1176 = vrot.slane %v1096, 4
      %v1177 = vsel %vm283, %v1172, %v1176
      %v1178 = vrot.slane %v1097, 4
      %v1179 = vsel %vm283, %v1174, %v1178
      %v1180 = vrot.slane %v1098, 4
      %v1181 = vsel %vm283, %v1176, %v1180
      %v1182 = vrot.slane %v1099, 4
      %v1183 = vsel %vm283, %v1178, %v1182
      %v1184 = vrot.slane %v1100, 4
      %v1185 = vsel %vm283, %v1180, %v1184
      %v1186 = vrot.slane %v1101, 4
      %v1187 = vsel %vm283, %v1182, %v1186
      %v1188 = vrot.slane %v1102, 4
      %v1189 = vsel %vm283, %v1184, %v1188
      %v1190 = vrot.slane %v1103, 4
      %v1191 = vsel %vm283, %v1186, %v1190
      %v1202 = vsel %vm336, %v1155, 0
      %v1204 = vsel %vm336, %v1159, 0
      %v1206 = vsel %vm336, %v1163, 0
      %v1208 = vsel %vm336, %v1167, 0
      %v1210 = vsel %vm336, %v1171, 0
      %v1212 = vsel %vm336, %v1175, 0
      %v1214 = vsel %vm336, %v1179, 0
      %v1216 = vsel %vm336, %v1183, 0
      %v1218 = vsel %vm336, %v1187, 0
      %v1220 = vsel %vm336, %v1191, 0
      %1222 = vmatprep.subr.mxu0 0.0
      %1223 = vmatpush1.msra.mxu0 %v1104
      %1224 = vmatprep.subr.mxu0 0.0
      %1225 = vmatpush1.msra.mxu0 %v1105
      %1226 = vmatprep.subr.mxu0 0.0
      %1227 = vmatpush1.msra.mxu0 %v1106
      %1228 = vmatprep.subr.mxu0 0.0
      %1229 = vmatpush1.msra.mxu0 %v1107
      %1230 = vmatprep.subr.mxu0 0.0
      %1231 = vmatpush1.msra.mxu0 %v1108
      %1232 = vmatprep.subr.mxu0 0.0
      %1233 = vmatpush1.msra.mxu0 %v1109
      %1234 = vmatprep.subr.mxu0 0.0
      %1235 = vmatpush1.msra.mxu0 %v1110
      %1236 = vmatprep.subr.mxu0 0.0
      %1237 = vmatpush1.msra.mxu0 %v1111
      %1238 = vmatprep.subr.mxu0 0.0
      %1239 = vmatpush1.msra.mxu0 %v1112
      %1240 = vmatprep.subr.mxu0 0.0
      %1241 = vmatpush1.msra.mxu0 %v1113
      %1242 = vmatprep.subr.mxu0 0.0
      %1243 = vmatpush1.msra.mxu0 %v1114
      %1244 = vmatprep.subr.mxu0 0.0
      %1245 = vmatpush1.msra.mxu0 %v1115
      %1246 = vmatprep.subr.mxu0 0.0
      %1247 = vmatpush1.msra.mxu0 %v1116
      %1248 = vmatprep.subr.mxu0 0.0
      %1249 = vmatpush1.msra.mxu0 %v1117
      %1250 = vmatprep.subr.mxu0 0.0
      %1251 = vmatpush1.msra.mxu0 %v1118
      %1252 = vmatprep.subr.mxu0 0.0
      %1253 = vmatpush1.msra.mxu0 %v1119
      %1254 = vmatprep.subr.mxu0 0.0
      %1255 = vmatpush1.msra.mxu0 %v1120
      %1256 = vmatprep.subr.mxu0 0.0
      %1257 = vmatpush1.msra.mxu0 %v1121
      %1258 = vmatprep.subr.mxu0 0.0
      %1259 = vmatpush1.msra.mxu0 %v1122
      %1260 = vmatprep.subr.mxu0 0.0
      %1261 = vmatpush1.msra.mxu0 %v1123
      %1262 = vmatprep.subr.mxu0 0.0
      %1263 = vmatpush1.msra.mxu0 %v1124
      %1264 = vmatprep.subr.mxu0 0.0
      %1265 = vmatpush1.msra.mxu0 %v1125
      %1266 = vmatprep.subr.mxu0 0.0
      %1267 = vmatpush1.msra.mxu0 %v1126
      %1268 = vmatprep.subr.mxu0 0.0
      %1269 = vmatpush1.msra.mxu0 %v1127
      %1270 = vmatprep.subr.mxu0 0.0
      %1271 = vmatpush1.msra.mxu0 0.0
      %1272 = vmatprep.subr.mxu0 0.0
      %1273 = vmatpush1.msra.mxu0 0.0
      %1274 = vmatprep.subr.mxu0 0.0
      %1275 = vmatpush1.msra.mxu0 0.0
      %1276 = vmatprep.subr.mxu0 0.0
      %1277 = vmatpush1.msra.mxu0 0.0
      %1278 = vmatprep.subr.mxu0 0.0
      %1279 = vmatpush1.msra.mxu0 0.0
      %1280 = vmatprep.subr.mxu0 0.0
      %1281 = vmatpush1.msra.mxu0 0.0
      %1282 = vmatprep.subr.mxu0 0.0
      %1283 = vmatpush1.msra.mxu0 0.0
      %1284 = vmatprep.subr.mxu0 0.0
      %1285 = vmatpush1.msra.mxu0 0.0
      %1286 = vmatprep.mubr.f32.mxu0 %v1202
      %1287 = vmatmul.mubr.f32.gmra.mrb[0].mxu0 %v1152
      %v1288 = vpop.f32.mrb[0].mxu0
      %v1289 = vadd.f32 0.0, %v1288
      %v1290 = vpop.f32.mrb[0].mxu0
      %1291 = vmatprep.mubr.f32.mxu0 %v1204
      %1292 = vmatmul.mubr.f32.gmra.mrb[0].mxu0 %v1157
      %v1293 = vpop.f32.mrb[0].mxu0
      %v1294 = vadd.f32 0.0, %v1293
      %v1295 = vpop.f32.mrb[0].mxu0
      %1296 = vmatprep.mubr.f32.mxu0 %v1206
      %1297 = vmatmul.mubr.f32.gmra.mrb[0].mxu0 %v1161
      %v1298 = vpop.f32.mrb[0].mxu0
      %v1299 = vadd.f32 0.0, %v1298
      %v1300 = vpop.f32.mrb[0].mxu0
      %1301 = vmatprep.mubr.f32.mxu0 %v1208
      %1302 = vmatmul.mubr.f32.gmra.mrb[0].mxu0 %v1165
      %v1303 = vpop.f32.mrb[0].mxu0
      %v1304 = vadd.f32 0.0, %v1303
      %v1305 = vpop.f32.mrb[0].mxu0
      %1306 = vmatprep.mubr.f32.mxu0 %v1210
      %1307 = vmatmul.mubr.f32.gmra.mrb[0].mxu0 %v1169
      %v1308 = vpop.f32.mrb[0].mxu0
      %v1309 = vadd.f32 0.0, %v1308
      %v1310 = vpop.f32.mrb[0].mxu0
      %1311 = vmatprep.mubr.f32.mxu0 %v1212
      %1312 = vmatmul.mubr.f32.gmra.mrb[0].mxu0 %v1173
      %v1313 = vpop.f32.mrb[0].mxu0
      %v1314 = vadd.f32 0.0, %v1313
      %v1315 = vpop.f32.mrb[0].mxu0
      %1316 = vmatprep.mubr.f32.mxu0 %v1214
      %1317 = vmatmul.mubr.f32.gmra.mrb[0].mxu0 %v1177
      %v1318 = vpop.f32.mrb[0].mxu0
      %v1319 = vadd.f32 0.0, %v1318
      %v1320 = vpop.f32.mrb[0].mxu0
      %1321 = vmatprep.mubr.f32.mxu0 %v1216
      %1322 = vmatmul.mubr.f32.gmra.mrb[0].mxu0 %v1181
      %v1323 = vpop.f32.mrb[0].mxu0
      %v1324 = vadd.f32 0.0, %v1323
      %v1325 = vpop.f32.mrb[0].mxu0
      %1326 = vmatprep.mubr.f32.mxu0 %v1218
      %1327 = vmatmul.mubr.f32.gmra.mrb[0].mxu0 %v1185
      %v1328 = vpop.f32.mrb[0].mxu0
      %v1329 = vadd.f32 0.0, %v1328
      %v1330 = vpop.f32.mrb[0].mxu0
      %1331 = vmatprep.mubr.f32.mxu0 %v1220
      %1332 = vmatmul.mubr.f32.gmra.mrb[0].mxu0 %v1189
      %v1333 = vpop.f32.mrb[0].mxu0
      %v1334 = vadd.f32 0.0, %v1333
      %v1335 = vpop.f32.mrb[0].mxu0
      %1336 = vdwg.mxu0
      %v1337 = vadd.f32 %v1072, %v1289
      %v1338 = vadd.f32 %v1073, %v1294
      %v1339 = vadd.f32 %v1074, %v1299
      %v1340 = vadd.f32 %v1075, %v1304
      %v1341 = vadd.f32 %v1076, %v1309
      %v1342 = vadd.f32 %v1077, %v1314
      %v1343 = vadd.f32 %v1078, %v1319
      %v1344 = vadd.f32 %v1079, %v1324
      %v1345 = vadd.f32 %v1080, %v1329
      %v1346 = vadd.f32 %v1081, %v1334
      %v1347 = vld [vmem:[%s165 + $0x190] sm:$0xfe]
      %v1348 = vld [vmem:[%s165 + $0x198] sm:$0xfe]
      %v1349 = vld [vmem:[%s165 + $0x1a0] sm:$0xff]
      %v1350 = vld [vmem:[%s165 + $0x1a8] sm:$0xff]
      %v1351 = vld [vmem:[%s165 + $0x1b0] sm:$0xff]
      %v1352 = vld [vmem:[%s165 + $0x1b8] sm:$0xff]
      %v1353 = vld [vmem:[%s165 + $0x1c0] sm:$0xff]
      %v1354 = vld [vmem:[%s165 + $0x1c8] sm:$0xff]
      %v1355 = vld [vmem:[%s165 + $0x1d0] sm:$0xff]
      %v1356 = vld [vmem:[%s165 + $0x1d8] sm:$0xff]
      %v1357 = vld [vmem:[%s165 + $0x1e0] sm:$0xff]
      %v1358 = vld [vmem:[%s165 + $0x1e8] sm:$0xff]
      %v1359 = vld [vmem:[%s165 + $0x1f0] sm:$0xff]
      %v1360 = vld [vmem:[%s165 + $0x1f8] sm:$0xff]
      %v1361 = vld [vmem:[%s165 + $0x200] sm:$0xff]
      %v1362 = vld [vmem:[%s165 + $0x208] sm:$0xff]
      %v1363 = vld [vmem:[%s165 + $0x210] sm:$0xff]
      %v1364 = vld [vmem:[%s165 + $0x218] sm:$0xff]
      %v1365 = vld [vmem:[%s165 + $0x220] sm:$0xff]
      %v1366 = vld [vmem:[%s165 + $0x228] sm:$0xff]
      %v1367 = vld [vmem:[%s165 + $0x230] sm:$0x1]
      %v1368 = vld [vmem:[%s165 + $0x238] sm:$0x1]
      %v1369 = vld [vmem:[%s1 + $0x3c0] sm:$0xff]
      %v1370 = vld [vmem:[%s1 + $0x3c8] sm:$0xff]
      %v1371 = vld [vmem:[%s1 + $0x3d0] sm:$0xff]
      %v1372 = vld [vmem:[%s1 + $0x3d8] sm:$0xff]
      %v1373 = vld [vmem:[%s1 + $0x3e0] sm:$0xff]
      %v1374 = vld [vmem:[%s1 + $0x3e8] sm:$0xff]
      %v1375 = vld [vmem:[%s1 + $0x3f0] sm:$0xff]
      %v1376 = vld [vmem:[%s1 + $0x3f8] sm:$0xff]
      %v1377 = vld [vmem:[%s1 + $0x400] sm:$0xff]
      %v1378 = vld [vmem:[%s1 + $0x408] sm:$0xff]
      %v1379 = vld [vmem:[%s1 + $0x410] sm:$0xff]
      %v1380 = vld [vmem:[%s1 + $0x418] sm:$0xff]
      %v1381 = vld [vmem:[%s1 + $0x420] sm:$0xff]
      %v1382 = vld [vmem:[%s1 + $0x428] sm:$0xff]
      %v1383 = vld [vmem:[%s1 + $0x430] sm:$0xff]
      %v1384 = vld [vmem:[%s1 + $0x438] sm:$0xff]
      %v1385 = vld [vmem:[%s1 + $0x440] sm:$0xff]
      %v1386 = vld [vmem:[%s1 + $0x448] sm:$0xff]
      %v1387 = vld [vmem:[%s1 + $0x450] sm:$0xff]
      %v1388 = vld [vmem:[%s1 + $0x458] sm:$0xff]
      %v1389 = vld [vmem:[%s1 + $0x460] sm:$0xff]
      %v1390 = vld [vmem:[%s1 + $0x468] sm:$0xff]
      %v1391 = vld [vmem:[%s1 + $0x470] sm:$0xff]
      %v1392 = vld [vmem:[%s1 + $0x478] sm:$0xff]
      %v1415 = vrot.slane %v1347, 1
      %v1416 = vrot.slane %v1349, 1
      %v1417 = vsel %vm685, %v1415, %v1416
      %v1418 = vrot.slane %v1348, 1
      %v1419 = vrot.slane %v1350, 1
      %v1420 = vsel %vm685, %v1418, %v1419
      %v1421 = vrot.slane %v1351, 1
      %v1422 = vsel %vm685, %v1416, %v1421
      %v1423 = vrot.slane %v1352, 1
      %v1424 = vsel %vm685, %v1419, %v1423
      %v1425 = vrot.slane %v1353, 1
      %v1426 = vsel %vm685, %v1421, %v1425
      %v1427 = vrot.slane %v1354, 1
      %v1428 = vsel %vm685, %v1423, %v1427
      %v1429 = vrot.slane %v1355, 1
      %v1430 = vsel %vm685, %v1425, %v1429
      %v1431 = vrot.slane %v1356, 1
      %v1432 = vsel %vm685, %v1427, %v1431
      %v1433 = vrot.slane %v1357, 1
      %v1434 = vsel %vm685, %v1429, %v1433
      %v1435 = vrot.slane %v1358, 1
      %v1436 = vsel %vm685, %v1431, %v1435
      %v1437 = vrot.slane %v1359, 1
      %v1438 = vsel %vm685, %v1433, %v1437
      %v1439 = vrot.slane %v1360, 1
      %v1440 = vsel %vm685, %v1435, %v1439
      %v1441 = vrot.slane %v1361, 1
      %v1442 = vsel %vm685, %v1437, %v1441
      %v1443 = vrot.slane %v1362, 1
      %v1444 = vsel %vm685, %v1439, %v1443
      %v1445 = vrot.slane %v1363, 1
      %v1446 = vsel %vm685, %v1441, %v1445
      %v1447 = vrot.slane %v1364, 1
      %v1448 = vsel %vm685, %v1443, %v1447
      %v1449 = vrot.slane %v1365, 1
      %v1450 = vsel %vm685, %v1445, %v1449
      %v1451 = vrot.slane %v1366, 1
      %v1452 = vsel %vm685, %v1447, %v1451
      %v1453 = vrot.slane %v1367, 1
      %v1454 = vsel %vm685, %v1449, %v1453
      %v1455 = vrot.slane %v1368, 1
      %v1456 = vsel %vm685, %v1451, %v1455
      %v1467 = vsel %vm336, %v1420, 0
      %v1469 = vsel %vm336, %v1424, 0
      %v1471 = vsel %vm336, %v1428, 0
      %v1473 = vsel %vm336, %v1432, 0
      %v1475 = vsel %vm336, %v1436, 0
      %v1477 = vsel %vm336, %v1440, 0
      %v1479 = vsel %vm336, %v1444, 0
      %v1481 = vsel %vm336, %v1448, 0
      %v1483 = vsel %vm336, %v1452, 0
      %v1485 = vsel %vm336, %v1456, 0
      %1487 = vmatprep.subr.mxu0 0.0
      %1488 = vmatpush1.msra.mxu0 %v1369
      %1489 = vmatprep.subr.mxu0 0.0
      %1490 = vmatpush1.msra.mxu0 %v1370
      %1491 = vmatprep.subr.mxu0 0.0
      %1492 = vmatpush1.msra.mxu0 %v1371
      %1493 = vmatprep.subr.mxu0 0.0
      %1494 = vmatpush1.msra.mxu0 %v1372
      %1495 = vmatprep.subr.mxu0 0.0
      %1496 = vmatpush1.msra.mxu0 %v1373
      %1497 = vmatprep.subr.mxu0 0.0
      %1498 = vmatpush1.msra.mxu0 %v1374
      %1499 = vmatprep.subr.mxu0 0.0
      %1500 = vmatpush1.msra.mxu0 %v1375
      %1501 = vmatprep.subr.mxu0 0.0
      %1502 = vmatpush1.msra.mxu0 %v1376
      %1503 = vmatprep.subr.mxu0 0.0
      %1504 = vmatpush1.msra.mxu0 %v1377
      %1505 = vmatprep.subr.mxu0 0.0
      %1506 = vmatpush1.msra.mxu0 %v1378
      %1507 = vmatprep.subr.mxu0 0.0
      %1508 = vmatpush1.msra.mxu0 %v1379
      %1509 = vmatprep.subr.mxu0 0.0
      %1510 = vmatpush1.msra.mxu0 %v1380
      %1511 = vmatprep.subr.mxu0 0.0
      %1512 = vmatpush1.msra.mxu0 %v1381
      %1513 = vmatprep.subr.mxu0 0.0
      %1514 = vmatpush1.msra.mxu0 %v1382
      %1515 = vmatprep.subr.mxu0 0.0
      %1516 = vmatpush1.msra.mxu0 %v1383
      %1517 = vmatprep.subr.mxu0 0.0
      %1518 = vmatpush1.msra.mxu0 %v1384
      %1519 = vmatprep.subr.mxu0 0.0
      %1520 = vmatpush1.msra.mxu0 %v1385
      %1521 = vmatprep.subr.mxu0 0.0
      %1522 = vmatpush1.msra.mxu0 %v1386
      %1523 = vmatprep.subr.mxu0 0.0
      %1524 = vmatpush1.msra.mxu0 %v1387
      %1525 = vmatprep.subr.mxu0 0.0
      %1526 = vmatpush1.msra.mxu0 %v1388
      %1527 = vmatprep.subr.mxu0 0.0
      %1528 = vmatpush1.msra.mxu0 %v1389
      %1529 = vmatprep.subr.mxu0 0.0
      %1530 = vmatpush1.msra.mxu0 %v1390
      %1531 = vmatprep.subr.mxu0 0.0
      %1532 = vmatpush1.msra.mxu0 %v1391
      %1533 = vmatprep.subr.mxu0 0.0
      %1534 = vmatpush1.msra.mxu0 %v1392
      %1535 = vmatprep.subr.mxu0 0.0
      %1536 = vmatpush1.msra.mxu0 0.0
      %1537 = vmatprep.subr.mxu0 0.0
      %1538 = vmatpush1.msra.mxu0 0.0
      %1539 = vmatprep.subr.mxu0 0.0
      %1540 = vmatpush1.msra.mxu0 0.0
      %1541 = vmatprep.subr.mxu0 0.0
      %1542 = vmatpush1.msra.mxu0 0.0
      %1543 = vmatprep.subr.mxu0 0.0
      %1544 = vmatpush1.msra.mxu0 0.0
      %1545 = vmatprep.subr.mxu0 0.0
      %1546 = vmatpush1.msra.mxu0 0.0
      %1547 = vmatprep.subr.mxu0 0.0
      %1548 = vmatpush1.msra.mxu0 0.0
      %1549 = vmatprep.subr.mxu0 0.0
      %1550 = vmatpush1.msra.mxu0 0.0
      %1551 = vmatprep.mubr.f32.mxu0 %v1467
      %1552 = vmatmul.mubr.f32.gmra.mrb[0].mxu0 %v1417
      %v1553 = vpop.f32.mrb[0].mxu0
      %v1554 = vadd.f32 0.0, %v1553
      %v1555 = vpop.f32.mrb[0].mxu0
      %1556 = vmatprep.mubr.f32.mxu0 %v1469
      %1557 = vmatmul.mubr.f32.gmra.mrb[0].mxu0 %v1422
      %v1558 = vpop.f32.mrb[0].mxu0
      %v1559 = vadd.f32 0.0, %v1558
      %v1560 = vpop.f32.mrb[0].mxu0
      %1561 = vmatprep.mubr.f32.mxu0 %v1471
      %1562 = vmatmul.mubr.f32.gmra.mrb[0].mxu0 %v1426
      %v1563 = vpop.f32.mrb[0].mxu0
      %v1564 = vadd.f32 0.0, %v1563
      %v1565 = vpop.f32.mrb[0].mxu0
      %1566 = vmatprep.mubr.f32.mxu0 %v1473
      %1567 = vmatmul.mubr.f32.gmra.mrb[0].mxu0 %v1430
      %v1568 = vpop.f32.mrb[0].mxu0
      %v1569 = vadd.f32 0.0, %v1568
      %v1570 = vpop.f32.mrb[0].mxu0
      %1571 = vmatprep.mubr.f32.mxu0 %v1475
      %1572 = vmatmul.mubr.f32.gmra.mrb[0].mxu0 %v1434
      %v1573 = vpop.f32.mrb[0].mxu0
      %v1574 = vadd.f32 0.0, %v1573
      %v1575 = vpop.f32.mrb[0].mxu0
      %1576 = vmatprep.mubr.f32.mxu0 %v1477
      %1577 = vmatmul.mubr.f32.gmra.mrb[0].mxu0 %v1438
      %v1578 = vpop.f32.mrb[0].mxu0
      %v1579 = vadd.f32 0.0, %v1578
      %v1580 = vpop.f32.mrb[0].mxu0
      %1581 = vmatprep.mubr.f32.mxu0 %v1479
      %1582 = vmatmul.mubr.f32.gmra.mrb[0].mxu0 %v1442
      %v1583 = vpop.f32.mrb[0].mxu0
      %v1584 = vadd.f32 0.0, %v1583
      %v1585 = vpop.f32.mrb[0].mxu0
      %1586 = vmatprep.mubr.f32.mxu0 %v1481
      %1587 = vmatmul.mubr.f32.gmra.mrb[0].mxu0 %v1446
      %v1588 = vpop.f32.mrb[0].mxu0
      %v1589 = vadd.f32 0.0, %v1588
      %v1590 = vpop.f32.mrb[0].mxu0
      %1591 = vmatprep.mubr.f32.mxu0 %v1483
      %1592 = vmatmul.mubr.f32.gmra.mrb[0].mxu0 %v1450
      %v1593 = vpop.f32.mrb[0].mxu0
      %v1594 = vadd.f32 0.0, %v1593
      %v1595 = vpop.f32.mrb[0].mxu0
      %1596 = vmatprep.mubr.f32.mxu0 %v1485
      %1597 = vmatmul.mubr.f32.gmra.mrb[0].mxu0 %v1454
      %v1598 = vpop.f32.mrb[0].mxu0
      %v1599 = vadd.f32 0.0, %v1598
      %v1600 = vpop.f32.mrb[0].mxu0
      %1601 = vdwg.mxu0
      %v1602 = vadd.f32 %v1337, %v1554
      %v1603 = vadd.f32 %v1338, %v1559
      %v1604 = vadd.f32 %v1339, %v1564
      %v1605 = vadd.f32 %v1340, %v1569
      %v1606 = vadd.f32 %v1341, %v1574
      %v1607 = vadd.f32 %v1342, %v1579
      %v1608 = vadd.f32 %v1343, %v1584
      %v1609 = vadd.f32 %v1344, %v1589
      %v1610 = vadd.f32 %v1345, %v1594
      %v1611 = vadd.f32 %v1346, %v1599
      %v1612 = vld [vmem:[%s165 + $0x10] sm:$0xfc]
      %v1613 = vld [vmem:[%s165 + $0x18] sm:$0xfc]
      %v1614 = vld [vmem:[%s165 + $0x20] sm:$0xff]
      %v1615 = vld [vmem:[%s165 + $0x28] sm:$0xff]
      %v1616 = vld [vmem:[%s165 + $0x30] sm:$0xff]
      %v1617 = vld [vmem:[%s165 + $0x38] sm:$0xff]
      %v1618 = vld [vmem:[%s165 + $0x40] sm:$0xff]
      %v1619 = vld [vmem:[%s165 + $0x48] sm:$0xff]
      %v1620 = vld [vmem:[%s165 + $0x50] sm:$0xff]
      %v1621 = vld [vmem:[%s165 + $0x58] sm:$0xff]
      %v1622 = vld [vmem:[%s165 + $0x60] sm:$0xff]
      %v1623 = vld [vmem:[%s165 + $0x68] sm:$0xff]
      %v1624 = vld [vmem:[%s165 + $0x70] sm:$0xff]
      %v1625 = vld [vmem:[%s165 + $0x78] sm:$0xff]
      %v1626 = vld [vmem:[%s165 + $0x80] sm:$0xff]
      %v1627 = vld [vmem:[%s165 + $0x88] sm:$0xff]
      %v1628 = vld [vmem:[%s165 + $0x90] sm:$0xff]
      %v1629 = vld [vmem:[%s165 + $0x98] sm:$0xff]
      %v1630 = vld [vmem:[%s165 + $0xa0] sm:$0xff]
      %v1631 = vld [vmem:[%s165 + $0xa8] sm:$0xff]
      %v1632 = vld [vmem:[%s165 + $0xb0] sm:$0x3]
      %v1633 = vld [vmem:[%s165 + $0xb8] sm:$0x3]
      %v1634 = vld [vmem:[%s1 + $0x480] sm:$0xff]
      %v1635 = vld [vmem:[%s1 + $0x488] sm:$0xff]
      %v1636 = vld [vmem:[%s1 + $0x490] sm:$0xff]
      %v1637 = vld [vmem:[%s1 + $0x498] sm:$0xff]
      %v1638 = vld [vmem:[%s1 + $0x4a0] sm:$0xff]
      %v1639 = vld [vmem:[%s1 + $0x4a8] sm:$0xff]
      %v1640 = vld [vmem:[%s1 + $0x4b0] sm:$0xff]
      %v1641 = vld [vmem:[%s1 + $0x4b8] sm:$0xff]
      %v1642 = vld [vmem:[%s1 + $0x4c0] sm:$0xff]
      %v1643 = vld [vmem:[%s1 + $0x4c8] sm:$0xff]
      %v1644 = vld [vmem:[%s1 + $0x4d0] sm:$0xff]
      %v1645 = vld [vmem:[%s1 + $0x4d8] sm:$0xff]
      %v1646 = vld [vmem:[%s1 + $0x4e0] sm:$0xff]
      %v1647 = vld [vmem:[%s1 + $0x4e8] sm:$0xff]
      %v1648 = vld [vmem:[%s1 + $0x4f0] sm:$0xff]
      %v1649 = vld [vmem:[%s1 + $0x4f8] sm:$0xff]
      %v1650 = vld [vmem:[%s1 + $0x500] sm:$0xff]
      %v1651 = vld [vmem:[%s1 + $0x508] sm:$0xff]
      %v1652 = vld [vmem:[%s1 + $0x510] sm:$0xff]
      %v1653 = vld [vmem:[%s1 + $0x518] sm:$0xff]
      %v1654 = vld [vmem:[%s1 + $0x520] sm:$0xff]
      %v1655 = vld [vmem:[%s1 + $0x528] sm:$0xff]
      %v1656 = vld [vmem:[%s1 + $0x530] sm:$0xff]
      %v1657 = vld [vmem:[%s1 + $0x538] sm:$0xff]
      %vm1680 = vcmask 1045504
      %v1681 = vrot.slane %v1612, 2
      %v1682 = vrot.slane %v1614, 2
      %v1683 = vsel %vm1680, %v1681, %v1682
      %v1684 = vrot.slane %v1613, 2
      %v1685 = vrot.slane %v1615, 2
      %v1686 = vsel %vm1680, %v1684, %v1685
      %v1687 = vrot.slane %v1616, 2
      %v1688 = vsel %vm1680, %v1682, %v1687
      %v1689 = vrot.slane %v1617, 2
      %v1690 = vsel %vm1680, %v1685, %v1689
      %v1691 = vrot.slane %v1618, 2
      %v1692 = vsel %vm1680, %v1687, %v1691
      %v1693 = vrot.slane %v1619, 2
      %v1694 = vsel %vm1680, %v1689, %v1693
      %v1695 = vrot.slane %v1620, 2
      %v1696 = vsel %vm1680, %v1691, %v1695
      %v1697 = vrot.slane %v1621, 2
      %v1698 = vsel %vm1680, %v1693, %v1697
      %v1699 = vrot.slane %v1622, 2
      %v1700 = vsel %vm1680, %v1695, %v1699
      %v1701 = vrot.slane %v1623, 2
      %v1702 = vsel %vm1680, %v1697, %v1701
      %v1703 = vrot.slane %v1624, 2
      %v1704 = vsel %vm1680, %v1699, %v1703
      %v1705 = vrot.slane %v1625, 2
      %v1706 = vsel %vm1680, %v1701, %v1705
      %v1707 = vrot.slane %v1626, 2
      %v1708 = vsel %vm1680, %v1703, %v1707
      %v1709 = vrot.slane %v1627, 2
      %v1710 = vsel %vm1680, %v1705, %v1709
      %v1711 = vrot.slane %v1628, 2
      %v1712 = vsel %vm1680, %v1707, %v1711
      %v1713 = vrot.slane %v1629, 2
      %v1714 = vsel %vm1680, %v1709, %v1713
      %v1715 = vrot.slane %v1630, 2
      %v1716 = vsel %vm1680, %v1711, %v1715
      %v1717 = vrot.slane %v1631, 2
      %v1718 = vsel %vm1680, %v1713, %v1717
      %v1719 = vrot.slane %v1632, 2
      %v1720 = vsel %vm1680, %v1715, %v1719
      %v1721 = vrot.slane %v1633, 2
      %v1722 = vsel %vm1680, %v1717, %v1721
      %v1733 = vsel %vm336, %v1686, 0
      %v1735 = vsel %vm336, %v1690, 0
      %v1737 = vsel %vm336, %v1694, 0
      %v1739 = vsel %vm336, %v1698, 0
      %v1741 = vsel %vm336, %v1702, 0
      %v1743 = vsel %vm336, %v1706, 0
      %v1745 = vsel %vm336, %v1710, 0
      %v1747 = vsel %vm336, %v1714, 0
      %v1749 = vsel %vm336, %v1718, 0
      %v1751 = vsel %vm336, %v1722, 0
      %1753 = vmatprep.subr.mxu0 0.0
      %1754 = vmatpush1.msra.mxu0 %v1634
      %1755 = vmatprep.subr.mxu0 0.0
      %1756 = vmatpush1.msra.mxu0 %v1635
      %1757 = vmatprep.subr.mxu0 0.0
      %1758 = vmatpush1.msra.mxu0 %v1636
      %1759 = vmatprep.subr.mxu0 0.0
      %1760 = vmatpush1.msra.mxu0 %v1637
      %1761 = vmatprep.subr.mxu0 0.0
      %1762 = vmatpush1.msra.mxu0 %v1638
      %1763 = vmatprep.subr.mxu0 0.0
      %1764 = vmatpush1.msra.mxu0 %v1639
      %1765 = vmatprep.subr.mxu0 0.0
      %1766 = vmatpush1.msra.mxu0 %v1640
      %1767 = vmatprep.subr.mxu0 0.0
      %1768 = vmatpush1.msra.mxu0 %v1641
      %1769 = vmatprep.subr.mxu0 0.0
      %1770 = vmatpush1.msra.mxu0 %v1642
      %1771 = vmatprep.subr.mxu0 0.0
      %1772 = vmatpush1.msra.mxu0 %v1643
      %1773 = vmatprep.subr.mxu0 0.0
      %1774 = vmatpush1.msra.mxu0 %v1644
      %1775 = vmatprep.subr.mxu0 0.0
      %1776 = vmatpush1.msra.mxu0 %v1645
      %1777 = vmatprep.subr.mxu0 0.0
      %1778 = vmatpush1.msra.mxu0 %v1646
      %1779 = vmatprep.subr.mxu0 0.0
      %1780 = vmatpush1.msra.mxu0 %v1647
      %1781 = vmatprep.subr.mxu0 0.0
      %1782 = vmatpush1.msra.mxu0 %v1648
      %1783 = vmatprep.subr.mxu0 0.0
      %1784 = vmatpush1.msra.mxu0 %v1649
      %1785 = vmatprep.subr.mxu0 0.0
      %1786 = vmatpush1.msra.mxu0 %v1650
      %1787 = vmatprep.subr.mxu0 0.0
      %1788 = vmatpush1.msra.mxu0 %v1651
      %1789 = vmatprep.subr.mxu0 0.0
      %1790 = vmatpush1.msra.mxu0 %v1652
      %1791 = vmatprep.subr.mxu0 0.0
      %1792 = vmatpush1.msra.mxu0 %v1653
      %1793 = vmatprep.subr.mxu0 0.0
      %1794 = vmatpush1.msra.mxu0 %v1654
      %1795 = vmatprep.subr.mxu0 0.0
      %1796 = vmatpush1.msra.mxu0 %v1655
      %1797 = vmatprep.subr.mxu0 0.0
      %1798 = vmatpush1.msra.mxu0 %v1656
      %1799 = vmatprep.subr.mxu0 0.0
      %1800 = vmatpush1.msra.mxu0 %v1657
      %1801 = vmatprep.subr.mxu0 0.0
      %1802 = vmatpush1.msra.mxu0 0.0
      %1803 = vmatprep.subr.mxu0 0.0
      %1804 = vmatpush1.msra.mxu0 0.0
      %1805 = vmatprep.subr.mxu0 0.0
      %1806 = vmatpush1.msra.mxu0 0.0
      %1807 = vmatprep.subr.mxu0 0.0
      %1808 = vmatpush1.msra.mxu0 0.0
      %1809 = vmatprep.subr.mxu0 0.0
      %1810 = vmatpush1.msra.mxu0 0.0
      %1811 = vmatprep.subr.mxu0 0.0
      %1812 = vmatpush1.msra.mxu0 0.0
      %1813 = vmatprep.subr.mxu0 0.0
      %1814 = vmatpush1.msra.mxu0 0.0
      %1815 = vmatprep.subr.mxu0 0.0
      %1816 = vmatpush1.msra.mxu0 0.0
      %1817 = vmatprep.mubr.f32.mxu0 %v1733
      %1818 = vmatmul.mubr.f32.gmra.mrb[0].mxu0 %v1683
      %v1819 = vpop.f32.mrb[0].mxu0
      %v1820 = vadd.f32 0.0, %v1819
      %v1821 = vpop.f32.mrb[0].mxu0
      %1822 = vmatprep.mubr.f32.mxu0 %v1735
      %1823 = vmatmul.mubr.f32.gmra.mrb[0].mxu0 %v1688
      %v1824 = vpop.f32.mrb[0].mxu0
      %v1825 = vadd.f32 0.0, %v1824
      %v1826 = vpop.f32.mrb[0].mxu0
      %1827 = vmatprep.mubr.f32.mxu0 %v1737
      %1828 = vmatmul.mubr.f32.gmra.mrb[0].mxu0 %v1692
      %v1829 = vpop.f32.mrb[0].mxu0
      %v1830 = vadd.f32 0.0, %v1829
      %v1831 = vpop.f32.mrb[0].mxu0
      %1832 = vmatprep.mubr.f32.mxu0 %v1739
      %1833 = vmatmul.mubr.f32.gmra.mrb[0].mxu0 %v1696
      %v1834 = vpop.f32.mrb[0].mxu0
      %v1835 = vadd.f32 0.0, %v1834
      %v1836 = vpop.f32.mrb[0].mxu0
      %1837 = vmatprep.mubr.f32.mxu0 %v1741
      %1838 = vmatmul.mubr.f32.gmra.mrb[0].mxu0 %v1700
      %v1839 = vpop.f32.mrb[0].mxu0
      %v1840 = vadd.f32 0.0, %v1839
      %v1841 = vpop.f32.mrb[0].mxu0
      %1842 = vmatprep.mubr.f32.mxu0 %v1743
      %1843 = vmatmul.mubr.f32.gmra.mrb[0].mxu0 %v1704
      %v1844 = vpop.f32.mrb[0].mxu0
      %v1845 = vadd.f32 0.0, %v1844
      %v1846 = vpop.f32.mrb[0].mxu0
      %1847 = vmatprep.mubr.f32.mxu0 %v1745
      %1848 = vmatmul.mubr.f32.gmra.mrb[0].mxu0 %v1708
      %v1849 = vpop.f32.mrb[0].mxu0
      %v1850 = vadd.f32 0.0, %v1849
      %v1851 = vpop.f32.mrb[0].mxu0
      %1852 = vmatprep.mubr.f32.mxu0 %v1747
      %1853 = vmatmul.mubr.f32.gmra.mrb[0].mxu0 %v1712
      %v1854 = vpop.f32.mrb[0].mxu0
      %v1855 = vadd.f32 0.0, %v1854
      %v1856 = vpop.f32.mrb[0].mxu0
      %1857 = vmatprep.mubr.f32.mxu0 %v1749
      %1858 = vmatmul.mubr.f32.gmra.mrb[0].mxu0 %v1716
      %v1859 = vpop.f32.mrb[0].mxu0
      %v1860 = vadd.f32 0.0, %v1859
      %v1861 = vpop.f32.mrb[0].mxu0
      %1862 = vmatprep.mubr.f32.mxu0 %v1751
      %1863 = vmatmul.mubr.f32.gmra.mrb[0].mxu0 %v1720
      %v1864 = vpop.f32.mrb[0].mxu0
      %v1865 = vadd.f32 0.0, %v1864
      %v1866 = vpop.f32.mrb[0].mxu0
      %1867 = vdwg.mxu0
      %v1868 = vadd.f32 %v1602, %v1820
      %v1869 = vadd.f32 %v1603, %v1825
      %v1870 = vadd.f32 %v1604, %v1830
      %v1871 = vadd.f32 %v1605, %v1835
      %v1872 = vadd.f32 %v1606, %v1840
      %v1873 = vadd.f32 %v1607, %v1845
      %v1874 = vadd.f32 %v1608, %v1850
      %v1875 = vadd.f32 %v1609, %v1855
      %v1876 = vadd.f32 %v1610, %v1860
      %v1877 = vadd.f32 %v1611, %v1865
      %v1878 = vld [vmem:[%s165 + $0xd0] sm:$0xc0]
      %v1879 = vld [vmem:[%s165 + $0xd8] sm:$0xc0]
      %v1880 = vld [vmem:[%s165 + $0xe0] sm:$0xff]
      %v1881 = vld [vmem:[%s165 + $0xe8] sm:$0xff]
      %v1882 = vld [vmem:[%s165 + $0xf0] sm:$0xff]
      %v1883 = vld [vmem:[%s165 + $0xf8] sm:$0xff]
      %v1884 = vld [vmem:[%s165 + $0x100] sm:$0xff]
      %v1885 = vld [vmem:[%s165 + $0x108] sm:$0xff]
      %v1886 = vld [vmem:[%s165 + $0x110] sm:$0xff]
      %v1887 = vld [vmem:[%s165 + $0x118] sm:$0xff]
      %v1888 = vld [vmem:[%s165 + $0x120] sm:$0xff]
      %v1889 = vld [vmem:[%s165 + $0x128] sm:$0xff]
      %v1890 = vld [vmem:[%s165 + $0x130] sm:$0xff]
      %v1891 = vld [vmem:[%s165 + $0x138] sm:$0xff]
      %v1892 = vld [vmem:[%s165 + $0x140] sm:$0xff]
      %v1893 = vld [vmem:[%s165 + $0x148] sm:$0xff]
      %v1894 = vld [vmem:[%s165 + $0x150] sm:$0xff]
      %v1895 = vld [vmem:[%s165 + $0x158] sm:$0xff]
      %v1896 = vld [vmem:[%s165 + $0x160] sm:$0xff]
      %v1897 = vld [vmem:[%s165 + $0x168] sm:$0xff]
      %v1898 = vld [vmem:[%s165 + $0x170] sm:$0x3f]
      %v1899 = vld [vmem:[%s165 + $0x178] sm:$0x3f]
      %v1900 = vld [vmem:[%s1 + $0x540] sm:$0xff]
      %v1901 = vld [vmem:[%s1 + $0x548] sm:$0xff]
      %v1902 = vld [vmem:[%s1 + $0x550] sm:$0xff]
      %v1903 = vld [vmem:[%s1 + $0x558] sm:$0xff]
      %v1904 = vld [vmem:[%s1 + $0x560] sm:$0xff]
      %v1905 = vld [vmem:[%s1 + $0x568] sm:$0xff]
      %v1906 = vld [vmem:[%s1 + $0x570] sm:$0xff]
      %v1907 = vld [vmem:[%s1 + $0x578] sm:$0xff]
      %v1908 = vld [vmem:[%s1 + $0x580] sm:$0xff]
      %v1909 = vld [vmem:[%s1 + $0x588] sm:$0xff]
      %v1910 = vld [vmem:[%s1 + $0x590] sm:$0xff]
      %v1911 = vld [vmem:[%s1 + $0x598] sm:$0xff]
      %v1912 = vld [vmem:[%s1 + $0x5a0] sm:$0xff]
      %v1913 = vld [vmem:[%s1 + $0x5a8] sm:$0xff]
      %v1914 = vld [vmem:[%s1 + $0x5b0] sm:$0xff]
      %v1915 = vld [vmem:[%s1 + $0x5b8] sm:$0xff]
      %v1916 = vld [vmem:[%s1 + $0x5c0] sm:$0xff]
      %v1917 = vld [vmem:[%s1 + $0x5c8] sm:$0xff]
      %v1918 = vld [vmem:[%s1 + $0x5d0] sm:$0xff]
      %v1919 = vld [vmem:[%s1 + $0x5d8] sm:$0xff]
      %v1920 = vld [vmem:[%s1 + $0x5e0] sm:$0xff]
      %v1921 = vld [vmem:[%s1 + $0x5e8] sm:$0xff]
      %v1922 = vld [vmem:[%s1 + $0x5f0] sm:$0xff]
      %v1923 = vld [vmem:[%s1 + $0x5f8] sm:$0xff]
      %vm1946 = vcmask 1041408
      %v1947 = vrot.slane %v1878, 6
      %v1948 = vrot.slane %v1880, 6
      %v1949 = vsel %vm1946, %v1947, %v1948
      %v1950 = vrot.slane %v1879, 6
      %v1951 = vrot.slane %v1881, 6
      %v1952 = vsel %vm1946, %v1950, %v1951
      %v1953 = vrot.slane %v1882, 6
      %v1954 = vsel %vm1946, %v1948, %v1953
      %v1955 = vrot.slane %v1883, 6
      %v1956 = vsel %vm1946, %v1951, %v1955
      %v1957 = vrot.slane %v1884, 6
      %v1958 = vsel %vm1946, %v1953, %v1957
      %v1959 = vrot.slane %v1885, 6
      %v1960 = vsel %vm1946, %v1955, %v1959
      %v1961 = vrot.slane %v1886, 6
      %v1962 = vsel %vm1946, %v1957, %v1961
      %v1963 = vrot.slane %v1887, 6
      %v1964 = vsel %vm1946, %v1959, %v1963
      %v1965 = vrot.slane %v1888, 6
      %v1966 = vsel %vm1946, %v1961, %v1965
      %v1967 = vrot.slane %v1889, 6
      %v1968 = vsel %vm1946, %v1963, %v1967
      %v1969 = vrot.slane %v1890, 6
      %v1970 = vsel %vm1946, %v1965, %v1969
      %v1971 = vrot.slane %v1891, 6
      %v1972 = vsel %vm1946, %v1967, %v1971
      %v1973 = vrot.slane %v1892, 6
      %v1974 = vsel %vm1946, %v1969, %v1973
      %v1975 = vrot.slane %v1893, 6
      %v1976 = vsel %vm1946, %v1971, %v1975
      %v1977 = vrot.slane %v1894, 6
      %v1978 = vsel %vm1946, %v1973, %v1977
      %v1979 = vrot.slane %v1895, 6
      %v1980 = vsel %vm1946, %v1975, %v1979
      %v1981 = vrot.slane %v1896, 6
      %v1982 = vsel %vm1946, %v1977, %v1981
      %v1983 = vrot.slane %v1897, 6
      %v1984 = vsel %vm1946, %v1979, %v1983
      %v1985 = vrot.slane %v1898, 6
      %v1986 = vsel %vm1946, %v1981, %v1985
      %v1987 = vrot.slane %v1899, 6
      %v1988 = vsel %vm1946, %v1983, %v1987
      %v1999 = vsel %vm336, %v1952, 0
      %v2001 = vsel %vm336, %v1956, 0
      %v2003 = vsel %vm336, %v1960, 0
      %v2005 = vsel %vm336, %v1964, 0
      %v2007 = vsel %vm336, %v1968, 0
      %v2009 = vsel %vm336, %v1972, 0
      %v2011 = vsel %vm336, %v1976, 0
      %v2013 = vsel %vm336, %v1980, 0
      %v2015 = vsel %vm336, %v1984, 0
      %v2017 = vsel %vm336, %v1988, 0
      %2019 = vmatprep.subr.mxu0 0.0
      %2020 = vmatpush1.msra.mxu0 %v1900
      %2021 = vmatprep.subr.mxu0 0.0
      %2022 = vmatpush1.msra.mxu0 %v1901
      %2023 = vmatprep.subr.mxu0 0.0
      %2024 = vmatpush1.msra.mxu0 %v1902
      %2025 = vmatprep.subr.mxu0 0.0
      %2026 = vmatpush1.msra.mxu0 %v1903
      %2027 = vmatprep.subr.mxu0 0.0
      %2028 = vmatpush1.msra.mxu0 %v1904
      %2029 = vmatprep.subr.mxu0 0.0
      %2030 = vmatpush1.msra.mxu0 %v1905
      %2031 = vmatprep.subr.mxu0 0.0
      %2032 = vmatpush1.msra.mxu0 %v1906
      %2033 = vmatprep.subr.mxu0 0.0
      %2034 = vmatpush1.msra.mxu0 %v1907
      %2035 = vmatprep.subr.mxu0 0.0
      %2036 = vmatpush1.msra.mxu0 %v1908
      %2037 = vmatprep.subr.mxu0 0.0
      %2038 = vmatpush1.msra.mxu0 %v1909
      %2039 = vmatprep.subr.mxu0 0.0
      %2040 = vmatpush1.msra.mxu0 %v1910
      %2041 = vmatprep.subr.mxu0 0.0
      %2042 = vmatpush1.msra.mxu0 %v1911
      %2043 = vmatprep.subr.mxu0 0.0
      %2044 = vmatpush1.msra.mxu0 %v1912
      %2045 = vmatprep.subr.mxu0 0.0
      %2046 = vmatpush1.msra.mxu0 %v1913
      %2047 = vmatprep.subr.mxu0 0.0
      %2048 = vmatpush1.msra.mxu0 %v1914
      %2049 = vmatprep.subr.mxu0 0.0
      %2050 = vmatpush1.msra.mxu0 %v1915
      %2051 = vmatprep.subr.mxu0 0.0
      %2052 = vmatpush1.msra.mxu0 %v1916
      %2053 = vmatprep.subr.mxu0 0.0
      %2054 = vmatpush1.msra.mxu0 %v1917
      %2055 = vmatprep.subr.mxu0 0.0
      %2056 = vmatpush1.msra.mxu0 %v1918
      %2057 = vmatprep.subr.mxu0 0.0
      %2058 = vmatpush1.msra.mxu0 %v1919
      %2059 = vmatprep.subr.mxu0 0.0
      %2060 = vmatpush1.msra.mxu0 %v1920
      %2061 = vmatprep.subr.mxu0 0.0
      %2062 = vmatpush1.msra.mxu0 %v1921
      %2063 = vmatprep.subr.mxu0 0.0
      %2064 = vmatpush1.msra.mxu0 %v1922
      %2065 = vmatprep.subr.mxu0 0.0
      %2066 = vmatpush1.msra.mxu0 %v1923
      %2067 = vmatprep.subr.mxu0 0.0
      %2068 = vmatpush1.msra.mxu0 0.0
      %2069 = vmatprep.subr.mxu0 0.0
      %2070 = vmatpush1.msra.mxu0 0.0
      %2071 = vmatprep.subr.mxu0 0.0
      %2072 = vmatpush1.msra.mxu0 0.0
      %2073 = vmatprep.subr.mxu0 0.0
      %2074 = vmatpush1.msra.mxu0 0.0
      %2075 = vmatprep.subr.mxu0 0.0
      %2076 = vmatpush1.msra.mxu0 0.0
      %2077 = vmatprep.subr.mxu0 0.0
      %2078 = vmatpush1.msra.mxu0 0.0
      %2079 = vmatprep.subr.mxu0 0.0
      %2080 = vmatpush1.msra.mxu0 0.0
      %2081 = vmatprep.subr.mxu0 0.0
      %2082 = vmatpush1.msra.mxu0 0.0
      %2083 = vmatprep.mubr.f32.mxu0 %v1999
      %2084 = vmatmul.mubr.f32.gmra.mrb[0].mxu0 %v1949
      %v2085 = vpop.f32.mrb[0].mxu0
      %v2086 = vadd.f32 0.0, %v2085
      %v2087 = vpop.f32.mrb[0].mxu0
      %2088 = vmatprep.mubr.f32.mxu0 %v2001
      %2089 = vmatmul.mubr.f32.gmra.mrb[0].mxu0 %v1954
      %v2090 = vpop.f32.mrb[0].mxu0
      %v2091 = vadd.f32 0.0, %v2090
      %v2092 = vpop.f32.mrb[0].mxu0
      %2093 = vmatprep.mubr.f32.mxu0 %v2003
      %2094 = vmatmul.mubr.f32.gmra.mrb[0].mxu0 %v1958
      %v2095 = vpop.f32.mrb[0].mxu0
      %v2096 = vadd.f32 0.0, %v2095
      %v2097 = vpop.f32.mrb[0].mxu0
      %2098 = vmatprep.mubr.f32.mxu0 %v2005
      %2099 = vmatmul.mubr.f32.gmra.mrb[0].mxu0 %v1962
      %v2100 = vpop.f32.mrb[0].mxu0
      %v2101 = vadd.f32 0.0, %v2100
      %v2102 = vpop.f32.mrb[0].mxu0
      %2103 = vmatprep.mubr.f32.mxu0 %v2007
      %2104 = vmatmul.mubr.f32.gmra.mrb[0].mxu0 %v1966
      %v2105 = vpop.f32.mrb[0].mxu0
      %v2106 = vadd.f32 0.0, %v2105
      %v2107 = vpop.f32.mrb[0].mxu0
      %2108 = vmatprep.mubr.f32.mxu0 %v2009
      %2109 = vmatmul.mubr.f32.gmra.mrb[0].mxu0 %v1970
      %v2110 = vpop.f32.mrb[0].mxu0
      %v2111 = vadd.f32 0.0, %v2110
      %v2112 = vpop.f32.mrb[0].mxu0
      %2113 = vmatprep.mubr.f32.mxu0 %v2011
      %2114 = vmatmul.mubr.f32.gmra.mrb[0].mxu0 %v1974
      %v2115 = vpop.f32.mrb[0].mxu0
      %v2116 = vadd.f32 0.0, %v2115
      %v2117 = vpop.f32.mrb[0].mxu0
      %2118 = vmatprep.mubr.f32.mxu0 %v2013
      %2119 = vmatmul.mubr.f32.gmra.mrb[0].mxu0 %v1978
      %v2120 = vpop.f32.mrb[0].mxu0
      %v2121 = vadd.f32 0.0, %v2120
      %v2122 = vpop.f32.mrb[0].mxu0
      %2123 = vmatprep.mubr.f32.mxu0 %v2015
      %2124 = vmatmul.mubr.f32.gmra.mrb[0].mxu0 %v1982
      %v2125 = vpop.f32.mrb[0].mxu0
      %v2126 = vadd.f32 0.0, %v2125
      %v2127 = vpop.f32.mrb[0].mxu0
      %2128 = vmatprep.mubr.f32.mxu0 %v2017
      %2129 = vmatmul.mubr.f32.gmra.mrb[0].mxu0 %v1986
      %v2130 = vpop.f32.mrb[0].mxu0
      %v2131 = vadd.f32 0.0, %v2130
      %v2132 = vpop.f32.mrb[0].mxu0
      %2133 = vdwg.mxu0
      %v2134 = vadd.f32 %v1868, %v2086
      %v2135 = vadd.f32 %v1869, %v2091
      %v2136 = vadd.f32 %v1870, %v2096
      %v2137 = vadd.f32 %v1871, %v2101
      %v2138 = vadd.f32 %v1872, %v2106
      %v2139 = vadd.f32 %v1873, %v2111
      %v2140 = vadd.f32 %v1874, %v2116
      %v2141 = vadd.f32 %v1875, %v2121
      %v2142 = vadd.f32 %v1876, %v2126
      %v2143 = vadd.f32 %v1877, %v2131
      %v2144 = vld [vmem:[%s165 + $0x10] sm:$0xf8]
      %v2145 = vld [vmem:[%s165 + $0x18] sm:$0xf8]
      %v2146 = vld [vmem:[%s165 + $0xb0] sm:$0x7]
      %v2147 = vld [vmem:[%s165 + $0xb8] sm:$0x7]
      %v2148 = vld [vmem:[%s1 + $0x600] sm:$0xff]
      %v2149 = vld [vmem:[%s1 + $0x608] sm:$0xff]
      %v2150 = vld [vmem:[%s1 + $0x610] sm:$0xff]
      %v2151 = vld [vmem:[%s1 + $0x618] sm:$0xff]
      %v2152 = vld [vmem:[%s1 + $0x620] sm:$0xff]
      %v2153 = vld [vmem:[%s1 + $0x628] sm:$0xff]
      %v2154 = vld [vmem:[%s1 + $0x630] sm:$0xff]
      %v2155 = vld [vmem:[%s1 + $0x638] sm:$0xff]
      %v2156 = vld [vmem:[%s1 + $0x640] sm:$0xff]
      %v2157 = vld [vmem:[%s1 + $0x648] sm:$0xff]
      %v2158 = vld [vmem:[%s1 + $0x650] sm:$0xff]
      %v2159 = vld [vmem:[%s1 + $0x658] sm:$0xff]
      %v2160 = vld [vmem:[%s1 + $0x660] sm:$0xff]
      %v2161 = vld [vmem:[%s1 + $0x668] sm:$0xff]
      %v2162 = vld [vmem:[%s1 + $0x670] sm:$0xff]
      %v2163 = vld [vmem:[%s1 + $0x678] sm:$0xff]
      %v2164 = vld [vmem:[%s1 + $0x680] sm:$0xff]
      %v2165 = vld [vmem:[%s1 + $0x688] sm:$0xff]
      %v2166 = vld [vmem:[%s1 + $0x690] sm:$0xff]
      %v2167 = vld [vmem:[%s1 + $0x698] sm:$0xff]
      %v2168 = vld [vmem:[%s1 + $0x6a0] sm:$0xff]
      %v2169 = vld [vmem:[%s1 + $0x6a8] sm:$0xff]
      %v2170 = vld [vmem:[%s1 + $0x6b0] sm:$0xff]
      %v2171 = vld [vmem:[%s1 + $0x6b8] sm:$0xff]
      %vm2176 = vcmask 1044480
      %v2177 = vrot.slane %v2144, 3
      %v2178 = vrot.slane %v1614, 3
      %v2179 = vsel %vm2176, %v2177, %v2178
      %v2180 = vrot.slane %v2145, 3
      %v2181 = vrot.slane %v1615, 3
      %v2182 = vsel %vm2176, %v2180, %v2181
      %v2183 = vrot.slane %v1616, 3
      %v2184 = vsel %vm2176, %v2178, %v2183
      %v2185 = vrot.slane %v1617, 3
      %v2186 = vsel %vm2176, %v2181, %v2185
      %v2187 = vrot.slane %v1618, 3
      %v2188 = vsel %vm2176, %v2183, %v2187
      %v2189 = vrot.slane %v1619, 3
      %v2190 = vsel %vm2176, %v2185, %v2189
      %v2191 = vrot.slane %v1620, 3
      %v2192 = vsel %vm2176, %v2187, %v2191
      %v2193 = vrot.slane %v1621, 3
      %v2194 = vsel %vm2176, %v2189, %v2193
      %v2195 = vrot.slane %v1622, 3
      %v2196 = vsel %vm2176, %v2191, %v2195
      %v2197 = vrot.slane %v1623, 3
      %v2198 = vsel %vm2176, %v2193, %v2197
      %v2199 = vrot.slane %v1624, 3
      %v2200 = vsel %vm2176, %v2195, %v2199
      %v2201 = vrot.slane %v1625, 3
      %v2202 = vsel %vm2176, %v2197, %v2201
      %v2203 = vrot.slane %v1626, 3
      %v2204 = vsel %vm2176, %v2199, %v2203
      %v2205 = vrot.slane %v1627, 3
      %v2206 = vsel %vm2176, %v2201, %v2205
      %v2207 = vrot.slane %v1628, 3
      %v2208 = vsel %vm2176, %v2203, %v2207
      %v2209 = vrot.slane %v1629, 3
      %v2210 = vsel %vm2176, %v2205, %v2209
      %v2211 = vrot.slane %v1630, 3
      %v2212 = vsel %vm2176, %v2207, %v2211
      %v2213 = vrot.slane %v1631, 3
      %v2214 = vsel %vm2176, %v2209, %v2213
      %v2215 = vrot.slane %v2146, 3
      %v2216 = vsel %vm2176, %v2211, %v2215
      %v2217 = vrot.slane %v2147, 3
      %v2218 = vsel %vm2176, %v2213, %v2217
      %v2229 = vsel %vm336, %v2182, 0
      %v2231 = vsel %vm336, %v2186, 0
      %v2233 = vsel %vm336, %v2190, 0
      %v2235 = vsel %vm336, %v2194, 0
      %v2237 = vsel %vm336, %v2198, 0
      %v2239 = vsel %vm336, %v2202, 0
      %v2241 = vsel %vm336, %v2206, 0
      %v2243 = vsel %vm336, %v2210, 0
      %v2245 = vsel %vm336, %v2214, 0
      %v2247 = vsel %vm336, %v2218, 0
      %2249 = vmatprep.subr.mxu0 0.0
      %2250 = vmatpush1.msra.mxu0 %v2148
      %2251 = vmatprep.subr.mxu0 0.0
      %2252 = vmatpush1.msra.mxu0 %v2149
      %2253 = vmatprep.subr.mxu0 0.0
      %2254 = vmatpush1.msra.mxu0 %v2150
      %2255 = vmatprep.subr.mxu0 0.0
      %2256 = vmatpush1.msra.mxu0 %v2151
      %2257 = vmatprep.subr.mxu0 0.0
      %2258 = vmatpush1.msra.mxu0 %v2152
      %2259 = vmatprep.subr.mxu0 0.0
      %2260 = vmatpush1.msra.mxu0 %v2153
      %2261 = vmatprep.subr.mxu0 0.0
      %2262 = vmatpush1.msra.mxu0 %v2154
      %2263 = vmatprep.subr.mxu0 0.0
      %2264 = vmatpush1.msra.mxu0 %v2155
      %2265 = vmatprep.subr.mxu0 0.0
      %2266 = vmatpush1.msra.mxu0 %v2156
      %2267 = vmatprep.subr.mxu0 0.0
      %2268 = vmatpush1.msra.mxu0 %v2157
      %2269 = vmatprep.subr.mxu0 0.0
      %2270 = vmatpush1.msra.mxu0 %v2158
      %2271 = vmatprep.subr.mxu0 0.0
      %2272 = vmatpush1.msra.mxu0 %v2159
      %2273 = vmatprep.subr.mxu0 0.0
      %2274 = vmatpush1.msra.mxu0 %v2160
      %2275 = vmatprep.subr.mxu0 0.0
      %2276 = vmatpush1.msra.mxu0 %v2161
      %2277 = vmatprep.subr.mxu0 0.0
      %2278 = vmatpush1.msra.mxu0 %v2162
      %2279 = vmatprep.subr.mxu0 0.0
      %2280 = vmatpush1.msra.mxu0 %v2163
      %2281 = vmatprep.subr.mxu0 0.0
      %2282 = vmatpush1.msra.mxu0 %v2164
      %2283 = vmatprep.subr.mxu0 0.0
      %2284 = vmatpush1.msra.mxu0 %v2165
      %2285 = vmatprep.subr.mxu0 0.0
      %2286 = vmatpush1.msra.mxu0 %v2166
      %2287 = vmatprep.subr.mxu0 0.0
      %2288 = vmatpush1.msra.mxu0 %v2167
      %2289 = vmatprep.subr.mxu0 0.0
      %2290 = vmatpush1.msra.mxu0 %v2168
      %2291 = vmatprep.subr.mxu0 0.0
      %2292 = vmatpush1.msra.mxu0 %v2169
      %2293 = vmatprep.subr.mxu0 0.0
      %2294 = vmatpush1.msra.mxu0 %v2170
      %2295 = vmatprep.subr.mxu0 0.0
      %2296 = vmatpush1.msra.mxu0 %v2171
      %2297 = vmatprep.subr.mxu0 0.0
      %2298 = vmatpush1.msra.mxu0 0.0
      %2299 = vmatprep.subr.mxu0 0.0
      %2300 = vmatpush1.msra.mxu0 0.0
      %2301 = vmatprep.subr.mxu0 0.0
      %2302 = vmatpush1.msra.mxu0 0.0
      %2303 = vmatprep.subr.mxu0 0.0
      %2304 = vmatpush1.msra.mxu0 0.0
      %2305 = vmatprep.subr.mxu0 0.0
      %2306 = vmatpush1.msra.mxu0 0.0
      %2307 = vmatprep.subr.mxu0 0.0
      %2308 = vmatpush1.msra.mxu0 0.0
      %2309 = vmatprep.subr.mxu0 0.0
      %2310 = vmatpush1.msra.mxu0 0.0
      %2311 = vmatprep.subr.mxu0 0.0
      %2312 = vmatpush1.msra.mxu0 0.0
      %2313 = vmatprep.mubr.f32.mxu0 %v2229
      %2314 = vmatmul.mubr.f32.gmra.mrb[0].mxu0 %v2179
      %v2315 = vpop.f32.mrb[0].mxu0
      %v2316 = vadd.f32 0.0, %v2315
      %v2317 = vpop.f32.mrb[0].mxu0
      %2318 = vmatprep.mubr.f32.mxu0 %v2231
      %2319 = vmatmul.mubr.f32.gmra.mrb[0].mxu0 %v2184
      %v2320 = vpop.f32.mrb[0].mxu0
      %v2321 = vadd.f32 0.0, %v2320
      %v2322 = vpop.f32.mrb[0].mxu0
      %2323 = vmatprep.mubr.f32.mxu0 %v2233
      %2324 = vmatmul.mubr.f32.gmra.mrb[0].mxu0 %v2188
      %v2325 = vpop.f32.mrb[0].mxu0
      %v2326 = vadd.f32 0.0, %v2325
      %v2327 = vpop.f32.mrb[0].mxu0
      %2328 = vmatprep.mubr.f32.mxu0 %v2235
      %2329 = vmatmul.mubr.f32.gmra.mrb[0].mxu0 %v2192
      %v2330 = vpop.f32.mrb[0].mxu0
      %v2331 = vadd.f32 0.0, %v2330
      %v2332 = vpop.f32.mrb[0].mxu0
      %2333 = vmatprep.mubr.f32.mxu0 %v2237
      %2334 = vmatmul.mubr.f32.gmra.mrb[0].mxu0 %v2196
      %v2335 = vpop.f32.mrb[0].mxu0
      %v2336 = vadd.f32 0.0, %v2335
      %v2337 = vpop.f32.mrb[0].mxu0
      %2338 = vmatprep.mubr.f32.mxu0 %v2239
      %2339 = vmatmul.mubr.f32.gmra.mrb[0].mxu0 %v2200
      %v2340 = vpop.f32.mrb[0].mxu0
      %v2341 = vadd.f32 0.0, %v2340
      %v2342 = vpop.f32.mrb[0].mxu0
      %2343 = vmatprep.mubr.f32.mxu0 %v2241
      %2344 = vmatmul.mubr.f32.gmra.mrb[0].mxu0 %v2204
      %v2345 = vpop.f32.mrb[0].mxu0
      %v2346 = vadd.f32 0.0, %v2345
      %v2347 = vpop.f32.mrb[0].mxu0
      %2348 = vmatprep.mubr.f32.mxu0 %v2243
      %2349 = vmatmul.mubr.f32.gmra.mrb[0].mxu0 %v2208
      %v2350 = vpop.f32.mrb[0].mxu0
      %v2351 = vadd.f32 0.0, %v2350
      %v2352 = vpop.f32.mrb[0].mxu0
      %2353 = vmatprep.mubr.f32.mxu0 %v2245
      %2354 = vmatmul.mubr.f32.gmra.mrb[0].mxu0 %v2212
      %v2355 = vpop.f32.mrb[0].mxu0
      %v2356 = vadd.f32 0.0, %v2355
      %v2357 = vpop.f32.mrb[0].mxu0
      %2358 = vmatprep.mubr.f32.mxu0 %v2247
      %2359 = vmatmul.mubr.f32.gmra.mrb[0].mxu0 %v2216
      %v2360 = vpop.f32.mrb[0].mxu0
      %v2361 = vadd.f32 0.0, %v2360
      %v2362 = vpop.f32.mrb[0].mxu0
      %2363 = vdwg.mxu0
      %v2364 = vadd.f32 %v2134, %v2316
      %v2365 = vadd.f32 %v2135, %v2321
      %v2366 = vadd.f32 %v2136, %v2326
      %v2367 = vadd.f32 %v2137, %v2331
      %v2368 = vadd.f32 %v2138, %v2336
      %v2369 = vadd.f32 %v2139, %v2341
      %v2370 = vadd.f32 %v2140, %v2346
      %v2371 = vadd.f32 %v2141, %v2351
      %v2372 = vadd.f32 %v2142, %v2356
      %v2373 = vadd.f32 %v2143, %v2361
      %v2374 = vld [vmem:[%s2] sm:$0x1]
      %v2376 = vlaneseq
      %v2377 = vshrl.u32 %v2376, 7
      %v2378 = vsub.s32 0, %v2377
      %v2379 = vrot.slane %v2374, %v2378
      %v2381 = vadd.f32 %v2364, %v2379
      %v2382 = vadd.f32 %v2365, %v2379
      %v2383 = vadd.f32 %v2366, %v2379
      %v2384 = vadd.f32 %v2367, %v2379
      %v2385 = vadd.f32 %v2368, %v2379
      %v2386 = vadd.f32 %v2369, %v2379
      %v2387 = vadd.f32 %v2370, %v2379
      %v2388 = vadd.f32 %v2371, %v2379
      %v2389 = vadd.f32 %v2372, %v2379
      %v2390 = vadd.f32 %v2373, %v2379
      %v2391 = vmax.f32 %v2381, 0.0
      %v2392 = vmax.f32 %v2382, 0.0
      %v2393 = vmax.f32 %v2383, 0.0
      %v2394 = vmax.f32 %v2384, 0.0
      %v2395 = vmax.f32 %v2385, 0.0
      %v2396 = vmax.f32 %v2386, 0.0
      %v2397 = vmax.f32 %v2387, 0.0
      %v2398 = vmax.f32 %v2388, 0.0
      %v2399 = vmax.f32 %v2389, 0.0
      %v2400 = vmax.f32 %v2390, 0.0
      %2401 = vst [vmem:[%s170] sm:$0xff] %v2391
      %2402 = vst [vmem:[%s170 + $0x8] sm:$0xff] %v2392
      %2403 = vst [vmem:[%s170 + $0x10] sm:$0xff] %v2393
      %2404 = vst [vmem:[%s170 + $0x18] sm:$0xff] %v2394
      %2405 = vst [vmem:[%s170 + $0x20] sm:$0xff] %v2395
      %2406 = vst [vmem:[%s170 + $0x28] sm:$0xff] %v2396
      %2407 = vst [vmem:[%s170 + $0x30] sm:$0xff] %v2397
      %2408 = vst [vmem:[%s170 + $0x38] sm:$0xff] %v2398
      %2409 = vst [vmem:[%s170 + $0x40] sm:$0xff] %v2399
      %2410 = vst [vmem:[%s170 + $0x48] sm:$0xff] %v2400
      %p2411 = scmp.lt.s32.totalorder %s14, 1
      %s2412 = scalar_select %p2411, %s14, 1
      %s2413 = smul.addr %s2412, 10
      %s2414 = smul.addr %s2413, 8
      %s2415 = scalar_lea.vmem %s3, %s2414
      // Predicated region
      $region33: #{asff_forward.7} parent=31 // pred_check
        %p2416 = pneg %p100
      $region34: #{asff_forward.7} parent=31 // pred_check_branch
        %2418 = sbr.rel (%p2416) target = $region36
      $region35: #{asff_forward.7} parent=31 // pred_region
        _
      $region36: #{asff_forward.7} parent=31 // pred_fallthru
        _
    $region32: #{asff_forward.7} parent=5 // pred_fallthru
      _
    %p2419 = scmp.le.s32.totalorder 2, %s9
    // Predicated region
    $region37: #{asff_forward.7} parent=5 // pred_check
      %p2420 = pneg %p2419
    $region38: #{asff_forward.7} parent=5 // pred_check_branch
      %2422 = sbr.rel (%p2420) target = $region40
    $region39: #{asff_forward.7} parent=5 // pred_region
      %s2423 = ssub.s32 %s9, 2
      // Predicated region
      $region41: #{asff_forward.7} parent=39 // pred_check
        %p2424 = pneg %p106
      $region42: #{asff_forward.7} parent=39 // pred_check_branch
        %2426 = sbr.rel (%p2424) target = $region44
      $region43: #{asff_forward.7} parent=39 // pred_region
        %p2427 = scmp.lt.s32.totalorder %s15, 1
        %s2428 = scalar_select %p2427, %s15, 1
        %s2429 = smul.addr %s2428, 10
        %s2430 = smul.addr %s2429, 8
        %s2431 = scalar_lea.vmem %s3, %s2430
      $region44: #{asff_forward.7} parent=39 // pred_fallthru
        _
    $region40: #{asff_forward.7} parent=5 // pred_fallthru
      _
  $region6: #{asff_forward.7} parent=0 // loop_footer
    %s13 = sadd.s32 1, %s9
  $region7: #{asff_forward.7} parent=0 // loop_footer_branch
    %8 = sbr.rel target = $region3
  $region8: #{asff_forward.7} parent=0 // loop_exit
    _

// kernel: asff_forward.6
$region0: #{asff_forward.6}
  #allocation0 [shape = 'u32[]', space=smem, size = 0x4, offset = 0x4, fixed_abs, tag = 'smem constant byte address 0x4 - core index']
  #allocation1 [shape = 'u32[144,128]{1,0:T(1,128)}', space=vmem, size = 0x12000, scoped, tag = 'internal scratch']
  %s0 = inlined_call_operand.vmem [shape: f32[128,256], index: 0, kind: input, shape index: {}]
  %s1 = inlined_call_operand.vmem [shape: f32[256,128], index: 1, kind: input, shape index: {}]
  %s2 = inlined_call_operand.vmem [shape: f32[1,128], index: 2, kind: input, shape index: {}]
  %s3 = inlined_call_operand.vmem [shape: f32[128,128], index: 3, kind: output, shape index: {}]
  %s4 = sld [smem:[#allocation0]]
  $region22: #{asff_forward.6} parent=0
    _
  %s6 = ssub.s32 1, %s4
  %s7 = scalar_select 0, %s6, %s4
  // Predicated region
  $region2: #{asff_forward.6} parent=0 // pred_check
    _
  $region3: #{asff_forward.6} parent=0 // pred_check_branch
    %9 = sbr.rel (0) target = $region5
  $region4: #{asff_forward.6} parent=0 // pred_region
    _
  $region5: #{asff_forward.6} parent=0 // pred_fallthru
    _
  // Predicated region
  $region6: #{asff_forward.6} parent=0 // pred_check
    _
  $region7: #{asff_forward.6} parent=0 // pred_check_branch
    %11 = sbr.rel (0) target = $region9
  $region8: #{asff_forward.6} parent=0 // pred_region
    _
  $region9: #{asff_forward.6} parent=0 // pred_fallthru
    _
  // Predicated region
  $region10: #{asff_forward.6} parent=0 // pred_check
    _
  $region11: #{asff_forward.6} parent=0 // pred_check_branch
    %13 = sbr.rel (0) target = $region13
  $region12: #{asff_forward.6} parent=0 // pred_region
    _
  $region13: #{asff_forward.6} parent=0 // pred_fallthru
    _
  %v14 = vld [vmem:[%s0] sm:$0xff]
  %v15 = vld [vmem:[%s0 + $0x8] sm:$0xff]
  %v16 = vld [vmem:[%s0 + $0x10] sm:$0xff]
  %v17 = vld [vmem:[%s0 + $0x18] sm:$0xff]
  %v18 = vld [vmem:[%s0 + $0x20] sm:$0xff]
  %v19 = vld [vmem:[%s0 + $0x28] sm:$0xff]
  %v20 = vld [vmem:[%s0 + $0x30] sm:$0xff]
  %v21 = vld [vmem:[%s0 + $0x38] sm:$0xff]
  %v22 = vld [vmem:[%s0 + $0x40] sm:$0xff]
  %v23 = vld [vmem:[%s0 + $0x48] sm:$0xff]
  %v24 = vld [vmem:[%s0 + $0x50] sm:$0xff]
  %v25 = vld [vmem:[%s0 + $0x58] sm:$0xff]
  %v26 = vld [vmem:[%s0 + $0x60] sm:$0xff]
  %v27 = vld [vmem:[%s0 + $0x68] sm:$0xff]
  %v28 = vld [vmem:[%s0 + $0x70] sm:$0xff]
  %v29 = vld [vmem:[%s0 + $0x78] sm:$0xff]
  %v30 = vld [vmem:[%s0 + $0x80] sm:$0xff]
  %v31 = vld [vmem:[%s0 + $0x88] sm:$0xff]
  %v32 = vld [vmem:[%s0 + $0x90] sm:$0xff]
  %v33 = vld [vmem:[%s0 + $0x98] sm:$0xff]
  %v34 = vld [vmem:[%s0 + $0xa0] sm:$0xff]
  %v35 = vld [vmem:[%s0 + $0xa8] sm:$0xff]
  %v36 = vld [vmem:[%s0 + $0xb0] sm:$0xff]
  %v37 = vld [vmem:[%s0 + $0xb8] sm:$0xff]
  %v38 = vld [vmem:[%s0 + $0xc0] sm:$0xff]
  %v39 = vld [vmem:[%s0 + $0xc8] sm:$0xff]
  %v40 = vld [vmem:[%s0 + $0xd0] sm:$0xff]
  %v41 = vld [vmem:[%s0 + $0xd8] sm:$0xff]
  %v42 = vld [vmem:[%s0 + $0xe0] sm:$0xff]
  %v43 = vld [vmem:[%s0 + $0xe8] sm:$0xff]
  %v44 = vld [vmem:[%s0 + $0xf0] sm:$0xff]
  %v45 = vld [vmem:[%s0 + $0xf8] sm:$0xff]
  %v46 = vld [vmem:[%s1] sm:$0xff]
  %v47 = vld [vmem:[%s1 + $0x8] sm:$0xff]
  %v48 = vld [vmem:[%s1 + $0x10] sm:$0xff]
  %v49 = vld [vmem:[%s1 + $0x18] sm:$0xff]
  %v50 = vld [vmem:[%s1 + $0x20] sm:$0xff]
  %v51 = vld [vmem:[%s1 + $0x28] sm:$0xff]
  %v52 = vld [vmem:[%s1 + $0x30] sm:$0xff]
  %v53 = vld [vmem:[%s1 + $0x38] sm:$0xff]
  %v54 = vld [vmem:[%s1 + $0x40] sm:$0xff]
  %v55 = vld [vmem:[%s1 + $0x48] sm:$0xff]
  %v56 = vld [vmem:[%s1 + $0x50] sm:$0xff]
  %v57 = vld [vmem:[%s1 + $0x58] sm:$0xff]
  %v58 = vld [vmem:[%s1 + $0x60] sm:$0xff]
  %v59 = vld [vmem:[%s1 + $0x68] sm:$0xff]
  %v60 = vld [vmem:[%s1 + $0x70] sm:$0xff]
  %v61 = vld [vmem:[%s1 + $0x78] sm:$0xff]
  %v62 = vld [vmem:[%s1 + $0x80] sm:$0xff]
  %v63 = vld [vmem:[%s1 + $0x88] sm:$0xff]
  %v64 = vld [vmem:[%s1 + $0x90] sm:$0xff]
  %v65 = vld [vmem:[%s1 + $0x98] sm:$0xff]
  %v66 = vld [vmem:[%s1 + $0xa0] sm:$0xff]
  %v67 = vld [vmem:[%s1 + $0xa8] sm:$0xff]
  %v68 = vld [vmem:[%s1 + $0xb0] sm:$0xff]
  %v69 = vld [vmem:[%s1 + $0xb8] sm:$0xff]
  %v70 = vld [vmem:[%s1 + $0xc0] sm:$0xff]
  %v71 = vld [vmem:[%s1 + $0xc8] sm:$0xff]
  %v72 = vld [vmem:[%s1 + $0xd0] sm:$0xff]
  %v73 = vld [vmem:[%s1 + $0xd8] sm:$0xff]
  %v74 = vld [vmem:[%s1 + $0xe0] sm:$0xff]
  %v75 = vld [vmem:[%s1 + $0xe8] sm:$0xff]
  %v76 = vld [vmem:[%s1 + $0xf0] sm:$0xff]
  %v77 = vld [vmem:[%s1 + $0xf8] sm:$0xff]
  %v78 = vld [vmem:[%s2] sm:$0x1]
  %v80 = vlaneseq
  %v81 = vshrl.u32 %v80, 7
  %v82 = vsub.s32 0, %v81
  %v83 = vrot.slane %v78, %v82
  %85 = vmatprep.subr.mxu0 0.0
  %86 = vmatpush1.msra.mxu0 %v46
  %87 = vmatprep.subr.mxu0 0.0
  %88 = vmatpush1.msra.mxu0 %v47
  %89 = vmatprep.subr.mxu0 0.0
  %90 = vmatpush1.msra.mxu0 %v48
  %91 = vmatprep.subr.mxu0 0.0
  %92 = vmatpush1.msra.mxu0 %v49
  %93 = vmatprep.subr.mxu0 0.0
  %94 = vmatpush1.msra.mxu0 %v50
  %95 = vmatprep.subr.mxu0 0.0
  %96 = vmatpush1.msra.mxu0 %v51
  %97 = vmatprep.subr.mxu0 0.0
  %98 = vmatpush1.msra.mxu0 %v52
  %99 = vmatprep.subr.mxu0 0.0
  %100 = vmatpush1.msra.mxu0 %v53
  %101 = vmatprep.subr.mxu0 0.0
  %102 = vmatpush1.msra.mxu0 %v54
  %103 = vmatprep.subr.mxu0 0.0
  %104 = vmatpush1.msra.mxu0 %v55
  %105 = vmatprep.subr.mxu0 0.0
  %106 = vmatpush1.msra.mxu0 %v56
  %107 = vmatprep.subr.mxu0 0.0
  %108 = vmatpush1.msra.mxu0 %v57
  %109 = vmatprep.subr.mxu0 0.0
  %110 = vmatpush1.msra.mxu0 %v58
  %111 = vmatprep.subr.mxu0 0.0
  %112 = vmatpush1.msra.mxu0 %v59
  %113 = vmatprep.subr.mxu0 0.0
  %114 = vmatpush1.msra.mxu0 %v60
  %115 = vmatprep.subr.mxu0 0.0
  %116 = vmatpush1.msra.mxu0 %v61
  %117 = vmatprep.subr.mxu0 0.0
  %118 = vmatpush1.msra.mxu0 %v62
  %119 = vmatprep.subr.mxu0 0.0
  %120 = vmatpush1.msra.mxu0 %v63
  %121 = vmatprep.subr.mxu0 0.0
  %122 = vmatpush1.msra.mxu0 %v64
  %123 = vmatprep.subr.mxu0 0.0
  %124 = vmatpush1.msra.mxu0 %v65
  %125 = vmatprep.subr.mxu0 0.0
  %126 = vmatpush1.msra.mxu0 %v66
  %127 = vmatprep.subr.mxu0 0.0
  %128 = vmatpush1.msra.mxu0 %v67
  %129 = vmatprep.subr.mxu0 0.0
  %130 = vmatpush1.msra.mxu0 %v68
  %131 = vmatprep.subr.mxu0 0.0
  %132 = vmatpush1.msra.mxu0 %v69
  %133 = vmatprep.subr.mxu0 0.0
  %134 = vmatpush1.msra.mxu0 %v70
  %135 = vmatprep.subr.mxu0 0.0
  %136 = vmatpush1.msra.mxu0 %v71
  %137 = vmatprep.subr.mxu0 0.0
  %138 = vmatpush1.msra.mxu0 %v72
  %139 = vmatprep.subr.mxu0 0.0
  %140 = vmatpush1.msra.mxu0 %v73
  %141 = vmatprep.subr.mxu0 0.0
  %142 = vmatpush1.msra.mxu0 %v74
  %143 = vmatprep.subr.mxu0 0.0
  %144 = vmatpush1.msra.mxu0 %v75
  %145 = vmatprep.subr.mxu0 0.0
  %146 = vmatpush1.msra.mxu0 %v76
  %147 = vmatprep.subr.mxu0 0.0
  %148 = vmatpush1.msra.mxu0 %v77
  %149 = vmatprep.mubr.f32.mxu0 %v15
  %150 = vmatmul.mubr.f32.gmra.mrb[0].mxu0 %v14
  %v151 = vpop.f32.mrb[0].mxu0
  %v152 = vadd.f32 %v83, %v151
  %v153 = vpop.f32.mrb[0].mxu0
  %154 = vmatprep.mubr.f32.mxu0 %v17
  %155 = vmatmul.mubr.f32.gmra.mrb[0].mxu0 %v16
  %v156 = vpop.f32.mrb[0].mxu0
  %v157 = vadd.f32 %v83, %v156
  %v158 = vpop.f32.mrb[0].mxu0
  %159 = vmatprep.mubr.f32.mxu0 %v19
  %160 = vmatmul.mubr.f32.gmra.mrb[0].mxu0 %v18
  %v161 = vpop.f32.mrb[0].mxu0
  %v162 = vadd.f32 %v83, %v161
  %v163 = vpop.f32.mrb[0].mxu0
  %164 = vmatprep.mubr.f32.mxu0 %v21
  %165 = vmatmul.mubr.f32.gmra.mrb[0].mxu0 %v20
  %v166 = vpop.f32.mrb[0].mxu0
  %v167 = vadd.f32 %v83, %v166
  %v168 = vpop.f32.mrb[0].mxu0
  %169 = vmatprep.mubr.f32.mxu0 %v23
  %170 = vmatmul.mubr.f32.gmra.mrb[0].mxu0 %v22
  %v171 = vpop.f32.mrb[0].mxu0
  %v172 = vadd.f32 %v83, %v171
  %v173 = vpop.f32.mrb[0].mxu0
  %174 = vmatprep.mubr.f32.mxu0 %v25
  %175 = vmatmul.mubr.f32.gmra.mrb[0].mxu0 %v24
  %v176 = vpop.f32.mrb[0].mxu0
  %v177 = vadd.f32 %v83, %v176
  %v178 = vpop.f32.mrb[0].mxu0
  %179 = vmatprep.mubr.f32.mxu0 %v27
  %180 = vmatmul.mubr.f32.gmra.mrb[0].mxu0 %v26
  %v181 = vpop.f32.mrb[0].mxu0
  %v182 = vadd.f32 %v83, %v181
  %v183 = vpop.f32.mrb[0].mxu0
  %184 = vmatprep.mubr.f32.mxu0 %v29
  %185 = vmatmul.mubr.f32.gmra.mrb[0].mxu0 %v28
  %v186 = vpop.f32.mrb[0].mxu0
  %v187 = vadd.f32 %v83, %v186
  %v188 = vpop.f32.mrb[0].mxu0
  %189 = vmatprep.mubr.f32.mxu0 %v31
  %190 = vmatmul.mubr.f32.gmra.mrb[0].mxu0 %v30
  %v191 = vpop.f32.mrb[0].mxu0
  %v192 = vadd.f32 %v83, %v191
  %v193 = vpop.f32.mrb[0].mxu0
  %194 = vmatprep.mubr.f32.mxu0 %v33
  %195 = vmatmul.mubr.f32.gmra.mrb[0].mxu0 %v32
  %v196 = vpop.f32.mrb[0].mxu0
  %v197 = vadd.f32 %v83, %v196
  %v198 = vpop.f32.mrb[0].mxu0
  %199 = vmatprep.mubr.f32.mxu0 %v35
  %200 = vmatmul.mubr.f32.gmra.mrb[0].mxu0 %v34
  %v201 = vpop.f32.mrb[0].mxu0
  %v202 = vadd.f32 %v83, %v201
  %v203 = vpop.f32.mrb[0].mxu0
  %204 = vmatprep.mubr.f32.mxu0 %v37
  %205 = vmatmul.mubr.f32.gmra.mrb[0].mxu0 %v36
  %v206 = vpop.f32.mrb[0].mxu0
  %v207 = vadd.f32 %v83, %v206
  %v208 = vpop.f32.mrb[0].mxu0
  %209 = vmatprep.mubr.f32.mxu0 %v39
  %210 = vmatmul.mubr.f32.gmra.mrb[0].mxu0 %v38
  %v211 = vpop.f32.mrb[0].mxu0
  %v212 = vadd.f32 %v83, %v211
  %v213 = vpop.f32.mrb[0].mxu0
  %214 = vmatprep.mubr.f32.mxu0 %v41
  %215 = vmatmul.mubr.f32.gmra.mrb[0].mxu0 %v40
  %v216 = vpop.f32.mrb[0].mxu0
  %v217 = vadd.f32 %v83, %v216
  %v218 = vpop.f32.mrb[0].mxu0
  %219 = vmatprep.mubr.f32.mxu0 %v43
  %220 = vmatmul.mubr.f32.gmra.mrb[0].mxu0 %v42
  %v221 = vpop.f32.mrb[0].mxu0
  %v222 = vadd.f32 %v83, %v221
  %v223 = vpop.f32.mrb[0].mxu0
  %224 = vmatprep.mubr.f32.mxu0 %v45
  %225 = vmatmul.mubr.f32.gmra.mrb[0].mxu0 %v44
  %v226 = vpop.f32.mrb[0].mxu0
  %v227 = vadd.f32 %v83, %v226
  %v228 = vpop.f32.mrb[0].mxu0
  %229 = vdwg.mxu0
  %v230 = vmax.f32 %v152, 0.0
  %v231 = vmax.f32 %v157, 0.0
  %v232 = vmax.f32 %v162, 0.0
  %v233 = vmax.f32 %v167, 0.0
  %v234 = vmax.f32 %v172, 0.0
  %v235 = vmax.f32 %v177, 0.0
  %v236 = vmax.f32 %v182, 0.0
  %v237 = vmax.f32 %v187, 0.0
  %v238 = vmax.f32 %v192, 0.0
  %v239 = vmax.f32 %v197, 0.0
  %v240 = vmax.f32 %v202, 0.0
  %v241 = vmax.f32 %v207, 0.0
  %v242 = vmax.f32 %v212, 0.0
  %v243 = vmax.f32 %v217, 0.0
  %v244 = vmax.f32 %v222, 0.0
  %v245 = vmax.f32 %v227, 0.0
  %246 = vst [vmem:[%s3] sm:$0xff] %v230
  %247 = vst [vmem:[%s3 + $0x8] sm:$0xff] %v231
  %248 = vst [vmem:[%s3 + $0x10] sm:$0xff] %v232
  %249 = vst [vmem:[%s3 + $0x18] sm:$0xff] %v233
  %250 = vst [vmem:[%s3 + $0x20] sm:$0xff] %v234
  %251 = vst [vmem:[%s3 + $0x28] sm:$0xff] %v235
  %252 = vst [vmem:[%s3 + $0x30] sm:$0xff] %v236
  %253 = vst [vmem:[%s3 + $0x38] sm:$0xff] %v237
  %254 = vst [vmem:[%s3 + $0x40] sm:$0xff] %v238
  %255 = vst [vmem:[%s3 + $0x48] sm:$0xff] %v239
  %256 = vst [vmem:[%s3 + $0x50] sm:$0xff] %v240
  %257 = vst [vmem:[%s3 + $0x58] sm:$0xff] %v241
  %258 = vst [vmem:[%s3 + $0x60] sm:$0xff] %v242
  %259 = vst [vmem:[%s3 + $0x68] sm:$0xff] %v243
  %260 = vst [vmem:[%s3 + $0x70] sm:$0xff] %v244
  %261 = vst [vmem:[%s3 + $0x78] sm:$0xff] %v245
  // Predicated region
  $region14: #{asff_forward.6} parent=0 // pred_check
    _
  $region15: #{asff_forward.6} parent=0 // pred_check_branch
    %263 = sbr.rel (0) target = $region17
  $region16: #{asff_forward.6} parent=0 // pred_region
    _
  $region17: #{asff_forward.6} parent=0 // pred_fallthru
    _
  // Predicated region
  $region18: #{asff_forward.6} parent=0 // pred_check
    _
  $region19: #{asff_forward.6} parent=0 // pred_check_branch
    %265 = sbr.rel (0) target = $region21
  $region20: #{asff_forward.6} parent=0 // pred_region
    _
  $region21: #{asff_forward.6} parent=0 // pred_fallthru
    _

// kernel: asff_forward.8
$region0: #{asff_forward.8}
  #allocation0 [shape = 'u32[]', space=smem, size = 0x4, offset = 0x4, fixed_abs, tag = 'smem constant byte address 0x4 - core index']
  #allocation1 [shape = 'u32[144,128]{1,0:T(1,128)}', space=vmem, size = 0x12000, scoped, tag = 'internal scratch']
  %s0 = inlined_call_operand.vmem [shape: f32[128,128], index: 0, kind: input, shape index: {}]
  %s1 = inlined_call_operand.vmem [shape: f32[128,128], index: 1, kind: input, shape index: {}]
  %s2 = inlined_call_operand.vmem [shape: f32[128,128], index: 2, kind: input, shape index: {}]
  %s3 = inlined_call_operand.vmem [shape: f32[384,16], index: 3, kind: input, shape index: {}]
  %s4 = inlined_call_operand.vmem [shape: f32[1,48], index: 4, kind: input, shape index: {}]
  %s5 = inlined_call_operand.vmem [shape: f32[48,3], index: 5, kind: input, shape index: {}]
  %s6 = inlined_call_operand.vmem [shape: f32[1,3], index: 6, kind: input, shape index: {}]
  %s7 = inlined_call_operand.vmem [shape: f32[128,128], index: 7, kind: output, shape index: {}]
  %s8 = sld [smem:[#allocation0]]
  $region38: #{asff_forward.8} parent=0
    _
  %s10 = ssub.s32 1, %s8
  %s11 = scalar_select 0, %s10, %s8
  // Predicated region
  $region2: #{asff_forward.8} parent=0 // pred_check
    _
  $region3: #{asff_forward.8} parent=0 // pred_check_branch
    %13 = sbr.rel (0) target = $region5
  $region4: #{asff_forward.8} parent=0 // pred_region
    _
  $region5: #{asff_forward.8} parent=0 // pred_fallthru
    _
  // Predicated region
  $region6: #{asff_forward.8} parent=0 // pred_check
    _
  $region7: #{asff_forward.8} parent=0 // pred_check_branch
    %15 = sbr.rel (0) target = $region9
  $region8: #{asff_forward.8} parent=0 // pred_region
    _
  $region9: #{asff_forward.8} parent=0 // pred_fallthru
    _
  // Predicated region
  $region10: #{asff_forward.8} parent=0 // pred_check
    _
  $region11: #{asff_forward.8} parent=0 // pred_check_branch
    %17 = sbr.rel (0) target = $region13
  $region12: #{asff_forward.8} parent=0 // pred_region
    _
  $region13: #{asff_forward.8} parent=0 // pred_fallthru
    _
  // Predicated region
  $region14: #{asff_forward.8} parent=0 // pred_check
    _
  $region15: #{asff_forward.8} parent=0 // pred_check_branch
    %19 = sbr.rel (0) target = $region17
  $region16: #{asff_forward.8} parent=0 // pred_region
    _
  $region17: #{asff_forward.8} parent=0 // pred_fallthru
    _
  // Predicated region
  $region18: #{asff_forward.8} parent=0 // pred_check
    _
  $region19: #{asff_forward.8} parent=0 // pred_check_branch
    %21 = sbr.rel (0) target = $region21
  $region20: #{asff_forward.8} parent=0 // pred_region
    _
  $region21: #{asff_forward.8} parent=0 // pred_fallthru
    _
  // Predicated region
  $region22: #{asff_forward.8} parent=0 // pred_check
    _
  $region23: #{asff_forward.8} parent=0 // pred_check_branch
    %23 = sbr.rel (0) target = $region25
  $region24: #{asff_forward.8} parent=0 // pred_region
    _
  $region25: #{asff_forward.8} parent=0 // pred_fallthru
    _
  // Predicated region
  $region26: #{asff_forward.8} parent=0 // pred_check
    _
  $region27: #{asff_forward.8} parent=0 // pred_check_branch
    %25 = sbr.rel (0) target = $region29
  $region28: #{asff_forward.8} parent=0 // pred_region
    _
  $region29: #{asff_forward.8} parent=0 // pred_fallthru
    _
  %v26 = vld [vmem:[%s0] sm:$0xff]
  %v27 = vld [vmem:[%s0 + $0x8] sm:$0xff]
  %v28 = vld [vmem:[%s0 + $0x10] sm:$0xff]
  %v29 = vld [vmem:[%s0 + $0x18] sm:$0xff]
  %v30 = vld [vmem:[%s0 + $0x20] sm:$0xff]
  %v31 = vld [vmem:[%s0 + $0x28] sm:$0xff]
  %v32 = vld [vmem:[%s0 + $0x30] sm:$0xff]
  %v33 = vld [vmem:[%s0 + $0x38] sm:$0xff]
  %v34 = vld [vmem:[%s0 + $0x40] sm:$0xff]
  %v35 = vld [vmem:[%s0 + $0x48] sm:$0xff]
  %v36 = vld [vmem:[%s0 + $0x50] sm:$0xff]
  %v37 = vld [vmem:[%s0 + $0x58] sm:$0xff]
  %v38 = vld [vmem:[%s0 + $0x60] sm:$0xff]
  %v39 = vld [vmem:[%s0 + $0x68] sm:$0xff]
  %v40 = vld [vmem:[%s0 + $0x70] sm:$0xff]
  %v41 = vld [vmem:[%s0 + $0x78] sm:$0xff]
  %v42 = vld [vmem:[%s1] sm:$0xff]
  %v43 = vld [vmem:[%s1 + $0x8] sm:$0xff]
  %v44 = vld [vmem:[%s1 + $0x10] sm:$0xff]
  %v45 = vld [vmem:[%s1 + $0x18] sm:$0xff]
  %v46 = vld [vmem:[%s1 + $0x20] sm:$0xff]
  %v47 = vld [vmem:[%s1 + $0x28] sm:$0xff]
  %v48 = vld [vmem:[%s1 + $0x30] sm:$0xff]
  %v49 = vld [vmem:[%s1 + $0x38] sm:$0xff]
  %v50 = vld [vmem:[%s1 + $0x40] sm:$0xff]
  %v51 = vld [vmem:[%s1 + $0x48] sm:$0xff]
  %v52 = vld [vmem:[%s1 + $0x50] sm:$0xff]
  %v53 = vld [vmem:[%s1 + $0x58] sm:$0xff]
  %v54 = vld [vmem:[%s1 + $0x60] sm:$0xff]
  %v55 = vld [vmem:[%s1 + $0x68] sm:$0xff]
  %v56 = vld [vmem:[%s1 + $0x70] sm:$0xff]
  %v57 = vld [vmem:[%s1 + $0x78] sm:$0xff]
  %v58 = vld [vmem:[%s2] sm:$0xff]
  %v59 = vld [vmem:[%s2 + $0x8] sm:$0xff]
  %v60 = vld [vmem:[%s2 + $0x10] sm:$0xff]
  %v61 = vld [vmem:[%s2 + $0x18] sm:$0xff]
  %v62 = vld [vmem:[%s2 + $0x20] sm:$0xff]
  %v63 = vld [vmem:[%s2 + $0x28] sm:$0xff]
  %v64 = vld [vmem:[%s2 + $0x30] sm:$0xff]
  %v65 = vld [vmem:[%s2 + $0x38] sm:$0xff]
  %v66 = vld [vmem:[%s2 + $0x40] sm:$0xff]
  %v67 = vld [vmem:[%s2 + $0x48] sm:$0xff]
  %v68 = vld [vmem:[%s2 + $0x50] sm:$0xff]
  %v69 = vld [vmem:[%s2 + $0x58] sm:$0xff]
  %v70 = vld [vmem:[%s2 + $0x60] sm:$0xff]
  %v71 = vld [vmem:[%s2 + $0x68] sm:$0xff]
  %v72 = vld [vmem:[%s2 + $0x70] sm:$0xff]
  %v73 = vld [vmem:[%s2 + $0x78] sm:$0xff]
  %v74 = vld [vmem:[%s4] sm:$0x1]
  %v75 = vld [vmem:[%s3] sm:$0xff]
  %v76 = vld [vmem:[%s3 + $0x8] sm:$0xff]
  %v77 = vld [vmem:[%s3 + $0x10] sm:$0xff]
  %v78 = vld [vmem:[%s3 + $0x18] sm:$0xff]
  %v79 = vld [vmem:[%s3 + $0x20] sm:$0xff]
  %v80 = vld [vmem:[%s3 + $0x28] sm:$0xff]
  %v81 = vld [vmem:[%s3 + $0x30] sm:$0xff]
  %v82 = vld [vmem:[%s3 + $0x38] sm:$0xff]
  %v83 = vld [vmem:[%s3 + $0x40] sm:$0xff]
  %v84 = vld [vmem:[%s3 + $0x48] sm:$0xff]
  %v85 = vld [vmem:[%s3 + $0x50] sm:$0xff]
  %v86 = vld [vmem:[%s3 + $0x58] sm:$0xff]
  %v87 = vld [vmem:[%s3 + $0x60] sm:$0xff]
  %v88 = vld [vmem:[%s3 + $0x68] sm:$0xff]
  %v89 = vld [vmem:[%s3 + $0x70] sm:$0xff]
  %v90 = vld [vmem:[%s3 + $0x78] sm:$0xff]
  %v92 = vlaneseq
  %v93 = vshrl.u32 %v92, 7
  %v94 = vsub.s32 0, %v93
  %v95 = vrot.slane %v74, %v94
  %97 = vmatprep.subr.mxu0 0.0
  %98 = vmatpush1.msra.mxu0 %v75
  %99 = vmatprep.subr.mxu0 0.0
  %100 = vmatpush1.msra.mxu0 %v76
  %101 = vmatprep.subr.mxu0 0.0
  %102 = vmatpush1.msra.mxu0 %v77
  %103 = vmatprep.subr.mxu0 0.0
  %104 = vmatpush1.msra.mxu0 %v78
  %105 = vmatprep.subr.mxu0 0.0
  %106 = vmatpush1.msra.mxu0 %v79
  %107 = vmatprep.subr.mxu0 0.0
  %108 = vmatpush1.msra.mxu0 %v80
  %109 = vmatprep.subr.mxu0 0.0
  %110 = vmatpush1.msra.mxu0 %v81
  %111 = vmatprep.subr.mxu0 0.0
  %112 = vmatpush1.msra.mxu0 %v82
  %113 = vmatprep.subr.mxu0 0.0
  %114 = vmatpush1.msra.mxu0 %v83
  %115 = vmatprep.subr.mxu0 0.0
  %116 = vmatpush1.msra.mxu0 %v84
  %117 = vmatprep.subr.mxu0 0.0
  %118 = vmatpush1.msra.mxu0 %v85
  %119 = vmatprep.subr.mxu0 0.0
  %120 = vmatpush1.msra.mxu0 %v86
  %121 = vmatprep.subr.mxu0 0.0
  %122 = vmatpush1.msra.mxu0 %v87
  %123 = vmatprep.subr.mxu0 0.0
  %124 = vmatpush1.msra.mxu0 %v88
  %125 = vmatprep.subr.mxu0 0.0
  %126 = vmatpush1.msra.mxu0 %v89
  %127 = vmatprep.subr.mxu0 0.0
  %128 = vmatpush1.msra.mxu0 %v90
  %129 = vmatprep.subr.mxu0 0.0
  %130 = vmatpush1.msra.mxu0 0.0
  %131 = vmatprep.subr.mxu0 0.0
  %132 = vmatpush1.msra.mxu0 0.0
  %133 = vmatprep.subr.mxu0 0.0
  %134 = vmatpush1.msra.mxu0 0.0
  %135 = vmatprep.subr.mxu0 0.0
  %136 = vmatpush1.msra.mxu0 0.0
  %137 = vmatprep.subr.mxu0 0.0
  %138 = vmatpush1.msra.mxu0 0.0
  %139 = vmatprep.subr.mxu0 0.0
  %140 = vmatpush1.msra.mxu0 0.0
  %141 = vmatprep.subr.mxu0 0.0
  %142 = vmatpush1.msra.mxu0 0.0
  %143 = vmatprep.subr.mxu0 0.0
  %144 = vmatpush1.msra.mxu0 0.0
  %145 = vmatprep.subr.mxu0 0.0
  %146 = vmatpush1.msra.mxu0 0.0
  %147 = vmatprep.subr.mxu0 0.0
  %148 = vmatpush1.msra.mxu0 0.0
  %149 = vmatprep.subr.mxu0 0.0
  %150 = vmatpush1.msra.mxu0 0.0
  %151 = vmatprep.subr.mxu0 0.0
  %152 = vmatpush1.msra.mxu0 0.0
  %153 = vmatprep.subr.mxu0 0.0
  %154 = vmatpush1.msra.mxu0 0.0
  %155 = vmatprep.subr.mxu0 0.0
  %156 = vmatpush1.msra.mxu0 0.0
  %157 = vmatprep.subr.mxu0 0.0
  %158 = vmatpush1.msra.mxu0 0.0
  %159 = vmatprep.subr.mxu0 0.0
  %160 = vmatpush1.msra.mxu0 0.0
  %161 = vmatprep.mubr.f32.mxu0 0.0
  %162 = vmatmul.mubr.f32.gmra.mrb[0].mxu0 %v26
  %v163 = vpop.f32.mrb[0].mxu0
  %v164 = vadd.f32 %v95, %v163
  %v165 = vpop.f32.mrb[0].mxu0
  %166 = vmatprep.mubr.f32.mxu0 0.0
  %167 = vmatmul.mubr.f32.gmra.mrb[0].mxu0 %v27
  %v168 = vpop.f32.mrb[0].mxu0
  %v169 = vadd.f32 %v95, %v168
  %v170 = vpop.f32.mrb[0].mxu0
  %171 = vmatprep.mubr.f32.mxu0 0.0
  %172 = vmatmul.mubr.f32.gmra.mrb[0].mxu0 %v28
  %v173 = vpop.f32.mrb[0].mxu0
  %v174 = vadd.f32 %v95, %v173
  %v175 = vpop.f32.mrb[0].mxu0
  %176 = vmatprep.mubr.f32.mxu0 0.0
  %177 = vmatmul.mubr.f32.gmra.mrb[0].mxu0 %v29
  %v178 = vpop.f32.mrb[0].mxu0
  %v179 = vadd.f32 %v95, %v178
  %v180 = vpop.f32.mrb[0].mxu0
  %181 = vmatprep.mubr.f32.mxu0 0.0
  %182 = vmatmul.mubr.f32.gmra.mrb[0].mxu0 %v30
  %v183 = vpop.f32.mrb[0].mxu0
  %v184 = vadd.f32 %v95, %v183
  %v185 = vpop.f32.mrb[0].mxu0
  %186 = vmatprep.mubr.f32.mxu0 0.0
  %187 = vmatmul.mubr.f32.gmra.mrb[0].mxu0 %v31
  %v188 = vpop.f32.mrb[0].mxu0
  %v189 = vadd.f32 %v95, %v188
  %v190 = vpop.f32.mrb[0].mxu0
  %191 = vmatprep.mubr.f32.mxu0 0.0
  %192 = vmatmul.mubr.f32.gmra.mrb[0].mxu0 %v32
  %v193 = vpop.f32.mrb[0].mxu0
  %v194 = vadd.f32 %v95, %v193
  %v195 = vpop.f32.mrb[0].mxu0
  %196 = vmatprep.mubr.f32.mxu0 0.0
  %197 = vmatmul.mubr.f32.gmra.mrb[0].mxu0 %v33
  %v198 = vpop.f32.mrb[0].mxu0
  %v199 = vadd.f32 %v95, %v198
  %v200 = vpop.f32.mrb[0].mxu0
  %201 = vmatprep.mubr.f32.mxu0 0.0
  %202 = vmatmul.mubr.f32.gmra.mrb[0].mxu0 %v34
  %v203 = vpop.f32.mrb[0].mxu0
  %v204 = vadd.f32 %v95, %v203
  %v205 = vpop.f32.mrb[0].mxu0
  %206 = vmatprep.mubr.f32.mxu0 0.0
  %207 = vmatmul.mubr.f32.gmra.mrb[0].mxu0 %v35
  %v208 = vpop.f32.mrb[0].mxu0
  %v209 = vadd.f32 %v95, %v208
  %v210 = vpop.f32.mrb[0].mxu0
  %211 = vmatprep.mubr.f32.mxu0 0.0
  %212 = vmatmul.mubr.f32.gmra.mrb[0].mxu0 %v36
  %v213 = vpop.f32.mrb[0].mxu0
  %v214 = vadd.f32 %v95, %v213
  %v215 = vpop.f32.mrb[0].mxu0
  %216 = vmatprep.mubr.f32.mxu0 0.0
  %217 = vmatmul.mubr.f32.gmra.mrb[0].mxu0 %v37
  %v218 = vpop.f32.mrb[0].mxu0
  %v219 = vadd.f32 %v95, %v218
  %v220 = vpop.f32.mrb[0].mxu0
  %221 = vmatprep.mubr.f32.mxu0 0.0
  %222 = vmatmul.mubr.f32.gmra.mrb[0].mxu0 %v38
  %v223 = vpop.f32.mrb[0].mxu0
  %v224 = vadd.f32 %v95, %v223
  %v225 = vpop.f32.mrb[0].mxu0
  %226 = vmatprep.mubr.f32.mxu0 0.0
  %227 = vmatmul.mubr.f32.gmra.mrb[0].mxu0 %v39
  %v228 = vpop.f32.mrb[0].mxu0
  %v229 = vadd.f32 %v95, %v228
  %v230 = vpop.f32.mrb[0].mxu0
  %231 = vmatprep.mubr.f32.mxu0 0.0
  %232 = vmatmul.mubr.f32.gmra.mrb[0].mxu0 %v40
  %v233 = vpop.f32.mrb[0].mxu0
  %v234 = vadd.f32 %v95, %v233
  %v235 = vpop.f32.mrb[0].mxu0
  %236 = vmatprep.mubr.f32.mxu0 0.0
  %237 = vmatmul.mubr.f32.gmra.mrb[0].mxu0 %v41
  %v238 = vpop.f32.mrb[0].mxu0
  %v239 = vadd.f32 %v95, %v238
  %v240 = vpop.f32.mrb[0].mxu0
  %241 = vdwg.mxu0
  %v242 = vmax.f32 %v164, 0.0
  %v243 = vmax.f32 %v169, 0.0
  %v244 = vmax.f32 %v174, 0.0
  %v245 = vmax.f32 %v179, 0.0
  %v246 = vmax.f32 %v184, 0.0
  %v247 = vmax.f32 %v189, 0.0
  %v248 = vmax.f32 %v194, 0.0
  %v249 = vmax.f32 %v199, 0.0
  %v250 = vmax.f32 %v204, 0.0
  %v251 = vmax.f32 %v209, 0.0
  %v252 = vmax.f32 %v214, 0.0
  %v253 = vmax.f32 %v219, 0.0
  %v254 = vmax.f32 %v224, 0.0
  %v255 = vmax.f32 %v229, 0.0
  %v256 = vmax.f32 %v234, 0.0
  %v257 = vmax.f32 %v239, 0.0
  %v258 = vld [vmem:[%s3 + $0x80] sm:$0xff]
  %v259 = vld [vmem:[%s3 + $0x88] sm:$0xff]
  %v260 = vld [vmem:[%s3 + $0x90] sm:$0xff]
  %v261 = vld [vmem:[%s3 + $0x98] sm:$0xff]
  %v262 = vld [vmem:[%s3 + $0xa0] sm:$0xff]
  %v263 = vld [vmem:[%s3 + $0xa8] sm:$0xff]
  %v264 = vld [vmem:[%s3 + $0xb0] sm:$0xff]
  %v265 = vld [vmem:[%s3 + $0xb8] sm:$0xff]
  %v266 = vld [vmem:[%s3 + $0xc0] sm:$0xff]
  %v267 = vld [vmem:[%s3 + $0xc8] sm:$0xff]
  %v268 = vld [vmem:[%s3 + $0xd0] sm:$0xff]
  %v269 = vld [vmem:[%s3 + $0xd8] sm:$0xff]
  %v270 = vld [vmem:[%s3 + $0xe0] sm:$0xff]
  %v271 = vld [vmem:[%s3 + $0xe8] sm:$0xff]
  %v272 = vld [vmem:[%s3 + $0xf0] sm:$0xff]
  %v273 = vld [vmem:[%s3 + $0xf8] sm:$0xff]
  %274 = vrot.lane.b32.xlu0 %v95, 112
  %v275 = vpop.permute.xlu0 %274
  %277 = vmatprep.subr.mxu0 0.0
  %278 = vmatpush1.msra.mxu0 %v258
  %279 = vmatprep.subr.mxu0 0.0
  %280 = vmatpush1.msra.mxu0 %v259
  %281 = vmatprep.subr.mxu0 0.0
  %282 = vmatpush1.msra.mxu0 %v260
  %283 = vmatprep.subr.mxu0 0.0
  %284 = vmatpush1.msra.mxu0 %v261
  %285 = vmatprep.subr.mxu0 0.0
  %286 = vmatpush1.msra.mxu0 %v262
  %287 = vmatprep.subr.mxu0 0.0
  %288 = vmatpush1.msra.mxu0 %v263
  %289 = vmatprep.subr.mxu0 0.0
  %290 = vmatpush1.msra.mxu0 %v264
  %291 = vmatprep.subr.mxu0 0.0
  %292 = vmatpush1.msra.mxu0 %v265
  %293 = vmatprep.subr.mxu0 0.0
  %294 = vmatpush1.msra.mxu0 %v266
  %295 = vmatprep.subr.mxu0 0.0
  %296 = vmatpush1.msra.mxu0 %v267
  %297 = vmatprep.subr.mxu0 0.0
  %298 = vmatpush1.msra.mxu0 %v268
  %299 = vmatprep.subr.mxu0 0.0
  %300 = vmatpush1.msra.mxu0 %v269
  %301 = vmatprep.subr.mxu0 0.0
  %302 = vmatpush1.msra.mxu0 %v270
  %303 = vmatprep.subr.mxu0 0.0
  %304 = vmatpush1.msra.mxu0 %v271
  %305 = vmatprep.subr.mxu0 0.0
  %306 = vmatpush1.msra.mxu0 %v272
  %307 = vmatprep.subr.mxu0 0.0
  %308 = vmatpush1.msra.mxu0 %v273
  %309 = vmatprep.subr.mxu0 0.0
  %310 = vmatpush1.msra.mxu0 0.0
  %311 = vmatprep.subr.mxu0 0.0
  %312 = vmatpush1.msra.mxu0 0.0
  %313 = vmatprep.subr.mxu0 0.0
  %314 = vmatpush1.msra.mxu0 0.0
  %315 = vmatprep.subr.mxu0 0.0
  %316 = vmatpush1.msra.mxu0 0.0
  %317 = vmatprep.subr.mxu0 0.0
  %318 = vmatpush1.msra.mxu0 0.0
  %319 = vmatprep.subr.mxu0 0.0
  %320 = vmatpush1.msra.mxu0 0.0
  %321 = vmatprep.subr.mxu0 0.0
  %322 = vmatpush1.msra.mxu0 0.0
  %323 = vmatprep.subr.mxu0 0.0
  %324 = vmatpush1.msra.mxu0 0.0
  %325 = vmatprep.subr.mxu0 0.0
  %326 = vmatpush1.msra.mxu0 0.0
  %327 = vmatprep.subr.mxu0 0.0
  %328 = vmatpush1.msra.mxu0 0.0
  %329 = vmatprep.subr.mxu0 0.0
  %330 = vmatpush1.msra.mxu0 0.0
  %331 = vmatprep.subr.mxu0 0.0
  %332 = vmatpush1.msra.mxu0 0.0
  %333 = vmatprep.subr.mxu0 0.0
  %334 = vmatpush1.msra.mxu0 0.0
  %335 = vmatprep.subr.mxu0 0.0
  %336 = vmatpush1.msra.mxu0 0.0
  %337 = vmatprep.subr.mxu0 0.0
  %338 = vmatpush1.msra.mxu0 0.0
  %339 = vmatprep.subr.mxu0 0.0
  %340 = vmatpush1.msra.mxu0 0.0
  %341 = vmatprep.mubr.f32.mxu0 0.0
  %342 = vmatmul.mubr.f32.gmra.mrb[0].mxu0 %v42
  %v343 = vpop.f32.mrb[0].mxu0
  %v344 = vadd.f32 %v275, %v343
  %v345 = vpop.f32.mrb[0].mxu0
  %346 = vmatprep.mubr.f32.mxu0 0.0
  %347 = vmatmul.mubr.f32.gmra.mrb[0].mxu0 %v43
  %v348 = vpop.f32.mrb[0].mxu0
  %v349 = vadd.f32 %v275, %v348
  %v350 = vpop.f32.mrb[0].mxu0
  %351 = vmatprep.mubr.f32.mxu0 0.0
  %352 = vmatmul.mubr.f32.gmra.mrb[0].mxu0 %v44
  %v353 = vpop.f32.mrb[0].mxu0
  %v354 = vadd.f32 %v275, %v353
  %v355 = vpop.f32.mrb[0].mxu0
  %356 = vmatprep.mubr.f32.mxu0 0.0
  %357 = vmatmul.mubr.f32.gmra.mrb[0].mxu0 %v45
  %v358 = vpop.f32.mrb[0].mxu0
  %v359 = vadd.f32 %v275, %v358
  %v360 = vpop.f32.mrb[0].mxu0
  %361 = vmatprep.mubr.f32.mxu0 0.0
  %362 = vmatmul.mubr.f32.gmra.mrb[0].mxu0 %v46
  %v363 = vpop.f32.mrb[0].mxu0
  %v364 = vadd.f32 %v275, %v363
  %v365 = vpop.f32.mrb[0].mxu0
  %366 = vmatprep.mubr.f32.mxu0 0.0
  %367 = vmatmul.mubr.f32.gmra.mrb[0].mxu0 %v47
  %v368 = vpop.f32.mrb[0].mxu0
  %v369 = vadd.f32 %v275, %v368
  %v370 = vpop.f32.mrb[0].mxu0
  %371 = vmatprep.mubr.f32.mxu0 0.0
  %372 = vmatmul.mubr.f32.gmra.mrb[0].mxu0 %v48
  %v373 = vpop.f32.mrb[0].mxu0
  %v374 = vadd.f32 %v275, %v373
  %v375 = vpop.f32.mrb[0].mxu0
  %376 = vmatprep.mubr.f32.mxu0 0.0
  %377 = vmatmul.mubr.f32.gmra.mrb[0].mxu0 %v49
  %v378 = vpop.f32.mrb[0].mxu0
  %v379 = vadd.f32 %v275, %v378
  %v380 = vpop.f32.mrb[0].mxu0
  %381 = vmatprep.mubr.f32.mxu0 0.0
  %382 = vmatmul.mubr.f32.gmra.mrb[0].mxu0 %v50
  %v383 = vpop.f32.mrb[0].mxu0
  %v384 = vadd.f32 %v275, %v383
  %v385 = vpop.f32.mrb[0].mxu0
  %386 = vmatprep.mubr.f32.mxu0 0.0
  %387 = vmatmul.mubr.f32.gmra.mrb[0].mxu0 %v51
  %v388 = vpop.f32.mrb[0].mxu0
  %v389 = vadd.f32 %v275, %v388
  %v390 = vpop.f32.mrb[0].mxu0
  %391 = vmatprep.mubr.f32.mxu0 0.0
  %392 = vmatmul.mubr.f32.gmra.mrb[0].mxu0 %v52
  %v393 = vpop.f32.mrb[0].mxu0
  %v394 = vadd.f32 %v275, %v393
  %v395 = vpop.f32.mrb[0].mxu0
  %396 = vmatprep.mubr.f32.mxu0 0.0
  %397 = vmatmul.mubr.f32.gmra.mrb[0].mxu0 %v53
  %v398 = vpop.f32.mrb[0].mxu0
  %v399 = vadd.f32 %v275, %v398
  %v400 = vpop.f32.mrb[0].mxu0
  %401 = vmatprep.mubr.f32.mxu0 0.0
  %402 = vmatmul.mubr.f32.gmra.mrb[0].mxu0 %v54
  %v403 = vpop.f32.mrb[0].mxu0
  %v404 = vadd.f32 %v275, %v403
  %v405 = vpop.f32.mrb[0].mxu0
  %406 = vmatprep.mubr.f32.mxu0 0.0
  %407 = vmatmul.mubr.f32.gmra.mrb[0].mxu0 %v55
  %v408 = vpop.f32.mrb[0].mxu0
  %v409 = vadd.f32 %v275, %v408
  %v410 = vpop.f32.mrb[0].mxu0
  %411 = vmatprep.mubr.f32.mxu0 0.0
  %412 = vmatmul.mubr.f32.gmra.mrb[0].mxu0 %v56
  %v413 = vpop.f32.mrb[0].mxu0
  %v414 = vadd.f32 %v275, %v413
  %v415 = vpop.f32.mrb[0].mxu0
  %416 = vmatprep.mubr.f32.mxu0 0.0
  %417 = vmatmul.mubr.f32.gmra.mrb[0].mxu0 %v57
  %v418 = vpop.f32.mrb[0].mxu0
  %v419 = vadd.f32 %v275, %v418
  %v420 = vpop.f32.mrb[0].mxu0
  %421 = vdwg.mxu0
  %v422 = vmax.f32 %v344, 0.0
  %v423 = vmax.f32 %v349, 0.0
  %v424 = vmax.f32 %v354, 0.0
  %v425 = vmax.f32 %v359, 0.0
  %v426 = vmax.f32 %v364, 0.0
  %v427 = vmax.f32 %v369, 0.0
  %v428 = vmax.f32 %v374, 0.0
  %v429 = vmax.f32 %v379, 0.0
  %v430 = vmax.f32 %v384, 0.0
  %v431 = vmax.f32 %v389, 0.0
  %v432 = vmax.f32 %v394, 0.0
  %v433 = vmax.f32 %v399, 0.0
  %v434 = vmax.f32 %v404, 0.0
  %v435 = vmax.f32 %v409, 0.0
  %v436 = vmax.f32 %v414, 0.0
  %v437 = vmax.f32 %v419, 0.0
  %v438 = vld [vmem:[%s3 + $0x100] sm:$0xff]
  %v439 = vld [vmem:[%s3 + $0x108] sm:$0xff]
  %v440 = vld [vmem:[%s3 + $0x110] sm:$0xff]
  %v441 = vld [vmem:[%s3 + $0x118] sm:$0xff]
  %v442 = vld [vmem:[%s3 + $0x120] sm:$0xff]
  %v443 = vld [vmem:[%s3 + $0x128] sm:$0xff]
  %v444 = vld [vmem:[%s3 + $0x130] sm:$0xff]
  %v445 = vld [vmem:[%s3 + $0x138] sm:$0xff]
  %v446 = vld [vmem:[%s3 + $0x140] sm:$0xff]
  %v447 = vld [vmem:[%s3 + $0x148] sm:$0xff]
  %v448 = vld [vmem:[%s3 + $0x150] sm:$0xff]
  %v449 = vld [vmem:[%s3 + $0x158] sm:$0xff]
  %v450 = vld [vmem:[%s3 + $0x160] sm:$0xff]
  %v451 = vld [vmem:[%s3 + $0x168] sm:$0xff]
  %v452 = vld [vmem:[%s3 + $0x170] sm:$0xff]
  %v453 = vld [vmem:[%s3 + $0x178] sm:$0xff]
  %454 = vrot.lane.b32.xlu0 %v95, 96
  %v455 = vpop.permute.xlu0 %454
  %457 = vmatprep.subr.mxu0 0.0
  %458 = vmatpush1.msra.mxu0 %v438
  %459 = vmatprep.subr.mxu0 0.0
  %460 = vmatpush1.msra.mxu0 %v439
  %461 = vmatprep.subr.mxu0 0.0
  %462 = vmatpush1.msra.mxu0 %v440
  %463 = vmatprep.subr.mxu0 0.0
  %464 = vmatpush1.msra.mxu0 %v441
  %465 = vmatprep.subr.mxu0 0.0
  %466 = vmatpush1.msra.mxu0 %v442
  %467 = vmatprep.subr.mxu0 0.0
  %468 = vmatpush1.msra.mxu0 %v443
  %469 = vmatprep.subr.mxu0 0.0
  %470 = vmatpush1.msra.mxu0 %v444
  %471 = vmatprep.subr.mxu0 0.0
  %472 = vmatpush1.msra.mxu0 %v445
  %473 = vmatprep.subr.mxu0 0.0
  %474 = vmatpush1.msra.mxu0 %v446
  %475 = vmatprep.subr.mxu0 0.0
  %476 = vmatpush1.msra.mxu0 %v447
  %477 = vmatprep.subr.mxu0 0.0
  %478 = vmatpush1.msra.mxu0 %v448
  %479 = vmatprep.subr.mxu0 0.0
  %480 = vmatpush1.msra.mxu0 %v449
  %481 = vmatprep.subr.mxu0 0.0
  %482 = vmatpush1.msra.mxu0 %v450
  %483 = vmatprep.subr.mxu0 0.0
  %484 = vmatpush1.msra.mxu0 %v451
  %485 = vmatprep.subr.mxu0 0.0
  %486 = vmatpush1.msra.mxu0 %v452
  %487 = vmatprep.subr.mxu0 0.0
  %488 = vmatpush1.msra.mxu0 %v453
  %489 = vmatprep.subr.mxu0 0.0
  %490 = vmatpush1.msra.mxu0 0.0
  %491 = vmatprep.subr.mxu0 0.0
  %492 = vmatpush1.msra.mxu0 0.0
  %493 = vmatprep.subr.mxu0 0.0
  %494 = vmatpush1.msra.mxu0 0.0
  %495 = vmatprep.subr.mxu0 0.0
  %496 = vmatpush1.msra.mxu0 0.0
  %497 = vmatprep.subr.mxu0 0.0
  %498 = vmatpush1.msra.mxu0 0.0
  %499 = vmatprep.subr.mxu0 0.0
  %500 = vmatpush1.msra.mxu0 0.0
  %501 = vmatprep.subr.mxu0 0.0
  %502 = vmatpush1.msra.mxu0 0.0
  %503 = vmatprep.subr.mxu0 0.0
  %504 = vmatpush1.msra.mxu0 0.0
  %505 = vmatprep.subr.mxu0 0.0
  %506 = vmatpush1.msra.mxu0 0.0
  %507 = vmatprep.subr.mxu0 0.0
  %508 = vmatpush1.msra.mxu0 0.0
  %509 = vmatprep.subr.mxu0 0.0
  %510 = vmatpush1.msra.mxu0 0.0
  %511 = vmatprep.subr.mxu0 0.0
  %512 = vmatpush1.msra.mxu0 0.0
  %513 = vmatprep.subr.mxu0 0.0
  %514 = vmatpush1.msra.mxu0 0.0
  %515 = vmatprep.subr.mxu0 0.0
  %516 = vmatpush1.msra.mxu0 0.0
  %517 = vmatprep.subr.mxu0 0.0
  %518 = vmatpush1.msra.mxu0 0.0
  %519 = vmatprep.subr.mxu0 0.0
  %520 = vmatpush1.msra.mxu0 0.0
  %521 = vmatprep.mubr.f32.mxu0 0.0
  %522 = vmatmul.mubr.f32.gmra.mrb[0].mxu0 %v58
  %v523 = vpop.f32.mrb[0].mxu0
  %v524 = vadd.f32 %v455, %v523
  %v525 = vpop.f32.mrb[0].mxu0
  %526 = vmatprep.mubr.f32.mxu0 0.0
  %527 = vmatmul.mubr.f32.gmra.mrb[0].mxu0 %v59
  %v528 = vpop.f32.mrb[0].mxu0
  %v529 = vadd.f32 %v455, %v528
  %v530 = vpop.f32.mrb[0].mxu0
  %531 = vmatprep.mubr.f32.mxu0 0.0
  %532 = vmatmul.mubr.f32.gmra.mrb[0].mxu0 %v60
  %v533 = vpop.f32.mrb[0].mxu0
  %v534 = vadd.f32 %v455, %v533
  %v535 = vpop.f32.mrb[0].mxu0
  %536 = vmatprep.mubr.f32.mxu0 0.0
  %537 = vmatmul.mubr.f32.gmra.mrb[0].mxu0 %v61
  %v538 = vpop.f32.mrb[0].mxu0
  %v539 = vadd.f32 %v455, %v538
  %v540 = vpop.f32.mrb[0].mxu0
  %541 = vmatprep.mubr.f32.mxu0 0.0
  %542 = vmatmul.mubr.f32.gmra.mrb[0].mxu0 %v62
  %v543 = vpop.f32.mrb[0].mxu0
  %v544 = vadd.f32 %v455, %v543
  %v545 = vpop.f32.mrb[0].mxu0
  %546 = vmatprep.mubr.f32.mxu0 0.0
  %547 = vmatmul.mubr.f32.gmra.mrb[0].mxu0 %v63
  %v548 = vpop.f32.mrb[0].mxu0
  %v549 = vadd.f32 %v455, %v548
  %v550 = vpop.f32.mrb[0].mxu0
  %551 = vmatprep.mubr.f32.mxu0 0.0
  %552 = vmatmul.mubr.f32.gmra.mrb[0].mxu0 %v64
  %v553 = vpop.f32.mrb[0].mxu0
  %v554 = vadd.f32 %v455, %v553
  %v555 = vpop.f32.mrb[0].mxu0
  %556 = vmatprep.mubr.f32.mxu0 0.0
  %557 = vmatmul.mubr.f32.gmra.mrb[0].mxu0 %v65
  %v558 = vpop.f32.mrb[0].mxu0
  %v559 = vadd.f32 %v455, %v558
  %v560 = vpop.f32.mrb[0].mxu0
  %561 = vmatprep.mubr.f32.mxu0 0.0
  %562 = vmatmul.mubr.f32.gmra.mrb[0].mxu0 %v66
  %v563 = vpop.f32.mrb[0].mxu0
  %v564 = vadd.f32 %v455, %v563
  %v565 = vpop.f32.mrb[0].mxu0
  %566 = vmatprep.mubr.f32.mxu0 0.0
  %567 = vmatmul.mubr.f32.gmra.mrb[0].mxu0 %v67
  %v568 = vpop.f32.mrb[0].mxu0
  %v569 = vadd.f32 %v455, %v568
  %v570 = vpop.f32.mrb[0].mxu0
  %571 = vmatprep.mubr.f32.mxu0 0.0
  %572 = vmatmul.mubr.f32.gmra.mrb[0].mxu0 %v68
  %v573 = vpop.f32.mrb[0].mxu0
  %v574 = vadd.f32 %v455, %v573
  %v575 = vpop.f32.mrb[0].mxu0
  %576 = vmatprep.mubr.f32.mxu0 0.0
  %577 = vmatmul.mubr.f32.gmra.mrb[0].mxu0 %v69
  %v578 = vpop.f32.mrb[0].mxu0
  %v579 = vadd.f32 %v455, %v578
  %v580 = vpop.f32.mrb[0].mxu0
  %581 = vmatprep.mubr.f32.mxu0 0.0
  %582 = vmatmul.mubr.f32.gmra.mrb[0].mxu0 %v70
  %v583 = vpop.f32.mrb[0].mxu0
  %v584 = vadd.f32 %v455, %v583
  %v585 = vpop.f32.mrb[0].mxu0
  %586 = vmatprep.mubr.f32.mxu0 0.0
  %587 = vmatmul.mubr.f32.gmra.mrb[0].mxu0 %v71
  %v588 = vpop.f32.mrb[0].mxu0
  %v589 = vadd.f32 %v455, %v588
  %v590 = vpop.f32.mrb[0].mxu0
  %591 = vmatprep.mubr.f32.mxu0 0.0
  %592 = vmatmul.mubr.f32.gmra.mrb[0].mxu0 %v72
  %v593 = vpop.f32.mrb[0].mxu0
  %v594 = vadd.f32 %v455, %v593
  %v595 = vpop.f32.mrb[0].mxu0
  %596 = vmatprep.mubr.f32.mxu0 0.0
  %597 = vmatmul.mubr.f32.gmra.mrb[0].mxu0 %v73
  %v598 = vpop.f32.mrb[0].mxu0
  %v599 = vadd.f32 %v455, %v598
  %v600 = vpop.f32.mrb[0].mxu0
  %601 = vdwg.mxu0
  %v602 = vmax.f32 %v524, 0.0
  %v603 = vmax.f32 %v529, 0.0
  %v604 = vmax.f32 %v534, 0.0
  %v605 = vmax.f32 %v539, 0.0
  %v606 = vmax.f32 %v544, 0.0
  %v607 = vmax.f32 %v549, 0.0
  %v608 = vmax.f32 %v554, 0.0
  %v609 = vmax.f32 %v559, 0.0
  %v610 = vmax.f32 %v564, 0.0
  %v611 = vmax.f32 %v569, 0.0
  %v612 = vmax.f32 %v574, 0.0
  %v613 = vmax.f32 %v579, 0.0
  %v614 = vmax.f32 %v584, 0.0
  %v615 = vmax.f32 %v589, 0.0
  %v616 = vmax.f32 %v594, 0.0
  %v617 = vmax.f32 %v599, 0.0
  %v618 = vld [vmem:[%s5] sm:$0xff]
  %v619 = vld [vmem:[%s5 + $0x8] sm:$0xff]
  %v620 = vld [vmem:[%s5 + $0x10] sm:$0xff]
  %v621 = vld [vmem:[%s5 + $0x18] sm:$0xff]
  %vm622 = vcmask 130048
  %v624 = vsel %vm622, %v422, 0
  %v627 = vsel %vm622, %v423, 0
  %v630 = vsel %vm622, %v424, 0
  %v633 = vsel %vm622, %v425, 0
  %v636 = vsel %vm622, %v426, 0
  %v639 = vsel %vm622, %v427, 0
  %v642 = vsel %vm622, %v428, 0
  %v645 = vsel %vm622, %v429, 0
  %v648 = vsel %vm622, %v430, 0
  %v651 = vsel %vm622, %v431, 0
  %v654 = vsel %vm622, %v432, 0
  %v657 = vsel %vm622, %v433, 0
  %v660 = vsel %vm622, %v434, 0
  %v663 = vsel %vm622, %v435, 0
  %v666 = vsel %vm622, %v436, 0
  %v669 = vsel %vm622, %v437, 0
  %671 = vmatprep.subr.mxu0 0.0
  %672 = vmatpush1.msra.mxu0 %v620
  %673 = vmatprep.subr.mxu0 0.0
  %674 = vmatpush1.msra.mxu0 %v621
  %675 = vmatprep.subr.mxu0 0.0
  %676 = vmatpush1.msra.mxu0 0.0
  %677 = vmatprep.subr.mxu0 0.0
  %678 = vmatpush1.msra.mxu0 0.0
  %679 = vmatprep.subr.mxu0 0.0
  %680 = vmatpush1.msra.mxu0 0.0
  %681 = vmatprep.subr.mxu0 0.0
  %682 = vmatpush1.msra.mxu0 0.0
  %683 = vmatprep.subr.mxu0 0.0
  %684 = vmatpush1.msra.mxu0 0.0
  %685 = vmatprep.subr.mxu0 0.0
  %686 = vmatpush1.msra.mxu0 0.0
  %687 = vmatprep.subr.mxu0 0.0
  %688 = vmatpush1.msra.mxu0 0.0
  %689 = vmatprep.subr.mxu0 0.0
  %690 = vmatpush1.msra.mxu0 0.0
  %691 = vmatprep.subr.mxu0 0.0
  %692 = vmatpush1.msra.mxu0 0.0
  %693 = vmatprep.subr.mxu0 0.0
  %694 = vmatpush1.msra.mxu0 0.0
  %695 = vmatprep.subr.mxu0 0.0
  %696 = vmatpush1.msra.mxu0 0.0
  %697 = vmatprep.subr.mxu0 0.0
  %698 = vmatpush1.msra.mxu0 0.0
  %699 = vmatprep.subr.mxu0 0.0
  %700 = vmatpush1.msra.mxu0 0.0
  %701 = vmatprep.subr.mxu0 0.0
  %702 = vmatpush1.msra.mxu0 0.0
  %703 = vmatprep.subr.mxu0 0.0
  %704 = vmatpush1.msra.mxu0 0.0
  %705 = vmatprep.subr.mxu0 0.0
  %706 = vmatpush1.msra.mxu0 0.0
  %707 = vmatprep.subr.mxu0 0.0
  %708 = vmatpush1.msra.mxu0 0.0
  %709 = vmatprep.subr.mxu0 0.0
  %710 = vmatpush1.msra.mxu0 0.0
  %711 = vmatprep.subr.mxu0 0.0
  %712 = vmatpush1.msra.mxu0 0.0
  %713 = vmatprep.subr.mxu0 0.0
  %714 = vmatpush1.msra.mxu0 0.0
  %715 = vmatprep.subr.mxu0 0.0
  %716 = vmatpush1.msra.mxu0 0.0
  %717 = vmatprep.subr.mxu0 0.0
  %718 = vmatpush1.msra.mxu0 0.0
  %719 = vmatprep.subr.mxu0 0.0
  %720 = vmatpush1.msra.mxu0 0.0
  %721 = vmatprep.subr.mxu0 0.0
  %722 = vmatpush1.msra.mxu0 0.0
  %723 = vmatprep.subr.mxu0 0.0
  %724 = vmatpush1.msra.mxu0 0.0
  %725 = vmatprep.subr.mxu0 0.0
  %726 = vmatpush1.msra.mxu0 0.0
  %727 = vmatprep.subr.mxu0 0.0
  %728 = vmatpush1.msra.mxu0 0.0
  %729 = vmatprep.subr.mxu0 0.0
  %730 = vmatpush1.msra.mxu0 0.0
  %731 = vmatprep.subr.mxu0 0.0
  %732 = vmatpush1.msra.mxu0 0.0
  %733 = vmatprep.subr.mxu0 0.0
  %734 = vmatpush1.msra.mxu0 0.0
  %735 = vmatprep.mubr.f32.mxu0 0.0
  %736 = vmatmul.mubr.f32.gmra.mrb[0].mxu0 %v624
  %v737 = vpop.f32.mrb[0].mxu0
  %v738 = vadd.f32 0.0, %v737
  %v739 = vpop.f32.mrb[0].mxu0
  %740 = vmatprep.mubr.f32.mxu0 0.0
  %741 = vmatmul.mubr.f32.gmra.mrb[0].mxu0 %v627
  %v742 = vpop.f32.mrb[0].mxu0
  %v743 = vadd.f32 0.0, %v742
  %v744 = vpop.f32.mrb[0].mxu0
  %745 = vmatprep.mubr.f32.mxu0 0.0
  %746 = vmatmul.mubr.f32.gmra.mrb[0].mxu0 %v630
  %v747 = vpop.f32.mrb[0].mxu0
  %v748 = vadd.f32 0.0, %v747
  %v749 = vpop.f32.mrb[0].mxu0
  %750 = vmatprep.mubr.f32.mxu0 0.0
  %751 = vmatmul.mubr.f32.gmra.mrb[0].mxu0 %v633
  %v752 = vpop.f32.mrb[0].mxu0
  %v753 = vadd.f32 0.0, %v752
  %v754 = vpop.f32.mrb[0].mxu0
  %755 = vmatprep.mubr.f32.mxu0 0.0
  %756 = vmatmul.mubr.f32.gmra.mrb[0].mxu0 %v636
  %v757 = vpop.f32.mrb[0].mxu0
  %v758 = vadd.f32 0.0, %v757
  %v759 = vpop.f32.mrb[0].mxu0
  %760 = vmatprep.mubr.f32.mxu0 0.0
  %761 = vmatmul.mubr.f32.gmra.mrb[0].mxu0 %v639
  %v762 = vpop.f32.mrb[0].mxu0
  %v763 = vadd.f32 0.0, %v762
  %v764 = vpop.f32.mrb[0].mxu0
  %765 = vmatprep.mubr.f32.mxu0 0.0
  %766 = vmatmul.mubr.f32.gmra.mrb[0].mxu0 %v642
  %v767 = vpop.f32.mrb[0].mxu0
  %v768 = vadd.f32 0.0, %v767
  %v769 = vpop.f32.mrb[0].mxu0
  %770 = vmatprep.mubr.f32.mxu0 0.0
  %771 = vmatmul.mubr.f32.gmra.mrb[0].mxu0 %v645
  %v772 = vpop.f32.mrb[0].mxu0
  %v773 = vadd.f32 0.0, %v772
  %v774 = vpop.f32.mrb[0].mxu0
  %775 = vmatprep.mubr.f32.mxu0 0.0
  %776 = vmatmul.mubr.f32.gmra.mrb[0].mxu0 %v648
  %v777 = vpop.f32.mrb[0].mxu0
  %v778 = vadd.f32 0.0, %v777
  %v779 = vpop.f32.mrb[0].mxu0
  %780 = vmatprep.mubr.f32.mxu0 0.0
  %781 = vmatmul.mubr.f32.gmra.mrb[0].mxu0 %v651
  %v782 = vpop.f32.mrb[0].mxu0
  %v783 = vadd.f32 0.0, %v782
  %v784 = vpop.f32.mrb[0].mxu0
  %785 = vmatprep.mubr.f32.mxu0 0.0
  %786 = vmatmul.mubr.f32.gmra.mrb[0].mxu0 %v654
  %v787 = vpop.f32.mrb[0].mxu0
  %v788 = vadd.f32 0.0, %v787
  %v789 = vpop.f32.mrb[0].mxu0
  %790 = vmatprep.mubr.f32.mxu0 0.0
  %791 = vmatmul.mubr.f32.gmra.mrb[0].mxu0 %v657
  %v792 = vpop.f32.mrb[0].mxu0
  %v793 = vadd.f32 0.0, %v792
  %v794 = vpop.f32.mrb[0].mxu0
  %795 = vmatprep.mubr.f32.mxu0 0.0
  %796 = vmatmul.mubr.f32.gmra.mrb[0].mxu0 %v660
  %v797 = vpop.f32.mrb[0].mxu0
  %v798 = vadd.f32 0.0, %v797
  %v799 = vpop.f32.mrb[0].mxu0
  %800 = vmatprep.mubr.f32.mxu0 0.0
  %801 = vmatmul.mubr.f32.gmra.mrb[0].mxu0 %v663
  %v802 = vpop.f32.mrb[0].mxu0
  %v803 = vadd.f32 0.0, %v802
  %v804 = vpop.f32.mrb[0].mxu0
  %805 = vmatprep.mubr.f32.mxu0 0.0
  %806 = vmatmul.mubr.f32.gmra.mrb[0].mxu0 %v666
  %v807 = vpop.f32.mrb[0].mxu0
  %v808 = vadd.f32 0.0, %v807
  %v809 = vpop.f32.mrb[0].mxu0
  %810 = vmatprep.mubr.f32.mxu0 0.0
  %811 = vmatmul.mubr.f32.gmra.mrb[0].mxu0 %v669
  %v812 = vpop.f32.mrb[0].mxu0
  %v813 = vadd.f32 0.0, %v812
  %v814 = vpop.f32.mrb[0].mxu0
  %815 = vdwg.mxu0
  %v817 = vsel %vm622, %v242, 0
  %v820 = vsel %vm622, %v243, 0
  %v823 = vsel %vm622, %v244, 0
  %v826 = vsel %vm622, %v245, 0
  %v829 = vsel %vm622, %v246, 0
  %v832 = vsel %vm622, %v247, 0
  %v835 = vsel %vm622, %v248, 0
  %v838 = vsel %vm622, %v249, 0
  %v841 = vsel %vm622, %v250, 0
  %v844 = vsel %vm622, %v251, 0
  %v847 = vsel %vm622, %v252, 0
  %v850 = vsel %vm622, %v253, 0
  %v853 = vsel %vm622, %v254, 0
  %v856 = vsel %vm622, %v255, 0
  %v859 = vsel %vm622, %v256, 0
  %v862 = vsel %vm622, %v257, 0
  %864 = vmatprep.subr.mxu0 0.0
  %865 = vmatpush1.msra.mxu0 %v618
  %866 = vmatprep.subr.mxu0 0.0
  %867 = vmatpush1.msra.mxu0 %v619
  %868 = vmatprep.subr.mxu0 0.0
  %869 = vmatpush1.msra.mxu0 0.0
  %870 = vmatprep.subr.mxu0 0.0
  %871 = vmatpush1.msra.mxu0 0.0
  %872 = vmatprep.subr.mxu0 0.0
  %873 = vmatpush1.msra.mxu0 0.0
  %874 = vmatprep.subr.mxu0 0.0
  %875 = vmatpush1.msra.mxu0 0.0
  %876 = vmatprep.subr.mxu0 0.0
  %877 = vmatpush1.msra.mxu0 0.0
  %878 = vmatprep.subr.mxu0 0.0
  %879 = vmatpush1.msra.mxu0 0.0
  %880 = vmatprep.subr.mxu0 0.0
  %881 = vmatpush1.msra.mxu0 0.0
  %882 = vmatprep.subr.mxu0 0.0
  %883 = vmatpush1.msra.mxu0 0.0
  %884 = vmatprep.subr.mxu0 0.0
  %885 = vmatpush1.msra.mxu0 0.0
  %886 = vmatprep.subr.mxu0 0.0
  %887 = vmatpush1.msra.mxu0 0.0
  %888 = vmatprep.subr.mxu0 0.0
  %889 = vmatpush1.msra.mxu0 0.0
  %890 = vmatprep.subr.mxu0 0.0
  %891 = vmatpush1.msra.mxu0 0.0
  %892 = vmatprep.subr.mxu0 0.0
  %893 = vmatpush1.msra.mxu0 0.0
  %894 = vmatprep.subr.mxu0 0.0
  %895 = vmatpush1.msra.mxu0 0.0
  %896 = vmatprep.subr.mxu0 0.0
  %897 = vmatpush1.msra.mxu0 0.0
  %898 = vmatprep.subr.mxu0 0.0
  %899 = vmatpush1.msra.mxu0 0.0
  %900 = vmatprep.subr.mxu0 0.0
  %901 = vmatpush1.msra.mxu0 0.0
  %902 = vmatprep.subr.mxu0 0.0
  %903 = vmatpush1.msra.mxu0 0.0
  %904 = vmatprep.subr.mxu0 0.0
  %905 = vmatpush1.msra.mxu0 0.0
  %906 = vmatprep.subr.mxu0 0.0
  %907 = vmatpush1.msra.mxu0 0.0
  %908 = vmatprep.subr.mxu0 0.0
  %909 = vmatpush1.msra.mxu0 0.0
  %910 = vmatprep.subr.mxu0 0.0
  %911 = vmatpush1.msra.mxu0 0.0
  %912 = vmatprep.subr.mxu0 0.0
  %913 = vmatpush1.msra.mxu0 0.0
  %914 = vmatprep.subr.mxu0 0.0
  %915 = vmatpush1.msra.mxu0 0.0
  %916 = vmatprep.subr.mxu0 0.0
  %917 = vmatpush1.msra.mxu0 0.0
  %918 = vmatprep.subr.mxu0 0.0
  %919 = vmatpush1.msra.mxu0 0.0
  %920 = vmatprep.subr.mxu0 0.0
  %921 = vmatpush1.msra.mxu0 0.0
  %922 = vmatprep.subr.mxu0 0.0
  %923 = vmatpush1.msra.mxu0 0.0
  %924 = vmatprep.subr.mxu0 0.0
  %925 = vmatpush1.msra.mxu0 0.0
  %926 = vmatprep.subr.mxu0 0.0
  %927 = vmatpush1.msra.mxu0 0.0
  %928 = vmatprep.mubr.f32.mxu0 0.0
  %929 = vmatmul.mubr.f32.gmra.mrb[0].mxu0 %v817
  %v930 = vpop.f32.mrb[0].mxu0
  %v931 = vadd.f32 %v738, %v930
  %v932 = vpop.f32.mrb[0].mxu0
  %933 = vmatprep.mubr.f32.mxu0 0.0
  %934 = vmatmul.mubr.f32.gmra.mrb[0].mxu0 %v820
  %v935 = vpop.f32.mrb[0].mxu0
  %v936 = vadd.f32 %v743, %v935
  %v937 = vpop.f32.mrb[0].mxu0
  %938 = vmatprep.mubr.f32.mxu0 0.0
  %939 = vmatmul.mubr.f32.gmra.mrb[0].mxu0 %v823
  %v940 = vpop.f32.mrb[0].mxu0
  %v941 = vadd.f32 %v748, %v940
  %v942 = vpop.f32.mrb[0].mxu0
  %943 = vmatprep.mubr.f32.mxu0 0.0
  %944 = vmatmul.mubr.f32.gmra.mrb[0].mxu0 %v826
  %v945 = vpop.f32.mrb[0].mxu0
  %v946 = vadd.f32 %v753, %v945
  %v947 = vpop.f32.mrb[0].mxu0
  %948 = vmatprep.mubr.f32.mxu0 0.0
  %949 = vmatmul.mubr.f32.gmra.mrb[0].mxu0 %v829
  %v950 = vpop.f32.mrb[0].mxu0
  %v951 = vadd.f32 %v758, %v950
  %v952 = vpop.f32.mrb[0].mxu0
  %953 = vmatprep.mubr.f32.mxu0 0.0
  %954 = vmatmul.mubr.f32.gmra.mrb[0].mxu0 %v832
  %v955 = vpop.f32.mrb[0].mxu0
  %v956 = vadd.f32 %v763, %v955
  %v957 = vpop.f32.mrb[0].mxu0
  %958 = vmatprep.mubr.f32.mxu0 0.0
  %959 = vmatmul.mubr.f32.gmra.mrb[0].mxu0 %v835
  %v960 = vpop.f32.mrb[0].mxu0
  %v961 = vadd.f32 %v768, %v960
  %v962 = vpop.f32.mrb[0].mxu0
  %963 = vmatprep.mubr.f32.mxu0 0.0
  %964 = vmatmul.mubr.f32.gmra.mrb[0].mxu0 %v838
  %v965 = vpop.f32.mrb[0].mxu0
  %v966 = vadd.f32 %v773, %v965
  %v967 = vpop.f32.mrb[0].mxu0
  %968 = vmatprep.mubr.f32.mxu0 0.0
  %969 = vmatmul.mubr.f32.gmra.mrb[0].mxu0 %v841
  %v970 = vpop.f32.mrb[0].mxu0
  %v971 = vadd.f32 %v778, %v970
  %v972 = vpop.f32.mrb[0].mxu0
  %973 = vmatprep.mubr.f32.mxu0 0.0
  %974 = vmatmul.mubr.f32.gmra.mrb[0].mxu0 %v844
  %v975 = vpop.f32.mrb[0].mxu0
  %v976 = vadd.f32 %v783, %v975
  %v977 = vpop.f32.mrb[0].mxu0
  %978 = vmatprep.mubr.f32.mxu0 0.0
  %979 = vmatmul.mubr.f32.gmra.mrb[0].mxu0 %v847
  %v980 = vpop.f32.mrb[0].mxu0
  %v981 = vadd.f32 %v788, %v980
  %v982 = vpop.f32.mrb[0].mxu0
  %983 = vmatprep.mubr.f32.mxu0 0.0
  %984 = vmatmul.mubr.f32.gmra.mrb[0].mxu0 %v850
  %v985 = vpop.f32.mrb[0].mxu0
  %v986 = vadd.f32 %v793, %v985
  %v987 = vpop.f32.mrb[0].mxu0
  %988 = vmatprep.mubr.f32.mxu0 0.0
  %989 = vmatmul.mubr.f32.gmra.mrb[0].mxu0 %v853
  %v990 = vpop.f32.mrb[0].mxu0
  %v991 = vadd.f32 %v798, %v990
  %v992 = vpop.f32.mrb[0].mxu0
  %993 = vmatprep.mubr.f32.mxu0 0.0
  %994 = vmatmul.mubr.f32.gmra.mrb[0].mxu0 %v856
  %v995 = vpop.f32.mrb[0].mxu0
  %v996 = vadd.f32 %v803, %v995
  %v997 = vpop.f32.mrb[0].mxu0
  %998 = vmatprep.mubr.f32.mxu0 0.0
  %999 = vmatmul.mubr.f32.gmra.mrb[0].mxu0 %v859
  %v1000 = vpop.f32.mrb[0].mxu0
  %v1001 = vadd.f32 %v808, %v1000
  %v1002 = vpop.f32.mrb[0].mxu0
  %1003 = vmatprep.mubr.f32.mxu0 0.0
  %1004 = vmatmul.mubr.f32.gmra.mrb[0].mxu0 %v862
  %v1005 = vpop.f32.mrb[0].mxu0
  %v1006 = vadd.f32 %v813, %v1005
  %v1007 = vpop.f32.mrb[0].mxu0
  %1008 = vdwg.mxu0
  %v1009 = vld [vmem:[%s5 + $0x20] sm:$0xff]
  %v1010 = vld [vmem:[%s5 + $0x28] sm:$0xff]
  %v1012 = vsel %vm622, %v602, 0
  %v1015 = vsel %vm622, %v603, 0
  %v1018 = vsel %vm622, %v604, 0
  %v1021 = vsel %vm622, %v605, 0
  %v1024 = vsel %vm622, %v606, 0
  %v1027 = vsel %vm622, %v607, 0
  %v1030 = vsel %vm622, %v608, 0
  %v1033 = vsel %vm622, %v609, 0
  %v1036 = vsel %vm622, %v610, 0
  %v1039 = vsel %vm622, %v611, 0
  %v1042 = vsel %vm622, %v612, 0
  %v1045 = vsel %vm622, %v613, 0
  %v1048 = vsel %vm622, %v614, 0
  %v1051 = vsel %vm622, %v615, 0
  %v1054 = vsel %vm622, %v616, 0
  %v1057 = vsel %vm622, %v617, 0
  %1059 = vmatprep.subr.mxu0 0.0
  %1060 = vmatpush1.msra.mxu0 %v1009
  %1061 = vmatprep.subr.mxu0 0.0
  %1062 = vmatpush1.msra.mxu0 %v1010
  %1063 = vmatprep.subr.mxu0 0.0
  %1064 = vmatpush1.msra.mxu0 0.0
  %1065 = vmatprep.subr.mxu0 0.0
  %1066 = vmatpush1.msra.mxu0 0.0
  %1067 = vmatprep.subr.mxu0 0.0
  %1068 = vmatpush1.msra.mxu0 0.0
  %1069 = vmatprep.subr.mxu0 0.0
  %1070 = vmatpush1.msra.mxu0 0.0
  %1071 = vmatprep.subr.mxu0 0.0
  %1072 = vmatpush1.msra.mxu0 0.0
  %1073 = vmatprep.subr.mxu0 0.0
  %1074 = vmatpush1.msra.mxu0 0.0
  %1075 = vmatprep.subr.mxu0 0.0
  %1076 = vmatpush1.msra.mxu0 0.0
  %1077 = vmatprep.subr.mxu0 0.0
  %1078 = vmatpush1.msra.mxu0 0.0
  %1079 = vmatprep.subr.mxu0 0.0
  %1080 = vmatpush1.msra.mxu0 0.0
  %1081 = vmatprep.subr.mxu0 0.0
  %1082 = vmatpush1.msra.mxu0 0.0
  %1083 = vmatprep.subr.mxu0 0.0
  %1084 = vmatpush1.msra.mxu0 0.0
  %1085 = vmatprep.subr.mxu0 0.0
  %1086 = vmatpush1.msra.mxu0 0.0
  %1087 = vmatprep.subr.mxu0 0.0
  %1088 = vmatpush1.msra.mxu0 0.0
  %1089 = vmatprep.subr.mxu0 0.0
  %1090 = vmatpush1.msra.mxu0 0.0
  %1091 = vmatprep.subr.mxu0 0.0
  %1092 = vmatpush1.msra.mxu0 0.0
  %1093 = vmatprep.subr.mxu0 0.0
  %1094 = vmatpush1.msra.mxu0 0.0
  %1095 = vmatprep.subr.mxu0 0.0
  %1096 = vmatpush1.msra.mxu0 0.0
  %1097 = vmatprep.subr.mxu0 0.0
  %1098 = vmatpush1.msra.mxu0 0.0
  %1099 = vmatprep.subr.mxu0 0.0
  %1100 = vmatpush1.msra.mxu0 0.0
  %1101 = vmatprep.subr.mxu0 0.0
  %1102 = vmatpush1.msra.mxu0 0.0
  %1103 = vmatprep.subr.mxu0 0.0
  %1104 = vmatpush1.msra.mxu0 0.0
  %1105 = vmatprep.subr.mxu0 0.0
  %1106 = vmatpush1.msra.mxu0 0.0
  %1107 = vmatprep.subr.mxu0 0.0
  %1108 = vmatpush1.msra.mxu0 0.0
  %1109 = vmatprep.subr.mxu0 0.0
  %1110 = vmatpush1.msra.mxu0 0.0
  %1111 = vmatprep.subr.mxu0 0.0
  %1112 = vmatpush1.msra.mxu0 0.0
  %1113 = vmatprep.subr.mxu0 0.0
  %1114 = vmatpush1.msra.mxu0 0.0
  %1115 = vmatprep.subr.mxu0 0.0
  %1116 = vmatpush1.msra.mxu0 0.0
  %1117 = vmatprep.subr.mxu0 0.0
  %1118 = vmatpush1.msra.mxu0 0.0
  %1119 = vmatprep.subr.mxu0 0.0
  %1120 = vmatpush1.msra.mxu0 0.0
  %1121 = vmatprep.subr.mxu0 0.0
  %1122 = vmatpush1.msra.mxu0 0.0
  %1123 = vmatprep.mubr.f32.mxu0 0.0
  %1124 = vmatmul.mubr.f32.gmra.mrb[0].mxu0 %v1012
  %v1125 = vpop.f32.mrb[0].mxu0
  %v1126 = vadd.f32 0.0, %v1125
  %v1127 = vpop.f32.mrb[0].mxu0
  %1128 = vmatprep.mubr.f32.mxu0 0.0
  %1129 = vmatmul.mubr.f32.gmra.mrb[0].mxu0 %v1015
  %v1130 = vpop.f32.mrb[0].mxu0
  %v1131 = vadd.f32 0.0, %v1130
  %v1132 = vpop.f32.mrb[0].mxu0
  %1133 = vmatprep.mubr.f32.mxu0 0.0
  %1134 = vmatmul.mubr.f32.gmra.mrb[0].mxu0 %v1018
  %v1135 = vpop.f32.mrb[0].mxu0
  %v1136 = vadd.f32 0.0, %v1135
  %v1137 = vpop.f32.mrb[0].mxu0
  %1138 = vmatprep.mubr.f32.mxu0 0.0
  %1139 = vmatmul.mubr.f32.gmra.mrb[0].mxu0 %v1021
  %v1140 = vpop.f32.mrb[0].mxu0
  %v1141 = vadd.f32 0.0, %v1140
  %v1142 = vpop.f32.mrb[0].mxu0
  %1143 = vmatprep.mubr.f32.mxu0 0.0
  %1144 = vmatmul.mubr.f32.gmra.mrb[0].mxu0 %v1024
  %v1145 = vpop.f32.mrb[0].mxu0
  %v1146 = vadd.f32 0.0, %v1145
  %v1147 = vpop.f32.mrb[0].mxu0
  %1148 = vmatprep.mubr.f32.mxu0 0.0
  %1149 = vmatmul.mubr.f32.gmra.mrb[0].mxu0 %v1027
  %v1150 = vpop.f32.mrb[0].mxu0
  %v1151 = vadd.f32 0.0, %v1150
  %v1152 = vpop.f32.mrb[0].mxu0
  %1153 = vmatprep.mubr.f32.mxu0 0.0
  %1154 = vmatmul.mubr.f32.gmra.mrb[0].mxu0 %v1030
  %v1155 = vpop.f32.mrb[0].mxu0
  %v1156 = vadd.f32 0.0, %v1155
  %v1157 = vpop.f32.mrb[0].mxu0
  %1158 = vmatprep.mubr.f32.mxu0 0.0
  %1159 = vmatmul.mubr.f32.gmra.mrb[0].mxu0 %v1033
  %v1160 = vpop.f32.mrb[0].mxu0
  %v1161 = vadd.f32 0.0, %v1160
  %v1162 = vpop.f32.mrb[0].mxu0
  %1163 = vmatprep.mubr.f32.mxu0 0.0
  %1164 = vmatmul.mubr.f32.gmra.mrb[0].mxu0 %v1036
  %v1165 = vpop.f32.mrb[0].mxu0
  %v1166 = vadd.f32 0.0, %v1165
  %v1167 = vpop.f32.mrb[0].mxu0
  %1168 = vmatprep.mubr.f32.mxu0 0.0
  %1169 = vmatmul.mubr.f32.gmra.mrb[0].mxu0 %v1039
  %v1170 = vpop.f32.mrb[0].mxu0
  %v1171 = vadd.f32 0.0, %v1170
  %v1172 = vpop.f32.mrb[0].mxu0
  %1173 = vmatprep.mubr.f32.mxu0 0.0
  %1174 = vmatmul.mubr.f32.gmra.mrb[0].mxu0 %v1042
  %v1175 = vpop.f32.mrb[0].mxu0
  %v1176 = vadd.f32 0.0, %v1175
  %v1177 = vpop.f32.mrb[0].mxu0
  %1178 = vmatprep.mubr.f32.mxu0 0.0
  %1179 = vmatmul.mubr.f32.gmra.mrb[0].mxu0 %v1045
  %v1180 = vpop.f32.mrb[0].mxu0
  %v1181 = vadd.f32 0.0, %v1180
  %v1182 = vpop.f32.mrb[0].mxu0
  %1183 = vmatprep.mubr.f32.mxu0 0.0
  %1184 = vmatmul.mubr.f32.gmra.mrb[0].mxu0 %v1048
  %v1185 = vpop.f32.mrb[0].mxu0
  %v1186 = vadd.f32 0.0, %v1185
  %v1187 = vpop.f32.mrb[0].mxu0
  %1188 = vmatprep.mubr.f32.mxu0 0.0
  %1189 = vmatmul.mubr.f32.gmra.mrb[0].mxu0 %v1051
  %v1190 = vpop.f32.mrb[0].mxu0
  %v1191 = vadd.f32 0.0, %v1190
  %v1192 = vpop.f32.mrb[0].mxu0
  %1193 = vmatprep.mubr.f32.mxu0 0.0
  %1194 = vmatmul.mubr.f32.gmra.mrb[0].mxu0 %v1054
  %v1195 = vpop.f32.mrb[0].mxu0
  %v1196 = vadd.f32 0.0, %v1195
  %v1197 = vpop.f32.mrb[0].mxu0
  %1198 = vmatprep.mubr.f32.mxu0 0.0
  %1199 = vmatmul.mubr.f32.gmra.mrb[0].mxu0 %v1057
  %v1200 = vpop.f32.mrb[0].mxu0
  %v1201 = vadd.f32 0.0, %v1200
  %v1202 = vpop.f32.mrb[0].mxu0
  %1203 = vdwg.mxu0
  %v1204 = vadd.f32 %v931, %v1126
  %v1205 = vadd.f32 %v936, %v1131
  %v1206 = vadd.f32 %v941, %v1136
  %v1207 = vadd.f32 %v946, %v1141
  %v1208 = vadd.f32 %v951, %v1146
  %v1209 = vadd.f32 %v956, %v1151
  %v1210 = vadd.f32 %v961, %v1156
  %v1211 = vadd.f32 %v966, %v1161
  %v1212 = vadd.f32 %v971, %v1166
  %v1213 = vadd.f32 %v976, %v1171
  %v1214 = vadd.f32 %v981, %v1176
  %v1215 = vadd.f32 %v986, %v1181
  %v1216 = vadd.f32 %v991, %v1186
  %v1217 = vadd.f32 %v996, %v1191
  %v1218 = vadd.f32 %v1001, %v1196
  %v1219 = vadd.f32 %v1006, %v1201
  %v1220 = vld [vmem:[%s6] sm:$0x1]
  %v1222 = vlaneseq
  %v1223 = vshrl.u32 %v1222, 7
  %v1224 = vsub.s32 0, %v1223
  %v1225 = vrot.slane %v1220, %v1224
  %v1227 = vadd.f32 %v1204, %v1225
  %v1228 = vadd.f32 %v1205, %v1225
  %v1229 = vadd.f32 %v1206, %v1225
  %v1230 = vadd.f32 %v1207, %v1225
  %v1231 = vadd.f32 %v1208, %v1225
  %v1232 = vadd.f32 %v1209, %v1225
  %v1233 = vadd.f32 %v1210, %v1225
  %v1234 = vadd.f32 %v1211, %v1225
  %v1235 = vadd.f32 %v1212, %v1225
  %v1236 = vadd.f32 %v1213, %v1225
  %v1237 = vadd.f32 %v1214, %v1225
  %v1238 = vadd.f32 %v1215, %v1225
  %v1239 = vadd.f32 %v1216, %v1225
  %v1240 = vadd.f32 %v1217, %v1225
  %v1241 = vadd.f32 %v1218, %v1225
  %v1242 = vadd.f32 %v1219, %v1225
  %1259 = vrot.lane.b32.xlu0 %v1227, 127
  %v1260 = vpop.permute.xlu0 %1259
  %1261 = vrot.lane.b32.xlu0 %v1228, 127
  %v1262 = vpop.permute.xlu0 %1261
  %1263 = vrot.lane.b32.xlu0 %v1229, 127
  %v1264 = vpop.permute.xlu0 %1263
  %1265 = vrot.lane.b32.xlu0 %v1230, 127
  %v1266 = vpop.permute.xlu0 %1265
  %1267 = vrot.lane.b32.xlu0 %v1231, 127
  %v1268 = vpop.permute.xlu0 %1267
  %1269 = vrot.lane.b32.xlu0 %v1232, 127
  %v1270 = vpop.permute.xlu0 %1269
  %1271 = vrot.lane.b32.xlu0 %v1233, 127
  %v1272 = vpop.permute.xlu0 %1271
  %1273 = vrot.lane.b32.xlu0 %v1234, 127
  %v1274 = vpop.permute.xlu0 %1273
  %1275 = vrot.lane.b32.xlu0 %v1235, 127
  %v1276 = vpop.permute.xlu0 %1275
  %1277 = vrot.lane.b32.xlu0 %v1236, 127
  %v1278 = vpop.permute.xlu0 %1277
  %1279 = vrot.lane.b32.xlu0 %v1237, 127
  %v1280 = vpop.permute.xlu0 %1279
  %1281 = vrot.lane.b32.xlu0 %v1238, 127
  %v1282 = vpop.permute.xlu0 %1281
  %1283 = vrot.lane.b32.xlu0 %v1239, 127
  %v1284 = vpop.permute.xlu0 %1283
  %1285 = vrot.lane.b32.xlu0 %v1240, 127
  %v1286 = vpop.permute.xlu0 %1285
  %1287 = vrot.lane.b32.xlu0 %v1241, 127
  %v1288 = vpop.permute.xlu0 %1287
  %1289 = vrot.lane.b32.xlu0 %v1242, 127
  %v1290 = vpop.permute.xlu0 %1289
  %v1307 = vmax.f32 %v1227, %v1260
  %v1308 = vmax.f32 %v1228, %v1262
  %v1309 = vmax.f32 %v1229, %v1264
  %v1310 = vmax.f32 %v1230, %v1266
  %v1311 = vmax.f32 %v1231, %v1268
  %v1312 = vmax.f32 %v1232, %v1270
  %v1313 = vmax.f32 %v1233, %v1272
  %v1314 = vmax.f32 %v1234, %v1274
  %v1315 = vmax.f32 %v1235, %v1276
  %v1316 = vmax.f32 %v1236, %v1278
  %v1317 = vmax.f32 %v1237, %v1280
  %v1318 = vmax.f32 %v1238, %v1282
  %v1319 = vmax.f32 %v1239, %v1284
  %v1320 = vmax.f32 %v1240, %v1286
  %v1321 = vmax.f32 %v1241, %v1288
  %v1322 = vmax.f32 %v1242, %v1290
  %1323 = vrot.lane.b32.xlu0 %v1227, 126
  %v1324 = vpop.permute.xlu0 %1323
  %1325 = vrot.lane.b32.xlu0 %v1228, 126
  %v1326 = vpop.permute.xlu0 %1325
  %1327 = vrot.lane.b32.xlu0 %v1229, 126
  %v1328 = vpop.permute.xlu0 %1327
  %1329 = vrot.lane.b32.xlu0 %v1230, 126
  %v1330 = vpop.permute.xlu0 %1329
  %1331 = vrot.lane.b32.xlu0 %v1231, 126
  %v1332 = vpop.permute.xlu0 %1331
  %1333 = vrot.lane.b32.xlu0 %v1232, 126
  %v1334 = vpop.permute.xlu0 %1333
  %1335 = vrot.lane.b32.xlu0 %v1233, 126
  %v1336 = vpop.permute.xlu0 %1335
  %1337 = vrot.lane.b32.xlu0 %v1234, 126
  %v1338 = vpop.permute.xlu0 %1337
  %1339 = vrot.lane.b32.xlu0 %v1235, 126
  %v1340 = vpop.permute.xlu0 %1339
  %1341 = vrot.lane.b32.xlu0 %v1236, 126
  %v1342 = vpop.permute.xlu0 %1341
  %1343 = vrot.lane.b32.xlu0 %v1237, 126
  %v1344 = vpop.permute.xlu0 %1343
  %1345 = vrot.lane.b32.xlu0 %v1238, 126
  %v1346 = vpop.permute.xlu0 %1345
  %1347 = vrot.lane.b32.xlu0 %v1239, 126
  %v1348 = vpop.permute.xlu0 %1347
  %1349 = vrot.lane.b32.xlu0 %v1240, 126
  %v1350 = vpop.permute.xlu0 %1349
  %1351 = vrot.lane.b32.xlu0 %v1241, 126
  %v1352 = vpop.permute.xlu0 %1351
  %1353 = vrot.lane.b32.xlu0 %v1242, 126
  %v1354 = vpop.permute.xlu0 %1353
  %v1371 = vmax.f32 %v1307, %v1324
  %v1372 = vmax.f32 %v1308, %v1326
  %v1373 = vmax.f32 %v1309, %v1328
  %v1374 = vmax.f32 %v1310, %v1330
  %v1375 = vmax.f32 %v1311, %v1332
  %v1376 = vmax.f32 %v1312, %v1334
  %v1377 = vmax.f32 %v1313, %v1336
  %v1378 = vmax.f32 %v1314, %v1338
  %v1379 = vmax.f32 %v1315, %v1340
  %v1380 = vmax.f32 %v1316, %v1342
  %v1381 = vmax.f32 %v1317, %v1344
  %v1382 = vmax.f32 %v1318, %v1346
  %v1383 = vmax.f32 %v1319, %v1348
  %v1384 = vmax.f32 %v1320, %v1350
  %v1385 = vmax.f32 %v1321, %v1352
  %v1386 = vmax.f32 %v1322, %v1354
  %v1387 = vsub.f32 %v1227, %v1371
  %v1388 = vsub.f32 %v1228, %v1372
  %v1389 = vsub.f32 %v1229, %v1373
  %v1390 = vsub.f32 %v1230, %v1374
  %v1391 = vsub.f32 %v1231, %v1375
  %v1392 = vsub.f32 %v1232, %v1376
  %v1393 = vsub.f32 %v1233, %v1377
  %v1394 = vsub.f32 %v1234, %v1378
  %v1395 = vsub.f32 %v1235, %v1379
  %v1396 = vsub.f32 %v1236, %v1380
  %v1397 = vsub.f32 %v1237, %v1381
  %v1398 = vsub.f32 %v1238, %v1382
  %v1399 = vsub.f32 %v1239, %v1383
  %v1400 = vsub.f32 %v1240, %v1384
  %v1401 = vsub.f32 %v1241, %v1385
  %v1402 = vsub.f32 %v1242, %v1386
  %v1403 = vmul.f32 %v1387, 1.442695
  %v1404 = vpow.pop %v1403
  %v1405 = vmul.f32 %v1388, 1.442695
  %v1406 = vpow.pop %v1405
  %v1407 = vmul.f32 %v1389, 1.442695
  %v1408 = vpow.pop %v1407
  %v1409 = vmul.f32 %v1390, 1.442695
  %v1410 = vpow.pop %v1409
  %v1411 = vmul.f32 %v1391, 1.442695
  %v1412 = vpow.pop %v1411
  %v1413 = vmul.f32 %v1392, 1.442695
  %v1414 = vpow.pop %v1413
  %v1415 = vmul.f32 %v1393, 1.442695
  %v1416 = vpow.pop %v1415
  %v1417 = vmul.f32 %v1394, 1.442695
  %v1418 = vpow.pop %v1417
  %v1419 = vmul.f32 %v1395, 1.442695
  %v1420 = vpow.pop %v1419
  %v1421 = vmul.f32 %v1396, 1.442695
  %v1422 = vpow.pop %v1421
  %v1423 = vmul.f32 %v1397, 1.442695
  %v1424 = vpow.pop %v1423
  %v1425 = vmul.f32 %v1398, 1.442695
  %v1426 = vpow.pop %v1425
  %v1427 = vmul.f32 %v1399, 1.442695
  %v1428 = vpow.pop %v1427
  %v1429 = vmul.f32 %v1400, 1.442695
  %v1430 = vpow.pop %v1429
  %v1431 = vmul.f32 %v1401, 1.442695
  %v1432 = vpow.pop %v1431
  %v1433 = vmul.f32 %v1402, 1.442695
  %v1434 = vpow.pop %v1433
  %1451 = vrot.lane.b32.xlu0 %v1371, 1
  %v1452 = vpop.permute.xlu0 %1451
  %1453 = vrot.lane.b32.xlu0 %v1372, 1
  %v1454 = vpop.permute.xlu0 %1453
  %1455 = vrot.lane.b32.xlu0 %v1373, 1
  %v1456 = vpop.permute.xlu0 %1455
  %1457 = vrot.lane.b32.xlu0 %v1374, 1
  %v1458 = vpop.permute.xlu0 %1457
  %1459 = vrot.lane.b32.xlu0 %v1375, 1
  %v1460 = vpop.permute.xlu0 %1459
  %1461 = vrot.lane.b32.xlu0 %v1376, 1
  %v1462 = vpop.permute.xlu0 %1461
  %1463 = vrot.lane.b32.xlu0 %v1377, 1
  %v1464 = vpop.permute.xlu0 %1463
  %1465 = vrot.lane.b32.xlu0 %v1378, 1
  %v1466 = vpop.permute.xlu0 %1465
  %1467 = vrot.lane.b32.xlu0 %v1379, 1
  %v1468 = vpop.permute.xlu0 %1467
  %1469 = vrot.lane.b32.xlu0 %v1380, 1
  %v1470 = vpop.permute.xlu0 %1469
  %1471 = vrot.lane.b32.xlu0 %v1381, 1
  %v1472 = vpop.permute.xlu0 %1471
  %1473 = vrot.lane.b32.xlu0 %v1382, 1
  %v1474 = vpop.permute.xlu0 %1473
  %1475 = vrot.lane.b32.xlu0 %v1383, 1
  %v1476 = vpop.permute.xlu0 %1475
  %1477 = vrot.lane.b32.xlu0 %v1384, 1
  %v1478 = vpop.permute.xlu0 %1477
  %1479 = vrot.lane.b32.xlu0 %v1385, 1
  %v1480 = vpop.permute.xlu0 %1479
  %1481 = vrot.lane.b32.xlu0 %v1386, 1
  %v1482 = vpop.permute.xlu0 %1481
  %v1499 = vsub.f32 %v1227, %v1452
  %v1500 = vsub.f32 %v1228, %v1454
  %v1501 = vsub.f32 %v1229, %v1456
  %v1502 = vsub.f32 %v1230, %v1458
  %v1503 = vsub.f32 %v1231, %v1460
  %v1504 = vsub.f32 %v1232, %v1462
  %v1505 = vsub.f32 %v1233, %v1464
  %v1506 = vsub.f32 %v1234, %v1466
  %v1507 = vsub.f32 %v1235, %v1468
  %v1508 = vsub.f32 %v1236, %v1470
  %v1509 = vsub.f32 %v1237, %v1472
  %v1510 = vsub.f32 %v1238, %v1474
  %v1511 = vsub.f32 %v1239, %v1476
  %v1512 = vsub.f32 %v1240, %v1478
  %v1513 = vsub.f32 %v1241, %v1480
  %v1514 = vsub.f32 %v1242, %v1482
  %v1515 = vmul.f32 %v1499, 1.442695
  %v1516 = vpow.pop %v1515
  %v1517 = vmul.f32 %v1500, 1.442695
  %v1518 = vpow.pop %v1517
  %v1519 = vmul.f32 %v1501, 1.442695
  %v1520 = vpow.pop %v1519
  %v1521 = vmul.f32 %v1502, 1.442695
  %v1522 = vpow.pop %v1521
  %v1523 = vmul.f32 %v1503, 1.442695
  %v1524 = vpow.pop %v1523
  %v1525 = vmul.f32 %v1504, 1.442695
  %v1526 = vpow.pop %v1525
  %v1527 = vmul.f32 %v1505, 1.442695
  %v1528 = vpow.pop %v1527
  %v1529 = vmul.f32 %v1506, 1.442695
  %v1530 = vpow.pop %v1529
  %v1531 = vmul.f32 %v1507, 1.442695
  %v1532 = vpow.pop %v1531
  %v1533 = vmul.f32 %v1508, 1.442695
  %v1534 = vpow.pop %v1533
  %v1535 = vmul.f32 %v1509, 1.442695
  %v1536 = vpow.pop %v1535
  %v1537 = vmul.f32 %v1510, 1.442695
  %v1538 = vpow.pop %v1537
  %v1539 = vmul.f32 %v1511, 1.442695
  %v1540 = vpow.pop %v1539
  %v1541 = vmul.f32 %v1512, 1.442695
  %v1542 = vpow.pop %v1541
  %v1543 = vmul.f32 %v1513, 1.442695
  %v1544 = vpow.pop %v1543
  %v1545 = vmul.f32 %v1514, 1.442695
  %v1546 = vpow.pop %v1545
  %1547 = vrot.lane.b32.xlu0 %v1371, 2
  %v1548 = vpop.permute.xlu0 %1547
  %1549 = vrot.lane.b32.xlu0 %v1372, 2
  %v1550 = vpop.permute.xlu0 %1549
  %1551 = vrot.lane.b32.xlu0 %v1373, 2
  %v1552 = vpop.permute.xlu0 %1551
  %1553 = vrot.lane.b32.xlu0 %v1374, 2
  %v1554 = vpop.permute.xlu0 %1553
  %1555 = vrot.lane.b32.xlu0 %v1375, 2
  %v1556 = vpop.permute.xlu0 %1555
  %1557 = vrot.lane.b32.xlu0 %v1376, 2
  %v1558 = vpop.permute.xlu0 %1557
  %1559 = vrot.lane.b32.xlu0 %v1377, 2
  %v1560 = vpop.permute.xlu0 %1559
  %1561 = vrot.lane.b32.xlu0 %v1378, 2
  %v1562 = vpop.permute.xlu0 %1561
  %1563 = vrot.lane.b32.xlu0 %v1379, 2
  %v1564 = vpop.permute.xlu0 %1563
  %1565 = vrot.lane.b32.xlu0 %v1380, 2
  %v1566 = vpop.permute.xlu0 %1565
  %1567 = vrot.lane.b32.xlu0 %v1381, 2
  %v1568 = vpop.permute.xlu0 %1567
  %1569 = vrot.lane.b32.xlu0 %v1382, 2
  %v1570 = vpop.permute.xlu0 %1569
  %1571 = vrot.lane.b32.xlu0 %v1383, 2
  %v1572 = vpop.permute.xlu0 %1571
  %1573 = vrot.lane.b32.xlu0 %v1384, 2
  %v1574 = vpop.permute.xlu0 %1573
  %1575 = vrot.lane.b32.xlu0 %v1385, 2
  %v1576 = vpop.permute.xlu0 %1575
  %1577 = vrot.lane.b32.xlu0 %v1386, 2
  %v1578 = vpop.permute.xlu0 %1577
  %v1595 = vsub.f32 %v1227, %v1548
  %v1596 = vsub.f32 %v1228, %v1550
  %v1597 = vsub.f32 %v1229, %v1552
  %v1598 = vsub.f32 %v1230, %v1554
  %v1599 = vsub.f32 %v1231, %v1556
  %v1600 = vsub.f32 %v1232, %v1558
  %v1601 = vsub.f32 %v1233, %v1560
  %v1602 = vsub.f32 %v1234, %v1562
  %v1603 = vsub.f32 %v1235, %v1564
  %v1604 = vsub.f32 %v1236, %v1566
  %v1605 = vsub.f32 %v1237, %v1568
  %v1606 = vsub.f32 %v1238, %v1570
  %v1607 = vsub.f32 %v1239, %v1572
  %v1608 = vsub.f32 %v1240, %v1574
  %v1609 = vsub.f32 %v1241, %v1576
  %v1610 = vsub.f32 %v1242, %v1578
  %v1611 = vmul.f32 %v1595, 1.442695
  %v1612 = vpow.pop %v1611
  %v1613 = vmul.f32 %v1596, 1.442695
  %v1614 = vpow.pop %v1613
  %v1615 = vmul.f32 %v1597, 1.442695
  %v1616 = vpow.pop %v1615
  %v1617 = vmul.f32 %v1598, 1.442695
  %v1618 = vpow.pop %v1617
  %v1619 = vmul.f32 %v1599, 1.442695
  %v1620 = vpow.pop %v1619
  %v1621 = vmul.f32 %v1600, 1.442695
  %v1622 = vpow.pop %v1621
  %v1623 = vmul.f32 %v1601, 1.442695
  %v1624 = vpow.pop %v1623
  %v1625 = vmul.f32 %v1602, 1.442695
  %v1626 = vpow.pop %v1625
  %v1627 = vmul.f32 %v1603, 1.442695
  %v1628 = vpow.pop %v1627
  %v1629 = vmul.f32 %v1604, 1.442695
  %v1630 = vpow.pop %v1629
  %v1631 = vmul.f32 %v1605, 1.442695
  %v1632 = vpow.pop %v1631
  %v1633 = vmul.f32 %v1606, 1.442695
  %v1634 = vpow.pop %v1633
  %v1635 = vmul.f32 %v1607, 1.442695
  %v1636 = vpow.pop %v1635
  %v1637 = vmul.f32 %v1608, 1.442695
  %v1638 = vpow.pop %v1637
  %v1639 = vmul.f32 %v1609, 1.442695
  %v1640 = vpow.pop %v1639
  %v1641 = vmul.f32 %v1610, 1.442695
  %v1642 = vpow.pop %v1641
  %1659 = vrot.lane.b32.xlu0 %v1516, 127
  %v1660 = vpop.permute.xlu0 %1659
  %1661 = vrot.lane.b32.xlu0 %v1518, 127
  %v1662 = vpop.permute.xlu0 %1661
  %1663 = vrot.lane.b32.xlu0 %v1520, 127
  %v1664 = vpop.permute.xlu0 %1663
  %1665 = vrot.lane.b32.xlu0 %v1522, 127
  %v1666 = vpop.permute.xlu0 %1665
  %1667 = vrot.lane.b32.xlu0 %v1524, 127
  %v1668 = vpop.permute.xlu0 %1667
  %1669 = vrot.lane.b32.xlu0 %v1526, 127
  %v1670 = vpop.permute.xlu0 %1669
  %1671 = vrot.lane.b32.xlu0 %v1528, 127
  %v1672 = vpop.permute.xlu0 %1671
  %1673 = vrot.lane.b32.xlu0 %v1530, 127
  %v1674 = vpop.permute.xlu0 %1673
  %1675 = vrot.lane.b32.xlu0 %v1532, 127
  %v1676 = vpop.permute.xlu0 %1675
  %1677 = vrot.lane.b32.xlu0 %v1534, 127
  %v1678 = vpop.permute.xlu0 %1677
  %1679 = vrot.lane.b32.xlu0 %v1536, 127
  %v1680 = vpop.permute.xlu0 %1679
  %1681 = vrot.lane.b32.xlu0 %v1538, 127
  %v1682 = vpop.permute.xlu0 %1681
  %1683 = vrot.lane.b32.xlu0 %v1540, 127
  %v1684 = vpop.permute.xlu0 %1683
  %1685 = vrot.lane.b32.xlu0 %v1542, 127
  %v1686 = vpop.permute.xlu0 %1685
  %1687 = vrot.lane.b32.xlu0 %v1544, 127
  %v1688 = vpop.permute.xlu0 %1687
  %1689 = vrot.lane.b32.xlu0 %v1546, 127
  %v1690 = vpop.permute.xlu0 %1689
  %v1707 = vadd.f32 %v1404, %v1660
  %v1708 = vadd.f32 %v1406, %v1662
  %v1709 = vadd.f32 %v1408, %v1664
  %v1710 = vadd.f32 %v1410, %v1666
  %v1711 = vadd.f32 %v1412, %v1668
  %v1712 = vadd.f32 %v1414, %v1670
  %v1713 = vadd.f32 %v1416, %v1672
  %v1714 = vadd.f32 %v1418, %v1674
  %v1715 = vadd.f32 %v1420, %v1676
  %v1716 = vadd.f32 %v1422, %v1678
  %v1717 = vadd.f32 %v1424, %v1680
  %v1718 = vadd.f32 %v1426, %v1682
  %v1719 = vadd.f32 %v1428, %v1684
  %v1720 = vadd.f32 %v1430, %v1686
  %v1721 = vadd.f32 %v1432, %v1688
  %v1722 = vadd.f32 %v1434, %v1690
  %1739 = vrot.lane.b32.xlu0 %v1612, 126
  %v1740 = vpop.permute.xlu0 %1739
  %1741 = vrot.lane.b32.xlu0 %v1614, 126
  %v1742 = vpop.permute.xlu0 %1741
  %1743 = vrot.lane.b32.xlu0 %v1616, 126
  %v1744 = vpop.permute.xlu0 %1743
  %1745 = vrot.lane.b32.xlu0 %v1618, 126
  %v1746 = vpop.permute.xlu0 %1745
  %1747 = vrot.lane.b32.xlu0 %v1620, 126
  %v1748 = vpop.permute.xlu0 %1747
  %1749 = vrot.lane.b32.xlu0 %v1622, 126
  %v1750 = vpop.permute.xlu0 %1749
  %1751 = vrot.lane.b32.xlu0 %v1624, 126
  %v1752 = vpop.permute.xlu0 %1751
  %1753 = vrot.lane.b32.xlu0 %v1626, 126
  %v1754 = vpop.permute.xlu0 %1753
  %1755 = vrot.lane.b32.xlu0 %v1628, 126
  %v1756 = vpop.permute.xlu0 %1755
  %1757 = vrot.lane.b32.xlu0 %v1630, 126
  %v1758 = vpop.permute.xlu0 %1757
  %1759 = vrot.lane.b32.xlu0 %v1632, 126
  %v1760 = vpop.permute.xlu0 %1759
  %1761 = vrot.lane.b32.xlu0 %v1634, 126
  %v1762 = vpop.permute.xlu0 %1761
  %1763 = vrot.lane.b32.xlu0 %v1636, 126
  %v1764 = vpop.permute.xlu0 %1763
  %1765 = vrot.lane.b32.xlu0 %v1638, 126
  %v1766 = vpop.permute.xlu0 %1765
  %1767 = vrot.lane.b32.xlu0 %v1640, 126
  %v1768 = vpop.permute.xlu0 %1767
  %1769 = vrot.lane.b32.xlu0 %v1642, 126
  %v1770 = vpop.permute.xlu0 %1769
  %v1787 = vadd.f32 %v1707, %v1740
  %v1788 = vadd.f32 %v1708, %v1742
  %v1789 = vadd.f32 %v1709, %v1744
  %v1790 = vadd.f32 %v1710, %v1746
  %v1791 = vadd.f32 %v1711, %v1748
  %v1792 = vadd.f32 %v1712, %v1750
  %v1793 = vadd.f32 %v1713, %v1752
  %v1794 = vadd.f32 %v1714, %v1754
  %v1795 = vadd.f32 %v1715, %v1756
  %v1796 = vadd.f32 %v1716, %v1758
  %v1797 = vadd.f32 %v1717, %v1760
  %v1798 = vadd.f32 %v1718, %v1762
  %v1799 = vadd.f32 %v1719, %v1764
  %v1800 = vadd.f32 %v1720, %v1766
  %v1801 = vadd.f32 %v1721, %v1768
  %v1802 = vadd.f32 %v1722, %v1770
  %v1803 = vrcp.pop %v1787
  %v1804 = vrcp.pop %v1788
  %v1805 = vrcp.pop %v1789
  %v1806 = vrcp.pop %v1790
  %v1807 = vrcp.pop %v1791
  %v1808 = vrcp.pop %v1792
  %v1809 = vrcp.pop %v1793
  %v1810 = vrcp.pop %v1794
  %v1811 = vrcp.pop %v1795
  %v1812 = vrcp.pop %v1796
  %v1813 = vrcp.pop %v1797
  %v1814 = vrcp.pop %v1798
  %v1815 = vrcp.pop %v1799
  %v1816 = vrcp.pop %v1800
  %v1817 = vrcp.pop %v1801
  %v1818 = vrcp.pop %v1802
  %1820 = vset.pattern.permute.xlu0 0
  %1821 = vperm.xlu0 %1820, %v1404
  %v1822 = vpop.permute.xlu0 %1821
  %1825 = vset.pattern.permute.xlu0 0
  %1826 = vperm.xlu0 %1825, %v1406
  %v1827 = vpop.permute.xlu0 %1826
  %1830 = vset.pattern.permute.xlu0 0
  %1831 = vperm.xlu0 %1830, %v1408
  %v1832 = vpop.permute.xlu0 %1831
  %1835 = vset.pattern.permute.xlu0 0
  %1836 = vperm.xlu0 %1835, %v1410
  %v1837 = vpop.permute.xlu0 %1836
  %1840 = vset.pattern.permute.xlu0 0
  %1841 = vperm.xlu0 %1840, %v1412
  %v1842 = vpop.permute.xlu0 %1841
  %1845 = vset.pattern.permute.xlu0 0
  %1846 = vperm.xlu0 %1845, %v1414
  %v1847 = vpop.permute.xlu0 %1846
  %1850 = vset.pattern.permute.xlu0 0
  %1851 = vperm.xlu0 %1850, %v1416
  %v1852 = vpop.permute.xlu0 %1851
  %1855 = vset.pattern.permute.xlu0 0
  %1856 = vperm.xlu0 %1855, %v1418
  %v1857 = vpop.permute.xlu0 %1856
  %1860 = vset.pattern.permute.xlu0 0
  %1861 = vperm.xlu0 %1860, %v1420
  %v1862 = vpop.permute.xlu0 %1861
  %1865 = vset.pattern.permute.xlu0 0
  %1866 = vperm.xlu0 %1865, %v1422
  %v1867 = vpop.permute.xlu0 %1866
  %1870 = vset.pattern.permute.xlu0 0
  %1871 = vperm.xlu0 %1870, %v1424
  %v1872 = vpop.permute.xlu0 %1871
  %1875 = vset.pattern.permute.xlu0 0
  %1876 = vperm.xlu0 %1875, %v1426
  %v1877 = vpop.permute.xlu0 %1876
  %1880 = vset.pattern.permute.xlu0 0
  %1881 = vperm.xlu0 %1880, %v1428
  %v1882 = vpop.permute.xlu0 %1881
  %1885 = vset.pattern.permute.xlu0 0
  %1886 = vperm.xlu0 %1885, %v1430
  %v1887 = vpop.permute.xlu0 %1886
  %1890 = vset.pattern.permute.xlu0 0
  %1891 = vperm.xlu0 %1890, %v1432
  %v1892 = vpop.permute.xlu0 %1891
  %1895 = vset.pattern.permute.xlu0 0
  %1896 = vperm.xlu0 %1895, %v1434
  %v1897 = vpop.permute.xlu0 %1896
  %v1899 = vmul.f32 %v1822, %v26
  %v1900 = vmul.f32 %v1827, %v27
  %v1901 = vmul.f32 %v1832, %v28
  %v1902 = vmul.f32 %v1837, %v29
  %v1903 = vmul.f32 %v1842, %v30
  %v1904 = vmul.f32 %v1847, %v31
  %v1905 = vmul.f32 %v1852, %v32
  %v1906 = vmul.f32 %v1857, %v33
  %v1907 = vmul.f32 %v1862, %v34
  %v1908 = vmul.f32 %v1867, %v35
  %v1909 = vmul.f32 %v1872, %v36
  %v1910 = vmul.f32 %v1877, %v37
  %v1911 = vmul.f32 %v1882, %v38
  %v1912 = vmul.f32 %v1887, %v39
  %v1913 = vmul.f32 %v1892, %v40
  %v1914 = vmul.f32 %v1897, %v41
  %1915 = vset.pattern.permute.xlu0 1
  %1916 = vperm.xlu0 %1915, %v1516
  %v1917 = vpop.permute.xlu0 %1916
  %1919 = vset.pattern.permute.xlu0 1
  %1920 = vperm.xlu0 %1919, %v1518
  %v1921 = vpop.permute.xlu0 %1920
  %1923 = vset.pattern.permute.xlu0 1
  %1924 = vperm.xlu0 %1923, %v1520
  %v1925 = vpop.permute.xlu0 %1924
  %1927 = vset.pattern.permute.xlu0 1
  %1928 = vperm.xlu0 %1927, %v1522
  %v1929 = vpop.permute.xlu0 %1928
  %1931 = vset.pattern.permute.xlu0 1
  %1932 = vperm.xlu0 %1931, %v1524
  %v1933 = vpop.permute.xlu0 %1932
  %1935 = vset.pattern.permute.xlu0 1
  %1936 = vperm.xlu0 %1935, %v1526
  %v1937 = vpop.permute.xlu0 %1936
  %1939 = vset.pattern.permute.xlu0 1
  %1940 = vperm.xlu0 %1939, %v1528
  %v1941 = vpop.permute.xlu0 %1940
  %1943 = vset.pattern.permute.xlu0 1
  %1944 = vperm.xlu0 %1943, %v1530
  %v1945 = vpop.permute.xlu0 %1944
  %1947 = vset.pattern.permute.xlu0 1
  %1948 = vperm.xlu0 %1947, %v1532
  %v1949 = vpop.permute.xlu0 %1948
  %1951 = vset.pattern.permute.xlu0 1
  %1952 = vperm.xlu0 %1951, %v1534
  %v1953 = vpop.permute.xlu0 %1952
  %1955 = vset.pattern.permute.xlu0 1
  %1956 = vperm.xlu0 %1955, %v1536
  %v1957 = vpop.permute.xlu0 %1956
  %1959 = vset.pattern.permute.xlu0 1
  %1960 = vperm.xlu0 %1959, %v1538
  %v1961 = vpop.permute.xlu0 %1960
  %1963 = vset.pattern.permute.xlu0 1
  %1964 = vperm.xlu0 %1963, %v1540
  %v1965 = vpop.permute.xlu0 %1964
  %1967 = vset.pattern.permute.xlu0 1
  %1968 = vperm.xlu0 %1967, %v1542
  %v1969 = vpop.permute.xlu0 %1968
  %1971 = vset.pattern.permute.xlu0 1
  %1972 = vperm.xlu0 %1971, %v1544
  %v1973 = vpop.permute.xlu0 %1972
  %1975 = vset.pattern.permute.xlu0 1
  %1976 = vperm.xlu0 %1975, %v1546
  %v1977 = vpop.permute.xlu0 %1976
  %v1979 = vmul.f32 %v1917, %v42
  %v1980 = vmul.f32 %v1921, %v43
  %v1981 = vmul.f32 %v1925, %v44
  %v1982 = vmul.f32 %v1929, %v45
  %v1983 = vmul.f32 %v1933, %v46
  %v1984 = vmul.f32 %v1937, %v47
  %v1985 = vmul.f32 %v1941, %v48
  %v1986 = vmul.f32 %v1945, %v49
  %v1987 = vmul.f32 %v1949, %v50
  %v1988 = vmul.f32 %v1953, %v51
  %v1989 = vmul.f32 %v1957, %v52
  %v1990 = vmul.f32 %v1961, %v53
  %v1991 = vmul.f32 %v1965, %v54
  %v1992 = vmul.f32 %v1969, %v55
  %v1993 = vmul.f32 %v1973, %v56
  %v1994 = vmul.f32 %v1977, %v57
  %v1995 = vadd.f32 %v1899, %v1979
  %v1996 = vadd.f32 %v1900, %v1980
  %v1997 = vadd.f32 %v1901, %v1981
  %v1998 = vadd.f32 %v1902, %v1982
  %v1999 = vadd.f32 %v1903, %v1983
  %v2000 = vadd.f32 %v1904, %v1984
  %v2001 = vadd.f32 %v1905, %v1985
  %v2002 = vadd.f32 %v1906, %v1986
  %v2003 = vadd.f32 %v1907, %v1987
  %v2004 = vadd.f32 %v1908, %v1988
  %v2005 = vadd.f32 %v1909, %v1989
  %v2006 = vadd.f32 %v1910, %v1990
  %v2007 = vadd.f32 %v1911, %v1991
  %v2008 = vadd.f32 %v1912, %v1992
  %v2009 = vadd.f32 %v1913, %v1993
  %v2010 = vadd.f32 %v1914, %v1994
  %2011 = vset.pattern.permute.xlu0 2
  %2012 = vperm.xlu0 %2011, %v1612
  %v2013 = vpop.permute.xlu0 %2012
  %2015 = vset.pattern.permute.xlu0 2
  %2016 = vperm.xlu0 %2015, %v1614
  %v2017 = vpop.permute.xlu0 %2016
  %2019 = vset.pattern.permute.xlu0 2
  %2020 = vperm.xlu0 %2019, %v1616
  %v2021 = vpop.permute.xlu0 %2020
  %2023 = vset.pattern.permute.xlu0 2
  %2024 = vperm.xlu0 %2023, %v1618
  %v2025 = vpop.permute.xlu0 %2024
  %2027 = vset.pattern.permute.xlu0 2
  %2028 = vperm.xlu0 %2027, %v1620
  %v2029 = vpop.permute.xlu0 %2028
  %2031 = vset.pattern.permute.xlu0 2
  %2032 = vperm.xlu0 %2031, %v1622
  %v2033 = vpop.permute.xlu0 %2032
  %2035 = vset.pattern.permute.xlu0 2
  %2036 = vperm.xlu0 %2035, %v1624
  %v2037 = vpop.permute.xlu0 %2036
  %2039 = vset.pattern.permute.xlu0 2
  %2040 = vperm.xlu0 %2039, %v1626
  %v2041 = vpop.permute.xlu0 %2040
  %2043 = vset.pattern.permute.xlu0 2
  %2044 = vperm.xlu0 %2043, %v1628
  %v2045 = vpop.permute.xlu0 %2044
  %2047 = vset.pattern.permute.xlu0 2
  %2048 = vperm.xlu0 %2047, %v1630
  %v2049 = vpop.permute.xlu0 %2048
  %2051 = vset.pattern.permute.xlu0 2
  %2052 = vperm.xlu0 %2051, %v1632
  %v2053 = vpop.permute.xlu0 %2052
  %2055 = vset.pattern.permute.xlu0 2
  %2056 = vperm.xlu0 %2055, %v1634
  %v2057 = vpop.permute.xlu0 %2056
  %2059 = vset.pattern.permute.xlu0 2
  %2060 = vperm.xlu0 %2059, %v1636
  %v2061 = vpop.permute.xlu0 %2060
  %2063 = vset.pattern.permute.xlu0 2
  %2064 = vperm.xlu0 %2063, %v1638
  %v2065 = vpop.permute.xlu0 %2064
  %2067 = vset.pattern.permute.xlu0 2
  %2068 = vperm.xlu0 %2067, %v1640
  %v2069 = vpop.permute.xlu0 %2068
  %2071 = vset.pattern.permute.xlu0 2
  %2072 = vperm.xlu0 %2071, %v1642
  %v2073 = vpop.permute.xlu0 %2072
  %v2075 = vmul.f32 %v2013, %v58
  %v2076 = vmul.f32 %v2017, %v59
  %v2077 = vmul.f32 %v2021, %v60
  %v2078 = vmul.f32 %v2025, %v61
  %v2079 = vmul.f32 %v2029, %v62
  %v2080 = vmul.f32 %v2033, %v63
  %v2081 = vmul.f32 %v2037, %v64
  %v2082 = vmul.f32 %v2041, %v65
  %v2083 = vmul.f32 %v2045, %v66
  %v2084 = vmul.f32 %v2049, %v67
  %v2085 = vmul.f32 %v2053, %v68
  %v2086 = vmul.f32 %v2057, %v69
  %v2087 = vmul.f32 %v2061, %v70
  %v2088 = vmul.f32 %v2065, %v71
  %v2089 = vmul.f32 %v2069, %v72
  %v2090 = vmul.f32 %v2073, %v73
  %v2091 = vadd.f32 %v1995, %v2075
  %v2092 = vadd.f32 %v1996, %v2076
  %v2093 = vadd.f32 %v1997, %v2077
  %v2094 = vadd.f32 %v1998, %v2078
  %v2095 = vadd.f32 %v1999, %v2079
  %v2096 = vadd.f32 %v2000, %v2080
  %v2097 = vadd.f32 %v2001, %v2081
  %v2098 = vadd.f32 %v2002, %v2082
  %v2099 = vadd.f32 %v2003, %v2083
  %v2100 = vadd.f32 %v2004, %v2084
  %v2101 = vadd.f32 %v2005, %v2085
  %v2102 = vadd.f32 %v2006, %v2086
  %v2103 = vadd.f32 %v2007, %v2087
  %v2104 = vadd.f32 %v2008, %v2088
  %v2105 = vadd.f32 %v2009, %v2089
  %v2106 = vadd.f32 %v2010, %v2090
  %2108 = vset.pattern.permute.xlu0 0
  %2109 = vperm.xlu0 %2108, %v1803
  %v2110 = vpop.permute.xlu0 %2109
  %2113 = vset.pattern.permute.xlu0 0
  %2114 = vperm.xlu0 %2113, %v1804
  %v2115 = vpop.permute.xlu0 %2114
  %2118 = vset.pattern.permute.xlu0 0
  %2119 = vperm.xlu0 %2118, %v1805
  %v2120 = vpop.permute.xlu0 %2119
  %2123 = vset.pattern.permute.xlu0 0
  %2124 = vperm.xlu0 %2123, %v1806
  %v2125 = vpop.permute.xlu0 %2124
  %2128 = vset.pattern.permute.xlu0 0
  %2129 = vperm.xlu0 %2128, %v1807
  %v2130 = vpop.permute.xlu0 %2129
  %2133 = vset.pattern.permute.xlu0 0
  %2134 = vperm.xlu0 %2133, %v1808
  %v2135 = vpop.permute.xlu0 %2134
  %2138 = vset.pattern.permute.xlu0 0
  %2139 = vperm.xlu0 %2138, %v1809
  %v2140 = vpop.permute.xlu0 %2139
  %2143 = vset.pattern.permute.xlu0 0
  %2144 = vperm.xlu0 %2143, %v1810
  %v2145 = vpop.permute.xlu0 %2144
  %2148 = vset.pattern.permute.xlu0 0
  %2149 = vperm.xlu0 %2148, %v1811
  %v2150 = vpop.permute.xlu0 %2149
  %2153 = vset.pattern.permute.xlu0 0
  %2154 = vperm.xlu0 %2153, %v1812
  %v2155 = vpop.permute.xlu0 %2154
  %2158 = vset.pattern.permute.xlu0 0
  %2159 = vperm.xlu0 %2158, %v1813
  %v2160 = vpop.permute.xlu0 %2159
  %2163 = vset.pattern.permute.xlu0 0
  %2164 = vperm.xlu0 %2163, %v1814
  %v2165 = vpop.permute.xlu0 %2164
  %2168 = vset.pattern.permute.xlu0 0
  %2169 = vperm.xlu0 %2168, %v1815
  %v2170 = vpop.permute.xlu0 %2169
  %2173 = vset.pattern.permute.xlu0 0
  %2174 = vperm.xlu0 %2173, %v1816
  %v2175 = vpop.permute.xlu0 %2174
  %2178 = vset.pattern.permute.xlu0 0
  %2179 = vperm.xlu0 %2178, %v1817
  %v2180 = vpop.permute.xlu0 %2179
  %2183 = vset.pattern.permute.xlu0 0
  %2184 = vperm.xlu0 %2183, %v1818
  %v2185 = vpop.permute.xlu0 %2184
  %v2187 = vmul.f32 %v2091, %v2110
  %v2188 = vmul.f32 %v2092, %v2115
  %v2189 = vmul.f32 %v2093, %v2120
  %v2190 = vmul.f32 %v2094, %v2125
  %v2191 = vmul.f32 %v2095, %v2130
  %v2192 = vmul.f32 %v2096, %v2135
  %v2193 = vmul.f32 %v2097, %v2140
  %v2194 = vmul.f32 %v2098, %v2145
  %v2195 = vmul.f32 %v2099, %v2150
  %v2196 = vmul.f32 %v2100, %v2155
  %v2197 = vmul.f32 %v2101, %v2160
  %v2198 = vmul.f32 %v2102, %v2165
  %v2199 = vmul.f32 %v2103, %v2170
  %v2200 = vmul.f32 %v2104, %v2175
  %v2201 = vmul.f32 %v2105, %v2180
  %v2202 = vmul.f32 %v2106, %v2185
  %2203 = vst [vmem:[%s7] sm:$0xff] %v2187
  %2204 = vst [vmem:[%s7 + $0x8] sm:$0xff] %v2188
  %2205 = vst [vmem:[%s7 + $0x10] sm:$0xff] %v2189
  %2206 = vst [vmem:[%s7 + $0x18] sm:$0xff] %v2190
  %2207 = vst [vmem:[%s7 + $0x20] sm:$0xff] %v2191
  %2208 = vst [vmem:[%s7 + $0x28] sm:$0xff] %v2192
  %2209 = vst [vmem:[%s7 + $0x30] sm:$0xff] %v2193
  %2210 = vst [vmem:[%s7 + $0x38] sm:$0xff] %v2194
  %2211 = vst [vmem:[%s7 + $0x40] sm:$0xff] %v2195
  %2212 = vst [vmem:[%s7 + $0x48] sm:$0xff] %v2196
  %2213 = vst [vmem:[%s7 + $0x50] sm:$0xff] %v2197
  %2214 = vst [vmem:[%s7 + $0x58] sm:$0xff] %v2198
  %2215 = vst [vmem:[%s7 + $0x60] sm:$0xff] %v2199
  %2216 = vst [vmem:[%s7 + $0x68] sm:$0xff] %v2200
  %2217 = vst [vmem:[%s7 + $0x70] sm:$0xff] %v2201
  %2218 = vst [vmem:[%s7 + $0x78] sm:$0xff] %v2202
  // Predicated region
  $region30: #{asff_forward.8} parent=0 // pred_check
    _
  $region31: #{asff_forward.8} parent=0 // pred_check_branch
    %2220 = sbr.rel (0) target = $region33
  $region32: #{asff_forward.8} parent=0 // pred_region
    _
  $region33: #{asff_forward.8} parent=0 // pred_fallthru
    _
  // Predicated region
  $region34: #{asff_forward.8} parent=0 // pred_check
    _
  $region35: #{asff_forward.8} parent=0 // pred_check_branch
    %2222 = sbr.rel (0) target = $region37
  $region36: #{asff_forward.8} parent=0 // pred_region
    _
  $region37: #{asff_forward.8} parent=0 // pred_fallthru
    _

// kernel: asff_forward.9
$region0: #{asff_forward.9}
  #allocation0 [shape = 'u32[]', space=smem, size = 0x4, offset = 0x4, fixed_abs, tag = 'smem constant byte address 0x4 - core index']
  #allocation1 [shape = 'u32[144,128]{1,0:T(1,128)}', space=vmem, size = 0x12000, scoped, tag = 'internal scratch']
  %s0 = inlined_call_operand.vmem [shape: f32[2,110,128], index: 0, kind: input, shape index: {}]
  %s1 = inlined_call_operand.vmem [shape: f32[1152,256], index: 1, kind: input, shape index: {}]
  %s2 = inlined_call_operand.vmem [shape: f32[1,256], index: 2, kind: input, shape index: {}]
  %s3 = inlined_call_operand.vmem [shape: f32[2,80,256], index: 3, kind: output, shape index: {}]
  %s4 = sld [smem:[#allocation0]]
  $region45: #{asff_forward.9} parent=0
    _
  %s6 = ssub.s32 1, %s4
  %s7 = scalar_select 0, %s6, %s4
  loop: start=0, step=1, limit=4
  $region2: #{asff_forward.9} parent=0 // loop_pre_header
    _
  $region3: #{asff_forward.9} parent=0 // loop_header
    %s9 = sphi 0, %s13
    %p10 = scmp.ge.s32.totalorder %s9, 4
    %s19 = sphi 0, %s21
    %s22 = sphi 0, %s19
    %s23 = sphi 0, %s22
    %s39 = sphi 0, %s23
    %s43 = sphi 0, %s43
    %s45 = sphi 0, %s43
    %s46 = sphi 0, %s45
    %s60 = sphi 0, %s46
    %s64 = sphi 0, %s64
    %s66 = sphi 0, %s64
    %s67 = sphi 0, %s66
    %s81 = sphi 0, %s67
    %s87 = sphi 0, %s89
    %s90 = sphi 0, %s87
    %s91 = sphi 0, %s90
    %s107 = sphi 0, %s91
  $region4: #{asff_forward.9} parent=0 // loop_header_branch
    %12 = sbr.rel (%p10) target = $region8
  $region5: #{asff_forward.9} parent=0 // loop_body
    %s14 = ssub.s32 %s9, 1
    %s15 = ssub.s32 %s9, 2
    %s16 = sadd.s32 %s9, 1
    %s17 = ssub.s32 %s9, %s16
    %p18 = scmp.eq.s32.totalorder %s17, 0
    %s20 = sadd.s32 %s19, 1
    %s21 = scalar_select %p18, %s19, %s20
    %p24 = pneg %p18
    %p25 = scmp.eq.s32.totalorder %s9, 1
    %p26 = por %p24, %p25
    %p27 = scmp.ne.s32.totalorder %s19, %s22
    %p28 = scmp.eq.s32.totalorder %s9, 0
    %p29 = por %p27, %p28
    %p30 = scmp.ne.s32.totalorder %s19, %s22
    %p31 = scmp.eq.s32.totalorder %s14, 1
    %p32 = por %p30, %p31
    %p33 = scmp.ne.s32.totalorder %s22, %s23
    %p34 = scmp.eq.s32.totalorder %s14, 0
    %p35 = por %p33, %p34
    %p36 = scmp.ne.s32.totalorder %s22, %s23
    %p37 = scmp.eq.s32.totalorder %s15, 1
    %p38 = por %p36, %p37
    %p40 = scmp.ne.s32.totalorder %s23, %s39
    %p41 = scmp.eq.s32.totalorder %s15, 0
    %p42 = por %p40, %p41
    %s44 = sadd.s32 %s43, 1
    %p47 = scmp.eq.s32.totalorder %s9, 1
    %p48 = scmp.ne.s32.totalorder %s43, %s45
    %p49 = scmp.eq.s32.totalorder %s9, 0
    %p50 = por %p48, %p49
    %p51 = scmp.ne.s32.totalorder %s43, %s45
    %p52 = scmp.eq.s32.totalorder %s14, 1
    %p53 = por %p51, %p52
    %p54 = scmp.ne.s32.totalorder %s45, %s46
    %p55 = scmp.eq.s32.totalorder %s14, 0
    %p56 = por %p54, %p55
    %p57 = scmp.ne.s32.totalorder %s45, %s46
    %p58 = scmp.eq.s32.totalorder %s15, 1
    %p59 = por %p57, %p58
    %p61 = scmp.ne.s32.totalorder %s46, %s60
    %p62 = scmp.eq.s32.totalorder %s15, 0
    %p63 = por %p61, %p62
    %s65 = sadd.s32 %s64, 1
    %p68 = scmp.eq.s32.totalorder %s9, 1
    %p69 = scmp.ne.s32.totalorder %s64, %s66
    %p70 = scmp.eq.s32.totalorder %s9, 0
    %p71 = por %p69, %p70
    %p72 = scmp.ne.s32.totalorder %s64, %s66
    %p73 = scmp.eq.s32.totalorder %s14, 1
    %p74 = por %p72, %p73
    %p75 = scmp.ne.s32.totalorder %s66, %s67
    %p76 = scmp.eq.s32.totalorder %s14, 0
    %p77 = por %p75, %p76
    %p78 = scmp.ne.s32.totalorder %s66, %s67
    %p79 = scmp.eq.s32.totalorder %s15, 1
    %p80 = por %p78, %p79
    %p82 = scmp.ne.s32.totalorder %s67, %s81
    %p83 = scmp.eq.s32.totalorder %s15, 0
    %p84 = por %p82, %p83
    %s85 = ssub.s32 %s9, %s16
    %p86 = scmp.eq.s32.totalorder %s85, 0
    %s88 = sadd.s32 %s87, 1
    %s89 = scalar_select %p86, %s87, %s88
    %p92 = pneg %p86
    %p93 = scmp.eq.s32.totalorder %s9, 1
    %p94 = por %p92, %p93
    %p95 = scmp.ne.s32.totalorder %s87, %s90
    %p96 = scmp.eq.s32.totalorder %s9, 0
    %p97 = por %p95, %p96
    %p98 = scmp.ne.s32.totalorder %s87, %s90
    %p99 = scmp.eq.s32.totalorder %s14, 1
    %p100 = por %p98, %p99
    %p101 = scmp.ne.s32.totalorder %s90, %s91
    %p102 = scmp.eq.s32.totalorder %s14, 0
    %p103 = por %p101, %p102
    %p104 = scmp.ne.s32.totalorder %s90, %s91
    %p105 = scmp.eq.s32.totalorder %s15, 1
    %p106 = por %p104, %p105
    %p108 = scmp.ne.s32.totalorder %s91, %s107
    %p109 = scmp.eq.s32.totalorder %s15, 0
    %p110 = por %p108, %p109
    %p111 = scmp.le.s32.totalorder 1, %s9
    %p112 = scmp.lt.s32.totalorder %s9, 3
    %p113 = pnand %p111, %p112
    %p114 = pneg %p113
    // Predicated region
    $region9: #{asff_forward.9} parent=5 // pred_check
      _
    $region10: #{asff_forward.9} parent=5 // pred_check_branch
      %116 = sbr.rel (%p113) target = $region12
    $region11: #{asff_forward.9} parent=5 // pred_region
      %s117 = ssub.s32 %s9, 1
      // Predicated region
      $region13: #{asff_forward.9} parent=11 // pred_check
        %p118 = pneg %p56
      $region14: #{asff_forward.9} parent=11 // pred_check_branch
        %120 = sbr.rel (%p118) target = $region16
      $region15: #{asff_forward.9} parent=11 // pred_region
        _
      $region16: #{asff_forward.9} parent=11 // pred_fallthru
        _
      // Predicated region
      $region17: #{asff_forward.9} parent=11 // pred_check
        %p121 = pneg %p77
      $region18: #{asff_forward.9} parent=11 // pred_check_branch
        %123 = sbr.rel (%p121) target = $region20
      $region19: #{asff_forward.9} parent=11 // pred_region
        _
      $region20: #{asff_forward.9} parent=11 // pred_fallthru
        _
    $region12: #{asff_forward.9} parent=5 // pred_fallthru
      _
    %p124 = scmp.lt.s32.totalorder %s9, 2
    // Predicated region
    $region21: #{asff_forward.9} parent=5 // pred_check
      %p125 = pneg %p124
    $region22: #{asff_forward.9} parent=5 // pred_check_branch
      %127 = sbr.rel (%p125) target = $region24
    $region23: #{asff_forward.9} parent=5 // pred_region
      // Predicated region
      $region25: #{asff_forward.9} parent=23 // pred_check
        %p128 = pneg %p29
      $region26: #{asff_forward.9} parent=23 // pred_check_branch
        %130 = sbr.rel (%p128) target = $region28
      $region27: #{asff_forward.9} parent=23 // pred_region
        %p131 = scmp.lt.s32.totalorder %s9, 1
        %s132 = scalar_select %p131, %s9, 1
        %s133 = smul.addr %s132, 14
        %s134 = smul.addr %s133, 8
        %s135 = scalar_lea.vmem %s0, %s134
      $region28: #{asff_forward.9} parent=23 // pred_fallthru
        _
    $region24: #{asff_forward.9} parent=5 // pred_fallthru
      _
    %p136 = scmp.le.s32.totalorder 1, %s9
    %p137 = scmp.lt.s32.totalorder %s9, 3
    %p138 = pnand %p136, %p137
    %p139 = pneg %p138
    // Predicated region
    $region29: #{asff_forward.9} parent=5 // pred_check
      _
    $region30: #{asff_forward.9} parent=5 // pred_check_branch
      %141 = sbr.rel (%p138) target = $region32
    $region31: #{asff_forward.9} parent=5 // pred_region
      %s142 = ssub.s32 %s9, 1
      %p143 = scmp.lt.s32.totalorder %s14, 1
      %s144 = scalar_select %p143, %s14, 1
      %s145 = smul.addr %s144, 14
      %s146 = smul.addr %s145, 8
      %s147 = scalar_lea.vmem %s0, %s146
      %p148 = pneg %p35
      %p149 = pneg %p32
      %p150 = pneg %p56
      %p151 = pneg %p53
      %p152 = pneg %p77
      %p153 = pneg %p74
      %p154 = pneg %p103
      %p155 = pneg %p100
      %p156 = scmp.lt.s32.totalorder %s14, 1
      %s157 = scalar_select %p156, %s14, 1
      %s158 = smul.addr %s157, 20
      %s159 = smul.addr %s158, 8
      %s160 = scalar_lea.vmem %s3, %s159
      %p161 = scmp.lt.s32.totalorder %s14, 1
      %s162 = scalar_select %p161, %s14, 1
      %s163 = smul.addr %s162, 14
      %s164 = smul.addr %s163, 8
      %s165 = scalar_lea.vmem %s0, %s164
      %p166 = scmp.lt.s32.totalorder %s14, 1
      %s167 = scalar_select %p166, %s14, 1
      %s168 = smul.addr %s167, 20
      %s169 = smul.addr %s168, 8
      %s170 = scalar_lea.vmem %s3, %s169
      %v171 = vld [vmem:[%s165] sm:$0xff]
      %v172 = vld [vmem:[%s165 + $0x8] sm:$0xff]
      %v173 = vld [vmem:[%s165 + $0x10] sm:$0xff]
      %v174 = vld [vmem:[%s165 + $0x18] sm:$0xff]
      %v175 = vld [vmem:[%s165 + $0x20] sm:$0xff]
      %v176 = vld [vmem:[%s165 + $0x28] sm:$0xff]
      %v177 = vld [vmem:[%s165 + $0x30] sm:$0xff]
      %v178 = vld [vmem:[%s165 + $0x38] sm:$0xff]
      %v179 = vld [vmem:[%s165 + $0x40] sm:$0xff]
      %v180 = vld [vmem:[%s165 + $0x48] sm:$0xff]
      %v181 = vld [vmem:[%s1] sm:$0xff]
      %v182 = vld [vmem:[%s1 + $0x8] sm:$0xff]
      %v183 = vld [vmem:[%s1 + $0x10] sm:$0xff]
      %v184 = vld [vmem:[%s1 + $0x18] sm:$0xff]
      %v185 = vld [vmem:[%s1 + $0x20] sm:$0xff]
      %v186 = vld [vmem:[%s1 + $0x28] sm:$0xff]
      %v187 = vld [vmem:[%s1 + $0x30] sm:$0xff]
      %v188 = vld [vmem:[%s1 + $0x38] sm:$0xff]
      %v189 = vld [vmem:[%s1 + $0x40] sm:$0xff]
      %v190 = vld [vmem:[%s1 + $0x48] sm:$0xff]
      %v191 = vld [vmem:[%s1 + $0x50] sm:$0xff]
      %v192 = vld [vmem:[%s1 + $0x58] sm:$0xff]
      %v193 = vld [vmem:[%s1 + $0x60] sm:$0xff]
      %v194 = vld [vmem:[%s1 + $0x68] sm:$0xff]
      %v195 = vld [vmem:[%s1 + $0x70] sm:$0xff]
      %v196 = vld [vmem:[%s1 + $0x78] sm:$0xff]
      %v197 = vld [vmem:[%s1 + $0x80] sm:$0xff]
      %v198 = vld [vmem:[%s1 + $0x88] sm:$0xff]
      %v199 = vld [vmem:[%s1 + $0x90] sm:$0xff]
      %v200 = vld [vmem:[%s1 + $0x98] sm:$0xff]
      %v201 = vld [vmem:[%s1 + $0xa0] sm:$0xff]
      %v202 = vld [vmem:[%s1 + $0xa8] sm:$0xff]
      %v203 = vld [vmem:[%s1 + $0xb0] sm:$0xff]
      %v204 = vld [vmem:[%s1 + $0xb8] sm:$0xff]
      %v205 = vld [vmem:[%s1 + $0xc0] sm:$0xff]
      %v206 = vld [vmem:[%s1 + $0xc8] sm:$0xff]
      %v207 = vld [vmem:[%s1 + $0xd0] sm:$0xff]
      %v208 = vld [vmem:[%s1 + $0xd8] sm:$0xff]
      %v209 = vld [vmem:[%s1 + $0xe0] sm:$0xff]
      %v210 = vld [vmem:[%s1 + $0xe8] sm:$0xff]
      %v211 = vld [vmem:[%s1 + $0xf0] sm:$0xff]
      %v212 = vld [vmem:[%s1 + $0xf8] sm:$0xff]
      %v213 = vld [vmem:[%s165 + $0x1] sm:$0xff]
      %v214 = vld [vmem:[%s165 + $0x9] sm:$0xff]
      %v215 = vld [vmem:[%s165 + $0x11] sm:$0xff]
      %v216 = vld [vmem:[%s165 + $0x19] sm:$0xff]
      %v217 = vld [vmem:[%s165 + $0x21] sm:$0xff]
      %v218 = vld [vmem:[%s165 + $0x29] sm:$0xff]
      %v219 = vld [vmem:[%s165 + $0x31] sm:$0xff]
      %v220 = vld [vmem:[%s165 + $0x39] sm:$0xff]
      %v221 = vld [vmem:[%s165 + $0x41] sm:$0xff]
      %v222 = vld [vmem:[%s165 + $0x49] sm:$0xff]
      %v223 = vld [vmem:[%s1 + $0x100] sm:$0xff]
      %v224 = vld [vmem:[%s1 + $0x108] sm:$0xff]
      %v225 = vld [vmem:[%s1 + $0x110] sm:$0xff]
      %v226 = vld [vmem:[%s1 + $0x118] sm:$0xff]
      %v227 = vld [vmem:[%s1 + $0x120] sm:$0xff]
      %v228 = vld [vmem:[%s1 + $0x128] sm:$0xff]
      %v229 = vld [vmem:[%s1 + $0x130] sm:$0xff]
      %v230 = vld [vmem:[%s1 + $0x138] sm:$0xff]
      %v231 = vld [vmem:[%s1 + $0x140] sm:$0xff]
      %v232 = vld [vmem:[%s1 + $0x148] sm:$0xff]
      %v233 = vld [vmem:[%s1 + $0x150] sm:$0xff]
      %v234 = vld [vmem:[%s1 + $0x158] sm:$0xff]
      %v235 = vld [vmem:[%s1 + $0x160] sm:$0xff]
      %v236 = vld [vmem:[%s1 + $0x168] sm:$0xff]
      %v237 = vld [vmem:[%s1 + $0x170] sm:$0xff]
      %v238 = vld [vmem:[%s1 + $0x178] sm:$0xff]
      %v239 = vld [vmem:[%s1 + $0x180] sm:$0xff]
      %v240 = vld [vmem:[%s1 + $0x188] sm:$0xff]
      %v241 = vld [vmem:[%s1 + $0x190] sm:$0xff]
      %v242 = vld [vmem:[%s1 + $0x198] sm:$0xff]
      %v243 = vld [vmem:[%s1 + $0x1a0] sm:$0xff]
      %v244 = vld [vmem:[%s1 + $0x1a8] sm:$0xff]
      %v245 = vld [vmem:[%s1 + $0x1b0] sm:$0xff]
      %v246 = vld [vmem:[%s1 + $0x1b8] sm:$0xff]
      %v247 = vld [vmem:[%s1 + $0x1c0] sm:$0xff]
      %v248 = vld [vmem:[%s1 + $0x1c8] sm:$0xff]
      %v249 = vld [vmem:[%s1 + $0x1d0] sm:$0xff]
      %v250 = vld [vmem:[%s1 + $0x1d8] sm:$0xff]
      %v251 = vld [vmem:[%s1 + $0x1e0] sm:$0xff]
      %v252 = vld [vmem:[%s1 + $0x1e8] sm:$0xff]
      %v253 = vld [vmem:[%s1 + $0x1f0] sm:$0xff]
      %v254 = vld [vmem:[%s1 + $0x1f8] sm:$0xff]
      %255 = vmatprep.subr.mxu0 %v224
      %256 = vmatpush1.msra.mxu0 %v223
      %257 = vmatprep.subr.mxu0 %v226
      %258 = vmatpush1.msra.mxu0 %v225
      %259 = vmatprep.subr.mxu0 %v228
      %260 = vmatpush1.msra.mxu0 %v227
      %261 = vmatprep.subr.mxu0 %v230
      %262 = vmatpush1.msra.mxu0 %v229
      %263 = vmatprep.subr.mxu0 %v232
      %264 = vmatpush1.msra.mxu0 %v231
      %265 = vmatprep.subr.mxu0 %v234
      %266 = vmatpush1.msra.mxu0 %v233
      %267 = vmatprep.subr.mxu0 %v236
      %268 = vmatpush1.msra.mxu0 %v235
      %269 = vmatprep.subr.mxu0 %v238
      %270 = vmatpush1.msra.mxu0 %v237
      %271 = vmatprep.subr.mxu0 %v240
      %272 = vmatpush1.msra.mxu0 %v239
      %273 = vmatprep.subr.mxu0 %v242
      %274 = vmatpush1.msra.mxu0 %v241
      %275 = vmatprep.subr.mxu0 %v244
      %276 = vmatpush1.msra.mxu0 %v243
      %277 = vmatprep.subr.mxu0 %v246
      %278 = vmatpush1.msra.mxu0 %v245
      %279 = vmatprep.subr.mxu0 %v248
      %280 = vmatpush1.msra.mxu0 %v247
      %281 = vmatprep.subr.mxu0 %v250
      %282 = vmatpush1.msra.mxu0 %v249
      %283 = vmatprep.subr.mxu0 %v252
      %284 = vmatpush1.msra.mxu0 %v251
      %285 = vmatprep.subr.mxu0 %v254
      %286 = vmatpush1.msra.mxu0 %v253
      %287 = vmatprep.subr.mxu0 0.0
      %288 = vmatpush1.msra.mxu0 0.0
      %289 = vmatprep.subr.mxu0 0.0
      %290 = vmatpush1.msra.mxu0 0.0
      %291 = vmatprep.subr.mxu0 0.0
      %292 = vmatpush1.msra.mxu0 0.0
      %293 = vmatprep.subr.mxu0 0.0
      %294 = vmatpush1.msra.mxu0 0.0
      %295 = vmatprep.subr.mxu0 0.0
      %296 = vmatpush1.msra.mxu0 0.0
      %297 = vmatprep.subr.mxu0 0.0
      %298 = vmatpush1.msra.mxu0 0.0
      %299 = vmatprep.subr.mxu0 0.0
      %300 = vmatpush1.msra.mxu0 0.0
      %301 = vmatprep.subr.mxu0 0.0
      %302 = vmatpush1.msra.mxu0 0.0
      %303 = vmatprep.subr.mxu0 0.0
      %304 = vmatpush1.msra.mxu0 0.0
      %305 = vmatprep.subr.mxu0 0.0
      %306 = vmatpush1.msra.mxu0 0.0
      %307 = vmatprep.subr.mxu0 0.0
      %308 = vmatpush1.msra.mxu0 0.0
      %309 = vmatprep.subr.mxu0 0.0
      %310 = vmatpush1.msra.mxu0 0.0
      %311 = vmatprep.subr.mxu0 0.0
      %312 = vmatpush1.msra.mxu0 0.0
      %313 = vmatprep.subr.mxu0 0.0
      %314 = vmatpush1.msra.mxu0 0.0
      %315 = vmatprep.subr.mxu0 0.0
      %316 = vmatpush1.msra.mxu0 0.0
      %317 = vmatprep.subr.mxu0 0.0
      %318 = vmatpush1.msra.mxu0 0.0
      %319 = vmatprep.mubr.f32.mxu0 0.0
      %320 = vmatmul.mubr.f32.gmra.mrb[0].mxu0 %v213
      %v321 = vpop.f32.mrb[0].mxu0
      %v322 = vadd.f32 0.0, %v321
      %v323 = vpop.f32.mrb[0].mxu0
      %v324 = vadd.f32 0.0, %v323
      %325 = vmatprep.mubr.f32.mxu0 0.0
      %326 = vmatmul.mubr.f32.gmra.mrb[0].mxu0 %v214
      %v327 = vpop.f32.mrb[0].mxu0
      %v328 = vadd.f32 0.0, %v327
      %v329 = vpop.f32.mrb[0].mxu0
      %v330 = vadd.f32 0.0, %v329
      %331 = vmatprep.mubr.f32.mxu0 0.0
      %332 = vmatmul.mubr.f32.gmra.mrb[0].mxu0 %v215
      %v333 = vpop.f32.mrb[0].mxu0
      %v334 = vadd.f32 0.0, %v333
      %v335 = vpop.f32.mrb[0].mxu0
      %v336 = vadd.f32 0.0, %v335
      %337 = vmatprep.mubr.f32.mxu0 0.0
      %338 = vmatmul.mubr.f32.gmra.mrb[0].mxu0 %v216
      %v339 = vpop.f32.mrb[0].mxu0
      %v340 = vadd.f32 0.0, %v339
      %v341 = vpop.f32.mrb[0].mxu0
      %v342 = vadd.f32 0.0, %v341
      %343 = vmatprep.mubr.f32.mxu0 0.0
      %344 = vmatmul.mubr.f32.gmra.mrb[0].mxu0 %v217
      %v345 = vpop.f32.mrb[0].mxu0
      %v346 = vadd.f32 0.0, %v345
      %v347 = vpop.f32.mrb[0].mxu0
      %v348 = vadd.f32 0.0, %v347
      %349 = vmatprep.mubr.f32.mxu0 0.0
      %350 = vmatmul.mubr.f32.gmra.mrb[0].mxu0 %v218
      %v351 = vpop.f32.mrb[0].mxu0
      %v352 = vadd.f32 0.0, %v351
      %v353 = vpop.f32.mrb[0].mxu0
      %v354 = vadd.f32 0.0, %v353
      %355 = vmatprep.mubr.f32.mxu0 0.0
      %356 = vmatmul.mubr.f32.gmra.mrb[0].mxu0 %v219
      %v357 = vpop.f32.mrb[0].mxu0
      %v358 = vadd.f32 0.0, %v357
      %v359 = vpop.f32.mrb[0].mxu0
      %v360 = vadd.f32 0.0, %v359
      %361 = vmatprep.mubr.f32.mxu0 0.0
      %362 = vmatmul.mubr.f32.gmra.mrb[0].mxu0 %v220
      %v363 = vpop.f32.mrb[0].mxu0
      %v364 = vadd.f32 0.0, %v363
      %v365 = vpop.f32.mrb[0].mxu0
      %v366 = vadd.f32 0.0, %v365
      %367 = vmatprep.mubr.f32.mxu0 0.0
      %368 = vmatmul.mubr.f32.gmra.mrb[0].mxu0 %v221
      %v369 = vpop.f32.mrb[0].mxu0
      %v370 = vadd.f32 0.0, %v369
      %v371 = vpop.f32.mrb[0].mxu0
      %v372 = vadd.f32 0.0, %v371
      %373 = vmatprep.mubr.f32.mxu0 0.0
      %374 = vmatmul.mubr.f32.gmra.mrb[0].mxu0 %v222
      %v375 = vpop.f32.mrb[0].mxu0
      %v376 = vadd.f32 0.0, %v375
      %v377 = vpop.f32.mrb[0].mxu0
      %v378 = vadd.f32 0.0, %v377
      %379 = vdwg.mxu0
      %380 = vmatprep.subr.mxu0 %v182
      %381 = vmatpush1.msra.mxu0 %v181
      %382 = vmatprep.subr.mxu0 %v184
      %383 = vmatpush1.msra.mxu0 %v183
      %384 = vmatprep.subr.mxu0 %v186
      %385 = vmatpush1.msra.mxu0 %v185
      %386 = vmatprep.subr.mxu0 %v188
      %387 = vmatpush1.msra.mxu0 %v187
      %388 = vmatprep.subr.mxu0 %v190
      %389 = vmatpush1.msra.mxu0 %v189
      %390 = vmatprep.subr.mxu0 %v192
      %391 = vmatpush1.msra.mxu0 %v191
      %392 = vmatprep.subr.mxu0 %v194
      %393 = vmatpush1.msra.mxu0 %v193
      %394 = vmatprep.subr.mxu0 %v196
      %395 = vmatpush1.msra.mxu0 %v195
      %396 = vmatprep.subr.mxu0 %v198
      %397 = vmatpush1.msra.mxu0 %v197
      %398 = vmatprep.subr.mxu0 %v200
      %399 = vmatpush1.msra.mxu0 %v199
      %400 = vmatprep.subr.mxu0 %v202
      %401 = vmatpush1.msra.mxu0 %v201
      %402 = vmatprep.subr.mxu0 %v204
      %403 = vmatpush1.msra.mxu0 %v203
      %404 = vmatprep.subr.mxu0 %v206
      %405 = vmatpush1.msra.mxu0 %v205
      %406 = vmatprep.subr.mxu0 %v208
      %407 = vmatpush1.msra.mxu0 %v207
      %408 = vmatprep.subr.mxu0 %v210
      %409 = vmatpush1.msra.mxu0 %v209
      %410 = vmatprep.subr.mxu0 %v212
      %411 = vmatpush1.msra.mxu0 %v211
      %412 = vmatprep.subr.mxu0 0.0
      %413 = vmatpush1.msra.mxu0 0.0
      %414 = vmatprep.subr.mxu0 0.0
      %415 = vmatpush1.msra.mxu0 0.0
      %416 = vmatprep.subr.mxu0 0.0
      %417 = vmatpush1.msra.mxu0 0.0
      %418 = vmatprep.subr.mxu0 0.0
      %419 = vmatpush1.msra.mxu0 0.0
      %420 = vmatprep.subr.mxu0 0.0
      %421 = vmatpush1.msra.mxu0 0.0
      %422 = vmatprep.subr.mxu0 0.0
      %423 = vmatpush1.msra.mxu0 0.0
      %424 = vmatprep.subr.mxu0 0.0
      %425 = vmatpush1.msra.mxu0 0.0
      %426 = vmatprep.subr.mxu0 0.0
      %427 = vmatpush1.msra.mxu0 0.0
      %428 = vmatprep.subr.mxu0 0.0
      %429 = vmatpush1.msra.mxu0 0.0
      %430 = vmatprep.subr.mxu0 0.0
      %431 = vmatpush1.msra.mxu0 0.0
      %432 = vmatprep.subr.mxu0 0.0
      %433 = vmatpush1.msra.mxu0 0.0
      %434 = vmatprep.subr.mxu0 0.0
      %435 = vmatpush1.msra.mxu0 0.0
      %436 = vmatprep.subr.mxu0 0.0
      %437 = vmatpush1.msra.mxu0 0.0
      %438 = vmatprep.subr.mxu0 0.0
      %439 = vmatpush1.msra.mxu0 0.0
      %440 = vmatprep.subr.mxu0 0.0
      %441 = vmatpush1.msra.mxu0 0.0
      %442 = vmatprep.subr.mxu0 0.0
      %443 = vmatpush1.msra.mxu0 0.0
      %444 = vmatprep.mubr.f32.mxu0 0.0
      %445 = vmatmul.mubr.f32.gmra.mrb[0].mxu0 %v171
      %v446 = vpop.f32.mrb[0].mxu0
      %v447 = vadd.f32 %v322, %v446
      %v448 = vpop.f32.mrb[0].mxu0
      %v449 = vadd.f32 %v324, %v448
      %450 = vmatprep.mubr.f32.mxu0 0.0
      %451 = vmatmul.mubr.f32.gmra.mrb[0].mxu0 %v172
      %v452 = vpop.f32.mrb[0].mxu0
      %v453 = vadd.f32 %v328, %v452
      %v454 = vpop.f32.mrb[0].mxu0
      %v455 = vadd.f32 %v330, %v454
      %456 = vmatprep.mubr.f32.mxu0 0.0
      %457 = vmatmul.mubr.f32.gmra.mrb[0].mxu0 %v173
      %v458 = vpop.f32.mrb[0].mxu0
      %v459 = vadd.f32 %v334, %v458
      %v460 = vpop.f32.mrb[0].mxu0
      %v461 = vadd.f32 %v336, %v460
      %462 = vmatprep.mubr.f32.mxu0 0.0
      %463 = vmatmul.mubr.f32.gmra.mrb[0].mxu0 %v174
      %v464 = vpop.f32.mrb[0].mxu0
      %v465 = vadd.f32 %v340, %v464
      %v466 = vpop.f32.mrb[0].mxu0
      %v467 = vadd.f32 %v342, %v466
      %468 = vmatprep.mubr.f32.mxu0 0.0
      %469 = vmatmul.mubr.f32.gmra.mrb[0].mxu0 %v175
      %v470 = vpop.f32.mrb[0].mxu0
      %v471 = vadd.f32 %v346, %v470
      %v472 = vpop.f32.mrb[0].mxu0
      %v473 = vadd.f32 %v348, %v472
      %474 = vmatprep.mubr.f32.mxu0 0.0
      %475 = vmatmul.mubr.f32.gmra.mrb[0].mxu0 %v176
      %v476 = vpop.f32.mrb[0].mxu0
      %v477 = vadd.f32 %v352, %v476
      %v478 = vpop.f32.mrb[0].mxu0
      %v479 = vadd.f32 %v354, %v478
      %480 = vmatprep.mubr.f32.mxu0 0.0
      %481 = vmatmul.mubr.f32.gmra.mrb[0].mxu0 %v177
      %v482 = vpop.f32.mrb[0].mxu0
      %v483 = vadd.f32 %v358, %v482
      %v484 = vpop.f32.mrb[0].mxu0
      %v485 = vadd.f32 %v360, %v484
      %486 = vmatprep.mubr.f32.mxu0 0.0
      %487 = vmatmul.mubr.f32.gmra.mrb[0].mxu0 %v178
      %v488 = vpop.f32.mrb[0].mxu0
      %v489 = vadd.f32 %v364, %v488
      %v490 = vpop.f32.mrb[0].mxu0
      %v491 = vadd.f32 %v366, %v490
      %492 = vmatprep.mubr.f32.mxu0 0.0
      %493 = vmatmul.mubr.f32.gmra.mrb[0].mxu0 %v179
      %v494 = vpop.f32.mrb[0].mxu0
      %v495 = vadd.f32 %v370, %v494
      %v496 = vpop.f32.mrb[0].mxu0
      %v497 = vadd.f32 %v372, %v496
      %498 = vmatprep.mubr.f32.mxu0 0.0
      %499 = vmatmul.mubr.f32.gmra.mrb[0].mxu0 %v180
      %v500 = vpop.f32.mrb[0].mxu0
      %v501 = vadd.f32 %v376, %v500
      %v502 = vpop.f32.mrb[0].mxu0
      %v503 = vadd.f32 %v378, %v502
      %504 = vdwg.mxu0
      %v505 = vld [vmem:[%s165 + $0x2] sm:$0xff]
      %v506 = vld [vmem:[%s165 + $0xa] sm:$0xff]
      %v507 = vld [vmem:[%s165 + $0x12] sm:$0xff]
      %v508 = vld [vmem:[%s165 + $0x1a] sm:$0xff]
      %v509 = vld [vmem:[%s165 + $0x22] sm:$0xff]
      %v510 = vld [vmem:[%s165 + $0x2a] sm:$0xff]
      %v511 = vld [vmem:[%s165 + $0x32] sm:$0xff]
      %v512 = vld [vmem:[%s165 + $0x3a] sm:$0xff]
      %v513 = vld [vmem:[%s165 + $0x42] sm:$0xff]
      %v514 = vld [vmem:[%s165 + $0x4a] sm:$0xff]
      %v515 = vld [vmem:[%s1 + $0x200] sm:$0xff]
      %v516 = vld [vmem:[%s1 + $0x208] sm:$0xff]
      %v517 = vld [vmem:[%s1 + $0x210] sm:$0xff]
      %v518 = vld [vmem:[%s1 + $0x218] sm:$0xff]
      %v519 = vld [vmem:[%s1 + $0x220] sm:$0xff]
      %v520 = vld [vmem:[%s1 + $0x228] sm:$0xff]
      %v521 = vld [vmem:[%s1 + $0x230] sm:$0xff]
      %v522 = vld [vmem:[%s1 + $0x238] sm:$0xff]
      %v523 = vld [vmem:[%s1 + $0x240] sm:$0xff]
      %v524 = vld [vmem:[%s1 + $0x248] sm:$0xff]
      %v525 = vld [vmem:[%s1 + $0x250] sm:$0xff]
      %v526 = vld [vmem:[%s1 + $0x258] sm:$0xff]
      %v527 = vld [vmem:[%s1 + $0x260] sm:$0xff]
      %v528 = vld [vmem:[%s1 + $0x268] sm:$0xff]
      %v529 = vld [vmem:[%s1 + $0x270] sm:$0xff]
      %v530 = vld [vmem:[%s1 + $0x278] sm:$0xff]
      %v531 = vld [vmem:[%s1 + $0x280] sm:$0xff]
      %v532 = vld [vmem:[%s1 + $0x288] sm:$0xff]
      %v533 = vld [vmem:[%s1 + $0x290] sm:$0xff]
      %v534 = vld [vmem:[%s1 + $0x298] sm:$0xff]
      %v535 = vld [vmem:[%s1 + $0x2a0] sm:$0xff]
      %v536 = vld [vmem:[%s1 + $0x2a8] sm:$0xff]
      %v537 = vld [vmem:[%s1 + $0x2b0] sm:$0xff]
      %v538 = vld [vmem:[%s1 + $0x2b8] sm:$0xff]
      %v539 = vld [vmem:[%s1 + $0x2c0] sm:$0xff]
      %v540 = vld [vmem:[%s1 + $0x2c8] sm:$0xff]
      %v541 = vld [vmem:[%s1 + $0x2d0] sm:$0xff]
      %v542 = vld [vmem:[%s1 + $0x2d8] sm:$0xff]
      %v543 = vld [vmem:[%s1 + $0x2e0] sm:$0xff]
      %v544 = vld [vmem:[%s1 + $0x2e8] sm:$0xff]
      %v545 = vld [vmem:[%s1 + $0x2f0] sm:$0xff]
      %v546 = vld [vmem:[%s1 + $0x2f8] sm:$0xff]
      %547 = vmatprep.subr.mxu0 %v516
      %548 = vmatpush1.msra.mxu0 %v515
      %549 = vmatprep.subr.mxu0 %v518
      %550 = vmatpush1.msra.mxu0 %v517
      %551 = vmatprep.subr.mxu0 %v520
      %552 = vmatpush1.msra.mxu0 %v519
      %553 = vmatprep.subr.mxu0 %v522
      %554 = vmatpush1.msra.mxu0 %v521
      %555 = vmatprep.subr.mxu0 %v524
      %556 = vmatpush1.msra.mxu0 %v523
      %557 = vmatprep.subr.mxu0 %v526
      %558 = vmatpush1.msra.mxu0 %v525
      %559 = vmatprep.subr.mxu0 %v528
      %560 = vmatpush1.msra.mxu0 %v527
      %561 = vmatprep.subr.mxu0 %v530
      %562 = vmatpush1.msra.mxu0 %v529
      %563 = vmatprep.subr.mxu0 %v532
      %564 = vmatpush1.msra.mxu0 %v531
      %565 = vmatprep.subr.mxu0 %v534
      %566 = vmatpush1.msra.mxu0 %v533
      %567 = vmatprep.subr.mxu0 %v536
      %568 = vmatpush1.msra.mxu0 %v535
      %569 = vmatprep.subr.mxu0 %v538
      %570 = vmatpush1.msra.mxu0 %v537
      %571 = vmatprep.subr.mxu0 %v540
      %572 = vmatpush1.msra.mxu0 %v539
      %573 = vmatprep.subr.mxu0 %v542
      %574 = vmatpush1.msra.mxu0 %v541
      %575 = vmatprep.subr.mxu0 %v544
      %576 = vmatpush1.msra.mxu0 %v543
      %577 = vmatprep.subr.mxu0 %v546
      %578 = vmatpush1.msra.mxu0 %v545
      %579 = vmatprep.subr.mxu0 0.0
      %580 = vmatpush1.msra.mxu0 0.0
      %581 = vmatprep.subr.mxu0 0.0
      %582 = vmatpush1.msra.mxu0 0.0
      %583 = vmatprep.subr.mxu0 0.0
      %584 = vmatpush1.msra.mxu0 0.0
      %585 = vmatprep.subr.mxu0 0.0
      %586 = vmatpush1.msra.mxu0 0.0
      %587 = vmatprep.subr.mxu0 0.0
      %588 = vmatpush1.msra.mxu0 0.0
      %589 = vmatprep.subr.mxu0 0.0
      %590 = vmatpush1.msra.mxu0 0.0
      %591 = vmatprep.subr.mxu0 0.0
      %592 = vmatpush1.msra.mxu0 0.0
      %593 = vmatprep.subr.mxu0 0.0
      %594 = vmatpush1.msra.mxu0 0.0
      %595 = vmatprep.subr.mxu0 0.0
      %596 = vmatpush1.msra.mxu0 0.0
      %597 = vmatprep.subr.mxu0 0.0
      %598 = vmatpush1.msra.mxu0 0.0
      %599 = vmatprep.subr.mxu0 0.0
      %600 = vmatpush1.msra.mxu0 0.0
      %601 = vmatprep.subr.mxu0 0.0
      %602 = vmatpush1.msra.mxu0 0.0
      %603 = vmatprep.subr.mxu0 0.0
      %604 = vmatpush1.msra.mxu0 0.0
      %605 = vmatprep.subr.mxu0 0.0
      %606 = vmatpush1.msra.mxu0 0.0
      %607 = vmatprep.subr.mxu0 0.0
      %608 = vmatpush1.msra.mxu0 0.0
      %609 = vmatprep.subr.mxu0 0.0
      %610 = vmatpush1.msra.mxu0 0.0
      %611 = vmatprep.mubr.f32.mxu0 0.0
      %612 = vmatmul.mubr.f32.gmra.mrb[0].mxu0 %v505
      %v613 = vpop.f32.mrb[0].mxu0
      %v614 = vadd.f32 0.0, %v613
      %v615 = vpop.f32.mrb[0].mxu0
      %v616 = vadd.f32 0.0, %v615
      %617 = vmatprep.mubr.f32.mxu0 0.0
      %618 = vmatmul.mubr.f32.gmra.mrb[0].mxu0 %v506
      %v619 = vpop.f32.mrb[0].mxu0
      %v620 = vadd.f32 0.0, %v619
      %v621 = vpop.f32.mrb[0].mxu0
      %v622 = vadd.f32 0.0, %v621
      %623 = vmatprep.mubr.f32.mxu0 0.0
      %624 = vmatmul.mubr.f32.gmra.mrb[0].mxu0 %v507
      %v625 = vpop.f32.mrb[0].mxu0
      %v626 = vadd.f32 0.0, %v625
      %v627 = vpop.f32.mrb[0].mxu0
      %v628 = vadd.f32 0.0, %v627
      %629 = vmatprep.mubr.f32.mxu0 0.0
      %630 = vmatmul.mubr.f32.gmra.mrb[0].mxu0 %v508
      %v631 = vpop.f32.mrb[0].mxu0
      %v632 = vadd.f32 0.0, %v631
      %v633 = vpop.f32.mrb[0].mxu0
      %v634 = vadd.f32 0.0, %v633
      %635 = vmatprep.mubr.f32.mxu0 0.0
      %636 = vmatmul.mubr.f32.gmra.mrb[0].mxu0 %v509
      %v637 = vpop.f32.mrb[0].mxu0
      %v638 = vadd.f32 0.0, %v637
      %v639 = vpop.f32.mrb[0].mxu0
      %v640 = vadd.f32 0.0, %v639
      %641 = vmatprep.mubr.f32.mxu0 0.0
      %642 = vmatmul.mubr.f32.gmra.mrb[0].mxu0 %v510
      %v643 = vpop.f32.mrb[0].mxu0
      %v644 = vadd.f32 0.0, %v643
      %v645 = vpop.f32.mrb[0].mxu0
      %v646 = vadd.f32 0.0, %v645
      %647 = vmatprep.mubr.f32.mxu0 0.0
      %648 = vmatmul.mubr.f32.gmra.mrb[0].mxu0 %v511
      %v649 = vpop.f32.mrb[0].mxu0
      %v650 = vadd.f32 0.0, %v649
      %v651 = vpop.f32.mrb[0].mxu0
      %v652 = vadd.f32 0.0, %v651
      %653 = vmatprep.mubr.f32.mxu0 0.0
      %654 = vmatmul.mubr.f32.gmra.mrb[0].mxu0 %v512
      %v655 = vpop.f32.mrb[0].mxu0
      %v656 = vadd.f32 0.0, %v655
      %v657 = vpop.f32.mrb[0].mxu0
      %v658 = vadd.f32 0.0, %v657
      %659 = vmatprep.mubr.f32.mxu0 0.0
      %660 = vmatmul.mubr.f32.gmra.mrb[0].mxu0 %v513
      %v661 = vpop.f32.mrb[0].mxu0
      %v662 = vadd.f32 0.0, %v661
      %v663 = vpop.f32.mrb[0].mxu0
      %v664 = vadd.f32 0.0, %v663
      %665 = vmatprep.mubr.f32.mxu0 0.0
      %666 = vmatmul.mubr.f32.gmra.mrb[0].mxu0 %v514
      %v667 = vpop.f32.mrb[0].mxu0
      %v668 = vadd.f32 0.0, %v667
      %v669 = vpop.f32.mrb[0].mxu0
      %v670 = vadd.f32 0.0, %v669
      %671 = vdwg.mxu0
      %v672 = vadd.f32 %v447, %v614
      %v673 = vadd.f32 %v449, %v616
      %v674 = vadd.f32 %v453, %v620
      %v675 = vadd.f32 %v455, %v622
      %v676 = vadd.f32 %v459, %v626
      %v677 = vadd.f32 %v461, %v628
      %v678 = vadd.f32 %v465, %v632
      %v679 = vadd.f32 %v467, %v634
      %v680 = vadd.f32 %v471, %v638
      %v681 = vadd.f32 %v473, %v640
      %v682 = vadd.f32 %v477, %v644
      %v683 = vadd.f32 %v479, %v646
      %v684 = vadd.f32 %v483, %v650
      %v685 = vadd.f32 %v485, %v652
      %v686 = vadd.f32 %v489, %v656
      %v687 = vadd.f32 %v491, %v658
      %v688 = vadd.f32 %v495, %v662
      %v689 = vadd.f32 %v497, %v664
      %v690 = vadd.f32 %v501, %v668
      %v691 = vadd.f32 %v503, %v670
      %v692 = vld [vmem:[%s165 + $0xa] sm:$0xff]
      %v693 = vld [vmem:[%s165 + $0x12] sm:$0xff]
      %v694 = vld [vmem:[%s165 + $0x1a] sm:$0xff]
      %v695 = vld [vmem:[%s165 + $0x22] sm:$0xff]
      %v696 = vld [vmem:[%s165 + $0x2a] sm:$0xff]
      %v697 = vld [vmem:[%s165 + $0x32] sm:$0xff]
      %v698 = vld [vmem:[%s165 + $0x3a] sm:$0xff]
      %v699 = vld [vmem:[%s165 + $0x42] sm:$0xff]
      %v700 = vld [vmem:[%s165 + $0x4a] sm:$0xff]
      %v701 = vld [vmem:[%s165 + $0x52] sm:$0xff]
      %v702 = vld [vmem:[%s1 + $0x300] sm:$0xff]
      %v703 = vld [vmem:[%s1 + $0x308] sm:$0xff]
      %v704 = vld [vmem:[%s1 + $0x310] sm:$0xff]
      %v705 = vld [vmem:[%s1 + $0x318] sm:$0xff]
      %v706 = vld [vmem:[%s1 + $0x320] sm:$0xff]
      %v707 = vld [vmem:[%s1 + $0x328] sm:$0xff]
      %v708 = vld [vmem:[%s1 + $0x330] sm:$0xff]
      %v709 = vld [vmem:[%s1 + $0x338] sm:$0xff]
      %v710 = vld [vmem:[%s1 + $0x340] sm:$0xff]
      %v711 = vld [vmem:[%s1 + $0x348] sm:$0xff]
      %v712 = vld [vmem:[%s1 + $0x350] sm:$0xff]
      %v713 = vld [vmem:[%s1 + $0x358] sm:$0xff]
      %v714 = vld [vmem:[%s1 + $0x360] sm:$0xff]
      %v715 = vld [vmem:[%s1 + $0x368] sm:$0xff]
      %v716 = vld [vmem:[%s1 + $0x370] sm:$0xff]
      %v717 = vld [vmem:[%s1 + $0x378] sm:$0xff]
      %v718 = vld [vmem:[%s1 + $0x380] sm:$0xff]
      %v719 = vld [vmem:[%s1 + $0x388] sm:$0xff]
      %v720 = vld [vmem:[%s1 + $0x390] sm:$0xff]
      %v721 = vld [vmem:[%s1 + $0x398] sm:$0xff]
      %v722 = vld [vmem:[%s1 + $0x3a0] sm:$0xff]
      %v723 = vld [vmem:[%s1 + $0x3a8] sm:$0xff]
      %v724 = vld [vmem:[%s1 + $0x3b0] sm:$0xff]
      %v725 = vld [vmem:[%s1 + $0x3b8] sm:$0xff]
      %v726 = vld [vmem:[%s1 + $0x3c0] sm:$0xff]
      %v727 = vld [vmem:[%s1 + $0x3c8] sm:$0xff]
      %v728 = vld [vmem:[%s1 + $0x3d0] sm:$0xff]
      %v729 = vld [vmem:[%s1 + $0x3d8] sm:$0xff]
      %v730 = vld [vmem:[%s1 + $0x3e0] sm:$0xff]
      %v731 = vld [vmem:[%s1 + $0x3e8] sm:$0xff]
      %v732 = vld [vmem:[%s1 + $0x3f0] sm:$0xff]
      %v733 = vld [vmem:[%s1 + $0x3f8] sm:$0xff]
      %734 = vmatprep.subr.mxu0 %v703
      %735 = vmatpush1.msra.mxu0 %v702
      %736 = vmatprep.subr.mxu0 %v705
      %737 = vmatpush1.msra.mxu0 %v704
      %738 = vmatprep.subr.mxu0 %v707
      %739 = vmatpush1.msra.mxu0 %v706
      %740 = vmatprep.subr.mxu0 %v709
      %741 = vmatpush1.msra.mxu0 %v708
      %742 = vmatprep.subr.mxu0 %v711
      %743 = vmatpush1.msra.mxu0 %v710
      %744 = vmatprep.subr.mxu0 %v713
      %745 = vmatpush1.msra.mxu0 %v712
      %746 = vmatprep.subr.mxu0 %v715
      %747 = vmatpush1.msra.mxu0 %v714
      %748 = vmatprep.subr.mxu0 %v717
      %749 = vmatpush1.msra.mxu0 %v716
      %750 = vmatprep.subr.mxu0 %v719
      %751 = vmatpush1.msra.mxu0 %v718
      %752 = vmatprep.subr.mxu0 %v721
      %753 = vmatpush1.msra.mxu0 %v720
      %754 = vmatprep.subr.mxu0 %v723
      %755 = vmatpush1.msra.mxu0 %v722
      %756 = vmatprep.subr.mxu0 %v725
      %757 = vmatpush1.msra.mxu0 %v724
      %758 = vmatprep.subr.mxu0 %v727
      %759 = vmatpush1.msra.mxu0 %v726
      %760 = vmatprep.subr.mxu0 %v729
      %761 = vmatpush1.msra.mxu0 %v728
      %762 = vmatprep.subr.mxu0 %v731
      %763 = vmatpush1.msra.mxu0 %v730
      %764 = vmatprep.subr.mxu0 %v733
      %765 = vmatpush1.msra.mxu0 %v732
      %766 = vmatprep.subr.mxu0 0.0
      %767 = vmatpush1.msra.mxu0 0.0
      %768 = vmatprep.subr.mxu0 0.0
      %769 = vmatpush1.msra.mxu0 0.0
      %770 = vmatprep.subr.mxu0 0.0
      %771 = vmatpush1.msra.mxu0 0.0
      %772 = vmatprep.subr.mxu0 0.0
      %773 = vmatpush1.msra.mxu0 0.0
      %774 = vmatprep.subr.mxu0 0.0
      %775 = vmatpush1.msra.mxu0 0.0
      %776 = vmatprep.subr.mxu0 0.0
      %777 = vmatpush1.msra.mxu0 0.0
      %778 = vmatprep.subr.mxu0 0.0
      %779 = vmatpush1.msra.mxu0 0.0
      %780 = vmatprep.subr.mxu0 0.0
      %781 = vmatpush1.msra.mxu0 0.0
      %782 = vmatprep.subr.mxu0 0.0
      %783 = vmatpush1.msra.mxu0 0.0
      %784 = vmatprep.subr.mxu0 0.0
      %785 = vmatpush1.msra.mxu0 0.0
      %786 = vmatprep.subr.mxu0 0.0
      %787 = vmatpush1.msra.mxu0 0.0
      %788 = vmatprep.subr.mxu0 0.0
      %789 = vmatpush1.msra.mxu0 0.0
      %790 = vmatprep.subr.mxu0 0.0
      %791 = vmatpush1.msra.mxu0 0.0
      %792 = vmatprep.subr.mxu0 0.0
      %793 = vmatpush1.msra.mxu0 0.0
      %794 = vmatprep.subr.mxu0 0.0
      %795 = vmatpush1.msra.mxu0 0.0
      %796 = vmatprep.subr.mxu0 0.0
      %797 = vmatpush1.msra.mxu0 0.0
      %798 = vmatprep.mubr.f32.mxu0 0.0
      %799 = vmatmul.mubr.f32.gmra.mrb[0].mxu0 %v692
      %v800 = vpop.f32.mrb[0].mxu0
      %v801 = vadd.f32 0.0, %v800
      %v802 = vpop.f32.mrb[0].mxu0
      %v803 = vadd.f32 0.0, %v802
      %804 = vmatprep.mubr.f32.mxu0 0.0
      %805 = vmatmul.mubr.f32.gmra.mrb[0].mxu0 %v693
      %v806 = vpop.f32.mrb[0].mxu0
      %v807 = vadd.f32 0.0, %v806
      %v808 = vpop.f32.mrb[0].mxu0
      %v809 = vadd.f32 0.0, %v808
      %810 = vmatprep.mubr.f32.mxu0 0.0
      %811 = vmatmul.mubr.f32.gmra.mrb[0].mxu0 %v694
      %v812 = vpop.f32.mrb[0].mxu0
      %v813 = vadd.f32 0.0, %v812
      %v814 = vpop.f32.mrb[0].mxu0
      %v815 = vadd.f32 0.0, %v814
      %816 = vmatprep.mubr.f32.mxu0 0.0
      %817 = vmatmul.mubr.f32.gmra.mrb[0].mxu0 %v695
      %v818 = vpop.f32.mrb[0].mxu0
      %v819 = vadd.f32 0.0, %v818
      %v820 = vpop.f32.mrb[0].mxu0
      %v821 = vadd.f32 0.0, %v820
      %822 = vmatprep.mubr.f32.mxu0 0.0
      %823 = vmatmul.mubr.f32.gmra.mrb[0].mxu0 %v696
      %v824 = vpop.f32.mrb[0].mxu0
      %v825 = vadd.f32 0.0, %v824
      %v826 = vpop.f32.mrb[0].mxu0
      %v827 = vadd.f32 0.0, %v826
      %828 = vmatprep.mubr.f32.mxu0 0.0
      %829 = vmatmul.mubr.f32.gmra.mrb[0].mxu0 %v697
      %v830 = vpop.f32.mrb[0].mxu0
      %v831 = vadd.f32 0.0, %v830
      %v832 = vpop.f32.mrb[0].mxu0
      %v833 = vadd.f32 0.0, %v832
      %834 = vmatprep.mubr.f32.mxu0 0.0
      %835 = vmatmul.mubr.f32.gmra.mrb[0].mxu0 %v698
      %v836 = vpop.f32.mrb[0].mxu0
      %v837 = vadd.f32 0.0, %v836
      %v838 = vpop.f32.mrb[0].mxu0
      %v839 = vadd.f32 0.0, %v838
      %840 = vmatprep.mubr.f32.mxu0 0.0
      %841 = vmatmul.mubr.f32.gmra.mrb[0].mxu0 %v699
      %v842 = vpop.f32.mrb[0].mxu0
      %v843 = vadd.f32 0.0, %v842
      %v844 = vpop.f32.mrb[0].mxu0
      %v845 = vadd.f32 0.0, %v844
      %846 = vmatprep.mubr.f32.mxu0 0.0
      %847 = vmatmul.mubr.f32.gmra.mrb[0].mxu0 %v700
      %v848 = vpop.f32.mrb[0].mxu0
      %v849 = vadd.f32 0.0, %v848
      %v850 = vpop.f32.mrb[0].mxu0
      %v851 = vadd.f32 0.0, %v850
      %852 = vmatprep.mubr.f32.mxu0 0.0
      %853 = vmatmul.mubr.f32.gmra.mrb[0].mxu0 %v701
      %v854 = vpop.f32.mrb[0].mxu0
      %v855 = vadd.f32 0.0, %v854
      %v856 = vpop.f32.mrb[0].mxu0
      %v857 = vadd.f32 0.0, %v856
      %858 = vdwg.mxu0
      %v859 = vadd.f32 %v672, %v801
      %v860 = vadd.f32 %v673, %v803
      %v861 = vadd.f32 %v674, %v807
      %v862 = vadd.f32 %v675, %v809
      %v863 = vadd.f32 %v676, %v813
      %v864 = vadd.f32 %v677, %v815
      %v865 = vadd.f32 %v678, %v819
      %v866 = vadd.f32 %v679, %v821
      %v867 = vadd.f32 %v680, %v825
      %v868 = vadd.f32 %v681, %v827
      %v869 = vadd.f32 %v682, %v831
      %v870 = vadd.f32 %v683, %v833
      %v871 = vadd.f32 %v684, %v837
      %v872 = vadd.f32 %v685, %v839
      %v873 = vadd.f32 %v686, %v843
      %v874 = vadd.f32 %v687, %v845
      %v875 = vadd.f32 %v688, %v849
      %v876 = vadd.f32 %v689, %v851
      %v877 = vadd.f32 %v690, %v855
      %v878 = vadd.f32 %v691, %v857
      %v879 = vld [vmem:[%s165 + $0xb] sm:$0xff]
      %v880 = vld [vmem:[%s165 + $0x13] sm:$0xff]
      %v881 = vld [vmem:[%s165 + $0x1b] sm:$0xff]
      %v882 = vld [vmem:[%s165 + $0x23] sm:$0xff]
      %v883 = vld [vmem:[%s165 + $0x2b] sm:$0xff]
      %v884 = vld [vmem:[%s165 + $0x33] sm:$0xff]
      %v885 = vld [vmem:[%s165 + $0x3b] sm:$0xff]
      %v886 = vld [vmem:[%s165 + $0x43] sm:$0xff]
      %v887 = vld [vmem:[%s165 + $0x4b] sm:$0xff]
      %v888 = vld [vmem:[%s165 + $0x53] sm:$0xff]
      %v889 = vld [vmem:[%s1 + $0x400] sm:$0xff]
      %v890 = vld [vmem:[%s1 + $0x408] sm:$0xff]
      %v891 = vld [vmem:[%s1 + $0x410] sm:$0xff]
      %v892 = vld [vmem:[%s1 + $0x418] sm:$0xff]
      %v893 = vld [vmem:[%s1 + $0x420] sm:$0xff]
      %v894 = vld [vmem:[%s1 + $0x428] sm:$0xff]
      %v895 = vld [vmem:[%s1 + $0x430] sm:$0xff]
      %v896 = vld [vmem:[%s1 + $0x438] sm:$0xff]
      %v897 = vld [vmem:[%s1 + $0x440] sm:$0xff]
      %v898 = vld [vmem:[%s1 + $0x448] sm:$0xff]
      %v899 = vld [vmem:[%s1 + $0x450] sm:$0xff]
      %v900 = vld [vmem:[%s1 + $0x458] sm:$0xff]
      %v901 = vld [vmem:[%s1 + $0x460] sm:$0xff]
      %v902 = vld [vmem:[%s1 + $0x468] sm:$0xff]
      %v903 = vld [vmem:[%s1 + $0x470] sm:$0xff]
      %v904 = vld [vmem:[%s1 + $0x478] sm:$0xff]
      %v905 = vld [vmem:[%s1 + $0x480] sm:$0xff]
      %v906 = vld [vmem:[%s1 + $0x488] sm:$0xff]
      %v907 = vld [vmem:[%s1 + $0x490] sm:$0xff]
      %v908 = vld [vmem:[%s1 + $0x498] sm:$0xff]
      %v909 = vld [vmem:[%s1 + $0x4a0] sm:$0xff]
      %v910 = vld [vmem:[%s1 + $0x4a8] sm:$0xff]
      %v911 = vld [vmem:[%s1 + $0x4b0] sm:$0xff]
      %v912 = vld [vmem:[%s1 + $0x4b8] sm:$0xff]
      %v913 = vld [vmem:[%s1 + $0x4c0] sm:$0xff]
      %v914 = vld [vmem:[%s1 + $0x4c8] sm:$0xff]
      %v915 = vld [vmem:[%s1 + $0x4d0] sm:$0xff]
      %v916 = vld [vmem:[%s1 + $0x4d8] sm:$0xff]
      %v917 = vld [vmem:[%s1 + $0x4e0] sm:$0xff]
      %v918 = vld [vmem:[%s1 + $0x4e8] sm:$0xff]
      %v919 = vld [vmem:[%s1 + $0x4f0] sm:$0xff]
      %v920 = vld [vmem:[%s1 + $0x4f8] sm:$0xff]
      %921 = vmatprep.subr.mxu0 %v890
      %922 = vmatpush1.msra.mxu0 %v889
      %923 = vmatprep.subr.mxu0 %v892
      %924 = vmatpush1.msra.mxu0 %v891
      %925 = vmatprep.subr.mxu0 %v894
      %926 = vmatpush1.msra.mxu0 %v893
      %927 = vmatprep.subr.mxu0 %v896
      %928 = vmatpush1.msra.mxu0 %v895
      %929 = vmatprep.subr.mxu0 %v898
      %930 = vmatpush1.msra.mxu0 %v897
      %931 = vmatprep.subr.mxu0 %v900
      %932 = vmatpush1.msra.mxu0 %v899
      %933 = vmatprep.subr.mxu0 %v902
      %934 = vmatpush1.msra.mxu0 %v901
      %935 = vmatprep.subr.mxu0 %v904
      %936 = vmatpush1.msra.mxu0 %v903
      %937 = vmatprep.subr.mxu0 %v906
      %938 = vmatpush1.msra.mxu0 %v905
      %939 = vmatprep.subr.mxu0 %v908
      %940 = vmatpush1.msra.mxu0 %v907
      %941 = vmatprep.subr.mxu0 %v910
      %942 = vmatpush1.msra.mxu0 %v909
      %943 = vmatprep.subr.mxu0 %v912
      %944 = vmatpush1.msra.mxu0 %v911
      %945 = vmatprep.subr.mxu0 %v914
      %946 = vmatpush1.msra.mxu0 %v913
      %947 = vmatprep.subr.mxu0 %v916
      %948 = vmatpush1.msra.mxu0 %v915
      %949 = vmatprep.subr.mxu0 %v918
      %950 = vmatpush1.msra.mxu0 %v917
      %951 = vmatprep.subr.mxu0 %v920
      %952 = vmatpush1.msra.mxu0 %v919
      %953 = vmatprep.subr.mxu0 0.0
      %954 = vmatpush1.msra.mxu0 0.0
      %955 = vmatprep.subr.mxu0 0.0
      %956 = vmatpush1.msra.mxu0 0.0
      %957 = vmatprep.subr.mxu0 0.0
      %958 = vmatpush1.msra.mxu0 0.0
      %959 = vmatprep.subr.mxu0 0.0
      %960 = vmatpush1.msra.mxu0 0.0
      %961 = vmatprep.subr.mxu0 0.0
      %962 = vmatpush1.msra.mxu0 0.0
      %963 = vmatprep.subr.mxu0 0.0
      %964 = vmatpush1.msra.mxu0 0.0
      %965 = vmatprep.subr.mxu0 0.0
      %966 = vmatpush1.msra.mxu0 0.0
      %967 = vmatprep.subr.mxu0 0.0
      %968 = vmatpush1.msra.mxu0 0.0
      %969 = vmatprep.subr.mxu0 0.0
      %970 = vmatpush1.msra.mxu0 0.0
      %971 = vmatprep.subr.mxu0 0.0
      %972 = vmatpush1.msra.mxu0 0.0
      %973 = vmatprep.subr.mxu0 0.0
      %974 = vmatpush1.msra.mxu0 0.0
      %975 = vmatprep.subr.mxu0 0.0
      %976 = vmatpush1.msra.mxu0 0.0
      %977 = vmatprep.subr.mxu0 0.0
      %978 = vmatpush1.msra.mxu0 0.0
      %979 = vmatprep.subr.mxu0 0.0
      %980 = vmatpush1.msra.mxu0 0.0
      %981 = vmatprep.subr.mxu0 0.0
      %982 = vmatpush1.msra.mxu0 0.0
      %983 = vmatprep.subr.mxu0 0.0
      %984 = vmatpush1.msra.mxu0 0.0
      %985 = vmatprep.mubr.f32.mxu0 0.0
      %986 = vmatmul.mubr.f32.gmra.mrb[0].mxu0 %v879
      %v987 = vpop.f32.mrb[0].mxu0
      %v988 = vadd.f32 0.0, %v987
      %v989 = vpop.f32.mrb[0].mxu0
      %v990 = vadd.f32 0.0, %v989
      %991 = vmatprep.mubr.f32.mxu0 0.0
      %992 = vmatmul.mubr.f32.gmra.mrb[0].mxu0 %v880
      %v993 = vpop.f32.mrb[0].mxu0
      %v994 = vadd.f32 0.0, %v993
      %v995 = vpop.f32.mrb[0].mxu0
      %v996 = vadd.f32 0.0, %v995
      %997 = vmatprep.mubr.f32.mxu0 0.0
      %998 = vmatmul.mubr.f32.gmra.mrb[0].mxu0 %v881
      %v999 = vpop.f32.mrb[0].mxu0
      %v1000 = vadd.f32 0.0, %v999
      %v1001 = vpop.f32.mrb[0].mxu0
      %v1002 = vadd.f32 0.0, %v1001
      %1003 = vmatprep.mubr.f32.mxu0 0.0
      %1004 = vmatmul.mubr.f32.gmra.mrb[0].mxu0 %v882
      %v1005 = vpop.f32.mrb[0].mxu0
      %v1006 = vadd.f32 0.0, %v1005
      %v1007 = vpop.f32.mrb[0].mxu0
      %v1008 = vadd.f32 0.0, %v1007
      %1009 = vmatprep.mubr.f32.mxu0 0.0
      %1010 = vmatmul.mubr.f32.gmra.mrb[0].mxu0 %v883
      %v1011 = vpop.f32.mrb[0].mxu0
      %v1012 = vadd.f32 0.0, %v1011
      %v1013 = vpop.f32.mrb[0].mxu0
      %v1014 = vadd.f32 0.0, %v1013
      %1015 = vmatprep.mubr.f32.mxu0 0.0
      %1016 = vmatmul.mubr.f32.gmra.mrb[0].mxu0 %v884
      %v1017 = vpop.f32.mrb[0].mxu0
      %v1018 = vadd.f32 0.0, %v1017
      %v1019 = vpop.f32.mrb[0].mxu0
      %v1020 = vadd.f32 0.0, %v1019
      %1021 = vmatprep.mubr.f32.mxu0 0.0
      %1022 = vmatmul.mubr.f32.gmra.mrb[0].mxu0 %v885
      %v1023 = vpop.f32.mrb[0].mxu0
      %v1024 = vadd.f32 0.0, %v1023
      %v1025 = vpop.f32.mrb[0].mxu0
      %v1026 = vadd.f32 0.0, %v1025
      %1027 = vmatprep.mubr.f32.mxu0 0.0
      %1028 = vmatmul.mubr.f32.gmra.mrb[0].mxu0 %v886
      %v1029 = vpop.f32.mrb[0].mxu0
      %v1030 = vadd.f32 0.0, %v1029
      %v1031 = vpop.f32.mrb[0].mxu0
      %v1032 = vadd.f32 0.0, %v1031
      %1033 = vmatprep.mubr.f32.mxu0 0.0
      %1034 = vmatmul.mubr.f32.gmra.mrb[0].mxu0 %v887
      %v1035 = vpop.f32.mrb[0].mxu0
      %v1036 = vadd.f32 0.0, %v1035
      %v1037 = vpop.f32.mrb[0].mxu0
      %v1038 = vadd.f32 0.0, %v1037
      %1039 = vmatprep.mubr.f32.mxu0 0.0
      %1040 = vmatmul.mubr.f32.gmra.mrb[0].mxu0 %v888
      %v1041 = vpop.f32.mrb[0].mxu0
      %v1042 = vadd.f32 0.0, %v1041
      %v1043 = vpop.f32.mrb[0].mxu0
      %v1044 = vadd.f32 0.0, %v1043
      %1045 = vdwg.mxu0
      %v1046 = vadd.f32 %v859, %v988
      %v1047 = vadd.f32 %v860, %v990
      %v1048 = vadd.f32 %v861, %v994
      %v1049 = vadd.f32 %v862, %v996
      %v1050 = vadd.f32 %v863, %v1000
      %v1051 = vadd.f32 %v864, %v1002
      %v1052 = vadd.f32 %v865, %v1006
      %v1053 = vadd.f32 %v866, %v1008
      %v1054 = vadd.f32 %v867, %v1012
      %v1055 = vadd.f32 %v868, %v1014
      %v1056 = vadd.f32 %v869, %v1018
      %v1057 = vadd.f32 %v870, %v1020
      %v1058 = vadd.f32 %v871, %v1024
      %v1059 = vadd.f32 %v872, %v1026
      %v1060 = vadd.f32 %v873, %v1030
      %v1061 = vadd.f32 %v874, %v1032
      %v1062 = vadd.f32 %v875, %v1036
      %v1063 = vadd.f32 %v876, %v1038
      %v1064 = vadd.f32 %v877, %v1042
      %v1065 = vadd.f32 %v878, %v1044
      %v1066 = vld [vmem:[%s165 + $0xc] sm:$0xff]
      %v1067 = vld [vmem:[%s165 + $0x14] sm:$0xff]
      %v1068 = vld [vmem:[%s165 + $0x1c] sm:$0xff]
      %v1069 = vld [vmem:[%s165 + $0x24] sm:$0xff]
      %v1070 = vld [vmem:[%s165 + $0x2c] sm:$0xff]
      %v1071 = vld [vmem:[%s165 + $0x34] sm:$0xff]
      %v1072 = vld [vmem:[%s165 + $0x3c] sm:$0xff]
      %v1073 = vld [vmem:[%s165 + $0x44] sm:$0xff]
      %v1074 = vld [vmem:[%s165 + $0x4c] sm:$0xff]
      %v1075 = vld [vmem:[%s165 + $0x54] sm:$0xff]
      %v1076 = vld [vmem:[%s1 + $0x500] sm:$0xff]
      %v1077 = vld [vmem:[%s1 + $0x508] sm:$0xff]
      %v1078 = vld [vmem:[%s1 + $0x510] sm:$0xff]
      %v1079 = vld [vmem:[%s1 + $0x518] sm:$0xff]
      %v1080 = vld [vmem:[%s1 + $0x520] sm:$0xff]
      %v1081 = vld [vmem:[%s1 + $0x528] sm:$0xff]
      %v1082 = vld [vmem:[%s1 + $0x530] sm:$0xff]
      %v1083 = vld [vmem:[%s1 + $0x538] sm:$0xff]
      %v1084 = vld [vmem:[%s1 + $0x540] sm:$0xff]
      %v1085 = vld [vmem:[%s1 + $0x548] sm:$0xff]
      %v1086 = vld [vmem:[%s1 + $0x550] sm:$0xff]
      %v1087 = vld [vmem:[%s1 + $0x558] sm:$0xff]
      %v1088 = vld [vmem:[%s1 + $0x560] sm:$0xff]
      %v1089 = vld [vmem:[%s1 + $0x568] sm:$0xff]
      %v1090 = vld [vmem:[%s1 + $0x570] sm:$0xff]
      %v1091 = vld [vmem:[%s1 + $0x578] sm:$0xff]
      %v1092 = vld [vmem:[%s1 + $0x580] sm:$0xff]
      %v1093 = vld [vmem:[%s1 + $0x588] sm:$0xff]
      %v1094 = vld [vmem:[%s1 + $0x590] sm:$0xff]
      %v1095 = vld [vmem:[%s1 + $0x598] sm:$0xff]
      %v1096 = vld [vmem:[%s1 + $0x5a0] sm:$0xff]
      %v1097 = vld [vmem:[%s1 + $0x5a8] sm:$0xff]
      %v1098 = vld [vmem:[%s1 + $0x5b0] sm:$0xff]
      %v1099 = vld [vmem:[%s1 + $0x5b8] sm:$0xff]
      %v1100 = vld [vmem:[%s1 + $0x5c0] sm:$0xff]
      %v1101 = vld [vmem:[%s1 + $0x5c8] sm:$0xff]
      %v1102 = vld [vmem:[%s1 + $0x5d0] sm:$0xff]
      %v1103 = vld [vmem:[%s1 + $0x5d8] sm:$0xff]
      %v1104 = vld [vmem:[%s1 + $0x5e0] sm:$0xff]
      %v1105 = vld [vmem:[%s1 + $0x5e8] sm:$0xff]
      %v1106 = vld [vmem:[%s1 + $0x5f0] sm:$0xff]
      %v1107 = vld [vmem:[%s1 + $0x5f8] sm:$0xff]
      %1108 = vmatprep.subr.mxu0 %v1077
      %1109 = vmatpush1.msra.mxu0 %v1076
      %1110 = vmatprep.subr.mxu0 %v1079
      %1111 = vmatpush1.msra.mxu0 %v1078
      %1112 = vmatprep.subr.mxu0 %v1081
      %1113 = vmatpush1.msra.mxu0 %v1080
      %1114 = vmatprep.subr.mxu0 %v1083
      %1115 = vmatpush1.msra.mxu0 %v1082
      %1116 = vmatprep.subr.mxu0 %v1085
      %1117 = vmatpush1.msra.mxu0 %v1084
      %1118 = vmatprep.subr.mxu0 %v1087
      %1119 = vmatpush1.msra.mxu0 %v1086
      %1120 = vmatprep.subr.mxu0 %v1089
      %1121 = vmatpush1.msra.mxu0 %v1088
      %1122 = vmatprep.subr.mxu0 %v1091
      %1123 = vmatpush1.msra.mxu0 %v1090
      %1124 = vmatprep.subr.mxu0 %v1093
      %1125 = vmatpush1.msra.mxu0 %v1092
      %1126 = vmatprep.subr.mxu0 %v1095
      %1127 = vmatpush1.msra.mxu0 %v1094
      %1128 = vmatprep.subr.mxu0 %v1097
      %1129 = vmatpush1.msra.mxu0 %v1096
      %1130 = vmatprep.subr.mxu0 %v1099
      %1131 = vmatpush1.msra.mxu0 %v1098
      %1132 = vmatprep.subr.mxu0 %v1101
      %1133 = vmatpush1.msra.mxu0 %v1100
      %1134 = vmatprep.subr.mxu0 %v1103
      %1135 = vmatpush1.msra.mxu0 %v1102
      %1136 = vmatprep.subr.mxu0 %v1105
      %1137 = vmatpush1.msra.mxu0 %v1104
      %1138 = vmatprep.subr.mxu0 %v1107
      %1139 = vmatpush1.msra.mxu0 %v1106
      %1140 = vmatprep.subr.mxu0 0.0
      %1141 = vmatpush1.msra.mxu0 0.0
      %1142 = vmatprep.subr.mxu0 0.0
      %1143 = vmatpush1.msra.mxu0 0.0
      %1144 = vmatprep.subr.mxu0 0.0
      %1145 = vmatpush1.msra.mxu0 0.0
      %1146 = vmatprep.subr.mxu0 0.0
      %1147 = vmatpush1.msra.mxu0 0.0
      %1148 = vmatprep.subr.mxu0 0.0
      %1149 = vmatpush1.msra.mxu0 0.0
      %1150 = vmatprep.subr.mxu0 0.0
      %1151 = vmatpush1.msra.mxu0 0.0
      %1152 = vmatprep.subr.mxu0 0.0
      %1153 = vmatpush1.msra.mxu0 0.0
      %1154 = vmatprep.subr.mxu0 0.0
      %1155 = vmatpush1.msra.mxu0 0.0
      %1156 = vmatprep.subr.mxu0 0.0
      %1157 = vmatpush1.msra.mxu0 0.0
      %1158 = vmatprep.subr.mxu0 0.0
      %1159 = vmatpush1.msra.mxu0 0.0
      %1160 = vmatprep.subr.mxu0 0.0
      %1161 = vmatpush1.msra.mxu0 0.0
      %1162 = vmatprep.subr.mxu0 0.0
      %1163 = vmatpush1.msra.mxu0 0.0
      %1164 = vmatprep.subr.mxu0 0.0
      %1165 = vmatpush1.msra.mxu0 0.0
      %1166 = vmatprep.subr.mxu0 0.0
      %1167 = vmatpush1.msra.mxu0 0.0
      %1168 = vmatprep.subr.mxu0 0.0
      %1169 = vmatpush1.msra.mxu0 0.0
      %1170 = vmatprep.subr.mxu0 0.0
      %1171 = vmatpush1.msra.mxu0 0.0
      %1172 = vmatprep.mubr.f32.mxu0 0.0
      %1173 = vmatmul.mubr.f32.gmra.mrb[0].mxu0 %v1066
      %v1174 = vpop.f32.mrb[0].mxu0
      %v1175 = vadd.f32 0.0, %v1174
      %v1176 = vpop.f32.mrb[0].mxu0
      %v1177 = vadd.f32 0.0, %v1176
      %1178 = vmatprep.mubr.f32.mxu0 0.0
      %1179 = vmatmul.mubr.f32.gmra.mrb[0].mxu0 %v1067
      %v1180 = vpop.f32.mrb[0].mxu0
      %v1181 = vadd.f32 0.0, %v1180
      %v1182 = vpop.f32.mrb[0].mxu0
      %v1183 = vadd.f32 0.0, %v1182
      %1184 = vmatprep.mubr.f32.mxu0 0.0
      %1185 = vmatmul.mubr.f32.gmra.mrb[0].mxu0 %v1068
      %v1186 = vpop.f32.mrb[0].mxu0
      %v1187 = vadd.f32 0.0, %v1186
      %v1188 = vpop.f32.mrb[0].mxu0
      %v1189 = vadd.f32 0.0, %v1188
      %1190 = vmatprep.mubr.f32.mxu0 0.0
      %1191 = vmatmul.mubr.f32.gmra.mrb[0].mxu0 %v1069
      %v1192 = vpop.f32.mrb[0].mxu0
      %v1193 = vadd.f32 0.0, %v1192
      %v1194 = vpop.f32.mrb[0].mxu0
      %v1195 = vadd.f32 0.0, %v1194
      %1196 = vmatprep.mubr.f32.mxu0 0.0
      %1197 = vmatmul.mubr.f32.gmra.mrb[0].mxu0 %v1070
      %v1198 = vpop.f32.mrb[0].mxu0
      %v1199 = vadd.f32 0.0, %v1198
      %v1200 = vpop.f32.mrb[0].mxu0
      %v1201 = vadd.f32 0.0, %v1200
      %1202 = vmatprep.mubr.f32.mxu0 0.0
      %1203 = vmatmul.mubr.f32.gmra.mrb[0].mxu0 %v1071
      %v1204 = vpop.f32.mrb[0].mxu0
      %v1205 = vadd.f32 0.0, %v1204
      %v1206 = vpop.f32.mrb[0].mxu0
      %v1207 = vadd.f32 0.0, %v1206
      %1208 = vmatprep.mubr.f32.mxu0 0.0
      %1209 = vmatmul.mubr.f32.gmra.mrb[0].mxu0 %v1072
      %v1210 = vpop.f32.mrb[0].mxu0
      %v1211 = vadd.f32 0.0, %v1210
      %v1212 = vpop.f32.mrb[0].mxu0
      %v1213 = vadd.f32 0.0, %v1212
      %1214 = vmatprep.mubr.f32.mxu0 0.0
      %1215 = vmatmul.mubr.f32.gmra.mrb[0].mxu0 %v1073
      %v1216 = vpop.f32.mrb[0].mxu0
      %v1217 = vadd.f32 0.0, %v1216
      %v1218 = vpop.f32.mrb[0].mxu0
      %v1219 = vadd.f32 0.0, %v1218
      %1220 = vmatprep.mubr.f32.mxu0 0.0
      %1221 = vmatmul.mubr.f32.gmra.mrb[0].mxu0 %v1074
      %v1222 = vpop.f32.mrb[0].mxu0
      %v1223 = vadd.f32 0.0, %v1222
      %v1224 = vpop.f32.mrb[0].mxu0
      %v1225 = vadd.f32 0.0, %v1224
      %1226 = vmatprep.mubr.f32.mxu0 0.0
      %1227 = vmatmul.mubr.f32.gmra.mrb[0].mxu0 %v1075
      %v1228 = vpop.f32.mrb[0].mxu0
      %v1229 = vadd.f32 0.0, %v1228
      %v1230 = vpop.f32.mrb[0].mxu0
      %v1231 = vadd.f32 0.0, %v1230
      %1232 = vdwg.mxu0
      %v1233 = vadd.f32 %v1046, %v1175
      %v1234 = vadd.f32 %v1047, %v1177
      %v1235 = vadd.f32 %v1048, %v1181
      %v1236 = vadd.f32 %v1049, %v1183
      %v1237 = vadd.f32 %v1050, %v1187
      %v1238 = vadd.f32 %v1051, %v1189
      %v1239 = vadd.f32 %v1052, %v1193
      %v1240 = vadd.f32 %v1053, %v1195
      %v1241 = vadd.f32 %v1054, %v1199
      %v1242 = vadd.f32 %v1055, %v1201
      %v1243 = vadd.f32 %v1056, %v1205
      %v1244 = vadd.f32 %v1057, %v1207
      %v1245 = vadd.f32 %v1058, %v1211
      %v1246 = vadd.f32 %v1059, %v1213
      %v1247 = vadd.f32 %v1060, %v1217
      %v1248 = vadd.f32 %v1061, %v1219
      %v1249 = vadd.f32 %v1062, %v1223
      %v1250 = vadd.f32 %v1063, %v1225
      %v1251 = vadd.f32 %v1064, %v1229
      %v1252 = vadd.f32 %v1065, %v1231
      %v1253 = vld [vmem:[%s165 + $0x14] sm:$0xff]
      %v1254 = vld [vmem:[%s165 + $0x1c] sm:$0xff]
      %v1255 = vld [vmem:[%s165 + $0x24] sm:$0xff]
      %v1256 = vld [vmem:[%s165 + $0x2c] sm:$0xff]
      %v1257 = vld [vmem:[%s165 + $0x34] sm:$0xff]
      %v1258 = vld [vmem:[%s165 + $0x3c] sm:$0xff]
      %v1259 = vld [vmem:[%s165 + $0x44] sm:$0xff]
      %v1260 = vld [vmem:[%s165 + $0x4c] sm:$0xff]
      %v1261 = vld [vmem:[%s165 + $0x54] sm:$0xff]
      %v1262 = vld [vmem:[%s165 + $0x5c] sm:$0xff]
      %v1263 = vld [vmem:[%s1 + $0x600] sm:$0xff]
      %v1264 = vld [vmem:[%s1 + $0x608] sm:$0xff]
      %v1265 = vld [vmem:[%s1 + $0x610] sm:$0xff]
      %v1266 = vld [vmem:[%s1 + $0x618] sm:$0xff]
      %v1267 = vld [vmem:[%s1 + $0x620] sm:$0xff]
      %v1268 = vld [vmem:[%s1 + $0x628] sm:$0xff]
      %v1269 = vld [vmem:[%s1 + $0x630] sm:$0xff]
      %v1270 = vld [vmem:[%s1 + $0x638] sm:$0xff]
      %v1271 = vld [vmem:[%s1 + $0x640] sm:$0xff]
      %v1272 = vld [vmem:[%s1 + $0x648] sm:$0xff]
      %v1273 = vld [vmem:[%s1 + $0x650] sm:$0xff]
      %v1274 = vld [vmem:[%s1 + $0x658] sm:$0xff]
      %v1275 = vld [vmem:[%s1 + $0x660] sm:$0xff]
      %v1276 = vld [vmem:[%s1 + $0x668] sm:$0xff]
      %v1277 = vld [vmem:[%s1 + $0x670] sm:$0xff]
      %v1278 = vld [vmem:[%s1 + $0x678] sm:$0xff]
      %v1279 = vld [vmem:[%s1 + $0x680] sm:$0xff]
      %v1280 = vld [vmem:[%s1 + $0x688] sm:$0xff]
      %v1281 = vld [vmem:[%s1 + $0x690] sm:$0xff]
      %v1282 = vld [vmem:[%s1 + $0x698] sm:$0xff]
      %v1283 = vld [vmem:[%s1 + $0x6a0] sm:$0xff]
      %v1284 = vld [vmem:[%s1 + $0x6a8] sm:$0xff]
      %v1285 = vld [vmem:[%s1 + $0x6b0] sm:$0xff]
      %v1286 = vld [vmem:[%s1 + $0x6b8] sm:$0xff]
      %v1287 = vld [vmem:[%s1 + $0x6c0] sm:$0xff]
      %v1288 = vld [vmem:[%s1 + $0x6c8] sm:$0xff]
      %v1289 = vld [vmem:[%s1 + $0x6d0] sm:$0xff]
      %v1290 = vld [vmem:[%s1 + $0x6d8] sm:$0xff]
      %v1291 = vld [vmem:[%s1 + $0x6e0] sm:$0xff]
      %v1292 = vld [vmem:[%s1 + $0x6e8] sm:$0xff]
      %v1293 = vld [vmem:[%s1 + $0x6f0] sm:$0xff]
      %v1294 = vld [vmem:[%s1 + $0x6f8] sm:$0xff]
      %1295 = vmatprep.subr.mxu0 %v1264
      %1296 = vmatpush1.msra.mxu0 %v1263
      %1297 = vmatprep.subr.mxu0 %v1266
      %1298 = vmatpush1.msra.mxu0 %v1265
      %1299 = vmatprep.subr.mxu0 %v1268
      %1300 = vmatpush1.msra.mxu0 %v1267
      %1301 = vmatprep.subr.mxu0 %v1270
      %1302 = vmatpush1.msra.mxu0 %v1269
      %1303 = vmatprep.subr.mxu0 %v1272
      %1304 = vmatpush1.msra.mxu0 %v1271
      %1305 = vmatprep.subr.mxu0 %v1274
      %1306 = vmatpush1.msra.mxu0 %v1273
      %1307 = vmatprep.subr.mxu0 %v1276
      %1308 = vmatpush1.msra.mxu0 %v1275
      %1309 = vmatprep.subr.mxu0 %v1278
      %1310 = vmatpush1.msra.mxu0 %v1277
      %1311 = vmatprep.subr.mxu0 %v1280
      %1312 = vmatpush1.msra.mxu0 %v1279
      %1313 = vmatprep.subr.mxu0 %v1282
      %1314 = vmatpush1.msra.mxu0 %v1281
      %1315 = vmatprep.subr.mxu0 %v1284
      %1316 = vmatpush1.msra.mxu0 %v1283
      %1317 = vmatprep.subr.mxu0 %v1286
      %1318 = vmatpush1.msra.mxu0 %v1285
      %1319 = vmatprep.subr.mxu0 %v1288
      %1320 = vmatpush1.msra.mxu0 %v1287
      %1321 = vmatprep.subr.mxu0 %v1290
      %1322 = vmatpush1.msra.mxu0 %v1289
      %1323 = vmatprep.subr.mxu0 %v1292
      %1324 = vmatpush1.msra.mxu0 %v1291
      %1325 = vmatprep.subr.mxu0 %v1294
      %1326 = vmatpush1.msra.mxu0 %v1293
      %1327 = vmatprep.subr.mxu0 0.0
      %1328 = vmatpush1.msra.mxu0 0.0
      %1329 = vmatprep.subr.mxu0 0.0
      %1330 = vmatpush1.msra.mxu0 0.0
      %1331 = vmatprep.subr.mxu0 0.0
      %1332 = vmatpush1.msra.mxu0 0.0
      %1333 = vmatprep.subr.mxu0 0.0
      %1334 = vmatpush1.msra.mxu0 0.0
      %1335 = vmatprep.subr.mxu0 0.0
      %1336 = vmatpush1.msra.mxu0 0.0
      %1337 = vmatprep.subr.mxu0 0.0
      %1338 = vmatpush1.msra.mxu0 0.0
      %1339 = vmatprep.subr.mxu0 0.0
      %1340 = vmatpush1.msra.mxu0 0.0
      %1341 = vmatprep.subr.mxu0 0.0
      %1342 = vmatpush1.msra.mxu0 0.0
      %1343 = vmatprep.subr.mxu0 0.0
      %1344 = vmatpush1.msra.mxu0 0.0
      %1345 = vmatprep.subr.mxu0 0.0
      %1346 = vmatpush1.msra.mxu0 0.0
      %1347 = vmatprep.subr.mxu0 0.0
      %1348 = vmatpush1.msra.mxu0 0.0
      %1349 = vmatprep.subr.mxu0 0.0
      %1350 = vmatpush1.msra.mxu0 0.0
      %1351 = vmatprep.subr.mxu0 0.0
      %1352 = vmatpush1.msra.mxu0 0.0
      %1353 = vmatprep.subr.mxu0 0.0
      %1354 = vmatpush1.msra.mxu0 0.0
      %1355 = vmatprep.subr.mxu0 0.0
      %1356 = vmatpush1.msra.mxu0 0.0
      %1357 = vmatprep.subr.mxu0 0.0
      %1358 = vmatpush1.msra.mxu0 0.0
      %1359 = vmatprep.mubr.f32.mxu0 0.0
      %1360 = vmatmul.mubr.f32.gmra.mrb[0].mxu0 %v1253
      %v1361 = vpop.f32.mrb[0].mxu0
      %v1362 = vadd.f32 0.0, %v1361
      %v1363 = vpop.f32.mrb[0].mxu0
      %v1364 = vadd.f32 0.0, %v1363
      %1365 = vmatprep.mubr.f32.mxu0 0.0
      %1366 = vmatmul.mubr.f32.gmra.mrb[0].mxu0 %v1254
      %v1367 = vpop.f32.mrb[0].mxu0
      %v1368 = vadd.f32 0.0, %v1367
      %v1369 = vpop.f32.mrb[0].mxu0
      %v1370 = vadd.f32 0.0, %v1369
      %1371 = vmatprep.mubr.f32.mxu0 0.0
      %1372 = vmatmul.mubr.f32.gmra.mrb[0].mxu0 %v1255
      %v1373 = vpop.f32.mrb[0].mxu0
      %v1374 = vadd.f32 0.0, %v1373
      %v1375 = vpop.f32.mrb[0].mxu0
      %v1376 = vadd.f32 0.0, %v1375
      %1377 = vmatprep.mubr.f32.mxu0 0.0
      %1378 = vmatmul.mubr.f32.gmra.mrb[0].mxu0 %v1256
      %v1379 = vpop.f32.mrb[0].mxu0
      %v1380 = vadd.f32 0.0, %v1379
      %v1381 = vpop.f32.mrb[0].mxu0
      %v1382 = vadd.f32 0.0, %v1381
      %1383 = vmatprep.mubr.f32.mxu0 0.0
      %1384 = vmatmul.mubr.f32.gmra.mrb[0].mxu0 %v1257
      %v1385 = vpop.f32.mrb[0].mxu0
      %v1386 = vadd.f32 0.0, %v1385
      %v1387 = vpop.f32.mrb[0].mxu0
      %v1388 = vadd.f32 0.0, %v1387
      %1389 = vmatprep.mubr.f32.mxu0 0.0
      %1390 = vmatmul.mubr.f32.gmra.mrb[0].mxu0 %v1258
      %v1391 = vpop.f32.mrb[0].mxu0
      %v1392 = vadd.f32 0.0, %v1391
      %v1393 = vpop.f32.mrb[0].mxu0
      %v1394 = vadd.f32 0.0, %v1393
      %1395 = vmatprep.mubr.f32.mxu0 0.0
      %1396 = vmatmul.mubr.f32.gmra.mrb[0].mxu0 %v1259
      %v1397 = vpop.f32.mrb[0].mxu0
      %v1398 = vadd.f32 0.0, %v1397
      %v1399 = vpop.f32.mrb[0].mxu0
      %v1400 = vadd.f32 0.0, %v1399
      %1401 = vmatprep.mubr.f32.mxu0 0.0
      %1402 = vmatmul.mubr.f32.gmra.mrb[0].mxu0 %v1260
      %v1403 = vpop.f32.mrb[0].mxu0
      %v1404 = vadd.f32 0.0, %v1403
      %v1405 = vpop.f32.mrb[0].mxu0
      %v1406 = vadd.f32 0.0, %v1405
      %1407 = vmatprep.mubr.f32.mxu0 0.0
      %1408 = vmatmul.mubr.f32.gmra.mrb[0].mxu0 %v1261
      %v1409 = vpop.f32.mrb[0].mxu0
      %v1410 = vadd.f32 0.0, %v1409
      %v1411 = vpop.f32.mrb[0].mxu0
      %v1412 = vadd.f32 0.0, %v1411
      %1413 = vmatprep.mubr.f32.mxu0 0.0
      %1414 = vmatmul.mubr.f32.gmra.mrb[0].mxu0 %v1262
      %v1415 = vpop.f32.mrb[0].mxu0
      %v1416 = vadd.f32 0.0, %v1415
      %v1417 = vpop.f32.mrb[0].mxu0
      %v1418 = vadd.f32 0.0, %v1417
      %1419 = vdwg.mxu0
      %v1420 = vadd.f32 %v1233, %v1362
      %v1421 = vadd.f32 %v1234, %v1364
      %v1422 = vadd.f32 %v1235, %v1368
      %v1423 = vadd.f32 %v1236, %v1370
      %v1424 = vadd.f32 %v1237, %v1374
      %v1425 = vadd.f32 %v1238, %v1376
      %v1426 = vadd.f32 %v1239, %v1380
      %v1427 = vadd.f32 %v1240, %v1382
      %v1428 = vadd.f32 %v1241, %v1386
      %v1429 = vadd.f32 %v1242, %v1388
      %v1430 = vadd.f32 %v1243, %v1392
      %v1431 = vadd.f32 %v1244, %v1394
      %v1432 = vadd.f32 %v1245, %v1398
      %v1433 = vadd.f32 %v1246, %v1400
      %v1434 = vadd.f32 %v1247, %v1404
      %v1435 = vadd.f32 %v1248, %v1406
      %v1436 = vadd.f32 %v1249, %v1410
      %v1437 = vadd.f32 %v1250, %v1412
      %v1438 = vadd.f32 %v1251, %v1416
      %v1439 = vadd.f32 %v1252, %v1418
      %v1440 = vld [vmem:[%s165 + $0x15] sm:$0xff]
      %v1441 = vld [vmem:[%s165 + $0x1d] sm:$0xff]
      %v1442 = vld [vmem:[%s165 + $0x25] sm:$0xff]
      %v1443 = vld [vmem:[%s165 + $0x2d] sm:$0xff]
      %v1444 = vld [vmem:[%s165 + $0x35] sm:$0xff]
      %v1445 = vld [vmem:[%s165 + $0x3d] sm:$0xff]
      %v1446 = vld [vmem:[%s165 + $0x45] sm:$0xff]
      %v1447 = vld [vmem:[%s165 + $0x4d] sm:$0xff]
      %v1448 = vld [vmem:[%s165 + $0x55] sm:$0xff]
      %v1449 = vld [vmem:[%s165 + $0x5d] sm:$0xff]
      %v1450 = vld [vmem:[%s1 + $0x700] sm:$0xff]
      %v1451 = vld [vmem:[%s1 + $0x708] sm:$0xff]
      %v1452 = vld [vmem:[%s1 + $0x710] sm:$0xff]
      %v1453 = vld [vmem:[%s1 + $0x718] sm:$0xff]
      %v1454 = vld [vmem:[%s1 + $0x720] sm:$0xff]
      %v1455 = vld [vmem:[%s1 + $0x728] sm:$0xff]
      %v1456 = vld [vmem:[%s1 + $0x730] sm:$0xff]
      %v1457 = vld [vmem:[%s1 + $0x738] sm:$0xff]
      %v1458 = vld [vmem:[%s1 + $0x740] sm:$0xff]
      %v1459 = vld [vmem:[%s1 + $0x748] sm:$0xff]
      %v1460 = vld [vmem:[%s1 + $0x750] sm:$0xff]
      %v1461 = vld [vmem:[%s1 + $0x758] sm:$0xff]
      %v1462 = vld [vmem:[%s1 + $0x760] sm:$0xff]
      %v1463 = vld [vmem:[%s1 + $0x768] sm:$0xff]
      %v1464 = vld [vmem:[%s1 + $0x770] sm:$0xff]
      %v1465 = vld [vmem:[%s1 + $0x778] sm:$0xff]
      %v1466 = vld [vmem:[%s1 + $0x780] sm:$0xff]
      %v1467 = vld [vmem:[%s1 + $0x788] sm:$0xff]
      %v1468 = vld [vmem:[%s1 + $0x790] sm:$0xff]
      %v1469 = vld [vmem:[%s1 + $0x798] sm:$0xff]
      %v1470 = vld [vmem:[%s1 + $0x7a0] sm:$0xff]
      %v1471 = vld [vmem:[%s1 + $0x7a8] sm:$0xff]
      %v1472 = vld [vmem:[%s1 + $0x7b0] sm:$0xff]
      %v1473 = vld [vmem:[%s1 + $0x7b8] sm:$0xff]
      %v1474 = vld [vmem:[%s1 + $0x7c0] sm:$0xff]
      %v1475 = vld [vmem:[%s1 + $0x7c8] sm:$0xff]
      %v1476 = vld [vmem:[%s1 + $0x7d0] sm:$0xff]
      %v1477 = vld [vmem:[%s1 + $0x7d8] sm:$0xff]
      %v1478 = vld [vmem:[%s1 + $0x7e0] sm:$0xff]
      %v1479 = vld [vmem:[%s1 + $0x7e8] sm:$0xff]
      %v1480 = vld [vmem:[%s1 + $0x7f0] sm:$0xff]
      %v1481 = vld [vmem:[%s1 + $0x7f8] sm:$0xff]
      %1482 = vmatprep.subr.mxu0 %v1451
      %1483 = vmatpush1.msra.mxu0 %v1450
      %1484 = vmatprep.subr.mxu0 %v1453
      %1485 = vmatpush1.msra.mxu0 %v1452
      %1486 = vmatprep.subr.mxu0 %v1455
      %1487 = vmatpush1.msra.mxu0 %v1454
      %1488 = vmatprep.subr.mxu0 %v1457
      %1489 = vmatpush1.msra.mxu0 %v1456
      %1490 = vmatprep.subr.mxu0 %v1459
      %1491 = vmatpush1.msra.mxu0 %v1458
      %1492 = vmatprep.subr.mxu0 %v1461
      %1493 = vmatpush1.msra.mxu0 %v1460
      %1494 = vmatprep.subr.mxu0 %v1463
      %1495 = vmatpush1.msra.mxu0 %v1462
      %1496 = vmatprep.subr.mxu0 %v1465
      %1497 = vmatpush1.msra.mxu0 %v1464
      %1498 = vmatprep.subr.mxu0 %v1467
      %1499 = vmatpush1.msra.mxu0 %v1466
      %1500 = vmatprep.subr.mxu0 %v1469
      %1501 = vmatpush1.msra.mxu0 %v1468
      %1502 = vmatprep.subr.mxu0 %v1471
      %1503 = vmatpush1.msra.mxu0 %v1470
      %1504 = vmatprep.subr.mxu0 %v1473
      %1505 = vmatpush1.msra.mxu0 %v1472
      %1506 = vmatprep.subr.mxu0 %v1475
      %1507 = vmatpush1.msra.mxu0 %v1474
      %1508 = vmatprep.subr.mxu0 %v1477
      %1509 = vmatpush1.msra.mxu0 %v1476
      %1510 = vmatprep.subr.mxu0 %v1479
      %1511 = vmatpush1.msra.mxu0 %v1478
      %1512 = vmatprep.subr.mxu0 %v1481
      %1513 = vmatpush1.msra.mxu0 %v1480
      %1514 = vmatprep.subr.mxu0 0.0
      %1515 = vmatpush1.msra.mxu0 0.0
      %1516 = vmatprep.subr.mxu0 0.0
      %1517 = vmatpush1.msra.mxu0 0.0
      %1518 = vmatprep.subr.mxu0 0.0
      %1519 = vmatpush1.msra.mxu0 0.0
      %1520 = vmatprep.subr.mxu0 0.0
      %1521 = vmatpush1.msra.mxu0 0.0
      %1522 = vmatprep.subr.mxu0 0.0
      %1523 = vmatpush1.msra.mxu0 0.0
      %1524 = vmatprep.subr.mxu0 0.0
      %1525 = vmatpush1.msra.mxu0 0.0
      %1526 = vmatprep.subr.mxu0 0.0
      %1527 = vmatpush1.msra.mxu0 0.0
      %1528 = vmatprep.subr.mxu0 0.0
      %1529 = vmatpush1.msra.mxu0 0.0
      %1530 = vmatprep.subr.mxu0 0.0
      %1531 = vmatpush1.msra.mxu0 0.0
      %1532 = vmatprep.subr.mxu0 0.0
      %1533 = vmatpush1.msra.mxu0 0.0
      %1534 = vmatprep.subr.mxu0 0.0
      %1535 = vmatpush1.msra.mxu0 0.0
      %1536 = vmatprep.subr.mxu0 0.0
      %1537 = vmatpush1.msra.mxu0 0.0
      %1538 = vmatprep.subr.mxu0 0.0
      %1539 = vmatpush1.msra.mxu0 0.0
      %1540 = vmatprep.subr.mxu0 0.0
      %1541 = vmatpush1.msra.mxu0 0.0
      %1542 = vmatprep.subr.mxu0 0.0
      %1543 = vmatpush1.msra.mxu0 0.0
      %1544 = vmatprep.subr.mxu0 0.0
      %1545 = vmatpush1.msra.mxu0 0.0
      %1546 = vmatprep.mubr.f32.mxu0 0.0
      %1547 = vmatmul.mubr.f32.gmra.mrb[0].mxu0 %v1440
      %v1548 = vpop.f32.mrb[0].mxu0
      %v1549 = vadd.f32 0.0, %v1548
      %v1550 = vpop.f32.mrb[0].mxu0
      %v1551 = vadd.f32 0.0, %v1550
      %1552 = vmatprep.mubr.f32.mxu0 0.0
      %1553 = vmatmul.mubr.f32.gmra.mrb[0].mxu0 %v1441
      %v1554 = vpop.f32.mrb[0].mxu0
      %v1555 = vadd.f32 0.0, %v1554
      %v1556 = vpop.f32.mrb[0].mxu0
      %v1557 = vadd.f32 0.0, %v1556
      %1558 = vmatprep.mubr.f32.mxu0 0.0
      %1559 = vmatmul.mubr.f32.gmra.mrb[0].mxu0 %v1442
      %v1560 = vpop.f32.mrb[0].mxu0
      %v1561 = vadd.f32 0.0, %v1560
      %v1562 = vpop.f32.mrb[0].mxu0
      %v1563 = vadd.f32 0.0, %v1562
      %1564 = vmatprep.mubr.f32.mxu0 0.0
      %1565 = vmatmul.mubr.f32.gmra.mrb[0].mxu0 %v1443
      %v1566 = vpop.f32.mrb[0].mxu0
      %v1567 = vadd.f32 0.0, %v1566
      %v1568 = vpop.f32.mrb[0].mxu0
      %v1569 = vadd.f32 0.0, %v1568
      %1570 = vmatprep.mubr.f32.mxu0 0.0
      %1571 = vmatmul.mubr.f32.gmra.mrb[0].mxu0 %v1444
      %v1572 = vpop.f32.mrb[0].mxu0
      %v1573 = vadd.f32 0.0, %v1572
      %v1574 = vpop.f32.mrb[0].mxu0
      %v1575 = vadd.f32 0.0, %v1574
      %1576 = vmatprep.mubr.f32.mxu0 0.0
      %1577 = vmatmul.mubr.f32.gmra.mrb[0].mxu0 %v1445
      %v1578 = vpop.f32.mrb[0].mxu0
      %v1579 = vadd.f32 0.0, %v1578
      %v1580 = vpop.f32.mrb[0].mxu0
      %v1581 = vadd.f32 0.0, %v1580
      %1582 = vmatprep.mubr.f32.mxu0 0.0
      %1583 = vmatmul.mubr.f32.gmra.mrb[0].mxu0 %v1446
      %v1584 = vpop.f32.mrb[0].mxu0
      %v1585 = vadd.f32 0.0, %v1584
      %v1586 = vpop.f32.mrb[0].mxu0
      %v1587 = vadd.f32 0.0, %v1586
      %1588 = vmatprep.mubr.f32.mxu0 0.0
      %1589 = vmatmul.mubr.f32.gmra.mrb[0].mxu0 %v1447
      %v1590 = vpop.f32.mrb[0].mxu0
      %v1591 = vadd.f32 0.0, %v1590
      %v1592 = vpop.f32.mrb[0].mxu0
      %v1593 = vadd.f32 0.0, %v1592
      %1594 = vmatprep.mubr.f32.mxu0 0.0
      %1595 = vmatmul.mubr.f32.gmra.mrb[0].mxu0 %v1448
      %v1596 = vpop.f32.mrb[0].mxu0
      %v1597 = vadd.f32 0.0, %v1596
      %v1598 = vpop.f32.mrb[0].mxu0
      %v1599 = vadd.f32 0.0, %v1598
      %1600 = vmatprep.mubr.f32.mxu0 0.0
      %1601 = vmatmul.mubr.f32.gmra.mrb[0].mxu0 %v1449
      %v1602 = vpop.f32.mrb[0].mxu0
      %v1603 = vadd.f32 0.0, %v1602
      %v1604 = vpop.f32.mrb[0].mxu0
      %v1605 = vadd.f32 0.0, %v1604
      %1606 = vdwg.mxu0
      %v1607 = vadd.f32 %v1420, %v1549
      %v1608 = vadd.f32 %v1421, %v1551
      %v1609 = vadd.f32 %v1422, %v1555
      %v1610 = vadd.f32 %v1423, %v1557
      %v1611 = vadd.f32 %v1424, %v1561
      %v1612 = vadd.f32 %v1425, %v1563
      %v1613 = vadd.f32 %v1426, %v1567
      %v1614 = vadd.f32 %v1427, %v1569
      %v1615 = vadd.f32 %v1428, %v1573
      %v1616 = vadd.f32 %v1429, %v1575
      %v1617 = vadd.f32 %v1430, %v1579
      %v1618 = vadd.f32 %v1431, %v1581
      %v1619 = vadd.f32 %v1432, %v1585
      %v1620 = vadd.f32 %v1433, %v1587
      %v1621 = vadd.f32 %v1434, %v1591
      %v1622 = vadd.f32 %v1435, %v1593
      %v1623 = vadd.f32 %v1436, %v1597
      %v1624 = vadd.f32 %v1437, %v1599
      %v1625 = vadd.f32 %v1438, %v1603
      %v1626 = vadd.f32 %v1439, %v1605
      %v1627 = vld [vmem:[%s165 + $0x16] sm:$0xff]
      %v1628 = vld [vmem:[%s165 + $0x1e] sm:$0xff]
      %v1629 = vld [vmem:[%s165 + $0x26] sm:$0xff]
      %v1630 = vld [vmem:[%s165 + $0x2e] sm:$0xff]
      %v1631 = vld [vmem:[%s165 + $0x36] sm:$0xff]
      %v1632 = vld [vmem:[%s165 + $0x3e] sm:$0xff]
      %v1633 = vld [vmem:[%s165 + $0x46] sm:$0xff]
      %v1634 = vld [vmem:[%s165 + $0x4e] sm:$0xff]
      %v1635 = vld [vmem:[%s165 + $0x56] sm:$0xff]
      %v1636 = vld [vmem:[%s165 + $0x5e] sm:$0xff]
      %v1637 = vld [vmem:[%s1 + $0x800] sm:$0xff]
      %v1638 = vld [vmem:[%s1 + $0x808] sm:$0xff]
      %v1639 = vld [vmem:[%s1 + $0x810] sm:$0xff]
      %v1640 = vld [vmem:[%s1 + $0x818] sm:$0xff]
      %v1641 = vld [vmem:[%s1 + $0x820] sm:$0xff]
      %v1642 = vld [vmem:[%s1 + $0x828] sm:$0xff]
      %v1643 = vld [vmem:[%s1 + $0x830] sm:$0xff]
      %v1644 = vld [vmem:[%s1 + $0x838] sm:$0xff]
      %v1645 = vld [vmem:[%s1 + $0x840] sm:$0xff]
      %v1646 = vld [vmem:[%s1 + $0x848] sm:$0xff]
      %v1647 = vld [vmem:[%s1 + $0x850] sm:$0xff]
      %v1648 = vld [vmem:[%s1 + $0x858] sm:$0xff]
      %v1649 = vld [vmem:[%s1 + $0x860] sm:$0xff]
      %v1650 = vld [vmem:[%s1 + $0x868] sm:$0xff]
      %v1651 = vld [vmem:[%s1 + $0x870] sm:$0xff]
      %v1652 = vld [vmem:[%s1 + $0x878] sm:$0xff]
      %v1653 = vld [vmem:[%s1 + $0x880] sm:$0xff]
      %v1654 = vld [vmem:[%s1 + $0x888] sm:$0xff]
      %v1655 = vld [vmem:[%s1 + $0x890] sm:$0xff]
      %v1656 = vld [vmem:[%s1 + $0x898] sm:$0xff]
      %v1657 = vld [vmem:[%s1 + $0x8a0] sm:$0xff]
      %v1658 = vld [vmem:[%s1 + $0x8a8] sm:$0xff]
      %v1659 = vld [vmem:[%s1 + $0x8b0] sm:$0xff]
      %v1660 = vld [vmem:[%s1 + $0x8b8] sm:$0xff]
      %v1661 = vld [vmem:[%s1 + $0x8c0] sm:$0xff]
      %v1662 = vld [vmem:[%s1 + $0x8c8] sm:$0xff]
      %v1663 = vld [vmem:[%s1 + $0x8d0] sm:$0xff]
      %v1664 = vld [vmem:[%s1 + $0x8d8] sm:$0xff]
      %v1665 = vld [vmem:[%s1 + $0x8e0] sm:$0xff]
      %v1666 = vld [vmem:[%s1 + $0x8e8] sm:$0xff]
      %v1667 = vld [vmem:[%s1 + $0x8f0] sm:$0xff]
      %v1668 = vld [vmem:[%s1 + $0x8f8] sm:$0xff]
      %1669 = vmatprep.subr.mxu0 %v1638
      %1670 = vmatpush1.msra.mxu0 %v1637
      %1671 = vmatprep.subr.mxu0 %v1640
      %1672 = vmatpush1.msra.mxu0 %v1639
      %1673 = vmatprep.subr.mxu0 %v1642
      %1674 = vmatpush1.msra.mxu0 %v1641
      %1675 = vmatprep.subr.mxu0 %v1644
      %1676 = vmatpush1.msra.mxu0 %v1643
      %1677 = vmatprep.subr.mxu0 %v1646
      %1678 = vmatpush1.msra.mxu0 %v1645
      %1679 = vmatprep.subr.mxu0 %v1648
      %1680 = vmatpush1.msra.mxu0 %v1647
      %1681 = vmatprep.subr.mxu0 %v1650
      %1682 = vmatpush1.msra.mxu0 %v1649
      %1683 = vmatprep.subr.mxu0 %v1652
      %1684 = vmatpush1.msra.mxu0 %v1651
      %1685 = vmatprep.subr.mxu0 %v1654
      %1686 = vmatpush1.msra.mxu0 %v1653
      %1687 = vmatprep.subr.mxu0 %v1656
      %1688 = vmatpush1.msra.mxu0 %v1655
      %1689 = vmatprep.subr.mxu0 %v1658
      %1690 = vmatpush1.msra.mxu0 %v1657
      %1691 = vmatprep.subr.mxu0 %v1660
      %1692 = vmatpush1.msra.mxu0 %v1659
      %1693 = vmatprep.subr.mxu0 %v1662
      %1694 = vmatpush1.msra.mxu0 %v1661
      %1695 = vmatprep.subr.mxu0 %v1664
      %1696 = vmatpush1.msra.mxu0 %v1663
      %1697 = vmatprep.subr.mxu0 %v1666
      %1698 = vmatpush1.msra.mxu0 %v1665
      %1699 = vmatprep.subr.mxu0 %v1668
      %1700 = vmatpush1.msra.mxu0 %v1667
      %1701 = vmatprep.subr.mxu0 0.0
      %1702 = vmatpush1.msra.mxu0 0.0
      %1703 = vmatprep.subr.mxu0 0.0
      %1704 = vmatpush1.msra.mxu0 0.0
      %1705 = vmatprep.subr.mxu0 0.0
      %1706 = vmatpush1.msra.mxu0 0.0
      %1707 = vmatprep.subr.mxu0 0.0
      %1708 = vmatpush1.msra.mxu0 0.0
      %1709 = vmatprep.subr.mxu0 0.0
      %1710 = vmatpush1.msra.mxu0 0.0
      %1711 = vmatprep.subr.mxu0 0.0
      %1712 = vmatpush1.msra.mxu0 0.0
      %1713 = vmatprep.subr.mxu0 0.0
      %1714 = vmatpush1.msra.mxu0 0.0
      %1715 = vmatprep.subr.mxu0 0.0
      %1716 = vmatpush1.msra.mxu0 0.0
      %1717 = vmatprep.subr.mxu0 0.0
      %1718 = vmatpush1.msra.mxu0 0.0
      %1719 = vmatprep.subr.mxu0 0.0
      %1720 = vmatpush1.msra.mxu0 0.0
      %1721 = vmatprep.subr.mxu0 0.0
      %1722 = vmatpush1.msra.mxu0 0.0
      %1723 = vmatprep.subr.mxu0 0.0
      %1724 = vmatpush1.msra.mxu0 0.0
      %1725 = vmatprep.subr.mxu0 0.0
      %1726 = vmatpush1.msra.mxu0 0.0
      %1727 = vmatprep.subr.mxu0 0.0
      %1728 = vmatpush1.msra.mxu0 0.0
      %1729 = vmatprep.subr.mxu0 0.0
      %1730 = vmatpush1.msra.mxu0 0.0
      %1731 = vmatprep.subr.mxu0 0.0
      %1732 = vmatpush1.msra.mxu0 0.0
      %1733 = vmatprep.mubr.f32.mxu0 0.0
      %1734 = vmatmul.mubr.f32.gmra.mrb[0].mxu0 %v1627
      %v1735 = vpop.f32.mrb[0].mxu0
      %v1736 = vadd.f32 0.0, %v1735
      %v1737 = vpop.f32.mrb[0].mxu0
      %v1738 = vadd.f32 0.0, %v1737
      %1739 = vmatprep.mubr.f32.mxu0 0.0
      %1740 = vmatmul.mubr.f32.gmra.mrb[0].mxu0 %v1628
      %v1741 = vpop.f32.mrb[0].mxu0
      %v1742 = vadd.f32 0.0, %v1741
      %v1743 = vpop.f32.mrb[0].mxu0
      %v1744 = vadd.f32 0.0, %v1743
      %1745 = vmatprep.mubr.f32.mxu0 0.0
      %1746 = vmatmul.mubr.f32.gmra.mrb[0].mxu0 %v1629
      %v1747 = vpop.f32.mrb[0].mxu0
      %v1748 = vadd.f32 0.0, %v1747
      %v1749 = vpop.f32.mrb[0].mxu0
      %v1750 = vadd.f32 0.0, %v1749
      %1751 = vmatprep.mubr.f32.mxu0 0.0
      %1752 = vmatmul.mubr.f32.gmra.mrb[0].mxu0 %v1630
      %v1753 = vpop.f32.mrb[0].mxu0
      %v1754 = vadd.f32 0.0, %v1753
      %v1755 = vpop.f32.mrb[0].mxu0
      %v1756 = vadd.f32 0.0, %v1755
      %1757 = vmatprep.mubr.f32.mxu0 0.0
      %1758 = vmatmul.mubr.f32.gmra.mrb[0].mxu0 %v1631
      %v1759 = vpop.f32.mrb[0].mxu0
      %v1760 = vadd.f32 0.0, %v1759
      %v1761 = vpop.f32.mrb[0].mxu0
      %v1762 = vadd.f32 0.0, %v1761
      %1763 = vmatprep.mubr.f32.mxu0 0.0
      %1764 = vmatmul.mubr.f32.gmra.mrb[0].mxu0 %v1632
      %v1765 = vpop.f32.mrb[0].mxu0
      %v1766 = vadd.f32 0.0, %v1765
      %v1767 = vpop.f32.mrb[0].mxu0
      %v1768 = vadd.f32 0.0, %v1767
      %1769 = vmatprep.mubr.f32.mxu0 0.0
      %1770 = vmatmul.mubr.f32.gmra.mrb[0].mxu0 %v1633
      %v1771 = vpop.f32.mrb[0].mxu0
      %v1772 = vadd.f32 0.0, %v1771
      %v1773 = vpop.f32.mrb[0].mxu0
      %v1774 = vadd.f32 0.0, %v1773
      %1775 = vmatprep.mubr.f32.mxu0 0.0
      %1776 = vmatmul.mubr.f32.gmra.mrb[0].mxu0 %v1634
      %v1777 = vpop.f32.mrb[0].mxu0
      %v1778 = vadd.f32 0.0, %v1777
      %v1779 = vpop.f32.mrb[0].mxu0
      %v1780 = vadd.f32 0.0, %v1779
      %1781 = vmatprep.mubr.f32.mxu0 0.0
      %1782 = vmatmul.mubr.f32.gmra.mrb[0].mxu0 %v1635
      %v1783 = vpop.f32.mrb[0].mxu0
      %v1784 = vadd.f32 0.0, %v1783
      %v1785 = vpop.f32.mrb[0].mxu0
      %v1786 = vadd.f32 0.0, %v1785
      %1787 = vmatprep.mubr.f32.mxu0 0.0
      %1788 = vmatmul.mubr.f32.gmra.mrb[0].mxu0 %v1636
      %v1789 = vpop.f32.mrb[0].mxu0
      %v1790 = vadd.f32 0.0, %v1789
      %v1791 = vpop.f32.mrb[0].mxu0
      %v1792 = vadd.f32 0.0, %v1791
      %1793 = vdwg.mxu0
      %v1794 = vadd.f32 %v1607, %v1736
      %v1795 = vadd.f32 %v1608, %v1738
      %v1796 = vadd.f32 %v1609, %v1742
      %v1797 = vadd.f32 %v1610, %v1744
      %v1798 = vadd.f32 %v1611, %v1748
      %v1799 = vadd.f32 %v1612, %v1750
      %v1800 = vadd.f32 %v1613, %v1754
      %v1801 = vadd.f32 %v1614, %v1756
      %v1802 = vadd.f32 %v1615, %v1760
      %v1803 = vadd.f32 %v1616, %v1762
      %v1804 = vadd.f32 %v1617, %v1766
      %v1805 = vadd.f32 %v1618, %v1768
      %v1806 = vadd.f32 %v1619, %v1772
      %v1807 = vadd.f32 %v1620, %v1774
      %v1808 = vadd.f32 %v1621, %v1778
      %v1809 = vadd.f32 %v1622, %v1780
      %v1810 = vadd.f32 %v1623, %v1784
      %v1811 = vadd.f32 %v1624, %v1786
      %v1812 = vadd.f32 %v1625, %v1790
      %v1813 = vadd.f32 %v1626, %v1792
      %v1814 = vld [vmem:[%s2] sm:$0x3]
      %v1816 = vlaneseq
      %v1817 = vshrl.u32 %v1816, 7
      %v1818 = vsub.s32 0, %v1817
      %v1819 = vrot.slane %v1814, %v1818
      %v1820 = vlaneseq
      %v1821 = vshrl.u32 %v1820, 7
      %v1822 = vsub.s32 1, %v1821
      %v1823 = vrot.slane %v1814, %v1822
      %v1826 = vadd.f32 %v1794, %v1819
      %v1827 = vadd.f32 %v1795, %v1823
      %v1828 = vadd.f32 %v1796, %v1819
      %v1829 = vadd.f32 %v1797, %v1823
      %v1830 = vadd.f32 %v1798, %v1819
      %v1831 = vadd.f32 %v1799, %v1823
      %v1832 = vadd.f32 %v1800, %v1819
      %v1833 = vadd.f32 %v1801, %v1823
      %v1834 = vadd.f32 %v1802, %v1819
      %v1835 = vadd.f32 %v1803, %v1823
      %v1836 = vadd.f32 %v1804, %v1819
      %v1837 = vadd.f32 %v1805, %v1823
      %v1838 = vadd.f32 %v1806, %v1819
      %v1839 = vadd.f32 %v1807, %v1823
      %v1840 = vadd.f32 %v1808, %v1819
      %v1841 = vadd.f32 %v1809, %v1823
      %v1842 = vadd.f32 %v1810, %v1819
      %v1843 = vadd.f32 %v1811, %v1823
      %v1844 = vadd.f32 %v1812, %v1819
      %v1845 = vadd.f32 %v1813, %v1823
      %v1846 = vmax.f32 %v1826, 0.0
      %v1847 = vmax.f32 %v1827, 0.0
      %v1848 = vmax.f32 %v1828, 0.0
      %v1849 = vmax.f32 %v1829, 0.0
      %v1850 = vmax.f32 %v1830, 0.0
      %v1851 = vmax.f32 %v1831, 0.0
      %v1852 = vmax.f32 %v1832, 0.0
      %v1853 = vmax.f32 %v1833, 0.0
      %v1854 = vmax.f32 %v1834, 0.0
      %v1855 = vmax.f32 %v1835, 0.0
      %v1856 = vmax.f32 %v1836, 0.0
      %v1857 = vmax.f32 %v1837, 0.0
      %v1858 = vmax.f32 %v1838, 0.0
      %v1859 = vmax.f32 %v1839, 0.0
      %v1860 = vmax.f32 %v1840, 0.0
      %v1861 = vmax.f32 %v1841, 0.0
      %v1862 = vmax.f32 %v1842, 0.0
      %v1863 = vmax.f32 %v1843, 0.0
      %v1864 = vmax.f32 %v1844, 0.0
      %v1865 = vmax.f32 %v1845, 0.0
      %1866 = vst [vmem:[%s170] sm:$0xff] %v1846
      %1867 = vst [vmem:[%s170 + $0x8] sm:$0xff] %v1847
      %1868 = vst [vmem:[%s170 + $0x10] sm:$0xff] %v1848
      %1869 = vst [vmem:[%s170 + $0x18] sm:$0xff] %v1849
      %1870 = vst [vmem:[%s170 + $0x20] sm:$0xff] %v1850
      %1871 = vst [vmem:[%s170 + $0x28] sm:$0xff] %v1851
      %1872 = vst [vmem:[%s170 + $0x30] sm:$0xff] %v1852
      %1873 = vst [vmem:[%s170 + $0x38] sm:$0xff] %v1853
      %1874 = vst [vmem:[%s170 + $0x40] sm:$0xff] %v1854
      %1875 = vst [vmem:[%s170 + $0x48] sm:$0xff] %v1855
      %1876 = vst [vmem:[%s170 + $0x50] sm:$0xff] %v1856
      %1877 = vst [vmem:[%s170 + $0x58] sm:$0xff] %v1857
      %1878 = vst [vmem:[%s170 + $0x60] sm:$0xff] %v1858
      %1879 = vst [vmem:[%s170 + $0x68] sm:$0xff] %v1859
      %1880 = vst [vmem:[%s170 + $0x70] sm:$0xff] %v1860
      %1881 = vst [vmem:[%s170 + $0x78] sm:$0xff] %v1861
      %1882 = vst [vmem:[%s170 + $0x80] sm:$0xff] %v1862
      %1883 = vst [vmem:[%s170 + $0x88] sm:$0xff] %v1863
      %1884 = vst [vmem:[%s170 + $0x90] sm:$0xff] %v1864
      %1885 = vst [vmem:[%s170 + $0x98] sm:$0xff] %v1865
      %p1886 = scmp.lt.s32.totalorder %s14, 1
      %s1887 = scalar_select %p1886, %s14, 1
      %s1888 = smul.addr %s1887, 20
      %s1889 = smul.addr %s1888, 8
      %s1890 = scalar_lea.vmem %s3, %s1889
      // Predicated region
      $region33: #{asff_forward.9} parent=31 // pred_check
        %p1891 = pneg %p100
      $region34: #{asff_forward.9} parent=31 // pred_check_branch
        %1893 = sbr.rel (%p1891) target = $region36
      $region35: #{asff_forward.9} parent=31 // pred_region
        _
      $region36: #{asff_forward.9} parent=31 // pred_fallthru
        _
    $region32: #{asff_forward.9} parent=5 // pred_fallthru
      _
    %p1894 = scmp.le.s32.totalorder 2, %s9
    // Predicated region
    $region37: #{asff_forward.9} parent=5 // pred_check
      %p1895 = pneg %p1894
    $region38: #{asff_forward.9} parent=5 // pred_check_branch
      %1897 = sbr.rel (%p1895) target = $region40
    $region39: #{asff_forward.9} parent=5 // pred_region
      %s1898 = ssub.s32 %s9, 2
      // Predicated region
      $region41: #{asff_forward.9} parent=39 // pred_check
        %p1899 = pneg %p106
      $region42: #{asff_forward.9} parent=39 // pred_check_branch
        %1901 = sbr.rel (%p1899) target = $region44
      $region43: #{asff_forward.9} parent=39 // pred_region
        %p1902 = scmp.lt.s32.totalorder %s15, 1
        %s1903 = scalar_select %p1902, %s15, 1
        %s1904 = smul.addr %s1903, 20
        %s1905 = smul.addr %s1904, 8
        %s1906 = scalar_lea.vmem %s3, %s1905
      $region44: #{asff_forward.9} parent=39 // pred_fallthru
        _
    $region40: #{asff_forward.9} parent=5 // pred_fallthru
      _
  $region6: #{asff_forward.9} parent=0 // loop_footer
    %s13 = sadd.s32 1, %s9
  $region7: #{asff_forward.9} parent=0 // loop_footer_branch
    %8 = sbr.rel target = $region3
  $region8: #{asff_forward.9} parent=0 // loop_exit
    _

</llo_original>
